<compile_context>
chip_gen: v7x
topology: tpu7x:2x2x1
jax: 0.10.0
libtpu: 0.0.40
codegen_flags: <defaults>
</compile_context>

<pallas_src>
import jax
import jax.numpy as jnp
from jax import lax
from jax.experimental import pallas as pl
from jax.experimental.pallas import tpu as pltpu


_UNROLL_ROWS = 32          # fully unroll the per-output-row loop below this many rows
_SINGLE_BUF = None         # set in __main__ by _probe_single_buffer()


# ----------------------------- Pallas kernel ------------------------------

def _make_layer_kernel(Ho, Wo, Cout, has_gdn):
    """Fused Conv2d(5x5, stride 2, pad 2) [+ GDN] over one image per grid step.

    Refs:
      xw_ref : (1, Hp, Wo, 5*Cin) bf16   width-im2col'd, spatially padded input
      w_ref  : (5, 5*Cin, Cout)   bf16   per-kh weight matrices
      b_ref  : (1, Cout)          f32    conv bias
      [g_ref : (Cout, Cout)       f32    gamma^T]
      [t_ref : (1, Cout)          f32    GDN beta]
      o_ref  : (1, Ho, Wo, Cout)
    """

    def kernel(xw_ref, w_ref, b_ref, *rest):
        if has_gdn:
            g_ref, t_ref, o_ref = rest
        else:
            (o_ref,) = rest

        def compute_row(ro):
            # 5 row-shifted (5*Cin)-wide matmuls accumulate the 5x5 conv for row `ro`.
            acc = jnp.zeros((Wo, Cout), jnp.float32)
            for kh in range(5):
                row = xw_ref[0, 2 * ro + kh]               # (Wo, 5*Cin) bf16
                acc = acc + jnp.dot(row, w_ref[kh],
                                    preferred_element_type=jnp.float32)
            y = acc + b_ref[...]                            # (Wo, Cout) f32
            if has_gdn:
                # GDN epilogue fused on the same tile; norm & rsqrt kept in f32.
                norm = jnp.dot(y * y, g_ref[...],
                               preferred_element_type=jnp.float32) + t_ref[...]
                y = y * lax.rsqrt(norm)
            o_ref[0, ro] = y.astype(o_ref.dtype)

        if Ho <= _UNROLL_ROWS:
            for ro in range(Ho):                            # static unroll (tiny images)
                compute_row(ro)
        else:
            def body(ro, carry):
                compute_row(ro)
                return carry
            lax.fori_loop(0, Ho, body, 0)

    return kernel


# ----------------------------- Pallas driver -------------------------------

def _const_spec(shape, index_map):
    """BlockSpec for grid-invariant operands; single-buffered when supported."""
    if _SINGLE_BUF is not None:
        return pl.BlockSpec(shape, index_map, pipeline_mode=_SINGLE_BUF)
    return pl.BlockSpec(shape, index_map)


def _vmem_limit_bytes():
    # ~75% of physical VMEM: ~48 MiB on v7x (64 MiB), ~96 MiB on v5e/v6e (128 MiB).
    cap = 64 * 1024 * 1024
    try:
        cap = int(pltpu.get_tpu_info().vmem_capacity_bytes)
    except Exception:
        pass
    return max(32 * 1024 * 1024, min(cap * 3 // 4, 100 * 1024 * 1024))


def _build_xw(x):
    """Width-direction im2col of a spatially padded NHWC activation (bf16).

    x: (B, H, W, Cin) -> xw: (B, H2+4, Wo, 5*Cin) with
    xw[b, r, wo, kw*Cin + c] = x_pad[b, r, 2*wo + kw, c].
    (H2, W2) are H, W rounded up to even; this does not change the conv output.
    """
    B, H, W, C = x.shape
    H2, W2 = H + (H % 2), W + (W % 2)
    Ho, Wo = H2 // 2, W2 // 2
    xp = jnp.pad(x, ((0, 0), (2, 2 + H2 - H), (2, 2 + W2 - W), (0, 0)))
    cols = [xp[:, :, kw:kw + 2 * Wo - 1:2, :] for kw in range(5)]
    xw = jnp.concatenate(cols, axis=-1)                     # (B, H2+4, Wo, 5*Cin)
    return xw, Ho, Wo


def _layer(x, w5, brow, gT=None, trow=None, out_dtype=jnp.bfloat16):
    """One fused Conv2d(5x5, s2, p2) [+ GDN] layer as a single pallas_call."""
    xw, Ho, Wo = _build_xw(x)
    B, Hp, _, FC = xw.shape
    Cout = w5.shape[-1]
    has_gdn = gT is not None

    img4 = lambda b: (b, 0, 0, 0)
    in_specs = [pl.BlockSpec((1, Hp, Wo, FC), img4),
                _const_spec((5, FC, Cout), lambda b: (0, 0, 0)),
                _const_spec((1, Cout), lambda b: (0, 0))]
    operands = [xw, w5, brow]
    if has_gdn:
        in_specs += [_const_spec((Cout, Cout), lambda b: (0, 0)),
                     _const_spec((1, Cout), lambda b: (0, 0))]
        operands += [gT, trow]

    # grid=(B,) "parallel": with B>=2 both v7x TensorCores get work; auto-pipelining
    # overlaps the next image's DMA with the current image's compute.
    return pl.pallas_call(
        _make_layer_kernel(Ho, Wo, Cout, has_gdn),
        out_shape=jax.ShapeDtypeStruct((B, Ho, Wo, Cout), out_dtype),
        grid=(B,),
        in_specs=in_specs,
        out_specs=pl.BlockSpec((1, Ho, Wo, Cout), img4),
        compiler_params=pltpu.CompilerParams(
            dimension_semantics=("parallel",),
            vmem_limit_bytes=_vmem_limit_bytes()),
    )(*operands)


# ------------------------------- packing -----------------------------------

def _pack_conv(w_oihw, b):
    # (Cout, Cin, 5, 5) OIHW -> (5, 5*Cin, Cout) bf16 (kw-major, cin-minor rows)
    Cout, Cin, kh, kw = w_oihw.shape
    w5 = (jnp.transpose(w_oihw, (2, 3, 1, 0))
          .reshape(kh, kw * Cin, Cout)
          .astype(jnp.bfloat16))
    return w5, b.reshape(1, Cout).astype(jnp.float32)


def _pack_gdn(gamma, beta):
    C = gamma.shape[0]
    return gamma.T.astype(jnp.float32), beta.reshape(1, C).astype(jnp.float32)


# ------------------------------- forward -----------------------------------

def analysis_forward(x_nchw, p):
    w1, b1 = _pack_conv(p["w1"], p["b1"]); g1, t1 = _pack_gdn(p["g1"], p["bt1"])
    w2, b2 = _pack_conv(p["w2"], p["b2"]); g2, t2 = _pack_gdn(p["g2"], p["bt2"])
    w3, b3 = _pack_conv(p["w3"], p["b3"]); g3, t3 = _pack_gdn(p["g3"], p["bt3"])
    w4, b4 = _pack_conv(p["w4"], p["b4"])

    x = jnp.transpose(x_nchw, (0, 2, 3, 1)).astype(jnp.bfloat16)   # NCHW -> NHWC bf16
    x = _layer(x, w1, b1, g1, t1)                                  # conv1 + GDN1 (fused)
    x = _layer(x, w2, b2, g2, t2)                                  # conv2 + GDN2 (fused)
    x = _layer(x, w3, b3, g3, t3)                                  # conv3 + GDN3 (fused)
    x = _layer(x, w4, b4, out_dtype=jnp.float32)                   # conv4
    return jnp.transpose(x, (0, 3, 1, 2))                          # NHWC -> NCHW


# ------------------------------ reference -----------------------------------

def _conv_ref(x, w, b):
    return lax.conv_general_dilated(
        x, jnp.transpose(w, (2, 3, 1, 0)),
        window_strides=(2, 2), padding=((2, 2), (2, 2)),
        dimension_numbers=("NHWC", "HWIO", "NHWC")) + b


def _gdn_ref(x, gamma, beta):
    norm = jnp.einsum("bhwc,oc->bhwo", x * x, gamma) + beta
    return x * lax.rsqrt(norm)


def analysis_ref(x_nchw, p):
    x = jnp.transpose(x_nchw, (0, 2, 3, 1))
    x = _gdn_ref(_conv_ref(x, p["w1"], p["b1"]), p["g1"], p["bt1"])
    x = _gdn_ref(_conv_ref(x, p["w2"], p["b2"]), p["g2"], p["bt2"])
    x = _gdn_ref(_conv_ref(x, p["w3"], p["b3"]), p["g3"], p["bt3"])
    x = _conv_ref(x, p["w4"], p["b4"])
    return jnp.transpose(x, (0, 3, 1, 2))


# ------------------------------- params -------------------------------------

def init_params(key, N=32, M=48):
    ks = jax.random.split(key, 11)

    def conv_init(kw_, kb_, cout, cin):
        fan_in = cin * 25
        w = jax.random.normal(kw_, (cout, cin, 5, 5), jnp.float32) / jnp.sqrt(float(fan_in))
        b = 0.01 * jax.random.normal(kb_, (cout,), jnp.float32)
        return w, b

    def gdn_init(kg, c):
        off = 0.01 * jnp.abs(jax.random.normal(kg, (c, c), jnp.float32))
        gamma = 0.1 * jnp.eye(c, dtype=jnp.float32) + off   # asymmetric, non-negative
        beta = jnp.ones((c,), jnp.float32)
        return gamma, beta

    p = {}
    p["w1"], p["b1"] = conv_init(ks[0], ks[1], N, 3)
    p["w2"], p["b2"] = conv_init(ks[2], ks[3], N, N)
    p["w3"], p["b3"] = conv_init(ks[4], ks[5], N, N)
    p["w4"], p["b4"] = conv_init(ks[6], ks[7], M, N)
    p["g1"], p["bt1"] = gdn_init(ks[8], N)
    p["g2"], p["bt2"] = gdn_init(ks[9], N)
    p["g3"], p["bt3"] = gdn_init(ks[10], N)
    return p


# ------------------------------- probe --------------------------------------

def _probe_single_buffer():
    """Return pl.Buffered(1) if single-buffering of grid-invariant BlockSpecs is
    supported by the running JAX, else None (fall back to default buffering)."""
    try:
        def k(x_ref, o_ref):
            o_ref[...] = x_ref[...] + 1.0
        spec = pl.BlockSpec((8, 128), lambda i: (0, 0), pipeline_mode=pl.Buffered(1))
        f = pl.pallas_call(
            k, out_shape=jax.ShapeDtypeStruct((8, 128), jnp.float32),
            grid=(2,), in_specs=[spec],
            out_specs=pl.BlockSpec((8, 128), lambda i: (0, 0)))
        jax.block_until_ready(jax.jit(f)(jnp.zeros((8, 128), jnp.float32)))
        return pl.Buffered(1)
    except Exception:
        return None


# -------------------------------- main ---------------------------------------

if __name__ == "__main__":
    _SINGLE_BUF = _probe_single_buffer()

    key = jax.random.PRNGKey(0)
    kx, kp = jax.random.split(key)

    N, M = 32, 48                                            # small stand-ins for 128 / 192
    x = jax.random.normal(kx, (2, 3, 16, 16), jnp.float32)   # NCHW like PyTorch
    params = init_params(kp, N=N, M=M)

    fwd = jax.jit(analysis_forward)
    out = jax.block_until_ready(fwd(x, params))

    ref = analysis_ref(x, params)
    assert out.shape == (2, M, 1, 1), out.shape              # 16 -> 8 -> 4 -> 2 -> 1
    err = float(jnp.max(jnp.abs(out - ref)))
    assert err < 5e-2, err                                   # bf16 kernel vs f32 reference

    print("KERNEL_OK")
</pallas_src>

<mosaic_0001>
module attributes {stable_mosaic.version = 11 : i64} {
  func.func @k(%arg0: i32, %arg1: memref<8x128xf32, #tpu.memory_space<vmem>>, %arg2: memref<8x128xf32, #tpu.memory_space<vmem>>) attributes {dimension_semantics = [#tpu.dimension_semantics<arbitrary>], iteration_bounds = array<i64: 2>, scalar_prefetch = 0 : i64, scratch_operands = 0 : i64, tpu.core_type = #tpu.core_type<tc>, window_params = [{pipeline_mode = #tpu.pipeline_mode<synchronous>, transform_indices = @transform_0, window_bounds = array<i64: 8, 128>}, {pipeline_mode = #tpu.pipeline_mode<synchronous>, transform_indices = @transform_1, window_bounds = array<i64: 8, 128>}]} {
    %c0 = arith.constant 0 : index
    %c0_0 = arith.constant 0 : index
    %0 = vector.load %arg1[%c0, %c0_0] : memref<8x128xf32, #tpu.memory_space<vmem>>, vector<8x128xf32>
    %cst = arith.constant 1.000000e+00 : f32
    %1 = vector.broadcast %cst : f32 to vector<8x128xf32>
    %2 = arith.addf %0, %1 : vector<8x128xf32>
    %c0_1 = arith.constant 0 : index
    %c0_2 = arith.constant 0 : index
    %3 = vector.load %arg2[%c0_1, %c0_2] : memref<8x128xf32, #tpu.memory_space<vmem>>, vector<8x128xf32>
    tpu.vector_store %arg2[%c0_1, %c0_2], %2 {strides = array<i32>} : memref<8x128xf32, #tpu.memory_space<vmem>>, vector<8x128xf32>,
    return
  }
  func.func @transform_0(%arg0: i32) -> (i32, i32) {
    %c0_i32 = arith.constant 0 : i32
    %c0_i32_0 = arith.constant 0 : i32
    %c0_i32_1 = arith.constant 0 : i32
    return %c0_i32, %c0_i32_0 : i32, i32
  }
  func.func @transform_1(%arg0: i32) -> (i32, i32) {
    %c0_i32 = arith.constant 0 : i32
    %c0_i32_0 = arith.constant 0 : i32
    %c0_i32_1 = arith.constant 0 : i32
    return %c0_i32, %c0_i32_0 : i32, i32
  }
}

module attributes {stable_mosaic.version = 11 : i64} {
  func.func @kernel(%arg0: i32, %arg1: memref<1x20x8x15xbf16, #tpu.memory_space<vmem>>, %arg2: memref<5x15x32xbf16, #tpu.memory_space<vmem>>, %arg3: memref<1x32xf32, #tpu.memory_space<vmem>>, %arg4: memref<32x32xf32, #tpu.memory_space<vmem>>, %arg5: memref<1x32xf32, #tpu.memory_space<vmem>>, %arg6: memref<1x8x8x32xbf16, #tpu.memory_space<vmem>>) attributes {dimension_semantics = [#tpu.dimension_semantics<parallel>], iteration_bounds = array<i64: 2>, scalar_prefetch = 0 : i64, scratch_operands = 0 : i64, tpu.core_type = #tpu.core_type<tc>, window_params = [{transform_indices = @transform_0, window_bounds = array<i64: 1, 20, 8, 15>}, {pipeline_mode = #tpu.pipeline_mode<synchronous>, transform_indices = @transform_1, window_bounds = array<i64: 5, 15, 32>}, {pipeline_mode = #tpu.pipeline_mode<synchronous>, transform_indices = @transform_2, window_bounds = array<i64: 1, 32>}, {pipeline_mode = #tpu.pipeline_mode<synchronous>, transform_indices = @transform_3, window_bounds = array<i64: 32, 32>}, {pipeline_mode = #tpu.pipeline_mode<synchronous>, transform_indices = @transform_4, window_bounds = array<i64: 1, 32>}, {transform_indices = @transform_5, window_bounds = array<i64: 1, 8, 8, 32>}]} {
    %cst = arith.constant 0.000000e+00 : f32
    %0 = vector.broadcast %cst : f32 to vector<8x32xf32>
    %c0 = arith.constant 0 : index
    %c0_0 = arith.constant 0 : index
    %c0_1 = arith.constant 0 : index
    %c0_2 = arith.constant 0 : index
    %1 = vector.load %arg1[%c0, %c0_0, %c0_1, %c0_2] : memref<1x20x8x15xbf16, #tpu.memory_space<vmem>>, vector<1x1x8x15xbf16>
    %2 = vector.shape_cast %1 : vector<1x1x8x15xbf16> to vector<8x15xbf16>
    %c0_3 = arith.constant 0 : index
    %c0_4 = arith.constant 0 : index
    %c0_5 = arith.constant 0 : index
    %3 = vector.load %arg2[%c0_3, %c0_4, %c0_5] : memref<5x15x32xbf16, #tpu.memory_space<vmem>>, vector<1x15x32xbf16>
    %4 = vector.shape_cast %3 : vector<1x15x32xbf16> to vector<15x32xbf16>
    %cst_6 = arith.constant dense<0.000000e+00> : vector<8x32xf32>
    %5 = tpu.matmul %2, %4, %cst_6 {dimension_numbers = #tpu.dot_dimension_numbers<[1], [0], [0], [1], [0, 0, 1, 1], [], []>} : vector<8x15xbf16>, vector<15x32xbf16>, vector<8x32xf32> -> vector<8x32xf32>
    %6 = arith.addf %0, %5 : vector<8x32xf32>
    %c0_7 = arith.constant 0 : index
    %c1 = arith.constant 1 : index
    %c0_8 = arith.constant 0 : index
    %c0_9 = arith.constant 0 : index
    %7 = vector.load %arg1[%c0_7, %c1, %c0_8, %c0_9] : memref<1x20x8x15xbf16, #tpu.memory_space<vmem>>, vector<1x1x8x15xbf16>
    %8 = vector.shape_cast %7 : vector<1x1x8x15xbf16> to vector<8x15xbf16>
    %c1_10 = arith.constant 1 : index
    %c0_11 = arith.constant 0 : index
    %c0_12 = arith.constant 0 : index
    %9 = vector.load %arg2[%c1_10, %c0_11, %c0_12] : memref<5x15x32xbf16, #tpu.memory_space<vmem>>, vector<1x15x32xbf16>
    %10 = vector.shape_cast %9 : vector<1x15x32xbf16> to vector<15x32xbf16>
    %cst_13 = arith.constant dense<0.000000e+00> : vector<8x32xf32>
    %11 = tpu.matmul %8, %10, %cst_13 {dimension_numbers = #tpu.dot_dimension_numbers<[1], [0], [0], [1], [0, 0, 1, 1], [], []>} : vector<8x15xbf16>, vector<15x32xbf16>, vector<8x32xf32> -> vector<8x32xf32>
    %12 = arith.addf %6, %11 : vector<8x32xf32>
    %c0_14 = arith.constant 0 : index
    %c2 = arith.constant 2 : index
    %c0_15 = arith.constant 0 : index
    %c0_16 = arith.constant 0 : index
    %13 = vector.load %arg1[%c0_14, %c2, %c0_15, %c0_16] : memref<1x20x8x15xbf16, #tpu.memory_space<vmem>>, vector<1x1x8x15xbf16>
    %14 = vector.shape_cast %13 : vector<1x1x8x15xbf16> to vector<8x15xbf16>
    %c2_17 = arith.constant 2 : index
    %c0_18 = arith.constant 0 : index
    %c0_19 = arith.constant 0 : index
    %15 = vector.load %arg2[%c2_17, %c0_18, %c0_19] : memref<5x15x32xbf16, #tpu.memory_space<vmem>>, vector<1x15x32xbf16>
    %16 = vector.shape_cast %15 : vector<1x15x32xbf16> to vector<15x32xbf16>
    %cst_20 = arith.constant dense<0.000000e+00> : vector<8x32xf32>
    %17 = tpu.matmul %14, %16, %cst_20 {dimension_numbers = #tpu.dot_dimension_numbers<[1], [0], [0], [1], [0, 0, 1, 1], [], []>} : vector<8x15xbf16>, vector<15x32xbf16>, vector<8x32xf32> -> vector<8x32xf32>
    %18 = arith.addf %12, %17 : vector<8x32xf32>
    %c0_21 = arith.constant 0 : index
    %c3 = arith.constant 3 : index
    %c0_22 = arith.constant 0 : index
    %c0_23 = arith.constant 0 : index
    %19 = vector.load %arg1[%c0_21, %c3, %c0_22, %c0_23] : memref<1x20x8x15xbf16, #tpu.memory_space<vmem>>, vector<1x1x8x15xbf16>
    %20 = vector.shape_cast %19 : vector<1x1x8x15xbf16> to vector<8x15xbf16>
    %c3_24 = arith.constant 3 : index
    %c0_25 = arith.constant 0 : index
    %c0_26 = arith.constant 0 : index
    %21 = vector.load %arg2[%c3_24, %c0_25, %c0_26] : memref<5x15x32xbf16, #tpu.memory_space<vmem>>, vector<1x15x32xbf16>
    %22 = vector.shape_cast %21 : vector<1x15x32xbf16> to vector<15x32xbf16>
    %cst_27 = arith.constant dense<0.000000e+00> : vector<8x32xf32>
    %23 = tpu.matmul %20, %22, %cst_27 {dimension_numbers = #tpu.dot_dimension_numbers<[1], [0], [0], [1], [0, 0, 1, 1], [], []>} : vector<8x15xbf16>, vector<15x32xbf16>, vector<8x32xf32> -> vector<8x32xf32>
    %24 = arith.addf %18, %23 : vector<8x32xf32>
    %c0_28 = arith.constant 0 : index
    %c4 = arith.constant 4 : index
    %c0_29 = arith.constant 0 : index
    %c0_30 = arith.constant 0 : index
    %25 = vector.load %arg1[%c0_28, %c4, %c0_29, %c0_30] : memref<1x20x8x15xbf16, #tpu.memory_space<vmem>>, vector<1x1x8x15xbf16>
    %26 = vector.shape_cast %25 : vector<1x1x8x15xbf16> to vector<8x15xbf16>
    %c4_31 = arith.constant 4 : index
    %c0_32 = arith.constant 0 : index
    %c0_33 = arith.constant 0 : index
    %27 = vector.load %arg2[%c4_31, %c0_32, %c0_33] : memref<5x15x32xbf16, #tpu.memory_space<vmem>>, vector<1x15x32xbf16>
    %28 = vector.shape_cast %27 : vector<1x15x32xbf16> to vector<15x32xbf16>
    %cst_34 = arith.constant dense<0.000000e+00> : vector<8x32xf32>
    %29 = tpu.matmul %26, %28, %cst_34 {dimension_numbers = #tpu.dot_dimension_numbers<[1], [0], [0], [1], [0, 0, 1, 1], [], []>} : vector<8x15xbf16>, vector<15x32xbf16>, vector<8x32xf32> -> vector<8x32xf32>
    %30 = arith.addf %24, %29 : vector<8x32xf32>
    %c0_35 = arith.constant 0 : index
    %c0_36 = arith.constant 0 : index
    %31 = vector.load %arg3[%c0_35, %c0_36] : memref<1x32xf32, #tpu.memory_space<vmem>>, vector<1x32xf32>
    %32 = vector.broadcast %31 : vector<1x32xf32> to vector<8x32xf32>
    %33 = arith.addf %30, %32 : vector<8x32xf32>
    %34 = arith.mulf %33, %33 : vector<8x32xf32>
    %c0_37 = arith.constant 0 : index
    %c0_38 = arith.constant 0 : index
    %35 = vector.load %arg4[%c0_37, %c0_38] : memref<32x32xf32, #tpu.memory_space<vmem>>, vector<32x32xf32>
    %cst_39 = arith.constant dense<0.000000e+00> : vector<8x32xf32>
    %36 = tpu.matmul %34, %35, %cst_39 {dimension_numbers = #tpu.dot_dimension_numbers<[1], [0], [0], [1], [0, 0, 1, 1], [], []>} : vector<8x32xf32>, vector<32x32xf32>, vector<8x32xf32> -> vector<8x32xf32>
    %c0_40 = arith.constant 0 : index
    %c0_41 = arith.constant 0 : index
    %37 = vector.load %arg5[%c0_40, %c0_41] : memref<1x32xf32, #tpu.memory_space<vmem>>, vector<1x32xf32>
    %38 = vector.broadcast %37 : vector<1x32xf32> to vector<8x32xf32>
    %39 = arith.addf %36, %38 : vector<8x32xf32>
    %40 = math.rsqrt %39 : vector<8x32xf32>
    %41 = arith.mulf %33, %40 : vector<8x32xf32>
    %42 = arith.truncf %41 : vector<8x32xf32> to vector<8x32xbf16>
    %c0_42 = arith.constant 0 : index
    %c0_43 = arith.constant 0 : index
    %c0_44 = arith.constant 0 : index
    %c0_45 = arith.constant 0 : index
    %43 = vector.load %arg6[%c0_42, %c0_43, %c0_44, %c0_45] : memref<1x8x8x32xbf16, #tpu.memory_space<vmem>>, vector<1x1x8x32xbf16>
    %44 = vector.shape_cast %43 : vector<1x1x8x32xbf16> to vector<8x32xbf16>
    %45 = vector.shape_cast %42 : vector<8x32xbf16> to vector<1x1x8x32xbf16>
    tpu.vector_store %arg6[%c0_42, %c0_43, %c0_44, %c0_45], %45 {strides = array<i32>} : memref<1x8x8x32xbf16, #tpu.memory_space<vmem>>, vector<1x1x8x32xbf16>,
    %cst_46 = arith.constant 0.000000e+00 : f32
    %46 = vector.broadcast %cst_46 : f32 to vector<8x32xf32>
    %c0_47 = arith.constant 0 : index
    %c2_48 = arith.constant 2 : index
    %c0_49 = arith.constant 0 : index
    %c0_50 = arith.constant 0 : index
    %47 = vector.load %arg1[%c0_47, %c2_48, %c0_49, %c0_50] : memref<1x20x8x15xbf16, #tpu.memory_space<vmem>>, vector<1x1x8x15xbf16>
    %48 = vector.shape_cast %47 : vector<1x1x8x15xbf16> to vector<8x15xbf16>
    %c0_51 = arith.constant 0 : index
    %c0_52 = arith.constant 0 : index
    %c0_53 = arith.constant 0 : index
    %49 = vector.load %arg2[%c0_51, %c0_52, %c0_53] : memref<5x15x32xbf16, #tpu.memory_space<vmem>>, vector<1x15x32xbf16>
    %50 = vector.shape_cast %49 : vector<1x15x32xbf16> to vector<15x32xbf16>
    %cst_54 = arith.constant dense<0.000000e+00> : vector<8x32xf32>
    %51 = tpu.matmul %48, %50, %cst_54 {dimension_numbers = #tpu.dot_dimension_numbers<[1], [0], [0], [1], [0, 0, 1, 1], [], []>} : vector<8x15xbf16>, vector<15x32xbf16>, vector<8x32xf32> -> vector<8x32xf32>
    %52 = arith.addf %46, %51 : vector<8x32xf32>
    %c0_55 = arith.constant 0 : index
    %c3_56 = arith.constant 3 : index
    %c0_57 = arith.constant 0 : index
    %c0_58 = arith.constant 0 : index
    %53 = vector.load %arg1[%c0_55, %c3_56, %c0_57, %c0_58] : memref<1x20x8x15xbf16, #tpu.memory_space<vmem>>, vector<1x1x8x15xbf16>
    %54 = vector.shape_cast %53 : vector<1x1x8x15xbf16> to vector<8x15xbf16>
    %c1_59 = arith.constant 1 : index
    %c0_60 = arith.constant 0 : index
    %c0_61 = arith.constant 0 : index
    %55 = vector.load %arg2[%c1_59, %c0_60, %c0_61] : memref<5x15x32xbf16, #tpu.memory_space<vmem>>, vector<1x15x32xbf16>
    %56 = vector.shape_cast %55 : vector<1x15x32xbf16> to vector<15x32xbf16>
    %cst_62 = arith.constant dense<0.000000e+00> : vector<8x32xf32>
    %57 = tpu.matmul %54, %56, %cst_62 {dimension_numbers = #tpu.dot_dimension_numbers<[1], [0], [0], [1], [0, 0, 1, 1], [], []>} : vector<8x15xbf16>, vector<15x32xbf16>, vector<8x32xf32> -> vector<8x32xf32>
    %58 = arith.addf %52, %57 : vector<8x32xf32>
    %c0_63 = arith.constant 0 : index
    %c4_64 = arith.constant 4 : index
    %c0_65 = arith.constant 0 : index
    %c0_66 = arith.constant 0 : index
    %59 = vector.load %arg1[%c0_63, %c4_64, %c0_65, %c0_66] : memref<1x20x8x15xbf16, #tpu.memory_space<vmem>>, vector<1x1x8x15xbf16>
    %60 = vector.shape_cast %59 : vector<1x1x8x15xbf16> to vector<8x15xbf16>
    %c2_67 = arith.constant 2 : index
    %c0_68 = arith.constant 0 : index
    %c0_69 = arith.constant 0 : index
    %61 = vector.load %arg2[%c2_67, %c0_68, %c0_69] : memref<5x15x32xbf16, #tpu.memory_space<vmem>>, vector<1x15x32xbf16>
    %62 = vector.shape_cast %61 : vector<1x15x32xbf16> to vector<15x32xbf16>
    %cst_70 = arith.constant dense<0.000000e+00> : vector<8x32xf32>
    %63 = tpu.matmul %60, %62, %cst_70 {dimension_numbers = #tpu.dot_dimension_numbers<[1], [0], [0], [1], [0, 0, 1, 1], [], []>} : vector<8x15xbf16>, vector<15x32xbf16>, vector<8x32xf32> -> vector<8x32xf32>
    %64 = arith.addf %58, %63 : vector<8x32xf32>
    %c0_71 = arith.constant 0 : index
    %c5 = arith.constant 5 : index
    %c0_72 = arith.constant 0 : index
    %c0_73 = arith.constant 0 : index
    %65 = vector.load %arg1[%c0_71, %c5, %c0_72, %c0_73] : memref<1x20x8x15xbf16, #tpu.memory_space<vmem>>, vector<1x1x8x15xbf16>
    %66 = vector.shape_cast %65 : vector<1x1x8x15xbf16> to vector<8x15xbf16>
    %c3_74 = arith.constant 3 : index
    %c0_75 = arith.constant 0 : index
    %c0_76 = arith.constant 0 : index
    %67 = vector.load %arg2[%c3_74, %c0_75, %c0_76] : memref<5x15x32xbf16, #tpu.memory_space<vmem>>, vector<1x15x32xbf16>
    %68 = vector.shape_cast %67 : vector<1x15x32xbf16> to vector<15x32xbf16>
    %cst_77 = arith.constant dense<0.000000e+00> : vector<8x32xf32>
    %69 = tpu.matmul %66, %68, %cst_77 {dimension_numbers = #tpu.dot_dimension_numbers<[1], [0], [0], [1], [0, 0, 1, 1], [], []>} : vector<8x15xbf16>, vector<15x32xbf16>, vector<8x32xf32> -> vector<8x32xf32>
    %70 = arith.addf %64, %69 : vector<8x32xf32>
    %c0_78 = arith.constant 0 : index
    %c6 = arith.constant 6 : index
    %c0_79 = arith.constant 0 : index
    %c0_80 = arith.constant 0 : index
    %71 = vector.load %arg1[%c0_78, %c6, %c0_79, %c0_80] : memref<1x20x8x15xbf16, #tpu.memory_space<vmem>>, vector<1x1x8x15xbf16>
    %72 = vector.shape_cast %71 : vector<1x1x8x15xbf16> to vector<8x15xbf16>
    %c4_81 = arith.constant 4 : index
    %c0_82 = arith.constant 0 : index
    %c0_83 = arith.constant 0 : index
    %73 = vector.load %arg2[%c4_81, %c0_82, %c0_83] : memref<5x15x32xbf16, #tpu.memory_space<vmem>>, vector<1x15x32xbf16>
    %74 = vector.shape_cast %73 : vector<1x15x32xbf16> to vector<15x32xbf16>
    %cst_84 = arith.constant dense<0.000000e+00> : vector<8x32xf32>
    %75 = tpu.matmul %72, %74, %cst_84 {dimension_numbers = #tpu.dot_dimension_numbers<[1], [0], [0], [1], [0, 0, 1, 1], [], []>} : vector<8x15xbf16>, vector<15x32xbf16>, vector<8x32xf32> -> vector<8x32xf32>
    %76 = arith.addf %70, %75 : vector<8x32xf32>
    %c0_85 = arith.constant 0 : index
    %c0_86 = arith.constant 0 : index
    %77 = vector.load %arg3[%c0_85, %c0_86] : memref<1x32xf32, #tpu.memory_space<vmem>>, vector<1x32xf32>
    %78 = vector.broadcast %77 : vector<1x32xf32> to vector<8x32xf32>
    %79 = arith.addf %76, %78 : vector<8x32xf32>
    %80 = arith.mulf %79, %79 : vector<8x32xf32>
    %c0_87 = arith.constant 0 : index
    %c0_88 = arith.constant 0 : index
    %81 = vector.load %arg4[%c0_87, %c0_88] : memref<32x32xf32, #tpu.memory_space<vmem>>, vector<32x32xf32>
    %cst_89 = arith.constant dense<0.000000e+00> : vector<8x32xf32>
    %82 = tpu.matmul %80, %81, %cst_89 {dimension_numbers = #tpu.dot_dimension_numbers<[1], [0], [0], [1], [0, 0, 1, 1], [], []>} : vector<8x32xf32>, vector<32x32xf32>, vector<8x32xf32> -> vector<8x32xf32>
    %c0_90 = arith.constant 0 : index
    %c0_91 = arith.constant 0 : index
    %83 = vector.load %arg5[%c0_90, %c0_91] : memref<1x32xf32, #tpu.memory_space<vmem>>, vector<1x32xf32>
    %84 = vector.broadcast %83 : vector<1x32xf32> to vector<8x32xf32>
    %85 = arith.addf %82, %84 : vector<8x32xf32>
    %86 = math.rsqrt %85 : vector<8x32xf32>
    %87 = arith.mulf %79, %86 : vector<8x32xf32>
    %88 = arith.truncf %87 : vector<8x32xf32> to vector<8x32xbf16>
    %c0_92 = arith.constant 0 : index
    %c1_93 = arith.constant 1 : index
    %c0_94 = arith.constant 0 : index
    %c0_95 = arith.constant 0 : index
    %89 = vector.load %arg6[%c0_92, %c1_93, %c0_94, %c0_95] : memref<1x8x8x32xbf16, #tpu.memory_space<vmem>>, vector<1x1x8x32xbf16>
    %90 = vector.shape_cast %89 : vector<1x1x8x32xbf16> to vector<8x32xbf16>
    %91 = vector.shape_cast %88 : vector<8x32xbf16> to vector<1x1x8x32xbf16>
    tpu.vector_store %arg6[%c0_92, %c1_93, %c0_94, %c0_95], %91 {strides = array<i32>} : memref<1x8x8x32xbf16, #tpu.memory_space<vmem>>, vector<1x1x8x32xbf16>,
    %cst_96 = arith.constant 0.000000e+00 : f32
    %92 = vector.broadcast %cst_96 : f32 to vector<8x32xf32>
    %c0_97 = arith.constant 0 : index
    %c4_98 = arith.constant 4 : index
    %c0_99 = arith.constant 0 : index
    %c0_100 = arith.constant 0 : index
    %93 = vector.load %arg1[%c0_97, %c4_98, %c0_99, %c0_100] : memref<1x20x8x15xbf16, #tpu.memory_space<vmem>>, vector<1x1x8x15xbf16>
    %94 = vector.shape_cast %93 : vector<1x1x8x15xbf16> to vector<8x15xbf16>
    %c0_101 = arith.constant 0 : index
    %c0_102 = arith.constant 0 : index
    %c0_103 = arith.constant 0 : index
    %95 = vector.load %arg2[%c0_101, %c0_102, %c0_103] : memref<5x15x32xbf16, #tpu.memory_space<vmem>>, vector<1x15x32xbf16>
    %96 = vector.shape_cast %95 : vector<1x15x32xbf16> to vector<15x32xbf16>
    %cst_104 = arith.constant dense<0.000000e+00> : vector<8x32xf32>
    %97 = tpu.matmul %94, %96, %cst_104 {dimension_numbers = #tpu.dot_dimension_numbers<[1], [0], [0], [1], [0, 0, 1, 1], [], []>} : vector<8x15xbf16>, vector<15x32xbf16>, vector<8x32xf32> -> vector<8x32xf32>
    %98 = arith.addf %92, %97 : vector<8x32xf32>
    %c0_105 = arith.constant 0 : index
    %c5_106 = arith.constant 5 : index
    %c0_107 = arith.constant 0 : index
    %c0_108 = arith.constant 0 : index
    %99 = vector.load %arg1[%c0_105, %c5_106, %c0_107, %c0_108] : memref<1x20x8x15xbf16, #tpu.memory_space<vmem>>, vector<1x1x8x15xbf16>
    %100 = vector.shape_cast %99 : vector<1x1x8x15xbf16> to vector<8x15xbf16>
    %c1_109 = arith.constant 1 : index
    %c0_110 = arith.constant 0 : index
    %c0_111 = arith.constant 0 : index
    %101 = vector.load %arg2[%c1_109, %c0_110, %c0_111] : memref<5x15x32xbf16, #tpu.memory_space<vmem>>, vector<1x15x32xbf16>
    %102 = vector.shape_cast %101 : vector<1x15x32xbf16> to vector<15x32xbf16>
    %cst_112 = arith.constant dense<0.000000e+00> : vector<8x32xf32>
    %103 = tpu.matmul %100, %102, %cst_112 {dimension_numbers = #tpu.dot_dimension_numbers<[1], [0], [0], [1], [0, 0, 1, 1], [], []>} : vector<8x15xbf16>, vector<15x32xbf16>, vector<8x32xf32> -> vector<8x32xf32>
    %104 = arith.addf %98, %103 : vector<8x32xf32>
    %c0_113 = arith.constant 0 : index
    %c6_114 = arith.constant 6 : index
    %c0_115 = arith.constant 0 : index
    %c0_116 = arith.constant 0 : index
    %105 = vector.load %arg1[%c0_113, %c6_114, %c0_115, %c0_116] : memref<1x20x8x15xbf16, #tpu.memory_space<vmem>>, vector<1x1x8x15xbf16>
    %106 = vector.shape_cast %105 : vector<1x1x8x15xbf16> to vector<8x15xbf16>
    %c2_117 = arith.constant 2 : index
    %c0_118 = arith.constant 0 : index
    %c0_119 = arith.constant 0 : index
    %107 = vector.load %arg2[%c2_117, %c0_118, %c0_119] : memref<5x15x32xbf16, #tpu.memory_space<vmem>>, vector<1x15x32xbf16>
    %108 = vector.shape_cast %107 : vector<1x15x32xbf16> to vector<15x32xbf16>
    %cst_120 = arith.constant dense<0.000000e+00> : vector<8x32xf32>
    %109 = tpu.matmul %106, %108, %cst_120 {dimension_numbers = #tpu.dot_dimension_numbers<[1], [0], [0], [1], [0, 0, 1, 1], [], []>} : vector<8x15xbf16>, vector<15x32xbf16>, vector<8x32xf32> -> vector<8x32xf32>
    %110 = arith.addf %104, %109 : vector<8x32xf32>
    %c0_121 = arith.constant 0 : index
    %c7 = arith.constant 7 : index
    %c0_122 = arith.constant 0 : index
    %c0_123 = arith.constant 0 : index
    %111 = vector.load %arg1[%c0_121, %c7, %c0_122, %c0_123] : memref<1x20x8x15xbf16, #tpu.memory_space<vmem>>, vector<1x1x8x15xbf16>
    %112 = vector.shape_cast %111 : vector<1x1x8x15xbf16> to vector<8x15xbf16>
    %c3_124 = arith.constant 3 : index
    %c0_125 = arith.constant 0 : index
    %c0_126 = arith.constant 0 : index
    %113 = vector.load %arg2[%c3_124, %c0_125, %c0_126] : memref<5x15x32xbf16, #tpu.memory_space<vmem>>, vector<1x15x32xbf16>
    %114 = vector.shape_cast %113 : vector<1x15x32xbf16> to vector<15x32xbf16>
    %cst_127 = arith.constant dense<0.000000e+00> : vector<8x32xf32>
    %115 = tpu.matmul %112, %114, %cst_127 {dimension_numbers = #tpu.dot_dimension_numbers<[1], [0], [0], [1], [0, 0, 1, 1], [], []>} : vector<8x15xbf16>, vector<15x32xbf16>, vector<8x32xf32> -> vector<8x32xf32>
    %116 = arith.addf %110, %115 : vector<8x32xf32>
    %c0_128 = arith.constant 0 : index
    %c8 = arith.constant 8 : index
    %c0_129 = arith.constant 0 : index
    %c0_130 = arith.constant 0 : index
    %117 = vector.load %arg1[%c0_128, %c8, %c0_129, %c0_130] : memref<1x20x8x15xbf16, #tpu.memory_space<vmem>>, vector<1x1x8x15xbf16>
    %118 = vector.shape_cast %117 : vector<1x1x8x15xbf16> to vector<8x15xbf16>
    %c4_131 = arith.constant 4 : index
    %c0_132 = arith.constant 0 : index
    %c0_133 = arith.constant 0 : index
    %119 = vector.load %arg2[%c4_131, %c0_132, %c0_133] : memref<5x15x32xbf16, #tpu.memory_space<vmem>>, vector<1x15x32xbf16>
    %120 = vector.shape_cast %119 : vector<1x15x32xbf16> to vector<15x32xbf16>
    %cst_134 = arith.constant dense<0.000000e+00> : vector<8x32xf32>
    %121 = tpu.matmul %118, %120, %cst_134 {dimension_numbers = #tpu.dot_dimension_numbers<[1], [0], [0], [1], [0, 0, 1, 1], [], []>} : vector<8x15xbf16>, vector<15x32xbf16>, vector<8x32xf32> -> vector<8x32xf32>
    %122 = arith.addf %116, %121 : vector<8x32xf32>
    %c0_135 = arith.constant 0 : index
    %c0_136 = arith.constant 0 : index
    %123 = vector.load %arg3[%c0_135, %c0_136] : memref<1x32xf32, #tpu.memory_space<vmem>>, vector<1x32xf32>
    %124 = vector.broadcast %123 : vector<1x32xf32> to vector<8x32xf32>
    %125 = arith.addf %122, %124 : vector<8x32xf32>
    %126 = arith.mulf %125, %125 : vector<8x32xf32>
    %c0_137 = arith.constant 0 : index
    %c0_138 = arith.constant 0 : index
    %127 = vector.load %arg4[%c0_137, %c0_138] : memref<32x32xf32, #tpu.memory_space<vmem>>, vector<32x32xf32>
    %cst_139 = arith.constant dense<0.000000e+00> : vector<8x32xf32>
    %128 = tpu.matmul %126, %127, %cst_139 {dimension_numbers = #tpu.dot_dimension_numbers<[1], [0], [0], [1], [0, 0, 1, 1], [], []>} : vector<8x32xf32>, vector<32x32xf32>, vector<8x32xf32> -> vector<8x32xf32>
    %c0_140 = arith.constant 0 : index
    %c0_141 = arith.constant 0 : index
    %129 = vector.load %arg5[%c0_140, %c0_141] : memref<1x32xf32, #tpu.memory_space<vmem>>, vector<1x32xf32>
    %130 = vector.broadcast %129 : vector<1x32xf32> to vector<8x32xf32>
    %131 = arith.addf %128, %130 : vector<8x32xf32>
    %132 = math.rsqrt %131 : vector<8x32xf32>
    %133 = arith.mulf %125, %132 : vector<8x32xf32>
    %134 = arith.truncf %133 : vector<8x32xf32> to vector<8x32xbf16>
    %c0_142 = arith.constant 0 : index
    %c2_143 = arith.constant 2 : index
    %c0_144 = arith.constant 0 : index
    %c0_145 = arith.constant 0 : index
    %135 = vector.load %arg6[%c0_142, %c2_143, %c0_144, %c0_145] : memref<1x8x8x32xbf16, #tpu.memory_space<vmem>>, vector<1x1x8x32xbf16>
    %136 = vector.shape_cast %135 : vector<1x1x8x32xbf16> to vector<8x32xbf16>
    %137 = vector.shape_cast %134 : vector<8x32xbf16> to vector<1x1x8x32xbf16>
    tpu.vector_store %arg6[%c0_142, %c2_143, %c0_144, %c0_145], %137 {strides = array<i32>} : memref<1x8x8x32xbf16, #tpu.memory_space<vmem>>, vector<1x1x8x32xbf16>,
    %cst_146 = arith.constant 0.000000e+00 : f32
    %138 = vector.broadcast %cst_146 : f32 to vector<8x32xf32>
    %c0_147 = arith.constant 0 : index
    %c6_148 = arith.constant 6 : index
    %c0_149 = arith.constant 0 : index
    %c0_150 = arith.constant 0 : index
    %139 = vector.load %arg1[%c0_147, %c6_148, %c0_149, %c0_150] : memref<1x20x8x15xbf16, #tpu.memory_space<vmem>>, vector<1x1x8x15xbf16>
    %140 = vector.shape_cast %139 : vector<1x1x8x15xbf16> to vector<8x15xbf16>
    %c0_151 = arith.constant 0 : index
    %c0_152 = arith.constant 0 : index
    %c0_153 = arith.constant 0 : index
    %141 = vector.load %arg2[%c0_151, %c0_152, %c0_153] : memref<5x15x32xbf16, #tpu.memory_space<vmem>>, vector<1x15x32xbf16>
    %142 = vector.shape_cast %141 : vector<1x15x32xbf16> to vector<15x32xbf16>
    %cst_154 = arith.constant dense<0.000000e+00> : vector<8x32xf32>
    %143 = tpu.matmul %140, %142, %cst_154 {dimension_numbers = #tpu.dot_dimension_numbers<[1], [0], [0], [1], [0, 0, 1, 1], [], []>} : vector<8x15xbf16>, vector<15x32xbf16>, vector<8x32xf32> -> vector<8x32xf32>
    %144 = arith.addf %138, %143 : vector<8x32xf32>
    %c0_155 = arith.constant 0 : index
    %c7_156 = arith.constant 7 : index
    %c0_157 = arith.constant 0 : index
    %c0_158 = arith.constant 0 : index
    %145 = vector.load %arg1[%c0_155, %c7_156, %c0_157, %c0_158] : memref<1x20x8x15xbf16, #tpu.memory_space<vmem>>, vector<1x1x8x15xbf16>
    %146 = vector.shape_cast %145 : vector<1x1x8x15xbf16> to vector<8x15xbf16>
    %c1_159 = arith.constant 1 : index
    %c0_160 = arith.constant 0 : index
    %c0_161 = arith.constant 0 : index
    %147 = vector.load %arg2[%c1_159, %c0_160, %c0_161] : memref<5x15x32xbf16, #tpu.memory_space<vmem>>, vector<1x15x32xbf16>
    %148 = vector.shape_cast %147 : vector<1x15x32xbf16> to vector<15x32xbf16>
    %cst_162 = arith.constant dense<0.000000e+00> : vector<8x32xf32>
    %149 = tpu.matmul %146, %148, %cst_162 {dimension_numbers = #tpu.dot_dimension_numbers<[1], [0], [0], [1], [0, 0, 1, 1], [], []>} : vector<8x15xbf16>, vector<15x32xbf16>, vector<8x32xf32> -> vector<8x32xf32>
    %150 = arith.addf %144, %149 : vector<8x32xf32>
    %c0_163 = arith.constant 0 : index
    %c8_164 = arith.constant 8 : index
    %c0_165 = arith.constant 0 : index
    %c0_166 = arith.constant 0 : index
    %151 = vector.load %arg1[%c0_163, %c8_164, %c0_165, %c0_166] : memref<1x20x8x15xbf16, #tpu.memory_space<vmem>>, vector<1x1x8x15xbf16>
    %152 = vector.shape_cast %151 : vector<1x1x8x15xbf16> to vector<8x15xbf16>
    %c2_167 = arith.constant 2 : index
    %c0_168 = arith.constant 0 : index
    %c0_169 = arith.constant 0 : index
    %153 = vector.load %arg2[%c2_167, %c0_168, %c0_169] : memref<5x15x32xbf16, #tpu.memory_space<vmem>>, vector<1x15x32xbf16>
    %154 = vector.shape_cast %153 : vector<1x15x32xbf16> to vector<15x32xbf16>
    %cst_170 = arith.constant dense<0.000000e+00> : vector<8x32xf32>
    %155 = tpu.matmul %152, %154, %cst_170 {dimension_numbers = #tpu.dot_dimension_numbers<[1], [0], [0], [1], [0, 0, 1, 1], [], []>} : vector<8x15xbf16>, vector<15x32xbf16>, vector<8x32xf32> -> vector<8x32xf32>
    %156 = arith.addf %150, %155 : vector<8x32xf32>
    %c0_171 = arith.constant 0 : index
    %c9 = arith.constant 9 : index
    %c0_172 = arith.constant 0 : index
    %c0_173 = arith.constant 0 : index
    %157 = vector.load %arg1[%c0_171, %c9, %c0_172, %c0_173] : memref<1x20x8x15xbf16, #tpu.memory_space<vmem>>, vector<1x1x8x15xbf16>
    %158 = vector.shape_cast %157 : vector<1x1x8x15xbf16> to vector<8x15xbf16>
    %c3_174 = arith.constant 3 : index
    %c0_175 = arith.constant 0 : index
    %c0_176 = arith.constant 0 : index
    %159 = vector.load %arg2[%c3_174, %c0_175, %c0_176] : memref<5x15x32xbf16, #tpu.memory_space<vmem>>, vector<1x15x32xbf16>
    %160 = vector.shape_cast %159 : vector<1x15x32xbf16> to vector<15x32xbf16>
    %cst_177 = arith.constant dense<0.000000e+00> : vector<8x32xf32>
    %161 = tpu.matmul %158, %160, %cst_177 {dimension_numbers = #tpu.dot_dimension_numbers<[1], [0], [0], [1], [0, 0, 1, 1], [], []>} : vector<8x15xbf16>, vector<15x32xbf16>, vector<8x32xf32> -> vector<8x32xf32>
    %162 = arith.addf %156, %161 : vector<8x32xf32>
    %c0_178 = arith.constant 0 : index
    %c10 = arith.constant 10 : index
    %c0_179 = arith.constant 0 : index
    %c0_180 = arith.constant 0 : index
    %163 = vector.load %arg1[%c0_178, %c10, %c0_179, %c0_180] : memref<1x20x8x15xbf16, #tpu.memory_space<vmem>>, vector<1x1x8x15xbf16>
    %164 = vector.shape_cast %163 : vector<1x1x8x15xbf16> to vector<8x15xbf16>
    %c4_181 = arith.constant 4 : index
    %c0_182 = arith.constant 0 : index
    %c0_183 = arith.constant 0 : index
    %165 = vector.load %arg2[%c4_181, %c0_182, %c0_183] : memref<5x15x32xbf16, #tpu.memory_space<vmem>>, vector<1x15x32xbf16>
    %166 = vector.shape_cast %165 : vector<1x15x32xbf16> to vector<15x32xbf16>
    %cst_184 = arith.constant dense<0.000000e+00> : vector<8x32xf32>
    %167 = tpu.matmul %164, %166, %cst_184 {dimension_numbers = #tpu.dot_dimension_numbers<[1], [0], [0], [1], [0, 0, 1, 1], [], []>} : vector<8x15xbf16>, vector<15x32xbf16>, vector<8x32xf32> -> vector<8x32xf32>
    %168 = arith.addf %162, %167 : vector<8x32xf32>
    %c0_185 = arith.constant 0 : index
    %c0_186 = arith.constant 0 : index
    %169 = vector.load %arg3[%c0_185, %c0_186] : memref<1x32xf32, #tpu.memory_space<vmem>>, vector<1x32xf32>
    %170 = vector.broadcast %169 : vector<1x32xf32> to vector<8x32xf32>
    %171 = arith.addf %168, %170 : vector<8x32xf32>
    %172 = arith.mulf %171, %171 : vector<8x32xf32>
    %c0_187 = arith.constant 0 : index
    %c0_188 = arith.constant 0 : index
    %173 = vector.load %arg4[%c0_187, %c0_188] : memref<32x32xf32, #tpu.memory_space<vmem>>, vector<32x32xf32>
    %cst_189 = arith.constant dense<0.000000e+00> : vector<8x32xf32>
    %174 = tpu.matmul %172, %173, %cst_189 {dimension_numbers = #tpu.dot_dimension_numbers<[1], [0], [0], [1], [0, 0, 1, 1], [], []>} : vector<8x32xf32>, vector<32x32xf32>, vector<8x32xf32> -> vector<8x32xf32>
    %c0_190 = arith.constant 0 : index
    %c0_191 = arith.constant 0 : index
    %175 = vector.load %arg5[%c0_190, %c0_191] : memref<1x32xf32, #tpu.memory_space<vmem>>, vector<1x32xf32>
    %176 = vector.broadcast %175 : vector<1x32xf32> to vector<8x32xf32>
    %177 = arith.addf %174, %176 : vector<8x32xf32>
    %178 = math.rsqrt %177 : vector<8x32xf32>
    %179 = arith.mulf %171, %178 : vector<8x32xf32>
    %180 = arith.truncf %179 : vector<8x32xf32> to vector<8x32xbf16>
    %c0_192 = arith.constant 0 : index
    %c3_193 = arith.constant 3 : index
    %c0_194 = arith.constant 0 : index
    %c0_195 = arith.constant 0 : index
    %181 = vector.load %arg6[%c0_192, %c3_193, %c0_194, %c0_195] : memref<1x8x8x32xbf16, #tpu.memory_space<vmem>>, vector<1x1x8x32xbf16>
    %182 = vector.shape_cast %181 : vector<1x1x8x32xbf16> to vector<8x32xbf16>
    %183 = vector.shape_cast %180 : vector<8x32xbf16> to vector<1x1x8x32xbf16>
    tpu.vector_store %arg6[%c0_192, %c3_193, %c0_194, %c0_195], %183 {strides = array<i32>} : memref<1x8x8x32xbf16, #tpu.memory_space<vmem>>, vector<1x1x8x32xbf16>,
    %cst_196 = arith.constant 0.000000e+00 : f32
    %184 = vector.broadcast %cst_196 : f32 to vector<8x32xf32>
    %c0_197 = arith.constant 0 : index
    %c8_198 = arith.constant 8 : index
    %c0_199 = arith.constant 0 : index
    %c0_200 = arith.constant 0 : index
    %185 = vector.load %arg1[%c0_197, %c8_198, %c0_199, %c0_200] : memref<1x20x8x15xbf16, #tpu.memory_space<vmem>>, vector<1x1x8x15xbf16>
    %186 = vector.shape_cast %185 : vector<1x1x8x15xbf16> to vector<8x15xbf16>
    %c0_201 = arith.constant 0 : index
    %c0_202 = arith.constant 0 : index
    %c0_203 = arith.constant 0 : index
    %187 = vector.load %arg2[%c0_201, %c0_202, %c0_203] : memref<5x15x32xbf16, #tpu.memory_space<vmem>>, vector<1x15x32xbf16>
    %188 = vector.shape_cast %187 : vector<1x15x32xbf16> to vector<15x32xbf16>
    %cst_204 = arith.constant dense<0.000000e+00> : vector<8x32xf32>
    %189 = tpu.matmul %186, %188, %cst_204 {dimension_numbers = #tpu.dot_dimension_numbers<[1], [0], [0], [1], [0, 0, 1, 1], [], []>} : vector<8x15xbf16>, vector<15x32xbf16>, vector<8x32xf32> -> vector<8x32xf32>
    %190 = arith.addf %184, %189 : vector<8x32xf32>
    %c0_205 = arith.constant 0 : index
    %c9_206 = arith.constant 9 : index
    %c0_207 = arith.constant 0 : index
    %c0_208 = arith.constant 0 : index
    %191 = vector.load %arg1[%c0_205, %c9_206, %c0_207, %c0_208] : memref<1x20x8x15xbf16, #tpu.memory_space<vmem>>, vector<1x1x8x15xbf16>
    %192 = vector.shape_cast %191 : vector<1x1x8x15xbf16> to vector<8x15xbf16>
    %c1_209 = arith.constant 1 : index
    %c0_210 = arith.constant 0 : index
    %c0_211 = arith.constant 0 : index
    %193 = vector.load %arg2[%c1_209, %c0_210, %c0_211] : memref<5x15x32xbf16, #tpu.memory_space<vmem>>, vector<1x15x32xbf16>
    %194 = vector.shape_cast %193 : vector<1x15x32xbf16> to vector<15x32xbf16>
    %cst_212 = arith.constant dense<0.000000e+00> : vector<8x32xf32>
    %195 = tpu.matmul %192, %194, %cst_212 {dimension_numbers = #tpu.dot_dimension_numbers<[1], [0], [0], [1], [0, 0, 1, 1], [], []>} : vector<8x15xbf16>, vector<15x32xbf16>, vector<8x32xf32> -> vector<8x32xf32>
    %196 = arith.addf %190, %195 : vector<8x32xf32>
    %c0_213 = arith.constant 0 : index
    %c10_214 = arith.constant 10 : index
    %c0_215 = arith.constant 0 : index
    %c0_216 = arith.constant 0 : index
    %197 = vector.load %arg1[%c0_213, %c10_214, %c0_215, %c0_216] : memref<1x20x8x15xbf16, #tpu.memory_space<vmem>>, vector<1x1x8x15xbf16>
    %198 = vector.shape_cast %197 : vector<1x1x8x15xbf16> to vector<8x15xbf16>
    %c2_217 = arith.constant 2 : index
    %c0_218 = arith.constant 0 : index
    %c0_219 = arith.constant 0 : index
    %199 = vector.load %arg2[%c2_217, %c0_218, %c0_219] : memref<5x15x32xbf16, #tpu.memory_space<vmem>>, vector<1x15x32xbf16>
    %200 = vector.shape_cast %199 : vector<1x15x32xbf16> to vector<15x32xbf16>
    %cst_220 = arith.constant dense<0.000000e+00> : vector<8x32xf32>
    %201 = tpu.matmul %198, %200, %cst_220 {dimension_numbers = #tpu.dot_dimension_numbers<[1], [0], [0], [1], [0, 0, 1, 1], [], []>} : vector<8x15xbf16>, vector<15x32xbf16>, vector<8x32xf32> -> vector<8x32xf32>
    %202 = arith.addf %196, %201 : vector<8x32xf32>
    %c0_221 = arith.constant 0 : index
    %c11 = arith.constant 11 : index
    %c0_222 = arith.constant 0 : index
    %c0_223 = arith.constant 0 : index
    %203 = vector.load %arg1[%c0_221, %c11, %c0_222, %c0_223] : memref<1x20x8x15xbf16, #tpu.memory_space<vmem>>, vector<1x1x8x15xbf16>
    %204 = vector.shape_cast %203 : vector<1x1x8x15xbf16> to vector<8x15xbf16>
    %c3_224 = arith.constant 3 : index
    %c0_225 = arith.constant 0 : index
    %c0_226 = arith.constant 0 : index
    %205 = vector.load %arg2[%c3_224, %c0_225, %c0_226] : memref<5x15x32xbf16, #tpu.memory_space<vmem>>, vector<1x15x32xbf16>
    %206 = vector.shape_cast %205 : vector<1x15x32xbf16> to vector<15x32xbf16>
    %cst_227 = arith.constant dense<0.000000e+00> : vector<8x32xf32>
    %207 = tpu.matmul %204, %206, %cst_227 {dimension_numbers = #tpu.dot_dimension_numbers<[1], [0], [0], [1], [0, 0, 1, 1], [], []>} : vector<8x15xbf16>, vector<15x32xbf16>, vector<8x32xf32> -> vector<8x32xf32>
    %208 = arith.addf %202, %207 : vector<8x32xf32>
    %c0_228 = arith.constant 0 : index
    %c12 = arith.constant 12 : index
    %c0_229 = arith.constant 0 : index
    %c0_230 = arith.constant 0 : index
    %209 = vector.load %arg1[%c0_228, %c12, %c0_229, %c0_230] : memref<1x20x8x15xbf16, #tpu.memory_space<vmem>>, vector<1x1x8x15xbf16>
    %210 = vector.shape_cast %209 : vector<1x1x8x15xbf16> to vector<8x15xbf16>
    %c4_231 = arith.constant 4 : index
    %c0_232 = arith.constant 0 : index
    %c0_233 = arith.constant 0 : index
    %211 = vector.load %arg2[%c4_231, %c0_232, %c0_233] : memref<5x15x32xbf16, #tpu.memory_space<vmem>>, vector<1x15x32xbf16>
    %212 = vector.shape_cast %211 : vector<1x15x32xbf16> to vector<15x32xbf16>
    %cst_234 = arith.constant dense<0.000000e+00> : vector<8x32xf32>
    %213 = tpu.matmul %210, %212, %cst_234 {dimension_numbers = #tpu.dot_dimension_numbers<[1], [0], [0], [1], [0, 0, 1, 1], [], []>} : vector<8x15xbf16>, vector<15x32xbf16>, vector<8x32xf32> -> vector<8x32xf32>
    %214 = arith.addf %208, %213 : vector<8x32xf32>
    %c0_235 = arith.constant 0 : index
    %c0_236 = arith.constant 0 : index
    %215 = vector.load %arg3[%c0_235, %c0_236] : memref<1x32xf32, #tpu.memory_space<vmem>>, vector<1x32xf32>
    %216 = vector.broadcast %215 : vector<1x32xf32> to vector<8x32xf32>
    %217 = arith.addf %214, %216 : vector<8x32xf32>
    %218 = arith.mulf %217, %217 : vector<8x32xf32>
    %c0_237 = arith.constant 0 : index
    %c0_238 = arith.constant 0 : index
    %219 = vector.load %arg4[%c0_237, %c0_238] : memref<32x32xf32, #tpu.memory_space<vmem>>, vector<32x32xf32>
    %cst_239 = arith.constant dense<0.000000e+00> : vector<8x32xf32>
    %220 = tpu.matmul %218, %219, %cst_239 {dimension_numbers = #tpu.dot_dimension_numbers<[1], [0], [0], [1], [0, 0, 1, 1], [], []>} : vector<8x32xf32>, vector<32x32xf32>, vector<8x32xf32> -> vector<8x32xf32>
    %c0_240 = arith.constant 0 : index
    %c0_241 = arith.constant 0 : index
    %221 = vector.load %arg5[%c0_240, %c0_241] : memref<1x32xf32, #tpu.memory_space<vmem>>, vector<1x32xf32>
    %222 = vector.broadcast %221 : vector<1x32xf32> to vector<8x32xf32>
    %223 = arith.addf %220, %222 : vector<8x32xf32>
    %224 = math.rsqrt %223 : vector<8x32xf32>
    %225 = arith.mulf %217, %224 : vector<8x32xf32>
    %226 = arith.truncf %225 : vector<8x32xf32> to vector<8x32xbf16>
    %c0_242 = arith.constant 0 : index
    %c4_243 = arith.constant 4 : index
    %c0_244 = arith.constant 0 : index
    %c0_245 = arith.constant 0 : index
    %227 = vector.load %arg6[%c0_242, %c4_243, %c0_244, %c0_245] : memref<1x8x8x32xbf16, #tpu.memory_space<vmem>>, vector<1x1x8x32xbf16>
    %228 = vector.shape_cast %227 : vector<1x1x8x32xbf16> to vector<8x32xbf16>
    %229 = vector.shape_cast %226 : vector<8x32xbf16> to vector<1x1x8x32xbf16>
    tpu.vector_store %arg6[%c0_242, %c4_243, %c0_244, %c0_245], %229 {strides = array<i32>} : memref<1x8x8x32xbf16, #tpu.memory_space<vmem>>, vector<1x1x8x32xbf16>,
    %cst_246 = arith.constant 0.000000e+00 : f32
    %230 = vector.broadcast %cst_246 : f32 to vector<8x32xf32>
    %c0_247 = arith.constant 0 : index
    %c10_248 = arith.constant 10 : index
    %c0_249 = arith.constant 0 : index
    %c0_250 = arith.constant 0 : index
    %231 = vector.load %arg1[%c0_247, %c10_248, %c0_249, %c0_250] : memref<1x20x8x15xbf16, #tpu.memory_space<vmem>>, vector<1x1x8x15xbf16>
    %232 = vector.shape_cast %231 : vector<1x1x8x15xbf16> to vector<8x15xbf16>
    %c0_251 = arith.constant 0 : index
    %c0_252 = arith.constant 0 : index
    %c0_253 = arith.constant 0 : index
    %233 = vector.load %arg2[%c0_251, %c0_252, %c0_253] : memref<5x15x32xbf16, #tpu.memory_space<vmem>>, vector<1x15x32xbf16>
    %234 = vector.shape_cast %233 : vector<1x15x32xbf16> to vector<15x32xbf16>
    %cst_254 = arith.constant dense<0.000000e+00> : vector<8x32xf32>
    %235 = tpu.matmul %232, %234, %cst_254 {dimension_numbers = #tpu.dot_dimension_numbers<[1], [0], [0], [1], [0, 0, 1, 1], [], []>} : vector<8x15xbf16>, vector<15x32xbf16>, vector<8x32xf32> -> vector<8x32xf32>
    %236 = arith.addf %230, %235 : vector<8x32xf32>
    %c0_255 = arith.constant 0 : index
    %c11_256 = arith.constant 11 : index
    %c0_257 = arith.constant 0 : index
    %c0_258 = arith.constant 0 : index
    %237 = vector.load %arg1[%c0_255, %c11_256, %c0_257, %c0_258] : memref<1x20x8x15xbf16, #tpu.memory_space<vmem>>, vector<1x1x8x15xbf16>
    %238 = vector.shape_cast %237 : vector<1x1x8x15xbf16> to vector<8x15xbf16>
    %c1_259 = arith.constant 1 : index
    %c0_260 = arith.constant 0 : index
    %c0_261 = arith.constant 0 : index
    %239 = vector.load %arg2[%c1_259, %c0_260, %c0_261] : memref<5x15x32xbf16, #tpu.memory_space<vmem>>, vector<1x15x32xbf16>
    %240 = vector.shape_cast %239 : vector<1x15x32xbf16> to vector<15x32xbf16>
    %cst_262 = arith.constant dense<0.000000e+00> : vector<8x32xf32>
    %241 = tpu.matmul %238, %240, %cst_262 {dimension_numbers = #tpu.dot_dimension_numbers<[1], [0], [0], [1], [0, 0, 1, 1], [], []>} : vector<8x15xbf16>, vector<15x32xbf16>, vector<8x32xf32> -> vector<8x32xf32>
    %242 = arith.addf %236, %241 : vector<8x32xf32>
    %c0_263 = arith.constant 0 : index
    %c12_264 = arith.constant 12 : index
    %c0_265 = arith.constant 0 : index
    %c0_266 = arith.constant 0 : index
    %243 = vector.load %arg1[%c0_263, %c12_264, %c0_265, %c0_266] : memref<1x20x8x15xbf16, #tpu.memory_space<vmem>>, vector<1x1x8x15xbf16>
    %244 = vector.shape_cast %243 : vector<1x1x8x15xbf16> to vector<8x15xbf16>
    %c2_267 = arith.constant 2 : index
    %c0_268 = arith.constant 0 : index
    %c0_269 = arith.constant 0 : index
    %245 = vector.load %arg2[%c2_267, %c0_268, %c0_269] : memref<5x15x32xbf16, #tpu.memory_space<vmem>>, vector<1x15x32xbf16>
    %246 = vector.shape_cast %245 : vector<1x15x32xbf16> to vector<15x32xbf16>
    %cst_270 = arith.constant dense<0.000000e+00> : vector<8x32xf32>
    %247 = tpu.matmul %244, %246, %cst_270 {dimension_numbers = #tpu.dot_dimension_numbers<[1], [0], [0], [1], [0, 0, 1, 1], [], []>} : vector<8x15xbf16>, vector<15x32xbf16>, vector<8x32xf32> -> vector<8x32xf32>
    %248 = arith.addf %242, %247 : vector<8x32xf32>
    %c0_271 = arith.constant 0 : index
    %c13 = arith.constant 13 : index
    %c0_272 = arith.constant 0 : index
    %c0_273 = arith.constant 0 : index
    %249 = vector.load %arg1[%c0_271, %c13, %c0_272, %c0_273] : memref<1x20x8x15xbf16, #tpu.memory_space<vmem>>, vector<1x1x8x15xbf16>
    %250 = vector.shape_cast %249 : vector<1x1x8x15xbf16> to vector<8x15xbf16>
    %c3_274 = arith.constant 3 : index
    %c0_275 = arith.constant 0 : index
    %c0_276 = arith.constant 0 : index
    %251 = vector.load %arg2[%c3_274, %c0_275, %c0_276] : memref<5x15x32xbf16, #tpu.memory_space<vmem>>, vector<1x15x32xbf16>
    %252 = vector.shape_cast %251 : vector<1x15x32xbf16> to vector<15x32xbf16>
    %cst_277 = arith.constant dense<0.000000e+00> : vector<8x32xf32>
    %253 = tpu.matmul %250, %252, %cst_277 {dimension_numbers = #tpu.dot_dimension_numbers<[1], [0], [0], [1], [0, 0, 1, 1], [], []>} : vector<8x15xbf16>, vector<15x32xbf16>, vector<8x32xf32> -> vector<8x32xf32>
    %254 = arith.addf %248, %253 : vector<8x32xf32>
    %c0_278 = arith.constant 0 : index
    %c14 = arith.constant 14 : index
    %c0_279 = arith.constant 0 : index
    %c0_280 = arith.constant 0 : index
    %255 = vector.load %arg1[%c0_278, %c14, %c0_279, %c0_280] : memref<1x20x8x15xbf16, #tpu.memory_space<vmem>>, vector<1x1x8x15xbf16>
    %256 = vector.shape_cast %255 : vector<1x1x8x15xbf16> to vector<8x15xbf16>
    %c4_281 = arith.constant 4 : index
    %c0_282 = arith.constant 0 : index
    %c0_283 = arith.constant 0 : index
    %257 = vector.load %arg2[%c4_281, %c0_282, %c0_283] : memref<5x15x32xbf16, #tpu.memory_space<vmem>>, vector<1x15x32xbf16>
    %258 = vector.shape_cast %257 : vector<1x15x32xbf16> to vector<15x32xbf16>
    %cst_284 = arith.constant dense<0.000000e+00> : vector<8x32xf32>
    %259 = tpu.matmul %256, %258, %cst_284 {dimension_numbers = #tpu.dot_dimension_numbers<[1], [0], [0], [1], [0, 0, 1, 1], [], []>} : vector<8x15xbf16>, vector<15x32xbf16>, vector<8x32xf32> -> vector<8x32xf32>
    %260 = arith.addf %254, %259 : vector<8x32xf32>
    %c0_285 = arith.constant 0 : index
    %c0_286 = arith.constant 0 : index
    %261 = vector.load %arg3[%c0_285, %c0_286] : memref<1x32xf32, #tpu.memory_space<vmem>>, vector<1x32xf32>
    %262 = vector.broadcast %261 : vector<1x32xf32> to vector<8x32xf32>
    %263 = arith.addf %260, %262 : vector<8x32xf32>
    %264 = arith.mulf %263, %263 : vector<8x32xf32>
    %c0_287 = arith.constant 0 : index
    %c0_288 = arith.constant 0 : index
    %265 = vector.load %arg4[%c0_287, %c0_288] : memref<32x32xf32, #tpu.memory_space<vmem>>, vector<32x32xf32>
    %cst_289 = arith.constant dense<0.000000e+00> : vector<8x32xf32>
    %266 = tpu.matmul %264, %265, %cst_289 {dimension_numbers = #tpu.dot_dimension_numbers<[1], [0], [0], [1], [0, 0, 1, 1], [], []>} : vector<8x32xf32>, vector<32x32xf32>, vector<8x32xf32> -> vector<8x32xf32>
    %c0_290 = arith.constant 0 : index
    %c0_291 = arith.constant 0 : index
    %267 = vector.load %arg5[%c0_290, %c0_291] : memref<1x32xf32, #tpu.memory_space<vmem>>, vector<1x32xf32>
    %268 = vector.broadcast %267 : vector<1x32xf32> to vector<8x32xf32>
    %269 = arith.addf %266, %268 : vector<8x32xf32>
    %270 = math.rsqrt %269 : vector<8x32xf32>
    %271 = arith.mulf %263, %270 : vector<8x32xf32>
    %272 = arith.truncf %271 : vector<8x32xf32> to vector<8x32xbf16>
    %c0_292 = arith.constant 0 : index
    %c5_293 = arith.constant 5 : index
    %c0_294 = arith.constant 0 : index
    %c0_295 = arith.constant 0 : index
    %273 = vector.load %arg6[%c0_292, %c5_293, %c0_294, %c0_295] : memref<1x8x8x32xbf16, #tpu.memory_space<vmem>>, vector<1x1x8x32xbf16>
    %274 = vector.shape_cast %273 : vector<1x1x8x32xbf16> to vector<8x32xbf16>
    %275 = vector.shape_cast %272 : vector<8x32xbf16> to vector<1x1x8x32xbf16>
    tpu.vector_store %arg6[%c0_292, %c5_293, %c0_294, %c0_295], %275 {strides = array<i32>} : memref<1x8x8x32xbf16, #tpu.memory_space<vmem>>, vector<1x1x8x32xbf16>,
    %cst_296 = arith.constant 0.000000e+00 : f32
    %276 = vector.broadcast %cst_296 : f32 to vector<8x32xf32>
    %c0_297 = arith.constant 0 : index
    %c12_298 = arith.constant 12 : index
    %c0_299 = arith.constant 0 : index
    %c0_300 = arith.constant 0 : index
    %277 = vector.load %arg1[%c0_297, %c12_298, %c0_299, %c0_300] : memref<1x20x8x15xbf16, #tpu.memory_space<vmem>>, vector<1x1x8x15xbf16>
    %278 = vector.shape_cast %277 : vector<1x1x8x15xbf16> to vector<8x15xbf16>
    %c0_301 = arith.constant 0 : index
    %c0_302 = arith.constant 0 : index
    %c0_303 = arith.constant 0 : index
    %279 = vector.load %arg2[%c0_301, %c0_302, %c0_303] : memref<5x15x32xbf16, #tpu.memory_space<vmem>>, vector<1x15x32xbf16>
    %280 = vector.shape_cast %279 : vector<1x15x32xbf16> to vector<15x32xbf16>
    %cst_304 = arith.constant dense<0.000000e+00> : vector<8x32xf32>
    %281 = tpu.matmul %278, %280, %cst_304 {dimension_numbers = #tpu.dot_dimension_numbers<[1], [0], [0], [1], [0, 0, 1, 1], [], []>} : vector<8x15xbf16>, vector<15x32xbf16>, vector<8x32xf32> -> vector<8x32xf32>
    %282 = arith.addf %276, %281 : vector<8x32xf32>
    %c0_305 = arith.constant 0 : index
    %c13_306 = arith.constant 13 : index
    %c0_307 = arith.constant 0 : index
    %c0_308 = arith.constant 0 : index
    %283 = vector.load %arg1[%c0_305, %c13_306, %c0_307, %c0_308] : memref<1x20x8x15xbf16, #tpu.memory_space<vmem>>, vector<1x1x8x15xbf16>
    %284 = vector.shape_cast %283 : vector<1x1x8x15xbf16> to vector<8x15xbf16>
    %c1_309 = arith.constant 1 : index
    %c0_310 = arith.constant 0 : index
    %c0_311 = arith.constant 0 : index
    %285 = vector.load %arg2[%c1_309, %c0_310, %c0_311] : memref<5x15x32xbf16, #tpu.memory_space<vmem>>, vector<1x15x32xbf16>
    %286 = vector.shape_cast %285 : vector<1x15x32xbf16> to vector<15x32xbf16>
    %cst_312 = arith.constant dense<0.000000e+00> : vector<8x32xf32>
    %287 = tpu.matmul %284, %286, %cst_312 {dimension_numbers = #tpu.dot_dimension_numbers<[1], [0], [0], [1], [0, 0, 1, 1], [], []>} : vector<8x15xbf16>, vector<15x32xbf16>, vector<8x32xf32> -> vector<8x32xf32>
    %288 = arith.addf %282, %287 : vector<8x32xf32>
    %c0_313 = arith.constant 0 : index
    %c14_314 = arith.constant 14 : index
    %c0_315 = arith.constant 0 : index
    %c0_316 = arith.constant 0 : index
    %289 = vector.load %arg1[%c0_313, %c14_314, %c0_315, %c0_316] : memref<1x20x8x15xbf16, #tpu.memory_space<vmem>>, vector<1x1x8x15xbf16>
    %290 = vector.shape_cast %289 : vector<1x1x8x15xbf16> to vector<8x15xbf16>
    %c2_317 = arith.constant 2 : index
    %c0_318 = arith.constant 0 : index
    %c0_319 = arith.constant 0 : index
    %291 = vector.load %arg2[%c2_317, %c0_318, %c0_319] : memref<5x15x32xbf16, #tpu.memory_space<vmem>>, vector<1x15x32xbf16>
    %292 = vector.shape_cast %291 : vector<1x15x32xbf16> to vector<15x32xbf16>
    %cst_320 = arith.constant dense<0.000000e+00> : vector<8x32xf32>
    %293 = tpu.matmul %290, %292, %cst_320 {dimension_numbers = #tpu.dot_dimension_numbers<[1], [0], [0], [1], [0, 0, 1, 1], [], []>} : vector<8x15xbf16>, vector<15x32xbf16>, vector<8x32xf32> -> vector<8x32xf32>
    %294 = arith.addf %288, %293 : vector<8x32xf32>
    %c0_321 = arith.constant 0 : index
    %c15 = arith.constant 15 : index
    %c0_322 = arith.constant 0 : index
    %c0_323 = arith.constant 0 : index
    %295 = vector.load %arg1[%c0_321, %c15, %c0_322, %c0_323] : memref<1x20x8x15xbf16, #tpu.memory_space<vmem>>, vector<1x1x8x15xbf16>
    %296 = vector.shape_cast %295 : vector<1x1x8x15xbf16> to vector<8x15xbf16>
    %c3_324 = arith.constant 3 : index
    %c0_325 = arith.constant 0 : index
    %c0_326 = arith.constant 0 : index
    %297 = vector.load %arg2[%c3_324, %c0_325, %c0_326] : memref<5x15x32xbf16, #tpu.memory_space<vmem>>, vector<1x15x32xbf16>
    %298 = vector.shape_cast %297 : vector<1x15x32xbf16> to vector<15x32xbf16>
    %cst_327 = arith.constant dense<0.000000e+00> : vector<8x32xf32>
    %299 = tpu.matmul %296, %298, %cst_327 {dimension_numbers = #tpu.dot_dimension_numbers<[1], [0], [0], [1], [0, 0, 1, 1], [], []>} : vector<8x15xbf16>, vector<15x32xbf16>, vector<8x32xf32> -> vector<8x32xf32>
    %300 = arith.addf %294, %299 : vector<8x32xf32>
    %c0_328 = arith.constant 0 : index
    %c16 = arith.constant 16 : index
    %c0_329 = arith.constant 0 : index
    %c0_330 = arith.constant 0 : index
    %301 = vector.load %arg1[%c0_328, %c16, %c0_329, %c0_330] : memref<1x20x8x15xbf16, #tpu.memory_space<vmem>>, vector<1x1x8x15xbf16>
    %302 = vector.shape_cast %301 : vector<1x1x8x15xbf16> to vector<8x15xbf16>
    %c4_331 = arith.constant 4 : index
    %c0_332 = arith.constant 0 : index
    %c0_333 = arith.constant 0 : index
    %303 = vector.load %arg2[%c4_331, %c0_332, %c0_333] : memref<5x15x32xbf16, #tpu.memory_space<vmem>>, vector<1x15x32xbf16>
    %304 = vector.shape_cast %303 : vector<1x15x32xbf16> to vector<15x32xbf16>
    %cst_334 = arith.constant dense<0.000000e+00> : vector<8x32xf32>
    %305 = tpu.matmul %302, %304, %cst_334 {dimension_numbers = #tpu.dot_dimension_numbers<[1], [0], [0], [1], [0, 0, 1, 1], [], []>} : vector<8x15xbf16>, vector<15x32xbf16>, vector<8x32xf32> -> vector<8x32xf32>
    %306 = arith.addf %300, %305 : vector<8x32xf32>
    %c0_335 = arith.constant 0 : index
    %c0_336 = arith.constant 0 : index
    %307 = vector.load %arg3[%c0_335, %c0_336] : memref<1x32xf32, #tpu.memory_space<vmem>>, vector<1x32xf32>
    %308 = vector.broadcast %307 : vector<1x32xf32> to vector<8x32xf32>
    %309 = arith.addf %306, %308 : vector<8x32xf32>
    %310 = arith.mulf %309, %309 : vector<8x32xf32>
    %c0_337 = arith.constant 0 : index
    %c0_338 = arith.constant 0 : index
    %311 = vector.load %arg4[%c0_337, %c0_338] : memref<32x32xf32, #tpu.memory_space<vmem>>, vector<32x32xf32>
    %cst_339 = arith.constant dense<0.000000e+00> : vector<8x32xf32>
    %312 = tpu.matmul %310, %311, %cst_339 {dimension_numbers = #tpu.dot_dimension_numbers<[1], [0], [0], [1], [0, 0, 1, 1], [], []>} : vector<8x32xf32>, vector<32x32xf32>, vector<8x32xf32> -> vector<8x32xf32>
    %c0_340 = arith.constant 0 : index
    %c0_341 = arith.constant 0 : index
    %313 = vector.load %arg5[%c0_340, %c0_341] : memref<1x32xf32, #tpu.memory_space<vmem>>, vector<1x32xf32>
    %314 = vector.broadcast %313 : vector<1x32xf32> to vector<8x32xf32>
    %315 = arith.addf %312, %314 : vector<8x32xf32>
    %316 = math.rsqrt %315 : vector<8x32xf32>
    %317 = arith.mulf %309, %316 : vector<8x32xf32>
    %318 = arith.truncf %317 : vector<8x32xf32> to vector<8x32xbf16>
    %c0_342 = arith.constant 0 : index
    %c6_343 = arith.constant 6 : index
    %c0_344 = arith.constant 0 : index
    %c0_345 = arith.constant 0 : index
    %319 = vector.load %arg6[%c0_342, %c6_343, %c0_344, %c0_345] : memref<1x8x8x32xbf16, #tpu.memory_space<vmem>>, vector<1x1x8x32xbf16>
    %320 = vector.shape_cast %319 : vector<1x1x8x32xbf16> to vector<8x32xbf16>
    %321 = vector.shape_cast %318 : vector<8x32xbf16> to vector<1x1x8x32xbf16>
    tpu.vector_store %arg6[%c0_342, %c6_343, %c0_344, %c0_345], %321 {strides = array<i32>} : memref<1x8x8x32xbf16, #tpu.memory_space<vmem>>, vector<1x1x8x32xbf16>,
    %cst_346 = arith.constant 0.000000e+00 : f32
    %322 = vector.broadcast %cst_346 : f32 to vector<8x32xf32>
    %c0_347 = arith.constant 0 : index
    %c14_348 = arith.constant 14 : index
    %c0_349 = arith.constant 0 : index
    %c0_350 = arith.constant 0 : index
    %323 = vector.load %arg1[%c0_347, %c14_348, %c0_349, %c0_350] : memref<1x20x8x15xbf16, #tpu.memory_space<vmem>>, vector<1x1x8x15xbf16>
    %324 = vector.shape_cast %323 : vector<1x1x8x15xbf16> to vector<8x15xbf16>
    %c0_351 = arith.constant 0 : index
    %c0_352 = arith.constant 0 : index
    %c0_353 = arith.constant 0 : index
    %325 = vector.load %arg2[%c0_351, %c0_352, %c0_353] : memref<5x15x32xbf16, #tpu.memory_space<vmem>>, vector<1x15x32xbf16>
    %326 = vector.shape_cast %325 : vector<1x15x32xbf16> to vector<15x32xbf16>
    %cst_354 = arith.constant dense<0.000000e+00> : vector<8x32xf32>
    %327 = tpu.matmul %324, %326, %cst_354 {dimension_numbers = #tpu.dot_dimension_numbers<[1], [0], [0], [1], [0, 0, 1, 1], [], []>} : vector<8x15xbf16>, vector<15x32xbf16>, vector<8x32xf32> -> vector<8x32xf32>
    %328 = arith.addf %322, %327 : vector<8x32xf32>
    %c0_355 = arith.constant 0 : index
    %c15_356 = arith.constant 15 : index
    %c0_357 = arith.constant 0 : index
    %c0_358 = arith.constant 0 : index
    %329 = vector.load %arg1[%c0_355, %c15_356, %c0_357, %c0_358] : memref<1x20x8x15xbf16, #tpu.memory_space<vmem>>, vector<1x1x8x15xbf16>
    %330 = vector.shape_cast %329 : vector<1x1x8x15xbf16> to vector<8x15xbf16>
    %c1_359 = arith.constant 1 : index
    %c0_360 = arith.constant 0 : index
    %c0_361 = arith.constant 0 : index
    %331 = vector.load %arg2[%c1_359, %c0_360, %c0_361] : memref<5x15x32xbf16, #tpu.memory_space<vmem>>, vector<1x15x32xbf16>
    %332 = vector.shape_cast %331 : vector<1x15x32xbf16> to vector<15x32xbf16>
    %cst_362 = arith.constant dense<0.000000e+00> : vector<8x32xf32>
    %333 = tpu.matmul %330, %332, %cst_362 {dimension_numbers = #tpu.dot_dimension_numbers<[1], [0], [0], [1], [0, 0, 1, 1], [], []>} : vector<8x15xbf16>, vector<15x32xbf16>, vector<8x32xf32> -> vector<8x32xf32>
    %334 = arith.addf %328, %333 : vector<8x32xf32>
    %c0_363 = arith.constant 0 : index
    %c16_364 = arith.constant 16 : index
    %c0_365 = arith.constant 0 : index
    %c0_366 = arith.constant 0 : index
    %335 = vector.load %arg1[%c0_363, %c16_364, %c0_365, %c0_366] : memref<1x20x8x15xbf16, #tpu.memory_space<vmem>>, vector<1x1x8x15xbf16>
    %336 = vector.shape_cast %335 : vector<1x1x8x15xbf16> to vector<8x15xbf16>
    %c2_367 = arith.constant 2 : index
    %c0_368 = arith.constant 0 : index
    %c0_369 = arith.constant 0 : index
    %337 = vector.load %arg2[%c2_367, %c0_368, %c0_369] : memref<5x15x32xbf16, #tpu.memory_space<vmem>>, vector<1x15x32xbf16>
    %338 = vector.shape_cast %337 : vector<1x15x32xbf16> to vector<15x32xbf16>
    %cst_370 = arith.constant dense<0.000000e+00> : vector<8x32xf32>
    %339 = tpu.matmul %336, %338, %cst_370 {dimension_numbers = #tpu.dot_dimension_numbers<[1], [0], [0], [1], [0, 0, 1, 1], [], []>} : vector<8x15xbf16>, vector<15x32xbf16>, vector<8x32xf32> -> vector<8x32xf32>
    %340 = arith.addf %334, %339 : vector<8x32xf32>
    %c0_371 = arith.constant 0 : index
    %c17 = arith.constant 17 : index
    %c0_372 = arith.constant 0 : index
    %c0_373 = arith.constant 0 : index
    %341 = vector.load %arg1[%c0_371, %c17, %c0_372, %c0_373] : memref<1x20x8x15xbf16, #tpu.memory_space<vmem>>, vector<1x1x8x15xbf16>
    %342 = vector.shape_cast %341 : vector<1x1x8x15xbf16> to vector<8x15xbf16>
    %c3_374 = arith.constant 3 : index
    %c0_375 = arith.constant 0 : index
    %c0_376 = arith.constant 0 : index
    %343 = vector.load %arg2[%c3_374, %c0_375, %c0_376] : memref<5x15x32xbf16, #tpu.memory_space<vmem>>, vector<1x15x32xbf16>
    %344 = vector.shape_cast %343 : vector<1x15x32xbf16> to vector<15x32xbf16>
    %cst_377 = arith.constant dense<0.000000e+00> : vector<8x32xf32>
    %345 = tpu.matmul %342, %344, %cst_377 {dimension_numbers = #tpu.dot_dimension_numbers<[1], [0], [0], [1], [0, 0, 1, 1], [], []>} : vector<8x15xbf16>, vector<15x32xbf16>, vector<8x32xf32> -> vector<8x32xf32>
    %346 = arith.addf %340, %345 : vector<8x32xf32>
    %c0_378 = arith.constant 0 : index
    %c18 = arith.constant 18 : index
    %c0_379 = arith.constant 0 : index
    %c0_380 = arith.constant 0 : index
    %347 = vector.load %arg1[%c0_378, %c18, %c0_379, %c0_380] : memref<1x20x8x15xbf16, #tpu.memory_space<vmem>>, vector<1x1x8x15xbf16>
    %348 = vector.shape_cast %347 : vector<1x1x8x15xbf16> to vector<8x15xbf16>
    %c4_381 = arith.constant 4 : index
    %c0_382 = arith.constant 0 : index
    %c0_383 = arith.constant 0 : index
    %349 = vector.load %arg2[%c4_381, %c0_382, %c0_383] : memref<5x15x32xbf16, #tpu.memory_space<vmem>>, vector<1x15x32xbf16>
    %350 = vector.shape_cast %349 : vector<1x15x32xbf16> to vector<15x32xbf16>
    %cst_384 = arith.constant dense<0.000000e+00> : vector<8x32xf32>
    %351 = tpu.matmul %348, %350, %cst_384 {dimension_numbers = #tpu.dot_dimension_numbers<[1], [0], [0], [1], [0, 0, 1, 1], [], []>} : vector<8x15xbf16>, vector<15x32xbf16>, vector<8x32xf32> -> vector<8x32xf32>
    %352 = arith.addf %346, %351 : vector<8x32xf32>
    %c0_385 = arith.constant 0 : index
    %c0_386 = arith.constant 0 : index
    %353 = vector.load %arg3[%c0_385, %c0_386] : memref<1x32xf32, #tpu.memory_space<vmem>>, vector<1x32xf32>
    %354 = vector.broadcast %353 : vector<1x32xf32> to vector<8x32xf32>
    %355 = arith.addf %352, %354 : vector<8x32xf32>
    %356 = arith.mulf %355, %355 : vector<8x32xf32>
    %c0_387 = arith.constant 0 : index
    %c0_388 = arith.constant 0 : index
    %357 = vector.load %arg4[%c0_387, %c0_388] : memref<32x32xf32, #tpu.memory_space<vmem>>, vector<32x32xf32>
    %cst_389 = arith.constant dense<0.000000e+00> : vector<8x32xf32>
    %358 = tpu.matmul %356, %357, %cst_389 {dimension_numbers = #tpu.dot_dimension_numbers<[1], [0], [0], [1], [0, 0, 1, 1], [], []>} : vector<8x32xf32>, vector<32x32xf32>, vector<8x32xf32> -> vector<8x32xf32>
    %c0_390 = arith.constant 0 : index
    %c0_391 = arith.constant 0 : index
    %359 = vector.load %arg5[%c0_390, %c0_391] : memref<1x32xf32, #tpu.memory_space<vmem>>, vector<1x32xf32>
    %360 = vector.broadcast %359 : vector<1x32xf32> to vector<8x32xf32>
    %361 = arith.addf %358, %360 : vector<8x32xf32>
    %362 = math.rsqrt %361 : vector<8x32xf32>
    %363 = arith.mulf %355, %362 : vector<8x32xf32>
    %364 = arith.truncf %363 : vector<8x32xf32> to vector<8x32xbf16>
    %c0_392 = arith.constant 0 : index
    %c7_393 = arith.constant 7 : index
    %c0_394 = arith.constant 0 : index
    %c0_395 = arith.constant 0 : index
    %365 = vector.load %arg6[%c0_392, %c7_393, %c0_394, %c0_395] : memref<1x8x8x32xbf16, #tpu.memory_space<vmem>>, vector<1x1x8x32xbf16>
    %366 = vector.shape_cast %365 : vector<1x1x8x32xbf16> to vector<8x32xbf16>
    %367 = vector.shape_cast %364 : vector<8x32xbf16> to vector<1x1x8x32xbf16>
    tpu.vector_store %arg6[%c0_392, %c7_393, %c0_394, %c0_395], %367 {strides = array<i32>} : memref<1x8x8x32xbf16, #tpu.memory_space<vmem>>, vector<1x1x8x32xbf16>,
    return
  }
  func.func @transform_0(%arg0: i32) -> (i32, i32, i32, i32) {
    %c0_i32 = arith.constant 0 : i32
    %c0_i32_0 = arith.constant 0 : i32
    %c0_i32_1 = arith.constant 0 : i32
    %c0_i32_2 = arith.constant 0 : i32
    return %arg0, %c0_i32, %c0_i32_0, %c0_i32_1 : i32, i32, i32, i32
  }
  func.func @transform_1(%arg0: i32) -> (i32, i32, i32) {
    %c0_i32 = arith.constant 0 : i32
    %c0_i32_0 = arith.constant 0 : i32
    %c0_i32_1 = arith.constant 0 : i32
    %c0_i32_2 = arith.constant 0 : i32
    return %c0_i32, %c0_i32_0, %c0_i32_1 : i32, i32, i32
  }
  func.func @transform_2(%arg0: i32) -> (i32, i32) {
    %c0_i32 = arith.constant 0 : i32
    %c0_i32_0 = arith.constant 0 : i32
    %c0_i32_1 = arith.constant 0 : i32
    return %c0_i32, %c0_i32_0 : i32, i32
  }
  func.func @transform_3(%arg0: i32) -> (i32, i32) {
    %c0_i32 = arith.constant 0 : i32
    %c0_i32_0 = arith.constant 0 : i32
    %c0_i32_1 = arith.constant 0 : i32
    return %c0_i32, %c0_i32_0 : i32, i32
  }
  func.func @transform_4(%arg0: i32) -> (i32, i32) {
    %c0_i32 = arith.constant 0 : i32
    %c0_i32_0 = arith.constant 0 : i32
    %c0_i32_1 = arith.constant 0 : i32
    return %c0_i32, %c0_i32_0 : i32, i32
  }
  func.func @transform_5(%arg0: i32) -> (i32, i32, i32, i32) {
    %c0_i32 = arith.constant 0 : i32
    %c0_i32_0 = arith.constant 0 : i32
    %c0_i32_1 = arith.constant 0 : i32
    %c0_i32_2 = arith.constant 0 : i32
    return %arg0, %c0_i32, %c0_i32_0, %c0_i32_1 : i32, i32, i32, i32
  }
}

module attributes {stable_mosaic.version = 11 : i64} {
  func.func @kernel(%arg0: i32, %arg1: memref<1x12x4x160xbf16, #tpu.memory_space<vmem>>, %arg2: memref<5x160x32xbf16, #tpu.memory_space<vmem>>, %arg3: memref<1x32xf32, #tpu.memory_space<vmem>>, %arg4: memref<32x32xf32, #tpu.memory_space<vmem>>, %arg5: memref<1x32xf32, #tpu.memory_space<vmem>>, %arg6: memref<1x4x4x32xbf16, #tpu.memory_space<vmem>>) attributes {dimension_semantics = [#tpu.dimension_semantics<parallel>], iteration_bounds = array<i64: 2>, scalar_prefetch = 0 : i64, scratch_operands = 0 : i64, tpu.core_type = #tpu.core_type<tc>, window_params = [{transform_indices = @transform_0, window_bounds = array<i64: 1, 12, 4, 160>}, {pipeline_mode = #tpu.pipeline_mode<synchronous>, transform_indices = @transform_1, window_bounds = array<i64: 5, 160, 32>}, {pipeline_mode = #tpu.pipeline_mode<synchronous>, transform_indices = @transform_2, window_bounds = array<i64: 1, 32>}, {pipeline_mode = #tpu.pipeline_mode<synchronous>, transform_indices = @transform_3, window_bounds = array<i64: 32, 32>}, {pipeline_mode = #tpu.pipeline_mode<synchronous>, transform_indices = @transform_4, window_bounds = array<i64: 1, 32>}, {transform_indices = @transform_5, window_bounds = array<i64: 1, 4, 4, 32>}]} {
    %cst = arith.constant 0.000000e+00 : f32
    %0 = vector.broadcast %cst : f32 to vector<4x32xf32>
    %c0 = arith.constant 0 : index
    %c0_0 = arith.constant 0 : index
    %c0_1 = arith.constant 0 : index
    %c0_2 = arith.constant 0 : index
    %1 = vector.load %arg1[%c0, %c0_0, %c0_1, %c0_2] : memref<1x12x4x160xbf16, #tpu.memory_space<vmem>>, vector<1x1x4x160xbf16>
    %2 = vector.shape_cast %1 : vector<1x1x4x160xbf16> to vector<4x160xbf16>
    %c0_3 = arith.constant 0 : index
    %c0_4 = arith.constant 0 : index
    %c0_5 = arith.constant 0 : index
    %3 = vector.load %arg2[%c0_3, %c0_4, %c0_5] : memref<5x160x32xbf16, #tpu.memory_space<vmem>>, vector<1x160x32xbf16>
    %4 = vector.shape_cast %3 : vector<1x160x32xbf16> to vector<160x32xbf16>
    %cst_6 = arith.constant dense<0.000000e+00> : vector<4x32xf32>
    %5 = tpu.matmul %2, %4, %cst_6 {dimension_numbers = #tpu.dot_dimension_numbers<[1], [0], [0], [1], [0, 0, 1, 1], [], []>} : vector<4x160xbf16>, vector<160x32xbf16>, vector<4x32xf32> -> vector<4x32xf32>
    %6 = arith.addf %0, %5 : vector<4x32xf32>
    %c0_7 = arith.constant 0 : index
    %c1 = arith.constant 1 : index
    %c0_8 = arith.constant 0 : index
    %c0_9 = arith.constant 0 : index
    %7 = vector.load %arg1[%c0_7, %c1, %c0_8, %c0_9] : memref<1x12x4x160xbf16, #tpu.memory_space<vmem>>, vector<1x1x4x160xbf16>
    %8 = vector.shape_cast %7 : vector<1x1x4x160xbf16> to vector<4x160xbf16>
    %c1_10 = arith.constant 1 : index
    %c0_11 = arith.constant 0 : index
    %c0_12 = arith.constant 0 : index
    %9 = vector.load %arg2[%c1_10, %c0_11, %c0_12] : memref<5x160x32xbf16, #tpu.memory_space<vmem>>, vector<1x160x32xbf16>
    %10 = vector.shape_cast %9 : vector<1x160x32xbf16> to vector<160x32xbf16>
    %cst_13 = arith.constant dense<0.000000e+00> : vector<4x32xf32>
    %11 = tpu.matmul %8, %10, %cst_13 {dimension_numbers = #tpu.dot_dimension_numbers<[1], [0], [0], [1], [0, 0, 1, 1], [], []>} : vector<4x160xbf16>, vector<160x32xbf16>, vector<4x32xf32> -> vector<4x32xf32>
    %12 = arith.addf %6, %11 : vector<4x32xf32>
    %c0_14 = arith.constant 0 : index
    %c2 = arith.constant 2 : index
    %c0_15 = arith.constant 0 : index
    %c0_16 = arith.constant 0 : index
    %13 = vector.load %arg1[%c0_14, %c2, %c0_15, %c0_16] : memref<1x12x4x160xbf16, #tpu.memory_space<vmem>>, vector<1x1x4x160xbf16>
    %14 = vector.shape_cast %13 : vector<1x1x4x160xbf16> to vector<4x160xbf16>
    %c2_17 = arith.constant 2 : index
    %c0_18 = arith.constant 0 : index
    %c0_19 = arith.constant 0 : index
    %15 = vector.load %arg2[%c2_17, %c0_18, %c0_19] : memref<5x160x32xbf16, #tpu.memory_space<vmem>>, vector<1x160x32xbf16>
    %16 = vector.shape_cast %15 : vector<1x160x32xbf16> to vector<160x32xbf16>
    %cst_20 = arith.constant dense<0.000000e+00> : vector<4x32xf32>
    %17 = tpu.matmul %14, %16, %cst_20 {dimension_numbers = #tpu.dot_dimension_numbers<[1], [0], [0], [1], [0, 0, 1, 1], [], []>} : vector<4x160xbf16>, vector<160x32xbf16>, vector<4x32xf32> -> vector<4x32xf32>
    %18 = arith.addf %12, %17 : vector<4x32xf32>
    %c0_21 = arith.constant 0 : index
    %c3 = arith.constant 3 : index
    %c0_22 = arith.constant 0 : index
    %c0_23 = arith.constant 0 : index
    %19 = vector.load %arg1[%c0_21, %c3, %c0_22, %c0_23] : memref<1x12x4x160xbf16, #tpu.memory_space<vmem>>, vector<1x1x4x160xbf16>
    %20 = vector.shape_cast %19 : vector<1x1x4x160xbf16> to vector<4x160xbf16>
    %c3_24 = arith.constant 3 : index
    %c0_25 = arith.constant 0 : index
    %c0_26 = arith.constant 0 : index
    %21 = vector.load %arg2[%c3_24, %c0_25, %c0_26] : memref<5x160x32xbf16, #tpu.memory_space<vmem>>, vector<1x160x32xbf16>
    %22 = vector.shape_cast %21 : vector<1x160x32xbf16> to vector<160x32xbf16>
    %cst_27 = arith.constant dense<0.000000e+00> : vector<4x32xf32>
    %23 = tpu.matmul %20, %22, %cst_27 {dimension_numbers = #tpu.dot_dimension_numbers<[1], [0], [0], [1], [0, 0, 1, 1], [], []>} : vector<4x160xbf16>, vector<160x32xbf16>, vector<4x32xf32> -> vector<4x32xf32>
    %24 = arith.addf %18, %23 : vector<4x32xf32>
    %c0_28 = arith.constant 0 : index
    %c4 = arith.constant 4 : index
    %c0_29 = arith.constant 0 : index
    %c0_30 = arith.constant 0 : index
    %25 = vector.load %arg1[%c0_28, %c4, %c0_29, %c0_30] : memref<1x12x4x160xbf16, #tpu.memory_space<vmem>>, vector<1x1x4x160xbf16>
    %26 = vector.shape_cast %25 : vector<1x1x4x160xbf16> to vector<4x160xbf16>
    %c4_31 = arith.constant 4 : index
    %c0_32 = arith.constant 0 : index
    %c0_33 = arith.constant 0 : index
    %27 = vector.load %arg2[%c4_31, %c0_32, %c0_33] : memref<5x160x32xbf16, #tpu.memory_space<vmem>>, vector<1x160x32xbf16>
    %28 = vector.shape_cast %27 : vector<1x160x32xbf16> to vector<160x32xbf16>
    %cst_34 = arith.constant dense<0.000000e+00> : vector<4x32xf32>
    %29 = tpu.matmul %26, %28, %cst_34 {dimension_numbers = #tpu.dot_dimension_numbers<[1], [0], [0], [1], [0, 0, 1, 1], [], []>} : vector<4x160xbf16>, vector<160x32xbf16>, vector<4x32xf32> -> vector<4x32xf32>
    %30 = arith.addf %24, %29 : vector<4x32xf32>
    %c0_35 = arith.constant 0 : index
    %c0_36 = arith.constant 0 : index
    %31 = vector.load %arg3[%c0_35, %c0_36] : memref<1x32xf32, #tpu.memory_space<vmem>>, vector<1x32xf32>
    %32 = vector.broadcast %31 : vector<1x32xf32> to vector<4x32xf32>
    %33 = arith.addf %30, %32 : vector<4x32xf32>
    %34 = arith.mulf %33, %33 : vector<4x32xf32>
    %c0_37 = arith.constant 0 : index
    %c0_38 = arith.constant 0 : index
    %35 = vector.load %arg4[%c0_37, %c0_38] : memref<32x32xf32, #tpu.memory_space<vmem>>, vector<32x32xf32>
    %cst_39 = arith.constant dense<0.000000e+00> : vector<4x32xf32>
    %36 = tpu.matmul %34, %35, %cst_39 {dimension_numbers = #tpu.dot_dimension_numbers<[1], [0], [0], [1], [0, 0, 1, 1], [], []>} : vector<4x32xf32>, vector<32x32xf32>, vector<4x32xf32> -> vector<4x32xf32>
    %c0_40 = arith.constant 0 : index
    %c0_41 = arith.constant 0 : index
    %37 = vector.load %arg5[%c0_40, %c0_41] : memref<1x32xf32, #tpu.memory_space<vmem>>, vector<1x32xf32>
    %38 = vector.broadcast %37 : vector<1x32xf32> to vector<4x32xf32>
    %39 = arith.addf %36, %38 : vector<4x32xf32>
    %40 = math.rsqrt %39 : vector<4x32xf32>
    %41 = arith.mulf %33, %40 : vector<4x32xf32>
    %42 = arith.truncf %41 : vector<4x32xf32> to vector<4x32xbf16>
    %c0_42 = arith.constant 0 : index
    %c0_43 = arith.constant 0 : index
    %c0_44 = arith.constant 0 : index
    %c0_45 = arith.constant 0 : index
    %43 = vector.load %arg6[%c0_42, %c0_43, %c0_44, %c0_45] : memref<1x4x4x32xbf16, #tpu.memory_space<vmem>>, vector<1x1x4x32xbf16>
    %44 = vector.shape_cast %43 : vector<1x1x4x32xbf16> to vector<4x32xbf16>
    %45 = vector.shape_cast %42 : vector<4x32xbf16> to vector<1x1x4x32xbf16>
    tpu.vector_store %arg6[%c0_42, %c0_43, %c0_44, %c0_45], %45 {strides = array<i32>} : memref<1x4x4x32xbf16, #tpu.memory_space<vmem>>, vector<1x1x4x32xbf16>,
    %cst_46 = arith.constant 0.000000e+00 : f32
    %46 = vector.broadcast %cst_46 : f32 to vector<4x32xf32>
    %c0_47 = arith.constant 0 : index
    %c2_48 = arith.constant 2 : index
    %c0_49 = arith.constant 0 : index
    %c0_50 = arith.constant 0 : index
    %47 = vector.load %arg1[%c0_47, %c2_48, %c0_49, %c0_50] : memref<1x12x4x160xbf16, #tpu.memory_space<vmem>>, vector<1x1x4x160xbf16>
    %48 = vector.shape_cast %47 : vector<1x1x4x160xbf16> to vector<4x160xbf16>
    %c0_51 = arith.constant 0 : index
    %c0_52 = arith.constant 0 : index
    %c0_53 = arith.constant 0 : index
    %49 = vector.load %arg2[%c0_51, %c0_52, %c0_53] : memref<5x160x32xbf16, #tpu.memory_space<vmem>>, vector<1x160x32xbf16>
    %50 = vector.shape_cast %49 : vector<1x160x32xbf16> to vector<160x32xbf16>
    %cst_54 = arith.constant dense<0.000000e+00> : vector<4x32xf32>
    %51 = tpu.matmul %48, %50, %cst_54 {dimension_numbers = #tpu.dot_dimension_numbers<[1], [0], [0], [1], [0, 0, 1, 1], [], []>} : vector<4x160xbf16>, vector<160x32xbf16>, vector<4x32xf32> -> vector<4x32xf32>
    %52 = arith.addf %46, %51 : vector<4x32xf32>
    %c0_55 = arith.constant 0 : index
    %c3_56 = arith.constant 3 : index
    %c0_57 = arith.constant 0 : index
    %c0_58 = arith.constant 0 : index
    %53 = vector.load %arg1[%c0_55, %c3_56, %c0_57, %c0_58] : memref<1x12x4x160xbf16, #tpu.memory_space<vmem>>, vector<1x1x4x160xbf16>
    %54 = vector.shape_cast %53 : vector<1x1x4x160xbf16> to vector<4x160xbf16>
    %c1_59 = arith.constant 1 : index
    %c0_60 = arith.constant 0 : index
    %c0_61 = arith.constant 0 : index
    %55 = vector.load %arg2[%c1_59, %c0_60, %c0_61] : memref<5x160x32xbf16, #tpu.memory_space<vmem>>, vector<1x160x32xbf16>
    %56 = vector.shape_cast %55 : vector<1x160x32xbf16> to vector<160x32xbf16>
    %cst_62 = arith.constant dense<0.000000e+00> : vector<4x32xf32>
    %57 = tpu.matmul %54, %56, %cst_62 {dimension_numbers = #tpu.dot_dimension_numbers<[1], [0], [0], [1], [0, 0, 1, 1], [], []>} : vector<4x160xbf16>, vector<160x32xbf16>, vector<4x32xf32> -> vector<4x32xf32>
    %58 = arith.addf %52, %57 : vector<4x32xf32>
    %c0_63 = arith.constant 0 : index
    %c4_64 = arith.constant 4 : index
    %c0_65 = arith.constant 0 : index
    %c0_66 = arith.constant 0 : index
    %59 = vector.load %arg1[%c0_63, %c4_64, %c0_65, %c0_66] : memref<1x12x4x160xbf16, #tpu.memory_space<vmem>>, vector<1x1x4x160xbf16>
    %60 = vector.shape_cast %59 : vector<1x1x4x160xbf16> to vector<4x160xbf16>
    %c2_67 = arith.constant 2 : index
    %c0_68 = arith.constant 0 : index
    %c0_69 = arith.constant 0 : index
    %61 = vector.load %arg2[%c2_67, %c0_68, %c0_69] : memref<5x160x32xbf16, #tpu.memory_space<vmem>>, vector<1x160x32xbf16>
    %62 = vector.shape_cast %61 : vector<1x160x32xbf16> to vector<160x32xbf16>
    %cst_70 = arith.constant dense<0.000000e+00> : vector<4x32xf32>
    %63 = tpu.matmul %60, %62, %cst_70 {dimension_numbers = #tpu.dot_dimension_numbers<[1], [0], [0], [1], [0, 0, 1, 1], [], []>} : vector<4x160xbf16>, vector<160x32xbf16>, vector<4x32xf32> -> vector<4x32xf32>
    %64 = arith.addf %58, %63 : vector<4x32xf32>
    %c0_71 = arith.constant 0 : index
    %c5 = arith.constant 5 : index
    %c0_72 = arith.constant 0 : index
    %c0_73 = arith.constant 0 : index
    %65 = vector.load %arg1[%c0_71, %c5, %c0_72, %c0_73] : memref<1x12x4x160xbf16, #tpu.memory_space<vmem>>, vector<1x1x4x160xbf16>
    %66 = vector.shape_cast %65 : vector<1x1x4x160xbf16> to vector<4x160xbf16>
    %c3_74 = arith.constant 3 : index
    %c0_75 = arith.constant 0 : index
    %c0_76 = arith.constant 0 : index
    %67 = vector.load %arg2[%c3_74, %c0_75, %c0_76] : memref<5x160x32xbf16, #tpu.memory_space<vmem>>, vector<1x160x32xbf16>
    %68 = vector.shape_cast %67 : vector<1x160x32xbf16> to vector<160x32xbf16>
    %cst_77 = arith.constant dense<0.000000e+00> : vector<4x32xf32>
    %69 = tpu.matmul %66, %68, %cst_77 {dimension_numbers = #tpu.dot_dimension_numbers<[1], [0], [0], [1], [0, 0, 1, 1], [], []>} : vector<4x160xbf16>, vector<160x32xbf16>, vector<4x32xf32> -> vector<4x32xf32>
    %70 = arith.addf %64, %69 : vector<4x32xf32>
    %c0_78 = arith.constant 0 : index
    %c6 = arith.constant 6 : index
    %c0_79 = arith.constant 0 : index
    %c0_80 = arith.constant 0 : index
    %71 = vector.load %arg1[%c0_78, %c6, %c0_79, %c0_80] : memref<1x12x4x160xbf16, #tpu.memory_space<vmem>>, vector<1x1x4x160xbf16>
    %72 = vector.shape_cast %71 : vector<1x1x4x160xbf16> to vector<4x160xbf16>
    %c4_81 = arith.constant 4 : index
    %c0_82 = arith.constant 0 : index
    %c0_83 = arith.constant 0 : index
    %73 = vector.load %arg2[%c4_81, %c0_82, %c0_83] : memref<5x160x32xbf16, #tpu.memory_space<vmem>>, vector<1x160x32xbf16>
    %74 = vector.shape_cast %73 : vector<1x160x32xbf16> to vector<160x32xbf16>
    %cst_84 = arith.constant dense<0.000000e+00> : vector<4x32xf32>
    %75 = tpu.matmul %72, %74, %cst_84 {dimension_numbers = #tpu.dot_dimension_numbers<[1], [0], [0], [1], [0, 0, 1, 1], [], []>} : vector<4x160xbf16>, vector<160x32xbf16>, vector<4x32xf32> -> vector<4x32xf32>
    %76 = arith.addf %70, %75 : vector<4x32xf32>
    %c0_85 = arith.constant 0 : index
    %c0_86 = arith.constant 0 : index
    %77 = vector.load %arg3[%c0_85, %c0_86] : memref<1x32xf32, #tpu.memory_space<vmem>>, vector<1x32xf32>
    %78 = vector.broadcast %77 : vector<1x32xf32> to vector<4x32xf32>
    %79 = arith.addf %76, %78 : vector<4x32xf32>
    %80 = arith.mulf %79, %79 : vector<4x32xf32>
    %c0_87 = arith.constant 0 : index
    %c0_88 = arith.constant 0 : index
    %81 = vector.load %arg4[%c0_87, %c0_88] : memref<32x32xf32, #tpu.memory_space<vmem>>, vector<32x32xf32>
    %cst_89 = arith.constant dense<0.000000e+00> : vector<4x32xf32>
    %82 = tpu.matmul %80, %81, %cst_89 {dimension_numbers = #tpu.dot_dimension_numbers<[1], [0], [0], [1], [0, 0, 1, 1], [], []>} : vector<4x32xf32>, vector<32x32xf32>, vector<4x32xf32> -> vector<4x32xf32>
    %c0_90 = arith.constant 0 : index
    %c0_91 = arith.constant 0 : index
    %83 = vector.load %arg5[%c0_90, %c0_91] : memref<1x32xf32, #tpu.memory_space<vmem>>, vector<1x32xf32>
    %84 = vector.broadcast %83 : vector<1x32xf32> to vector<4x32xf32>
    %85 = arith.addf %82, %84 : vector<4x32xf32>
    %86 = math.rsqrt %85 : vector<4x32xf32>
    %87 = arith.mulf %79, %86 : vector<4x32xf32>
    %88 = arith.truncf %87 : vector<4x32xf32> to vector<4x32xbf16>
    %c0_92 = arith.constant 0 : index
    %c1_93 = arith.constant 1 : index
    %c0_94 = arith.constant 0 : index
    %c0_95 = arith.constant 0 : index
    %89 = vector.load %arg6[%c0_92, %c1_93, %c0_94, %c0_95] : memref<1x4x4x32xbf16, #tpu.memory_space<vmem>>, vector<1x1x4x32xbf16>
    %90 = vector.shape_cast %89 : vector<1x1x4x32xbf16> to vector<4x32xbf16>
    %91 = vector.shape_cast %88 : vector<4x32xbf16> to vector<1x1x4x32xbf16>
    tpu.vector_store %arg6[%c0_92, %c1_93, %c0_94, %c0_95], %91 {strides = array<i32>} : memref<1x4x4x32xbf16, #tpu.memory_space<vmem>>, vector<1x1x4x32xbf16>,
    %cst_96 = arith.constant 0.000000e+00 : f32
    %92 = vector.broadcast %cst_96 : f32 to vector<4x32xf32>
    %c0_97 = arith.constant 0 : index
    %c4_98 = arith.constant 4 : index
    %c0_99 = arith.constant 0 : index
    %c0_100 = arith.constant 0 : index
    %93 = vector.load %arg1[%c0_97, %c4_98, %c0_99, %c0_100] : memref<1x12x4x160xbf16, #tpu.memory_space<vmem>>, vector<1x1x4x160xbf16>
    %94 = vector.shape_cast %93 : vector<1x1x4x160xbf16> to vector<4x160xbf16>
    %c0_101 = arith.constant 0 : index
    %c0_102 = arith.constant 0 : index
    %c0_103 = arith.constant 0 : index
    %95 = vector.load %arg2[%c0_101, %c0_102, %c0_103] : memref<5x160x32xbf16, #tpu.memory_space<vmem>>, vector<1x160x32xbf16>
    %96 = vector.shape_cast %95 : vector<1x160x32xbf16> to vector<160x32xbf16>
    %cst_104 = arith.constant dense<0.000000e+00> : vector<4x32xf32>
    %97 = tpu.matmul %94, %96, %cst_104 {dimension_numbers = #tpu.dot_dimension_numbers<[1], [0], [0], [1], [0, 0, 1, 1], [], []>} : vector<4x160xbf16>, vector<160x32xbf16>, vector<4x32xf32> -> vector<4x32xf32>
    %98 = arith.addf %92, %97 : vector<4x32xf32>
    %c0_105 = arith.constant 0 : index
    %c5_106 = arith.constant 5 : index
    %c0_107 = arith.constant 0 : index
    %c0_108 = arith.constant 0 : index
    %99 = vector.load %arg1[%c0_105, %c5_106, %c0_107, %c0_108] : memref<1x12x4x160xbf16, #tpu.memory_space<vmem>>, vector<1x1x4x160xbf16>
    %100 = vector.shape_cast %99 : vector<1x1x4x160xbf16> to vector<4x160xbf16>
    %c1_109 = arith.constant 1 : index
    %c0_110 = arith.constant 0 : index
    %c0_111 = arith.constant 0 : index
    %101 = vector.load %arg2[%c1_109, %c0_110, %c0_111] : memref<5x160x32xbf16, #tpu.memory_space<vmem>>, vector<1x160x32xbf16>
    %102 = vector.shape_cast %101 : vector<1x160x32xbf16> to vector<160x32xbf16>
    %cst_112 = arith.constant dense<0.000000e+00> : vector<4x32xf32>
    %103 = tpu.matmul %100, %102, %cst_112 {dimension_numbers = #tpu.dot_dimension_numbers<[1], [0], [0], [1], [0, 0, 1, 1], [], []>} : vector<4x160xbf16>, vector<160x32xbf16>, vector<4x32xf32> -> vector<4x32xf32>
    %104 = arith.addf %98, %103 : vector<4x32xf32>
    %c0_113 = arith.constant 0 : index
    %c6_114 = arith.constant 6 : index
    %c0_115 = arith.constant 0 : index
    %c0_116 = arith.constant 0 : index
    %105 = vector.load %arg1[%c0_113, %c6_114, %c0_115, %c0_116] : memref<1x12x4x160xbf16, #tpu.memory_space<vmem>>, vector<1x1x4x160xbf16>
    %106 = vector.shape_cast %105 : vector<1x1x4x160xbf16> to vector<4x160xbf16>
    %c2_117 = arith.constant 2 : index
    %c0_118 = arith.constant 0 : index
    %c0_119 = arith.constant 0 : index
    %107 = vector.load %arg2[%c2_117, %c0_118, %c0_119] : memref<5x160x32xbf16, #tpu.memory_space<vmem>>, vector<1x160x32xbf16>
    %108 = vector.shape_cast %107 : vector<1x160x32xbf16> to vector<160x32xbf16>
    %cst_120 = arith.constant dense<0.000000e+00> : vector<4x32xf32>
    %109 = tpu.matmul %106, %108, %cst_120 {dimension_numbers = #tpu.dot_dimension_numbers<[1], [0], [0], [1], [0, 0, 1, 1], [], []>} : vector<4x160xbf16>, vector<160x32xbf16>, vector<4x32xf32> -> vector<4x32xf32>
    %110 = arith.addf %104, %109 : vector<4x32xf32>
    %c0_121 = arith.constant 0 : index
    %c7 = arith.constant 7 : index
    %c0_122 = arith.constant 0 : index
    %c0_123 = arith.constant 0 : index
    %111 = vector.load %arg1[%c0_121, %c7, %c0_122, %c0_123] : memref<1x12x4x160xbf16, #tpu.memory_space<vmem>>, vector<1x1x4x160xbf16>
    %112 = vector.shape_cast %111 : vector<1x1x4x160xbf16> to vector<4x160xbf16>
    %c3_124 = arith.constant 3 : index
    %c0_125 = arith.constant 0 : index
    %c0_126 = arith.constant 0 : index
    %113 = vector.load %arg2[%c3_124, %c0_125, %c0_126] : memref<5x160x32xbf16, #tpu.memory_space<vmem>>, vector<1x160x32xbf16>
    %114 = vector.shape_cast %113 : vector<1x160x32xbf16> to vector<160x32xbf16>
    %cst_127 = arith.constant dense<0.000000e+00> : vector<4x32xf32>
    %115 = tpu.matmul %112, %114, %cst_127 {dimension_numbers = #tpu.dot_dimension_numbers<[1], [0], [0], [1], [0, 0, 1, 1], [], []>} : vector<4x160xbf16>, vector<160x32xbf16>, vector<4x32xf32> -> vector<4x32xf32>
    %116 = arith.addf %110, %115 : vector<4x32xf32>
    %c0_128 = arith.constant 0 : index
    %c8 = arith.constant 8 : index
    %c0_129 = arith.constant 0 : index
    %c0_130 = arith.constant 0 : index
    %117 = vector.load %arg1[%c0_128, %c8, %c0_129, %c0_130] : memref<1x12x4x160xbf16, #tpu.memory_space<vmem>>, vector<1x1x4x160xbf16>
    %118 = vector.shape_cast %117 : vector<1x1x4x160xbf16> to vector<4x160xbf16>
    %c4_131 = arith.constant 4 : index
    %c0_132 = arith.constant 0 : index
    %c0_133 = arith.constant 0 : index
    %119 = vector.load %arg2[%c4_131, %c0_132, %c0_133] : memref<5x160x32xbf16, #tpu.memory_space<vmem>>, vector<1x160x32xbf16>
    %120 = vector.shape_cast %119 : vector<1x160x32xbf16> to vector<160x32xbf16>
    %cst_134 = arith.constant dense<0.000000e+00> : vector<4x32xf32>
    %121 = tpu.matmul %118, %120, %cst_134 {dimension_numbers = #tpu.dot_dimension_numbers<[1], [0], [0], [1], [0, 0, 1, 1], [], []>} : vector<4x160xbf16>, vector<160x32xbf16>, vector<4x32xf32> -> vector<4x32xf32>
    %122 = arith.addf %116, %121 : vector<4x32xf32>
    %c0_135 = arith.constant 0 : index
    %c0_136 = arith.constant 0 : index
    %123 = vector.load %arg3[%c0_135, %c0_136] : memref<1x32xf32, #tpu.memory_space<vmem>>, vector<1x32xf32>
    %124 = vector.broadcast %123 : vector<1x32xf32> to vector<4x32xf32>
    %125 = arith.addf %122, %124 : vector<4x32xf32>
    %126 = arith.mulf %125, %125 : vector<4x32xf32>
    %c0_137 = arith.constant 0 : index
    %c0_138 = arith.constant 0 : index
    %127 = vector.load %arg4[%c0_137, %c0_138] : memref<32x32xf32, #tpu.memory_space<vmem>>, vector<32x32xf32>
    %cst_139 = arith.constant dense<0.000000e+00> : vector<4x32xf32>
    %128 = tpu.matmul %126, %127, %cst_139 {dimension_numbers = #tpu.dot_dimension_numbers<[1], [0], [0], [1], [0, 0, 1, 1], [], []>} : vector<4x32xf32>, vector<32x32xf32>, vector<4x32xf32> -> vector<4x32xf32>
    %c0_140 = arith.constant 0 : index
    %c0_141 = arith.constant 0 : index
    %129 = vector.load %arg5[%c0_140, %c0_141] : memref<1x32xf32, #tpu.memory_space<vmem>>, vector<1x32xf32>
    %130 = vector.broadcast %129 : vector<1x32xf32> to vector<4x32xf32>
    %131 = arith.addf %128, %130 : vector<4x32xf32>
    %132 = math.rsqrt %131 : vector<4x32xf32>
    %133 = arith.mulf %125, %132 : vector<4x32xf32>
    %134 = arith.truncf %133 : vector<4x32xf32> to vector<4x32xbf16>
    %c0_142 = arith.constant 0 : index
    %c2_143 = arith.constant 2 : index
    %c0_144 = arith.constant 0 : index
    %c0_145 = arith.constant 0 : index
    %135 = vector.load %arg6[%c0_142, %c2_143, %c0_144, %c0_145] : memref<1x4x4x32xbf16, #tpu.memory_space<vmem>>, vector<1x1x4x32xbf16>
    %136 = vector.shape_cast %135 : vector<1x1x4x32xbf16> to vector<4x32xbf16>
    %137 = vector.shape_cast %134 : vector<4x32xbf16> to vector<1x1x4x32xbf16>
    tpu.vector_store %arg6[%c0_142, %c2_143, %c0_144, %c0_145], %137 {strides = array<i32>} : memref<1x4x4x32xbf16, #tpu.memory_space<vmem>>, vector<1x1x4x32xbf16>,
    %cst_146 = arith.constant 0.000000e+00 : f32
    %138 = vector.broadcast %cst_146 : f32 to vector<4x32xf32>
    %c0_147 = arith.constant 0 : index
    %c6_148 = arith.constant 6 : index
    %c0_149 = arith.constant 0 : index
    %c0_150 = arith.constant 0 : index
    %139 = vector.load %arg1[%c0_147, %c6_148, %c0_149, %c0_150] : memref<1x12x4x160xbf16, #tpu.memory_space<vmem>>, vector<1x1x4x160xbf16>
    %140 = vector.shape_cast %139 : vector<1x1x4x160xbf16> to vector<4x160xbf16>
    %c0_151 = arith.constant 0 : index
    %c0_152 = arith.constant 0 : index
    %c0_153 = arith.constant 0 : index
    %141 = vector.load %arg2[%c0_151, %c0_152, %c0_153] : memref<5x160x32xbf16, #tpu.memory_space<vmem>>, vector<1x160x32xbf16>
    %142 = vector.shape_cast %141 : vector<1x160x32xbf16> to vector<160x32xbf16>
    %cst_154 = arith.constant dense<0.000000e+00> : vector<4x32xf32>
    %143 = tpu.matmul %140, %142, %cst_154 {dimension_numbers = #tpu.dot_dimension_numbers<[1], [0], [0], [1], [0, 0, 1, 1], [], []>} : vector<4x160xbf16>, vector<160x32xbf16>, vector<4x32xf32> -> vector<4x32xf32>
    %144 = arith.addf %138, %143 : vector<4x32xf32>
    %c0_155 = arith.constant 0 : index
    %c7_156 = arith.constant 7 : index
    %c0_157 = arith.constant 0 : index
    %c0_158 = arith.constant 0 : index
    %145 = vector.load %arg1[%c0_155, %c7_156, %c0_157, %c0_158] : memref<1x12x4x160xbf16, #tpu.memory_space<vmem>>, vector<1x1x4x160xbf16>
    %146 = vector.shape_cast %145 : vector<1x1x4x160xbf16> to vector<4x160xbf16>
    %c1_159 = arith.constant 1 : index
    %c0_160 = arith.constant 0 : index
    %c0_161 = arith.constant 0 : index
    %147 = vector.load %arg2[%c1_159, %c0_160, %c0_161] : memref<5x160x32xbf16, #tpu.memory_space<vmem>>, vector<1x160x32xbf16>
    %148 = vector.shape_cast %147 : vector<1x160x32xbf16> to vector<160x32xbf16>
    %cst_162 = arith.constant dense<0.000000e+00> : vector<4x32xf32>
    %149 = tpu.matmul %146, %148, %cst_162 {dimension_numbers = #tpu.dot_dimension_numbers<[1], [0], [0], [1], [0, 0, 1, 1], [], []>} : vector<4x160xbf16>, vector<160x32xbf16>, vector<4x32xf32> -> vector<4x32xf32>
    %150 = arith.addf %144, %149 : vector<4x32xf32>
    %c0_163 = arith.constant 0 : index
    %c8_164 = arith.constant 8 : index
    %c0_165 = arith.constant 0 : index
    %c0_166 = arith.constant 0 : index
    %151 = vector.load %arg1[%c0_163, %c8_164, %c0_165, %c0_166] : memref<1x12x4x160xbf16, #tpu.memory_space<vmem>>, vector<1x1x4x160xbf16>
    %152 = vector.shape_cast %151 : vector<1x1x4x160xbf16> to vector<4x160xbf16>
    %c2_167 = arith.constant 2 : index
    %c0_168 = arith.constant 0 : index
    %c0_169 = arith.constant 0 : index
    %153 = vector.load %arg2[%c2_167, %c0_168, %c0_169] : memref<5x160x32xbf16, #tpu.memory_space<vmem>>, vector<1x160x32xbf16>
    %154 = vector.shape_cast %153 : vector<1x160x32xbf16> to vector<160x32xbf16>
    %cst_170 = arith.constant dense<0.000000e+00> : vector<4x32xf32>
    %155 = tpu.matmul %152, %154, %cst_170 {dimension_numbers = #tpu.dot_dimension_numbers<[1], [0], [0], [1], [0, 0, 1, 1], [], []>} : vector<4x160xbf16>, vector<160x32xbf16>, vector<4x32xf32> -> vector<4x32xf32>
    %156 = arith.addf %150, %155 : vector<4x32xf32>
    %c0_171 = arith.constant 0 : index
    %c9 = arith.constant 9 : index
    %c0_172 = arith.constant 0 : index
    %c0_173 = arith.constant 0 : index
    %157 = vector.load %arg1[%c0_171, %c9, %c0_172, %c0_173] : memref<1x12x4x160xbf16, #tpu.memory_space<vmem>>, vector<1x1x4x160xbf16>
    %158 = vector.shape_cast %157 : vector<1x1x4x160xbf16> to vector<4x160xbf16>
    %c3_174 = arith.constant 3 : index
    %c0_175 = arith.constant 0 : index
    %c0_176 = arith.constant 0 : index
    %159 = vector.load %arg2[%c3_174, %c0_175, %c0_176] : memref<5x160x32xbf16, #tpu.memory_space<vmem>>, vector<1x160x32xbf16>
    %160 = vector.shape_cast %159 : vector<1x160x32xbf16> to vector<160x32xbf16>
    %cst_177 = arith.constant dense<0.000000e+00> : vector<4x32xf32>
    %161 = tpu.matmul %158, %160, %cst_177 {dimension_numbers = #tpu.dot_dimension_numbers<[1], [0], [0], [1], [0, 0, 1, 1], [], []>} : vector<4x160xbf16>, vector<160x32xbf16>, vector<4x32xf32> -> vector<4x32xf32>
    %162 = arith.addf %156, %161 : vector<4x32xf32>
    %c0_178 = arith.constant 0 : index
    %c10 = arith.constant 10 : index
    %c0_179 = arith.constant 0 : index
    %c0_180 = arith.constant 0 : index
    %163 = vector.load %arg1[%c0_178, %c10, %c0_179, %c0_180] : memref<1x12x4x160xbf16, #tpu.memory_space<vmem>>, vector<1x1x4x160xbf16>
    %164 = vector.shape_cast %163 : vector<1x1x4x160xbf16> to vector<4x160xbf16>
    %c4_181 = arith.constant 4 : index
    %c0_182 = arith.constant 0 : index
    %c0_183 = arith.constant 0 : index
    %165 = vector.load %arg2[%c4_181, %c0_182, %c0_183] : memref<5x160x32xbf16, #tpu.memory_space<vmem>>, vector<1x160x32xbf16>
    %166 = vector.shape_cast %165 : vector<1x160x32xbf16> to vector<160x32xbf16>
    %cst_184 = arith.constant dense<0.000000e+00> : vector<4x32xf32>
    %167 = tpu.matmul %164, %166, %cst_184 {dimension_numbers = #tpu.dot_dimension_numbers<[1], [0], [0], [1], [0, 0, 1, 1], [], []>} : vector<4x160xbf16>, vector<160x32xbf16>, vector<4x32xf32> -> vector<4x32xf32>
    %168 = arith.addf %162, %167 : vector<4x32xf32>
    %c0_185 = arith.constant 0 : index
    %c0_186 = arith.constant 0 : index
    %169 = vector.load %arg3[%c0_185, %c0_186] : memref<1x32xf32, #tpu.memory_space<vmem>>, vector<1x32xf32>
    %170 = vector.broadcast %169 : vector<1x32xf32> to vector<4x32xf32>
    %171 = arith.addf %168, %170 : vector<4x32xf32>
    %172 = arith.mulf %171, %171 : vector<4x32xf32>
    %c0_187 = arith.constant 0 : index
    %c0_188 = arith.constant 0 : index
    %173 = vector.load %arg4[%c0_187, %c0_188] : memref<32x32xf32, #tpu.memory_space<vmem>>, vector<32x32xf32>
    %cst_189 = arith.constant dense<0.000000e+00> : vector<4x32xf32>
    %174 = tpu.matmul %172, %173, %cst_189 {dimension_numbers = #tpu.dot_dimension_numbers<[1], [0], [0], [1], [0, 0, 1, 1], [], []>} : vector<4x32xf32>, vector<32x32xf32>, vector<4x32xf32> -> vector<4x32xf32>
    %c0_190 = arith.constant 0 : index
    %c0_191 = arith.constant 0 : index
    %175 = vector.load %arg5[%c0_190, %c0_191] : memref<1x32xf32, #tpu.memory_space<vmem>>, vector<1x32xf32>
    %176 = vector.broadcast %175 : vector<1x32xf32> to vector<4x32xf32>
    %177 = arith.addf %174, %176 : vector<4x32xf32>
    %178 = math.rsqrt %177 : vector<4x32xf32>
    %179 = arith.mulf %171, %178 : vector<4x32xf32>
    %180 = arith.truncf %179 : vector<4x32xf32> to vector<4x32xbf16>
    %c0_192 = arith.constant 0 : index
    %c3_193 = arith.constant 3 : index
    %c0_194 = arith.constant 0 : index
    %c0_195 = arith.constant 0 : index
    %181 = vector.load %arg6[%c0_192, %c3_193, %c0_194, %c0_195] : memref<1x4x4x32xbf16, #tpu.memory_space<vmem>>, vector<1x1x4x32xbf16>
    %182 = vector.shape_cast %181 : vector<1x1x4x32xbf16> to vector<4x32xbf16>
    %183 = vector.shape_cast %180 : vector<4x32xbf16> to vector<1x1x4x32xbf16>
    tpu.vector_store %arg6[%c0_192, %c3_193, %c0_194, %c0_195], %183 {strides = array<i32>} : memref<1x4x4x32xbf16, #tpu.memory_space<vmem>>, vector<1x1x4x32xbf16>,
    return
  }
  func.func @transform_0(%arg0: i32) -> (i32, i32, i32, i32) {
    %c0_i32 = arith.constant 0 : i32
    %c0_i32_0 = arith.constant 0 : i32
    %c0_i32_1 = arith.constant 0 : i32
    %c0_i32_2 = arith.constant 0 : i32
    return %arg0, %c0_i32, %c0_i32_0, %c0_i32_1 : i32, i32, i32, i32
  }
  func.func @transform_1(%arg0: i32) -> (i32, i32, i32) {
    %c0_i32 = arith.constant 0 : i32
    %c0_i32_0 = arith.constant 0 : i32
    %c0_i32_1 = arith.constant 0 : i32
    %c0_i32_2 = arith.constant 0 : i32
    return %c0_i32, %c0_i32_0, %c0_i32_1 : i32, i32, i32
  }
  func.func @transform_2(%arg0: i32) -> (i32, i32) {
    %c0_i32 = arith.constant 0 : i32
    %c0_i32_0 = arith.constant 0 : i32
    %c0_i32_1 = arith.constant 0 : i32
    return %c0_i32, %c0_i32_0 : i32, i32
  }
  func.func @transform_3(%arg0: i32) -> (i32, i32) {
    %c0_i32 = arith.constant 0 : i32
    %c0_i32_0 = arith.constant 0 : i32
    %c0_i32_1 = arith.constant 0 : i32
    return %c0_i32, %c0_i32_0 : i32, i32
  }
  func.func @transform_4(%arg0: i32) -> (i32, i32) {
    %c0_i32 = arith.constant 0 : i32
    %c0_i32_0 = arith.constant 0 : i32
    %c0_i32_1 = arith.constant 0 : i32
    return %c0_i32, %c0_i32_0 : i32, i32
  }
  func.func @transform_5(%arg0: i32) -> (i32, i32, i32, i32) {
    %c0_i32 = arith.constant 0 : i32
    %c0_i32_0 = arith.constant 0 : i32
    %c0_i32_1 = arith.constant 0 : i32
    %c0_i32_2 = arith.constant 0 : i32
    return %arg0, %c0_i32, %c0_i32_0, %c0_i32_1 : i32, i32, i32, i32
  }
}

module attributes {stable_mosaic.version = 11 : i64} {
  func.func @kernel(%arg0: i32, %arg1: memref<1x8x2x160xbf16, #tpu.memory_space<vmem>>, %arg2: memref<5x160x32xbf16, #tpu.memory_space<vmem>>, %arg3: memref<1x32xf32, #tpu.memory_space<vmem>>, %arg4: memref<32x32xf32, #tpu.memory_space<vmem>>, %arg5: memref<1x32xf32, #tpu.memory_space<vmem>>, %arg6: memref<1x2x2x32xbf16, #tpu.memory_space<vmem>>) attributes {dimension_semantics = [#tpu.dimension_semantics<parallel>], iteration_bounds = array<i64: 2>, scalar_prefetch = 0 : i64, scratch_operands = 0 : i64, tpu.core_type = #tpu.core_type<tc>, window_params = [{transform_indices = @transform_0, window_bounds = array<i64: 1, 8, 2, 160>}, {pipeline_mode = #tpu.pipeline_mode<synchronous>, transform_indices = @transform_1, window_bounds = array<i64: 5, 160, 32>}, {pipeline_mode = #tpu.pipeline_mode<synchronous>, transform_indices = @transform_2, window_bounds = array<i64: 1, 32>}, {pipeline_mode = #tpu.pipeline_mode<synchronous>, transform_indices = @transform_3, window_bounds = array<i64: 32, 32>}, {pipeline_mode = #tpu.pipeline_mode<synchronous>, transform_indices = @transform_4, window_bounds = array<i64: 1, 32>}, {transform_indices = @transform_5, window_bounds = array<i64: 1, 2, 2, 32>}]} {
    %cst = arith.constant 0.000000e+00 : f32
    %0 = vector.broadcast %cst : f32 to vector<2x32xf32>
    %c0 = arith.constant 0 : index
    %c0_0 = arith.constant 0 : index
    %c0_1 = arith.constant 0 : index
    %c0_2 = arith.constant 0 : index
    %1 = vector.load %arg1[%c0, %c0_0, %c0_1, %c0_2] : memref<1x8x2x160xbf16, #tpu.memory_space<vmem>>, vector<1x1x2x160xbf16>
    %2 = vector.shape_cast %1 : vector<1x1x2x160xbf16> to vector<2x160xbf16>
    %c0_3 = arith.constant 0 : index
    %c0_4 = arith.constant 0 : index
    %c0_5 = arith.constant 0 : index
    %3 = vector.load %arg2[%c0_3, %c0_4, %c0_5] : memref<5x160x32xbf16, #tpu.memory_space<vmem>>, vector<1x160x32xbf16>
    %4 = vector.shape_cast %3 : vector<1x160x32xbf16> to vector<160x32xbf16>
    %cst_6 = arith.constant dense<0.000000e+00> : vector<2x32xf32>
    %5 = tpu.matmul %2, %4, %cst_6 {dimension_numbers = #tpu.dot_dimension_numbers<[1], [0], [0], [1], [0, 0, 1, 1], [], []>} : vector<2x160xbf16>, vector<160x32xbf16>, vector<2x32xf32> -> vector<2x32xf32>
    %6 = arith.addf %0, %5 : vector<2x32xf32>
    %c0_7 = arith.constant 0 : index
    %c1 = arith.constant 1 : index
    %c0_8 = arith.constant 0 : index
    %c0_9 = arith.constant 0 : index
    %7 = vector.load %arg1[%c0_7, %c1, %c0_8, %c0_9] : memref<1x8x2x160xbf16, #tpu.memory_space<vmem>>, vector<1x1x2x160xbf16>
    %8 = vector.shape_cast %7 : vector<1x1x2x160xbf16> to vector<2x160xbf16>
    %c1_10 = arith.constant 1 : index
    %c0_11 = arith.constant 0 : index
    %c0_12 = arith.constant 0 : index
    %9 = vector.load %arg2[%c1_10, %c0_11, %c0_12] : memref<5x160x32xbf16, #tpu.memory_space<vmem>>, vector<1x160x32xbf16>
    %10 = vector.shape_cast %9 : vector<1x160x32xbf16> to vector<160x32xbf16>
    %cst_13 = arith.constant dense<0.000000e+00> : vector<2x32xf32>
    %11 = tpu.matmul %8, %10, %cst_13 {dimension_numbers = #tpu.dot_dimension_numbers<[1], [0], [0], [1], [0, 0, 1, 1], [], []>} : vector<2x160xbf16>, vector<160x32xbf16>, vector<2x32xf32> -> vector<2x32xf32>
    %12 = arith.addf %6, %11 : vector<2x32xf32>
    %c0_14 = arith.constant 0 : index
    %c2 = arith.constant 2 : index
    %c0_15 = arith.constant 0 : index
    %c0_16 = arith.constant 0 : index
    %13 = vector.load %arg1[%c0_14, %c2, %c0_15, %c0_16] : memref<1x8x2x160xbf16, #tpu.memory_space<vmem>>, vector<1x1x2x160xbf16>
    %14 = vector.shape_cast %13 : vector<1x1x2x160xbf16> to vector<2x160xbf16>
    %c2_17 = arith.constant 2 : index
    %c0_18 = arith.constant 0 : index
    %c0_19 = arith.constant 0 : index
    %15 = vector.load %arg2[%c2_17, %c0_18, %c0_19] : memref<5x160x32xbf16, #tpu.memory_space<vmem>>, vector<1x160x32xbf16>
    %16 = vector.shape_cast %15 : vector<1x160x32xbf16> to vector<160x32xbf16>
    %cst_20 = arith.constant dense<0.000000e+00> : vector<2x32xf32>
    %17 = tpu.matmul %14, %16, %cst_20 {dimension_numbers = #tpu.dot_dimension_numbers<[1], [0], [0], [1], [0, 0, 1, 1], [], []>} : vector<2x160xbf16>, vector<160x32xbf16>, vector<2x32xf32> -> vector<2x32xf32>
    %18 = arith.addf %12, %17 : vector<2x32xf32>
    %c0_21 = arith.constant 0 : index
    %c3 = arith.constant 3 : index
    %c0_22 = arith.constant 0 : index
    %c0_23 = arith.constant 0 : index
    %19 = vector.load %arg1[%c0_21, %c3, %c0_22, %c0_23] : memref<1x8x2x160xbf16, #tpu.memory_space<vmem>>, vector<1x1x2x160xbf16>
    %20 = vector.shape_cast %19 : vector<1x1x2x160xbf16> to vector<2x160xbf16>
    %c3_24 = arith.constant 3 : index
    %c0_25 = arith.constant 0 : index
    %c0_26 = arith.constant 0 : index
    %21 = vector.load %arg2[%c3_24, %c0_25, %c0_26] : memref<5x160x32xbf16, #tpu.memory_space<vmem>>, vector<1x160x32xbf16>
    %22 = vector.shape_cast %21 : vector<1x160x32xbf16> to vector<160x32xbf16>
    %cst_27 = arith.constant dense<0.000000e+00> : vector<2x32xf32>
    %23 = tpu.matmul %20, %22, %cst_27 {dimension_numbers = #tpu.dot_dimension_numbers<[1], [0], [0], [1], [0, 0, 1, 1], [], []>} : vector<2x160xbf16>, vector<160x32xbf16>, vector<2x32xf32> -> vector<2x32xf32>
    %24 = arith.addf %18, %23 : vector<2x32xf32>
    %c0_28 = arith.constant 0 : index
    %c4 = arith.constant 4 : index
    %c0_29 = arith.constant 0 : index
    %c0_30 = arith.constant 0 : index
    %25 = vector.load %arg1[%c0_28, %c4, %c0_29, %c0_30] : memref<1x8x2x160xbf16, #tpu.memory_space<vmem>>, vector<1x1x2x160xbf16>
    %26 = vector.shape_cast %25 : vector<1x1x2x160xbf16> to vector<2x160xbf16>
    %c4_31 = arith.constant 4 : index
    %c0_32 = arith.constant 0 : index
    %c0_33 = arith.constant 0 : index
    %27 = vector.load %arg2[%c4_31, %c0_32, %c0_33] : memref<5x160x32xbf16, #tpu.memory_space<vmem>>, vector<1x160x32xbf16>
    %28 = vector.shape_cast %27 : vector<1x160x32xbf16> to vector<160x32xbf16>
    %cst_34 = arith.constant dense<0.000000e+00> : vector<2x32xf32>
    %29 = tpu.matmul %26, %28, %cst_34 {dimension_numbers = #tpu.dot_dimension_numbers<[1], [0], [0], [1], [0, 0, 1, 1], [], []>} : vector<2x160xbf16>, vector<160x32xbf16>, vector<2x32xf32> -> vector<2x32xf32>
    %30 = arith.addf %24, %29 : vector<2x32xf32>
    %c0_35 = arith.constant 0 : index
    %c0_36 = arith.constant 0 : index
    %31 = vector.load %arg3[%c0_35, %c0_36] : memref<1x32xf32, #tpu.memory_space<vmem>>, vector<1x32xf32>
    %32 = vector.broadcast %31 : vector<1x32xf32> to vector<2x32xf32>
    %33 = arith.addf %30, %32 : vector<2x32xf32>
    %34 = arith.mulf %33, %33 : vector<2x32xf32>
    %c0_37 = arith.constant 0 : index
    %c0_38 = arith.constant 0 : index
    %35 = vector.load %arg4[%c0_37, %c0_38] : memref<32x32xf32, #tpu.memory_space<vmem>>, vector<32x32xf32>
    %cst_39 = arith.constant dense<0.000000e+00> : vector<2x32xf32>
    %36 = tpu.matmul %34, %35, %cst_39 {dimension_numbers = #tpu.dot_dimension_numbers<[1], [0], [0], [1], [0, 0, 1, 1], [], []>} : vector<2x32xf32>, vector<32x32xf32>, vector<2x32xf32> -> vector<2x32xf32>
    %c0_40 = arith.constant 0 : index
    %c0_41 = arith.constant 0 : index
    %37 = vector.load %arg5[%c0_40, %c0_41] : memref<1x32xf32, #tpu.memory_space<vmem>>, vector<1x32xf32>
    %38 = vector.broadcast %37 : vector<1x32xf32> to vector<2x32xf32>
    %39 = arith.addf %36, %38 : vector<2x32xf32>
    %40 = math.rsqrt %39 : vector<2x32xf32>
    %41 = arith.mulf %33, %40 : vector<2x32xf32>
    %42 = arith.truncf %41 : vector<2x32xf32> to vector<2x32xbf16>
    %c0_42 = arith.constant 0 : index
    %c0_43 = arith.constant 0 : index
    %c0_44 = arith.constant 0 : index
    %c0_45 = arith.constant 0 : index
    %43 = vector.load %arg6[%c0_42, %c0_43, %c0_44, %c0_45] : memref<1x2x2x32xbf16, #tpu.memory_space<vmem>>, vector<1x1x2x32xbf16>
    %44 = vector.shape_cast %43 : vector<1x1x2x32xbf16> to vector<2x32xbf16>
    %45 = vector.shape_cast %42 : vector<2x32xbf16> to vector<1x1x2x32xbf16>
    tpu.vector_store %arg6[%c0_42, %c0_43, %c0_44, %c0_45], %45 {strides = array<i32>} : memref<1x2x2x32xbf16, #tpu.memory_space<vmem>>, vector<1x1x2x32xbf16>,
    %cst_46 = arith.constant 0.000000e+00 : f32
    %46 = vector.broadcast %cst_46 : f32 to vector<2x32xf32>
    %c0_47 = arith.constant 0 : index
    %c2_48 = arith.constant 2 : index
    %c0_49 = arith.constant 0 : index
    %c0_50 = arith.constant 0 : index
    %47 = vector.load %arg1[%c0_47, %c2_48, %c0_49, %c0_50] : memref<1x8x2x160xbf16, #tpu.memory_space<vmem>>, vector<1x1x2x160xbf16>
    %48 = vector.shape_cast %47 : vector<1x1x2x160xbf16> to vector<2x160xbf16>
    %c0_51 = arith.constant 0 : index
    %c0_52 = arith.constant 0 : index
    %c0_53 = arith.constant 0 : index
    %49 = vector.load %arg2[%c0_51, %c0_52, %c0_53] : memref<5x160x32xbf16, #tpu.memory_space<vmem>>, vector<1x160x32xbf16>
    %50 = vector.shape_cast %49 : vector<1x160x32xbf16> to vector<160x32xbf16>
    %cst_54 = arith.constant dense<0.000000e+00> : vector<2x32xf32>
    %51 = tpu.matmul %48, %50, %cst_54 {dimension_numbers = #tpu.dot_dimension_numbers<[1], [0], [0], [1], [0, 0, 1, 1], [], []>} : vector<2x160xbf16>, vector<160x32xbf16>, vector<2x32xf32> -> vector<2x32xf32>
    %52 = arith.addf %46, %51 : vector<2x32xf32>
    %c0_55 = arith.constant 0 : index
    %c3_56 = arith.constant 3 : index
    %c0_57 = arith.constant 0 : index
    %c0_58 = arith.constant 0 : index
    %53 = vector.load %arg1[%c0_55, %c3_56, %c0_57, %c0_58] : memref<1x8x2x160xbf16, #tpu.memory_space<vmem>>, vector<1x1x2x160xbf16>
    %54 = vector.shape_cast %53 : vector<1x1x2x160xbf16> to vector<2x160xbf16>
    %c1_59 = arith.constant 1 : index
    %c0_60 = arith.constant 0 : index
    %c0_61 = arith.constant 0 : index
    %55 = vector.load %arg2[%c1_59, %c0_60, %c0_61] : memref<5x160x32xbf16, #tpu.memory_space<vmem>>, vector<1x160x32xbf16>
    %56 = vector.shape_cast %55 : vector<1x160x32xbf16> to vector<160x32xbf16>
    %cst_62 = arith.constant dense<0.000000e+00> : vector<2x32xf32>
    %57 = tpu.matmul %54, %56, %cst_62 {dimension_numbers = #tpu.dot_dimension_numbers<[1], [0], [0], [1], [0, 0, 1, 1], [], []>} : vector<2x160xbf16>, vector<160x32xbf16>, vector<2x32xf32> -> vector<2x32xf32>
    %58 = arith.addf %52, %57 : vector<2x32xf32>
    %c0_63 = arith.constant 0 : index
    %c4_64 = arith.constant 4 : index
    %c0_65 = arith.constant 0 : index
    %c0_66 = arith.constant 0 : index
    %59 = vector.load %arg1[%c0_63, %c4_64, %c0_65, %c0_66] : memref<1x8x2x160xbf16, #tpu.memory_space<vmem>>, vector<1x1x2x160xbf16>
    %60 = vector.shape_cast %59 : vector<1x1x2x160xbf16> to vector<2x160xbf16>
    %c2_67 = arith.constant 2 : index
    %c0_68 = arith.constant 0 : index
    %c0_69 = arith.constant 0 : index
    %61 = vector.load %arg2[%c2_67, %c0_68, %c0_69] : memref<5x160x32xbf16, #tpu.memory_space<vmem>>, vector<1x160x32xbf16>
    %62 = vector.shape_cast %61 : vector<1x160x32xbf16> to vector<160x32xbf16>
    %cst_70 = arith.constant dense<0.000000e+00> : vector<2x32xf32>
    %63 = tpu.matmul %60, %62, %cst_70 {dimension_numbers = #tpu.dot_dimension_numbers<[1], [0], [0], [1], [0, 0, 1, 1], [], []>} : vector<2x160xbf16>, vector<160x32xbf16>, vector<2x32xf32> -> vector<2x32xf32>
    %64 = arith.addf %58, %63 : vector<2x32xf32>
    %c0_71 = arith.constant 0 : index
    %c5 = arith.constant 5 : index
    %c0_72 = arith.constant 0 : index
    %c0_73 = arith.constant 0 : index
    %65 = vector.load %arg1[%c0_71, %c5, %c0_72, %c0_73] : memref<1x8x2x160xbf16, #tpu.memory_space<vmem>>, vector<1x1x2x160xbf16>
    %66 = vector.shape_cast %65 : vector<1x1x2x160xbf16> to vector<2x160xbf16>
    %c3_74 = arith.constant 3 : index
    %c0_75 = arith.constant 0 : index
    %c0_76 = arith.constant 0 : index
    %67 = vector.load %arg2[%c3_74, %c0_75, %c0_76] : memref<5x160x32xbf16, #tpu.memory_space<vmem>>, vector<1x160x32xbf16>
    %68 = vector.shape_cast %67 : vector<1x160x32xbf16> to vector<160x32xbf16>
    %cst_77 = arith.constant dense<0.000000e+00> : vector<2x32xf32>
    %69 = tpu.matmul %66, %68, %cst_77 {dimension_numbers = #tpu.dot_dimension_numbers<[1], [0], [0], [1], [0, 0, 1, 1], [], []>} : vector<2x160xbf16>, vector<160x32xbf16>, vector<2x32xf32> -> vector<2x32xf32>
    %70 = arith.addf %64, %69 : vector<2x32xf32>
    %c0_78 = arith.constant 0 : index
    %c6 = arith.constant 6 : index
    %c0_79 = arith.constant 0 : index
    %c0_80 = arith.constant 0 : index
    %71 = vector.load %arg1[%c0_78, %c6, %c0_79, %c0_80] : memref<1x8x2x160xbf16, #tpu.memory_space<vmem>>, vector<1x1x2x160xbf16>
    %72 = vector.shape_cast %71 : vector<1x1x2x160xbf16> to vector<2x160xbf16>
    %c4_81 = arith.constant 4 : index
    %c0_82 = arith.constant 0 : index
    %c0_83 = arith.constant 0 : index
    %73 = vector.load %arg2[%c4_81, %c0_82, %c0_83] : memref<5x160x32xbf16, #tpu.memory_space<vmem>>, vector<1x160x32xbf16>
    %74 = vector.shape_cast %73 : vector<1x160x32xbf16> to vector<160x32xbf16>
    %cst_84 = arith.constant dense<0.000000e+00> : vector<2x32xf32>
    %75 = tpu.matmul %72, %74, %cst_84 {dimension_numbers = #tpu.dot_dimension_numbers<[1], [0], [0], [1], [0, 0, 1, 1], [], []>} : vector<2x160xbf16>, vector<160x32xbf16>, vector<2x32xf32> -> vector<2x32xf32>
    %76 = arith.addf %70, %75 : vector<2x32xf32>
    %c0_85 = arith.constant 0 : index
    %c0_86 = arith.constant 0 : index
    %77 = vector.load %arg3[%c0_85, %c0_86] : memref<1x32xf32, #tpu.memory_space<vmem>>, vector<1x32xf32>
    %78 = vector.broadcast %77 : vector<1x32xf32> to vector<2x32xf32>
    %79 = arith.addf %76, %78 : vector<2x32xf32>
    %80 = arith.mulf %79, %79 : vector<2x32xf32>
    %c0_87 = arith.constant 0 : index
    %c0_88 = arith.constant 0 : index
    %81 = vector.load %arg4[%c0_87, %c0_88] : memref<32x32xf32, #tpu.memory_space<vmem>>, vector<32x32xf32>
    %cst_89 = arith.constant dense<0.000000e+00> : vector<2x32xf32>
    %82 = tpu.matmul %80, %81, %cst_89 {dimension_numbers = #tpu.dot_dimension_numbers<[1], [0], [0], [1], [0, 0, 1, 1], [], []>} : vector<2x32xf32>, vector<32x32xf32>, vector<2x32xf32> -> vector<2x32xf32>
    %c0_90 = arith.constant 0 : index
    %c0_91 = arith.constant 0 : index
    %83 = vector.load %arg5[%c0_90, %c0_91] : memref<1x32xf32, #tpu.memory_space<vmem>>, vector<1x32xf32>
    %84 = vector.broadcast %83 : vector<1x32xf32> to vector<2x32xf32>
    %85 = arith.addf %82, %84 : vector<2x32xf32>
    %86 = math.rsqrt %85 : vector<2x32xf32>
    %87 = arith.mulf %79, %86 : vector<2x32xf32>
    %88 = arith.truncf %87 : vector<2x32xf32> to vector<2x32xbf16>
    %c0_92 = arith.constant 0 : index
    %c1_93 = arith.constant 1 : index
    %c0_94 = arith.constant 0 : index
    %c0_95 = arith.constant 0 : index
    %89 = vector.load %arg6[%c0_92, %c1_93, %c0_94, %c0_95] : memref<1x2x2x32xbf16, #tpu.memory_space<vmem>>, vector<1x1x2x32xbf16>
    %90 = vector.shape_cast %89 : vector<1x1x2x32xbf16> to vector<2x32xbf16>
    %91 = vector.shape_cast %88 : vector<2x32xbf16> to vector<1x1x2x32xbf16>
    tpu.vector_store %arg6[%c0_92, %c1_93, %c0_94, %c0_95], %91 {strides = array<i32>} : memref<1x2x2x32xbf16, #tpu.memory_space<vmem>>, vector<1x1x2x32xbf16>,
    return
  }
  func.func @transform_0(%arg0: i32) -> (i32, i32, i32, i32) {
    %c0_i32 = arith.constant 0 : i32
    %c0_i32_0 = arith.constant 0 : i32
    %c0_i32_1 = arith.constant 0 : i32
    %c0_i32_2 = arith.constant 0 : i32
    return %arg0, %c0_i32, %c0_i32_0, %c0_i32_1 : i32, i32, i32, i32
  }
  func.func @transform_1(%arg0: i32) -> (i32, i32, i32) {
    %c0_i32 = arith.constant 0 : i32
    %c0_i32_0 = arith.constant 0 : i32
    %c0_i32_1 = arith.constant 0 : i32
    %c0_i32_2 = arith.constant 0 : i32
    return %c0_i32, %c0_i32_0, %c0_i32_1 : i32, i32, i32
  }
  func.func @transform_2(%arg0: i32) -> (i32, i32) {
    %c0_i32 = arith.constant 0 : i32
    %c0_i32_0 = arith.constant 0 : i32
    %c0_i32_1 = arith.constant 0 : i32
    return %c0_i32, %c0_i32_0 : i32, i32
  }
  func.func @transform_3(%arg0: i32) -> (i32, i32) {
    %c0_i32 = arith.constant 0 : i32
    %c0_i32_0 = arith.constant 0 : i32
    %c0_i32_1 = arith.constant 0 : i32
    return %c0_i32, %c0_i32_0 : i32, i32
  }
  func.func @transform_4(%arg0: i32) -> (i32, i32) {
    %c0_i32 = arith.constant 0 : i32
    %c0_i32_0 = arith.constant 0 : i32
    %c0_i32_1 = arith.constant 0 : i32
    return %c0_i32, %c0_i32_0 : i32, i32
  }
  func.func @transform_5(%arg0: i32) -> (i32, i32, i32, i32) {
    %c0_i32 = arith.constant 0 : i32
    %c0_i32_0 = arith.constant 0 : i32
    %c0_i32_1 = arith.constant 0 : i32
    %c0_i32_2 = arith.constant 0 : i32
    return %arg0, %c0_i32, %c0_i32_0, %c0_i32_1 : i32, i32, i32, i32
  }
}

module attributes {stable_mosaic.version = 11 : i64} {
  func.func @kernel(%arg0: i32, %arg1: memref<1x6x1x160xbf16, #tpu.memory_space<vmem>>, %arg2: memref<5x160x48xbf16, #tpu.memory_space<vmem>>, %arg3: memref<1x48xf32, #tpu.memory_space<vmem>>, %arg4: memref<1x1x1x48xf32, #tpu.memory_space<vmem>>) attributes {dimension_semantics = [#tpu.dimension_semantics<parallel>], iteration_bounds = array<i64: 2>, scalar_prefetch = 0 : i64, scratch_operands = 0 : i64, tpu.core_type = #tpu.core_type<tc>, window_params = [{transform_indices = @transform_0, window_bounds = array<i64: 1, 6, 1, 160>}, {pipeline_mode = #tpu.pipeline_mode<synchronous>, transform_indices = @transform_1, window_bounds = array<i64: 5, 160, 48>}, {pipeline_mode = #tpu.pipeline_mode<synchronous>, transform_indices = @transform_2, window_bounds = array<i64: 1, 48>}, {transform_indices = @transform_3, window_bounds = array<i64: 1, 1, 1, 48>}]} {
    %cst = arith.constant 0.000000e+00 : f32
    %0 = vector.broadcast %cst : f32 to vector<1x48xf32>
    %c0 = arith.constant 0 : index
    %c0_0 = arith.constant 0 : index
    %c0_1 = arith.constant 0 : index
    %c0_2 = arith.constant 0 : index
    %1 = vector.load %arg1[%c0, %c0_0, %c0_1, %c0_2] : memref<1x6x1x160xbf16, #tpu.memory_space<vmem>>, vector<1x1x1x160xbf16>
    %2 = vector.shape_cast %1 : vector<1x1x1x160xbf16> to vector<1x160xbf16>
    %c0_3 = arith.constant 0 : index
    %c0_4 = arith.constant 0 : index
    %c0_5 = arith.constant 0 : index
    %3 = vector.load %arg2[%c0_3, %c0_4, %c0_5] : memref<5x160x48xbf16, #tpu.memory_space<vmem>>, vector<1x160x48xbf16>
    %4 = vector.shape_cast %3 : vector<1x160x48xbf16> to vector<160x48xbf16>
    %cst_6 = arith.constant dense<0.000000e+00> : vector<1x48xf32>
    %5 = tpu.matmul %2, %4, %cst_6 {dimension_numbers = #tpu.dot_dimension_numbers<[1], [0], [0], [1], [0, 0, 1, 1], [], []>} : vector<1x160xbf16>, vector<160x48xbf16>, vector<1x48xf32> -> vector<1x48xf32>
    %6 = arith.addf %0, %5 : vector<1x48xf32>
    %c0_7 = arith.constant 0 : index
    %c1 = arith.constant 1 : index
    %c0_8 = arith.constant 0 : index
    %c0_9 = arith.constant 0 : index
    %7 = vector.load %arg1[%c0_7, %c1, %c0_8, %c0_9] : memref<1x6x1x160xbf16, #tpu.memory_space<vmem>>, vector<1x1x1x160xbf16>
    %8 = vector.shape_cast %7 : vector<1x1x1x160xbf16> to vector<1x160xbf16>
    %c1_10 = arith.constant 1 : index
    %c0_11 = arith.constant 0 : index
    %c0_12 = arith.constant 0 : index
    %9 = vector.load %arg2[%c1_10, %c0_11, %c0_12] : memref<5x160x48xbf16, #tpu.memory_space<vmem>>, vector<1x160x48xbf16>
    %10 = vector.shape_cast %9 : vector<1x160x48xbf16> to vector<160x48xbf16>
    %cst_13 = arith.constant dense<0.000000e+00> : vector<1x48xf32>
    %11 = tpu.matmul %8, %10, %cst_13 {dimension_numbers = #tpu.dot_dimension_numbers<[1], [0], [0], [1], [0, 0, 1, 1], [], []>} : vector<1x160xbf16>, vector<160x48xbf16>, vector<1x48xf32> -> vector<1x48xf32>
    %12 = arith.addf %6, %11 : vector<1x48xf32>
    %c0_14 = arith.constant 0 : index
    %c2 = arith.constant 2 : index
    %c0_15 = arith.constant 0 : index
    %c0_16 = arith.constant 0 : index
    %13 = vector.load %arg1[%c0_14, %c2, %c0_15, %c0_16] : memref<1x6x1x160xbf16, #tpu.memory_space<vmem>>, vector<1x1x1x160xbf16>
    %14 = vector.shape_cast %13 : vector<1x1x1x160xbf16> to vector<1x160xbf16>
    %c2_17 = arith.constant 2 : index
    %c0_18 = arith.constant 0 : index
    %c0_19 = arith.constant 0 : index
    %15 = vector.load %arg2[%c2_17, %c0_18, %c0_19] : memref<5x160x48xbf16, #tpu.memory_space<vmem>>, vector<1x160x48xbf16>
    %16 = vector.shape_cast %15 : vector<1x160x48xbf16> to vector<160x48xbf16>
    %cst_20 = arith.constant dense<0.000000e+00> : vector<1x48xf32>
    %17 = tpu.matmul %14, %16, %cst_20 {dimension_numbers = #tpu.dot_dimension_numbers<[1], [0], [0], [1], [0, 0, 1, 1], [], []>} : vector<1x160xbf16>, vector<160x48xbf16>, vector<1x48xf32> -> vector<1x48xf32>
    %18 = arith.addf %12, %17 : vector<1x48xf32>
    %c0_21 = arith.constant 0 : index
    %c3 = arith.constant 3 : index
    %c0_22 = arith.constant 0 : index
    %c0_23 = arith.constant 0 : index
    %19 = vector.load %arg1[%c0_21, %c3, %c0_22, %c0_23] : memref<1x6x1x160xbf16, #tpu.memory_space<vmem>>, vector<1x1x1x160xbf16>
    %20 = vector.shape_cast %19 : vector<1x1x1x160xbf16> to vector<1x160xbf16>
    %c3_24 = arith.constant 3 : index
    %c0_25 = arith.constant 0 : index
    %c0_26 = arith.constant 0 : index
    %21 = vector.load %arg2[%c3_24, %c0_25, %c0_26] : memref<5x160x48xbf16, #tpu.memory_space<vmem>>, vector<1x160x48xbf16>
    %22 = vector.shape_cast %21 : vector<1x160x48xbf16> to vector<160x48xbf16>
    %cst_27 = arith.constant dense<0.000000e+00> : vector<1x48xf32>
    %23 = tpu.matmul %20, %22, %cst_27 {dimension_numbers = #tpu.dot_dimension_numbers<[1], [0], [0], [1], [0, 0, 1, 1], [], []>} : vector<1x160xbf16>, vector<160x48xbf16>, vector<1x48xf32> -> vector<1x48xf32>
    %24 = arith.addf %18, %23 : vector<1x48xf32>
    %c0_28 = arith.constant 0 : index
    %c4 = arith.constant 4 : index
    %c0_29 = arith.constant 0 : index
    %c0_30 = arith.constant 0 : index
    %25 = vector.load %arg1[%c0_28, %c4, %c0_29, %c0_30] : memref<1x6x1x160xbf16, #tpu.memory_space<vmem>>, vector<1x1x1x160xbf16>
    %26 = vector.shape_cast %25 : vector<1x1x1x160xbf16> to vector<1x160xbf16>
    %c4_31 = arith.constant 4 : index
    %c0_32 = arith.constant 0 : index
    %c0_33 = arith.constant 0 : index
    %27 = vector.load %arg2[%c4_31, %c0_32, %c0_33] : memref<5x160x48xbf16, #tpu.memory_space<vmem>>, vector<1x160x48xbf16>
    %28 = vector.shape_cast %27 : vector<1x160x48xbf16> to vector<160x48xbf16>
    %cst_34 = arith.constant dense<0.000000e+00> : vector<1x48xf32>
    %29 = tpu.matmul %26, %28, %cst_34 {dimension_numbers = #tpu.dot_dimension_numbers<[1], [0], [0], [1], [0, 0, 1, 1], [], []>} : vector<1x160xbf16>, vector<160x48xbf16>, vector<1x48xf32> -> vector<1x48xf32>
    %30 = arith.addf %24, %29 : vector<1x48xf32>
    %c0_35 = arith.constant 0 : index
    %c0_36 = arith.constant 0 : index
    %31 = vector.load %arg3[%c0_35, %c0_36] : memref<1x48xf32, #tpu.memory_space<vmem>>, vector<1x48xf32>
    %32 = arith.addf %30, %31 : vector<1x48xf32>
    %c0_37 = arith.constant 0 : index
    %c0_38 = arith.constant 0 : index
    %c0_39 = arith.constant 0 : index
    %c0_40 = arith.constant 0 : index
    %33 = vector.load %arg4[%c0_37, %c0_38, %c0_39, %c0_40] : memref<1x1x1x48xf32, #tpu.memory_space<vmem>>, vector<1x1x1x48xf32>
    %34 = vector.shape_cast %33 : vector<1x1x1x48xf32> to vector<1x48xf32>
    %35 = vector.shape_cast %32 : vector<1x48xf32> to vector<1x1x1x48xf32>
    tpu.vector_store %arg4[%c0_37, %c0_38, %c0_39, %c0_40], %35 {strides = array<i32>} : memref<1x1x1x48xf32, #tpu.memory_space<vmem>>, vector<1x1x1x48xf32>,
    return
  }
  func.func @transform_0(%arg0: i32) -> (i32, i32, i32, i32) {
    %c0_i32 = arith.constant 0 : i32
    %c0_i32_0 = arith.constant 0 : i32
    %c0_i32_1 = arith.constant 0 : i32
    %c0_i32_2 = arith.constant 0 : i32
    return %arg0, %c0_i32, %c0_i32_0, %c0_i32_1 : i32, i32, i32, i32
  }
  func.func @transform_1(%arg0: i32) -> (i32, i32, i32) {
    %c0_i32 = arith.constant 0 : i32
    %c0_i32_0 = arith.constant 0 : i32
    %c0_i32_1 = arith.constant 0 : i32
    %c0_i32_2 = arith.constant 0 : i32
    return %c0_i32, %c0_i32_0, %c0_i32_1 : i32, i32, i32
  }
  func.func @transform_2(%arg0: i32) -> (i32, i32) {
    %c0_i32 = arith.constant 0 : i32
    %c0_i32_0 = arith.constant 0 : i32
    %c0_i32_1 = arith.constant 0 : i32
    return %c0_i32, %c0_i32_0 : i32, i32
  }
  func.func @transform_3(%arg0: i32) -> (i32, i32, i32, i32) {
    %c0_i32 = arith.constant 0 : i32
    %c0_i32_0 = arith.constant 0 : i32
    %c0_i32_1 = arith.constant 0 : i32
    %c0_i32_2 = arith.constant 0 : i32
    return %arg0, %c0_i32, %c0_i32_0, %c0_i32_1 : i32, i32, i32, i32
  }
}

</mosaic_0001>

<llo_original>
// kernel: tpu_custom_call.1
$region0: #{tpu_custom_call.1}
  #allocation0 [shape = 'u32[]', space=smem, size = 0x4, offset = 0x4, fixed_abs, tag = 'smem constant byte address 0x4 - core index']
  #allocation1 [shape = 'u32[144,128]{1,0:T(1,128)}', space=vmem, size = 0x12000, scoped, tag = 'internal scratch']
  %s0 = inlined_call_operand.hbm [shape: f32[8,128], index: 0, kind: input, shape index: {}]
  %s1 = inlined_call_operand.hbm [shape: f32[8,128], index: 1, kind: output, shape index: {}]
  %s2 = sld [smem:[#allocation0]]
  $region41: #{tpu_custom_call.1} parent=0
    _
  %s4 = ssub.s32 1, %s2
  %s5 = scalar_select 0, %s4, %s2
  $region1: #{tpu_custom_call.1} parent=0
    #allocation2 [shape = 'u8[4096]{0}', space=vmem, size = 0x1000, scoped, tag = 'input window, operand 0, single buffered']
    #allocation3 [shape = 's32[2]{0}', space=sflag, size = 0x8, scoped, tag = 'scoped memory for tpu_custom_call.1']
    #allocation4 [shape = 's32[2]{0}', space=sflag, size = 0x8, scoped, tag = 'scoped memory for tpu_custom_call.1']
    #allocation5 [shape = 'u8[4096]{0}', space=vmem, size = 0x1000, scoped, tag = 'output window, operand 0, single buffered']
    %6 = vsyncpa [#allocation3], 0
    %7 = vsyncpa [#allocation4], 0
    loop: start=0, step=1, limit=4
    $region2: #{tpu_custom_call.1} parent=1 // loop_pre_header
      _
    $region3: #{tpu_custom_call.1} parent=1 // loop_header
      %s9 = sphi 0, %s13
      %p10 = scmp.ge.s32.totalorder %s9, 4
      %s17 = sphi 0, %s17
      %s19 = sphi 0, %s17
      %s20 = sphi 0, %s19
      %s34 = sphi 0, %s20
      %s38 = sphi 0, %s38
      %s40 = sphi 0, %s38
      %s41 = sphi 0, %s40
      %s55 = sphi 0, %s41
    $region4: #{tpu_custom_call.1} parent=1 // loop_header_branch
      %12 = sbr.rel (%p10) target = $region8
    $region5: #{tpu_custom_call.1} parent=1 // loop_body
      %s14 = ssub.s32 %s9, 1
      %s15 = ssub.s32 %s9, 2
      %s16 = sadd.s32 %s9, 1
      %s18 = sadd.s32 %s17, 1
      %p21 = scmp.eq.s32.totalorder %s9, 1
      %p22 = scmp.ne.s32.totalorder %s17, %s19
      %p23 = scmp.eq.s32.totalorder %s9, 0
      %p24 = por %p22, %p23
      %p25 = scmp.ne.s32.totalorder %s17, %s19
      %p26 = scmp.eq.s32.totalorder %s14, 1
      %p27 = por %p25, %p26
      %p28 = scmp.ne.s32.totalorder %s19, %s20
      %p29 = scmp.eq.s32.totalorder %s14, 0
      %p30 = por %p28, %p29
      %p31 = scmp.ne.s32.totalorder %s19, %s20
      %p32 = scmp.eq.s32.totalorder %s15, 1
      %p33 = por %p31, %p32
      %p35 = scmp.ne.s32.totalorder %s20, %s34
      %p36 = scmp.eq.s32.totalorder %s15, 0
      %p37 = por %p35, %p36
      %s39 = sadd.s32 %s38, 1
      %p42 = scmp.eq.s32.totalorder %s9, 1
      %p43 = scmp.ne.s32.totalorder %s38, %s40
      %p44 = scmp.eq.s32.totalorder %s9, 0
      %p45 = por %p43, %p44
      %p46 = scmp.ne.s32.totalorder %s38, %s40
      %p47 = scmp.eq.s32.totalorder %s14, 1
      %p48 = por %p46, %p47
      %p49 = scmp.ne.s32.totalorder %s40, %s41
      %p50 = scmp.eq.s32.totalorder %s14, 0
      %p51 = por %p49, %p50
      %p52 = scmp.ne.s32.totalorder %s40, %s41
      %p53 = scmp.eq.s32.totalorder %s15, 1
      %p54 = por %p52, %p53
      %p56 = scmp.ne.s32.totalorder %s41, %s55
      %p57 = scmp.eq.s32.totalorder %s15, 0
      %p58 = por %p56, %p57
      %p59 = scmp.le.s32.totalorder 1, %s9
      %p60 = scmp.lt.s32.totalorder %s9, 3
      %p61 = pnand %p59, %p60
      %p62 = pneg %p61
      // Predicated region
      $region9: #{tpu_custom_call.1} parent=5 // pred_check
        _
      $region10: #{tpu_custom_call.1} parent=5 // pred_check_branch
        %64 = sbr.rel (%p61) target = $region12
      $region11: #{tpu_custom_call.1} parent=5 // pred_region
        %s65 = ssub.s32 %s9, 1
        // Predicated region
        $region13: #{tpu_custom_call.1} parent=11 // pred_check
          %p66 = pneg %p30
        $region14: #{tpu_custom_call.1} parent=11 // pred_check_branch
          %68 = sbr.rel (%p66) target = $region16
        $region15: #{tpu_custom_call.1} parent=11 // pred_region
          %s70 = ssub.s32 128, 128
          %71 = vsyncadd [#allocation3], %s70
          %s73 = sshll.u32 [#allocation2], 4
          %s74 = int_to_ptr.vmem [resolvable:$true] %s73
          %76 = dma.hbm_to_vmem [thread:$0]  %s0, 128, %s74, [#allocation3]
        $region16: #{tpu_custom_call.1} parent=11 // pred_fallthru
          _
      $region12: #{tpu_custom_call.1} parent=5 // pred_fallthru
        _
      %p77 = scmp.lt.s32.totalorder %s9, 2
      // Predicated region
      $region17: #{tpu_custom_call.1} parent=5 // pred_check
        %p78 = pneg %p77
      $region18: #{tpu_custom_call.1} parent=5 // pred_check_branch
        %80 = sbr.rel (%p78) target = $region20
      $region19: #{tpu_custom_call.1} parent=5 // pred_region
        _
      $region20: #{tpu_custom_call.1} parent=5 // pred_fallthru
        _
      %p81 = scmp.le.s32.totalorder 1, %s9
      %p82 = scmp.lt.s32.totalorder %s9, 3
      %p83 = pnand %p81, %p82
      %p84 = pneg %p83
      // Predicated region
      $region21: #{tpu_custom_call.1} parent=5 // pred_check
        _
      $region22: #{tpu_custom_call.1} parent=5 // pred_check_branch
        %86 = sbr.rel (%p83) target = $region24
      $region23: #{tpu_custom_call.1} parent=5 // pred_region
        %s87 = ssub.s32 %s9, 1
        // Predicated region
        $region25: #{tpu_custom_call.1} parent=23 // pred_check
          %p88 = pneg %p30
        $region26: #{tpu_custom_call.1} parent=23 // pred_check_branch
          %90 = sbr.rel (%p88) target = $region28
        $region27: #{tpu_custom_call.1} parent=23 // pred_region
          %91 = dma.done [#allocation3], 128
        $region28: #{tpu_custom_call.1} parent=23 // pred_fallthru
          _
        %p92 = pneg %p30
        %p93 = pneg %p27
        %p94 = pneg %p51
        %p95 = pneg %p48
        %v96 = vld [vmem:[#allocation2] sm:$0xff]
        %v97 = vadd.f32 %v96, 1.0
        %98 = vst [vmem:[#allocation5] sm:$0xff] %v97
        // Predicated region
        $region29: #{tpu_custom_call.1} parent=23 // pred_check
          %p99 = pneg %p48
        $region30: #{tpu_custom_call.1} parent=23 // pred_check_branch
          %101 = sbr.rel (%p99) target = $region32
        $region31: #{tpu_custom_call.1} parent=23 // pred_region
          %s103 = ssub.s32 128, 128
          %104 = vsyncadd [#allocation4], %s103
          %s106 = sshll.u32 [#allocation5], 4
          %s107 = int_to_ptr.vmem [resolvable:$true] %s106
          %109 = dma.vmem_to_hbm [thread:$0]  %s107, 128, %s1, [#allocation4]
        $region32: #{tpu_custom_call.1} parent=23 // pred_fallthru
          _
        // Predicated region
        $region33: #{tpu_custom_call.1} parent=23 // pred_check
          %p110 = pneg %p48
        $region34: #{tpu_custom_call.1} parent=23 // pred_check_branch
          %112 = sbr.rel (%p110) target = $region36
        $region35: #{tpu_custom_call.1} parent=23 // pred_region
          %113 = dma.done [#allocation4], 128
        $region36: #{tpu_custom_call.1} parent=23 // pred_fallthru
          _
      $region24: #{tpu_custom_call.1} parent=5 // pred_fallthru
        _
      %p114 = scmp.le.s32.totalorder 2, %s9
      // Predicated region
      $region37: #{tpu_custom_call.1} parent=5 // pred_check
        %p115 = pneg %p114
      $region38: #{tpu_custom_call.1} parent=5 // pred_check_branch
        %117 = sbr.rel (%p115) target = $region40
      $region39: #{tpu_custom_call.1} parent=5 // pred_region
        %s118 = ssub.s32 %s9, 2
      $region40: #{tpu_custom_call.1} parent=5 // pred_fallthru
        _
    $region6: #{tpu_custom_call.1} parent=1 // loop_footer
      %s13 = sadd.s32 1, %s9
    $region7: #{tpu_custom_call.1} parent=1 // loop_footer_branch
      %8 = sbr.rel target = $region3
    $region8: #{tpu_custom_call.1} parent=1 // loop_exit
      _
    %119 = vsyncpa [#allocation3], 1
    %s120 = scalar_lea.sflag [#allocation3], 1
    %121 = vsyncpa %s120, 1
    %122 = vsyncpa [#allocation4], 1
    %s123 = scalar_lea.sflag [#allocation4], 1
    %124 = vsyncpa %s123, 1

// kernel: analysis_forward.4
$region0: #{analysis_forward.4}
  #allocation0 [shape = 'u32[]', space=smem, size = 0x4, offset = 0x4, fixed_abs, tag = 'smem constant byte address 0x4 - core index']
  #allocation1 [shape = 'u32[144,128]{1,0:T(1,128)}', space=vmem, size = 0x12000, scoped, tag = 'internal scratch']
  %s0 = inlined_call_operand.vmem [shape: bf16[2,20,8,15], index: 0, kind: input, shape index: {}]
  %s1 = inlined_call_operand.vmem [shape: bf16[5,15,32], index: 1, kind: input, shape index: {}]
  %s2 = inlined_call_operand.vmem [shape: f32[1,32], index: 2, kind: input, shape index: {}]
  %s3 = inlined_call_operand.vmem [shape: f32[32,32], index: 3, kind: input, shape index: {}]
  %s4 = inlined_call_operand.vmem [shape: f32[1,32], index: 4, kind: input, shape index: {}]
  %s5 = inlined_call_operand.vmem [shape: bf16[2,8,8,32], index: 5, kind: output, shape index: {}]
  %s6 = sld [smem:[#allocation0]]
  $region53: #{analysis_forward.4} parent=0
    _
  %s8 = ssub.s32 1, %s6
  %s9 = scalar_select 0, %s8, %s6
  loop: start=0, step=1, limit=4
  $region2: #{analysis_forward.4} parent=0 // loop_pre_header
    _
  $region3: #{analysis_forward.4} parent=0 // loop_header
    %s11 = sphi 0, %s15
    %p12 = scmp.ge.s32.totalorder %s11, 4
    %s21 = sphi 0, %s23
    %s24 = sphi 0, %s21
    %s25 = sphi 0, %s24
    %s41 = sphi 0, %s25
    %s45 = sphi 0, %s45
    %s47 = sphi 0, %s45
    %s48 = sphi 0, %s47
    %s62 = sphi 0, %s48
    %s66 = sphi 0, %s66
    %s68 = sphi 0, %s66
    %s69 = sphi 0, %s68
    %s83 = sphi 0, %s69
    %s87 = sphi 0, %s87
    %s89 = sphi 0, %s87
    %s90 = sphi 0, %s89
    %s104 = sphi 0, %s90
    %s108 = sphi 0, %s108
    %s110 = sphi 0, %s108
    %s111 = sphi 0, %s110
    %s125 = sphi 0, %s111
    %s131 = sphi 0, %s133
    %s134 = sphi 0, %s131
    %s135 = sphi 0, %s134
    %s151 = sphi 0, %s135
  $region4: #{analysis_forward.4} parent=0 // loop_header_branch
    %14 = sbr.rel (%p12) target = $region8
  $region5: #{analysis_forward.4} parent=0 // loop_body
    %s16 = ssub.s32 %s11, 1
    %s17 = ssub.s32 %s11, 2
    %s18 = sadd.s32 %s11, 1
    %s19 = ssub.s32 %s11, %s18
    %p20 = scmp.eq.s32.totalorder %s19, 0
    %s22 = sadd.s32 %s21, 1
    %s23 = scalar_select %p20, %s21, %s22
    %p26 = pneg %p20
    %p27 = scmp.eq.s32.totalorder %s11, 1
    %p28 = por %p26, %p27
    %p29 = scmp.ne.s32.totalorder %s21, %s24
    %p30 = scmp.eq.s32.totalorder %s11, 0
    %p31 = por %p29, %p30
    %p32 = scmp.ne.s32.totalorder %s21, %s24
    %p33 = scmp.eq.s32.totalorder %s16, 1
    %p34 = por %p32, %p33
    %p35 = scmp.ne.s32.totalorder %s24, %s25
    %p36 = scmp.eq.s32.totalorder %s16, 0
    %p37 = por %p35, %p36
    %p38 = scmp.ne.s32.totalorder %s24, %s25
    %p39 = scmp.eq.s32.totalorder %s17, 1
    %p40 = por %p38, %p39
    %p42 = scmp.ne.s32.totalorder %s25, %s41
    %p43 = scmp.eq.s32.totalorder %s17, 0
    %p44 = por %p42, %p43
    %s46 = sadd.s32 %s45, 1
    %p49 = scmp.eq.s32.totalorder %s11, 1
    %p50 = scmp.ne.s32.totalorder %s45, %s47
    %p51 = scmp.eq.s32.totalorder %s11, 0
    %p52 = por %p50, %p51
    %p53 = scmp.ne.s32.totalorder %s45, %s47
    %p54 = scmp.eq.s32.totalorder %s16, 1
    %p55 = por %p53, %p54
    %p56 = scmp.ne.s32.totalorder %s47, %s48
    %p57 = scmp.eq.s32.totalorder %s16, 0
    %p58 = por %p56, %p57
    %p59 = scmp.ne.s32.totalorder %s47, %s48
    %p60 = scmp.eq.s32.totalorder %s17, 1
    %p61 = por %p59, %p60
    %p63 = scmp.ne.s32.totalorder %s48, %s62
    %p64 = scmp.eq.s32.totalorder %s17, 0
    %p65 = por %p63, %p64
    %s67 = sadd.s32 %s66, 1
    %p70 = scmp.eq.s32.totalorder %s11, 1
    %p71 = scmp.ne.s32.totalorder %s66, %s68
    %p72 = scmp.eq.s32.totalorder %s11, 0
    %p73 = por %p71, %p72
    %p74 = scmp.ne.s32.totalorder %s66, %s68
    %p75 = scmp.eq.s32.totalorder %s16, 1
    %p76 = por %p74, %p75
    %p77 = scmp.ne.s32.totalorder %s68, %s69
    %p78 = scmp.eq.s32.totalorder %s16, 0
    %p79 = por %p77, %p78
    %p80 = scmp.ne.s32.totalorder %s68, %s69
    %p81 = scmp.eq.s32.totalorder %s17, 1
    %p82 = por %p80, %p81
    %p84 = scmp.ne.s32.totalorder %s69, %s83
    %p85 = scmp.eq.s32.totalorder %s17, 0
    %p86 = por %p84, %p85
    %s88 = sadd.s32 %s87, 1
    %p91 = scmp.eq.s32.totalorder %s11, 1
    %p92 = scmp.ne.s32.totalorder %s87, %s89
    %p93 = scmp.eq.s32.totalorder %s11, 0
    %p94 = por %p92, %p93
    %p95 = scmp.ne.s32.totalorder %s87, %s89
    %p96 = scmp.eq.s32.totalorder %s16, 1
    %p97 = por %p95, %p96
    %p98 = scmp.ne.s32.totalorder %s89, %s90
    %p99 = scmp.eq.s32.totalorder %s16, 0
    %p100 = por %p98, %p99
    %p101 = scmp.ne.s32.totalorder %s89, %s90
    %p102 = scmp.eq.s32.totalorder %s17, 1
    %p103 = por %p101, %p102
    %p105 = scmp.ne.s32.totalorder %s90, %s104
    %p106 = scmp.eq.s32.totalorder %s17, 0
    %p107 = por %p105, %p106
    %s109 = sadd.s32 %s108, 1
    %p112 = scmp.eq.s32.totalorder %s11, 1
    %p113 = scmp.ne.s32.totalorder %s108, %s110
    %p114 = scmp.eq.s32.totalorder %s11, 0
    %p115 = por %p113, %p114
    %p116 = scmp.ne.s32.totalorder %s108, %s110
    %p117 = scmp.eq.s32.totalorder %s16, 1
    %p118 = por %p116, %p117
    %p119 = scmp.ne.s32.totalorder %s110, %s111
    %p120 = scmp.eq.s32.totalorder %s16, 0
    %p121 = por %p119, %p120
    %p122 = scmp.ne.s32.totalorder %s110, %s111
    %p123 = scmp.eq.s32.totalorder %s17, 1
    %p124 = por %p122, %p123
    %p126 = scmp.ne.s32.totalorder %s111, %s125
    %p127 = scmp.eq.s32.totalorder %s17, 0
    %p128 = por %p126, %p127
    %s129 = ssub.s32 %s11, %s18
    %p130 = scmp.eq.s32.totalorder %s129, 0
    %s132 = sadd.s32 %s131, 1
    %s133 = scalar_select %p130, %s131, %s132
    %p136 = pneg %p130
    %p137 = scmp.eq.s32.totalorder %s11, 1
    %p138 = por %p136, %p137
    %p139 = scmp.ne.s32.totalorder %s131, %s134
    %p140 = scmp.eq.s32.totalorder %s11, 0
    %p141 = por %p139, %p140
    %p142 = scmp.ne.s32.totalorder %s131, %s134
    %p143 = scmp.eq.s32.totalorder %s16, 1
    %p144 = por %p142, %p143
    %p145 = scmp.ne.s32.totalorder %s134, %s135
    %p146 = scmp.eq.s32.totalorder %s16, 0
    %p147 = por %p145, %p146
    %p148 = scmp.ne.s32.totalorder %s134, %s135
    %p149 = scmp.eq.s32.totalorder %s17, 1
    %p150 = por %p148, %p149
    %p152 = scmp.ne.s32.totalorder %s135, %s151
    %p153 = scmp.eq.s32.totalorder %s17, 0
    %p154 = por %p152, %p153
    %p155 = scmp.le.s32.totalorder 1, %s11
    %p156 = scmp.lt.s32.totalorder %s11, 3
    %p157 = pnand %p155, %p156
    %p158 = pneg %p157
    // Predicated region
    $region9: #{analysis_forward.4} parent=5 // pred_check
      _
    $region10: #{analysis_forward.4} parent=5 // pred_check_branch
      %160 = sbr.rel (%p157) target = $region12
    $region11: #{analysis_forward.4} parent=5 // pred_region
      %s161 = ssub.s32 %s11, 1
      // Predicated region
      $region13: #{analysis_forward.4} parent=11 // pred_check
        %p162 = pneg %p58
      $region14: #{analysis_forward.4} parent=11 // pred_check_branch
        %164 = sbr.rel (%p162) target = $region16
      $region15: #{analysis_forward.4} parent=11 // pred_region
        _
      $region16: #{analysis_forward.4} parent=11 // pred_fallthru
        _
      // Predicated region
      $region17: #{analysis_forward.4} parent=11 // pred_check
        %p165 = pneg %p79
      $region18: #{analysis_forward.4} parent=11 // pred_check_branch
        %167 = sbr.rel (%p165) target = $region20
      $region19: #{analysis_forward.4} parent=11 // pred_region
        _
      $region20: #{analysis_forward.4} parent=11 // pred_fallthru
        _
      // Predicated region
      $region21: #{analysis_forward.4} parent=11 // pred_check
        %p168 = pneg %p100
      $region22: #{analysis_forward.4} parent=11 // pred_check_branch
        %170 = sbr.rel (%p168) target = $region24
      $region23: #{analysis_forward.4} parent=11 // pred_region
        _
      $region24: #{analysis_forward.4} parent=11 // pred_fallthru
        _
      // Predicated region
      $region25: #{analysis_forward.4} parent=11 // pred_check
        %p171 = pneg %p121
      $region26: #{analysis_forward.4} parent=11 // pred_check_branch
        %173 = sbr.rel (%p171) target = $region28
      $region27: #{analysis_forward.4} parent=11 // pred_region
        _
      $region28: #{analysis_forward.4} parent=11 // pred_fallthru
        _
    $region12: #{analysis_forward.4} parent=5 // pred_fallthru
      _
    %p174 = scmp.lt.s32.totalorder %s11, 2
    // Predicated region
    $region29: #{analysis_forward.4} parent=5 // pred_check
      %p175 = pneg %p174
    $region30: #{analysis_forward.4} parent=5 // pred_check_branch
      %177 = sbr.rel (%p175) target = $region32
    $region31: #{analysis_forward.4} parent=5 // pred_region
      // Predicated region
      $region33: #{analysis_forward.4} parent=31 // pred_check
        %p178 = pneg %p31
      $region34: #{analysis_forward.4} parent=31 // pred_check_branch
        %180 = sbr.rel (%p178) target = $region36
      $region35: #{analysis_forward.4} parent=31 // pred_region
        %p181 = scmp.lt.s32.totalorder %s11, 1
        %s182 = scalar_select %p181, %s11, 1
        %s183 = smul.addr %s182, 20
        %s184 = smul.addr %s183, 4
        %s185 = scalar_lea.vmem %s0, %s184
      $region36: #{analysis_forward.4} parent=31 // pred_fallthru
        _
    $region32: #{analysis_forward.4} parent=5 // pred_fallthru
      _
    %p186 = scmp.le.s32.totalorder 1, %s11
    %p187 = scmp.lt.s32.totalorder %s11, 3
    %p188 = pnand %p186, %p187
    %p189 = pneg %p188
    // Predicated region
    $region37: #{analysis_forward.4} parent=5 // pred_check
      _
    $region38: #{analysis_forward.4} parent=5 // pred_check_branch
      %191 = sbr.rel (%p188) target = $region40
    $region39: #{analysis_forward.4} parent=5 // pred_region
      %s192 = ssub.s32 %s11, 1
      %p193 = scmp.lt.s32.totalorder %s16, 1
      %s194 = scalar_select %p193, %s16, 1
      %s195 = smul.addr %s194, 20
      %s196 = smul.addr %s195, 4
      %s197 = scalar_lea.vmem %s0, %s196
      %p198 = pneg %p37
      %p199 = pneg %p34
      %p200 = pneg %p58
      %p201 = pneg %p55
      %p202 = pneg %p79
      %p203 = pneg %p76
      %p204 = pneg %p100
      %p205 = pneg %p97
      %p206 = pneg %p121
      %p207 = pneg %p118
      %p208 = pneg %p147
      %p209 = pneg %p144
      %p210 = scmp.lt.s32.totalorder %s16, 1
      %s211 = scalar_select %p210, %s16, 1
      %s212 = smul.addr %s211, 8
      %s213 = smul.addr %s212, 4
      %s214 = scalar_lea.vmem %s5, %s213
      %p215 = scmp.lt.s32.totalorder %s16, 1
      %s216 = scalar_select %p215, %s16, 1
      %s217 = smul.addr %s216, 20
      %s218 = smul.addr %s217, 4
      %s219 = scalar_lea.vmem %s0, %s218
      %p220 = scmp.lt.s32.totalorder %s16, 1
      %s221 = scalar_select %p220, %s16, 1
      %s222 = smul.addr %s221, 8
      %s223 = smul.addr %s222, 4
      %s224 = scalar_lea.vmem %s5, %s223
      %v226 = vld [vmem:[%s219] sm:$0xf]
      %v227 = vld [vmem:[%s1] sm:$0xf]
      %v228 = vld [vmem:[%s1 + $0x4] sm:$0xf]
      %s229 = scalar_lea.vmem %s219, 4
      %v230 = vld [vmem:[%s229] sm:$0xf]
      %s231 = scalar_lea.vmem %s1, 8
      %v232 = vld [vmem:[%s231] sm:$0xf]
      %v233 = vld [vmem:[%s231 + $0x4] sm:$0xf]
      %v236 = vunpack.c.l.b16 %v232
      %v237 = vunpack.c.l.b16 %v233
      %v238 = vpack.c.b16 %v237, %v236
      %vm239 = vcmask 121856
      %v241 = vsel %vm239, %v230, 0
      %vm243 = vcmask 1046528
      %vm244 = vcmask 1047552
      %v245 = vsel %vm243, 4294967295, 65535
      %v246 = vsel %vm244, %v245, 0
      %v248 = vand.u32 %v238, %v246
      %250 = vmatprep.subr.bf16.mxu0 0
      %251 = vmatpush1.bf16.msra.mxu0 %v248
      %252 = vmatprep.subr.bf16.mxu0 0
      %253 = vmatpush1.bf16.msra.mxu0 0
      %254 = vmatprep.subr.bf16.mxu0 0
      %255 = vmatpush1.bf16.msra.mxu0 0
      %256 = vmatprep.subr.bf16.mxu0 0
      %257 = vmatpush1.bf16.msra.mxu0 0
      %258 = vmatprep.subr.bf16.mxu0 0
      %259 = vmatpush1.bf16.msra.mxu0 0
      %260 = vmatprep.subr.bf16.mxu0 0
      %261 = vmatpush1.bf16.msra.mxu0 0
      %262 = vmatprep.subr.bf16.mxu0 0
      %263 = vmatpush1.bf16.msra.mxu0 0
      %264 = vmatprep.subr.bf16.mxu0 0
      %265 = vmatpush1.bf16.msra.mxu0 0
      %266 = vmatprep.subr.bf16.mxu0 0
      %267 = vmatpush1.bf16.msra.mxu0 0
      %268 = vmatprep.subr.bf16.mxu0 0
      %269 = vmatpush1.bf16.msra.mxu0 0
      %270 = vmatprep.subr.bf16.mxu0 0
      %271 = vmatpush1.bf16.msra.mxu0 0
      %272 = vmatprep.subr.bf16.mxu0 0
      %273 = vmatpush1.bf16.msra.mxu0 0
      %274 = vmatprep.subr.bf16.mxu0 0
      %275 = vmatpush1.bf16.msra.mxu0 0
      %276 = vmatprep.subr.bf16.mxu0 0
      %277 = vmatpush1.bf16.msra.mxu0 0
      %278 = vmatprep.subr.bf16.mxu0 0
      %279 = vmatpush1.bf16.msra.mxu0 0
      %280 = vmatprep.subr.bf16.mxu0 0
      %281 = vmatpush1.bf16.msra.mxu0 0
      %282 = vmatprep.mubr.bf16.mxu0 0
      %283 = vmatmul.mubr.bf16.gmra.mrb[0].mxu0 %v241
      %v284 = vpop.f32.mrb[0].mxu0
      %v285 = vadd.f32 0.0, %v284
      %v286 = vpop.f32.mrb[0].mxu0
      %v287 = vpop.f32.mrb[0].mxu0
      %v288 = vpop.f32.mrb[0].mxu0
      %289 = vdwg.mxu0
      %v292 = vunpack.c.l.b16 %v227
      %v293 = vunpack.c.l.b16 %v228
      %v294 = vpack.c.b16 %v293, %v292
      %v296 = vsel %vm239, %v226, 0
      %v299 = vand.u32 %v294, %v246
      %301 = vmatprep.subr.bf16.mxu0 0
      %302 = vmatpush1.bf16.msra.mxu0 %v299
      %303 = vmatprep.subr.bf16.mxu0 0
      %304 = vmatpush1.bf16.msra.mxu0 0
      %305 = vmatprep.subr.bf16.mxu0 0
      %306 = vmatpush1.bf16.msra.mxu0 0
      %307 = vmatprep.subr.bf16.mxu0 0
      %308 = vmatpush1.bf16.msra.mxu0 0
      %309 = vmatprep.subr.bf16.mxu0 0
      %310 = vmatpush1.bf16.msra.mxu0 0
      %311 = vmatprep.subr.bf16.mxu0 0
      %312 = vmatpush1.bf16.msra.mxu0 0
      %313 = vmatprep.subr.bf16.mxu0 0
      %314 = vmatpush1.bf16.msra.mxu0 0
      %315 = vmatprep.subr.bf16.mxu0 0
      %316 = vmatpush1.bf16.msra.mxu0 0
      %317 = vmatprep.subr.bf16.mxu0 0
      %318 = vmatpush1.bf16.msra.mxu0 0
      %319 = vmatprep.subr.bf16.mxu0 0
      %320 = vmatpush1.bf16.msra.mxu0 0
      %321 = vmatprep.subr.bf16.mxu0 0
      %322 = vmatpush1.bf16.msra.mxu0 0
      %323 = vmatprep.subr.bf16.mxu0 0
      %324 = vmatpush1.bf16.msra.mxu0 0
      %325 = vmatprep.subr.bf16.mxu0 0
      %326 = vmatpush1.bf16.msra.mxu0 0
      %327 = vmatprep.subr.bf16.mxu0 0
      %328 = vmatpush1.bf16.msra.mxu0 0
      %329 = vmatprep.subr.bf16.mxu0 0
      %330 = vmatpush1.bf16.msra.mxu0 0
      %331 = vmatprep.subr.bf16.mxu0 0
      %332 = vmatpush1.bf16.msra.mxu0 0
      %333 = vmatprep.mubr.bf16.mxu0 0
      %334 = vmatmul.mubr.bf16.gmra.mrb[0].mxu0 %v296
      %v335 = vpop.f32.mrb[0].mxu0
      %v336 = vadd.f32 %v285, %v335
      %v337 = vpop.f32.mrb[0].mxu0
      %v338 = vpop.f32.mrb[0].mxu0
      %v339 = vpop.f32.mrb[0].mxu0
      %340 = vdwg.mxu0
      %s341 = scalar_lea.vmem %s219, 8
      %v342 = vld [vmem:[%s341] sm:$0xf]
      %s343 = scalar_lea.vmem %s1, 16
      %v344 = vld [vmem:[%s343] sm:$0xf]
      %v345 = vld [vmem:[%s343 + $0x4] sm:$0xf]
      %v348 = vunpack.c.l.b16 %v344
      %v349 = vunpack.c.l.b16 %v345
      %v350 = vpack.c.b16 %v349, %v348
      %v352 = vsel %vm239, %v342, 0
      %v355 = vand.u32 %v350, %v246
      %357 = vmatprep.subr.bf16.mxu0 0
      %358 = vmatpush1.bf16.msra.mxu0 %v355
      %359 = vmatprep.subr.bf16.mxu0 0
      %360 = vmatpush1.bf16.msra.mxu0 0
      %361 = vmatprep.subr.bf16.mxu0 0
      %362 = vmatpush1.bf16.msra.mxu0 0
      %363 = vmatprep.subr.bf16.mxu0 0
      %364 = vmatpush1.bf16.msra.mxu0 0
      %365 = vmatprep.subr.bf16.mxu0 0
      %366 = vmatpush1.bf16.msra.mxu0 0
      %367 = vmatprep.subr.bf16.mxu0 0
      %368 = vmatpush1.bf16.msra.mxu0 0
      %369 = vmatprep.subr.bf16.mxu0 0
      %370 = vmatpush1.bf16.msra.mxu0 0
      %371 = vmatprep.subr.bf16.mxu0 0
      %372 = vmatpush1.bf16.msra.mxu0 0
      %373 = vmatprep.subr.bf16.mxu0 0
      %374 = vmatpush1.bf16.msra.mxu0 0
      %375 = vmatprep.subr.bf16.mxu0 0
      %376 = vmatpush1.bf16.msra.mxu0 0
      %377 = vmatprep.subr.bf16.mxu0 0
      %378 = vmatpush1.bf16.msra.mxu0 0
      %379 = vmatprep.subr.bf16.mxu0 0
      %380 = vmatpush1.bf16.msra.mxu0 0
      %381 = vmatprep.subr.bf16.mxu0 0
      %382 = vmatpush1.bf16.msra.mxu0 0
      %383 = vmatprep.subr.bf16.mxu0 0
      %384 = vmatpush1.bf16.msra.mxu0 0
      %385 = vmatprep.subr.bf16.mxu0 0
      %386 = vmatpush1.bf16.msra.mxu0 0
      %387 = vmatprep.subr.bf16.mxu0 0
      %388 = vmatpush1.bf16.msra.mxu0 0
      %389 = vmatprep.mubr.bf16.mxu0 0
      %390 = vmatmul.mubr.bf16.gmra.mrb[0].mxu0 %v352
      %v391 = vpop.f32.mrb[0].mxu0
      %v392 = vadd.f32 0.0, %v391
      %v393 = vpop.f32.mrb[0].mxu0
      %v394 = vpop.f32.mrb[0].mxu0
      %v395 = vpop.f32.mrb[0].mxu0
      %396 = vdwg.mxu0
      %v397 = vadd.f32 %v336, %v392
      %s398 = scalar_lea.vmem %s219, 12
      %v399 = vld [vmem:[%s398] sm:$0xf]
      %s400 = scalar_lea.vmem %s1, 24
      %v401 = vld [vmem:[%s400] sm:$0xf]
      %v402 = vld [vmem:[%s400 + $0x4] sm:$0xf]
      %v405 = vunpack.c.l.b16 %v401
      %v406 = vunpack.c.l.b16 %v402
      %v407 = vpack.c.b16 %v406, %v405
      %v409 = vsel %vm239, %v399, 0
      %v412 = vand.u32 %v407, %v246
      %414 = vmatprep.subr.bf16.mxu0 0
      %415 = vmatpush1.bf16.msra.mxu0 %v412
      %416 = vmatprep.subr.bf16.mxu0 0
      %417 = vmatpush1.bf16.msra.mxu0 0
      %418 = vmatprep.subr.bf16.mxu0 0
      %419 = vmatpush1.bf16.msra.mxu0 0
      %420 = vmatprep.subr.bf16.mxu0 0
      %421 = vmatpush1.bf16.msra.mxu0 0
      %422 = vmatprep.subr.bf16.mxu0 0
      %423 = vmatpush1.bf16.msra.mxu0 0
      %424 = vmatprep.subr.bf16.mxu0 0
      %425 = vmatpush1.bf16.msra.mxu0 0
      %426 = vmatprep.subr.bf16.mxu0 0
      %427 = vmatpush1.bf16.msra.mxu0 0
      %428 = vmatprep.subr.bf16.mxu0 0
      %429 = vmatpush1.bf16.msra.mxu0 0
      %430 = vmatprep.subr.bf16.mxu0 0
      %431 = vmatpush1.bf16.msra.mxu0 0
      %432 = vmatprep.subr.bf16.mxu0 0
      %433 = vmatpush1.bf16.msra.mxu0 0
      %434 = vmatprep.subr.bf16.mxu0 0
      %435 = vmatpush1.bf16.msra.mxu0 0
      %436 = vmatprep.subr.bf16.mxu0 0
      %437 = vmatpush1.bf16.msra.mxu0 0
      %438 = vmatprep.subr.bf16.mxu0 0
      %439 = vmatpush1.bf16.msra.mxu0 0
      %440 = vmatprep.subr.bf16.mxu0 0
      %441 = vmatpush1.bf16.msra.mxu0 0
      %442 = vmatprep.subr.bf16.mxu0 0
      %443 = vmatpush1.bf16.msra.mxu0 0
      %444 = vmatprep.subr.bf16.mxu0 0
      %445 = vmatpush1.bf16.msra.mxu0 0
      %446 = vmatprep.mubr.bf16.mxu0 0
      %447 = vmatmul.mubr.bf16.gmra.mrb[0].mxu0 %v409
      %v448 = vpop.f32.mrb[0].mxu0
      %v449 = vadd.f32 0.0, %v448
      %v450 = vpop.f32.mrb[0].mxu0
      %v451 = vpop.f32.mrb[0].mxu0
      %v452 = vpop.f32.mrb[0].mxu0
      %453 = vdwg.mxu0
      %v454 = vadd.f32 %v397, %v449
      %s455 = scalar_lea.vmem %s219, 16
      %v456 = vld [vmem:[%s455] sm:$0xf]
      %s457 = scalar_lea.vmem %s1, 32
      %v458 = vld [vmem:[%s457] sm:$0xf]
      %v459 = vld [vmem:[%s457 + $0x4] sm:$0xf]
      %v462 = vunpack.c.l.b16 %v458
      %v463 = vunpack.c.l.b16 %v459
      %v464 = vpack.c.b16 %v463, %v462
      %v466 = vsel %vm239, %v456, 0
      %v469 = vand.u32 %v464, %v246
      %471 = vmatprep.subr.bf16.mxu0 0
      %472 = vmatpush1.bf16.msra.mxu0 %v469
      %473 = vmatprep.subr.bf16.mxu0 0
      %474 = vmatpush1.bf16.msra.mxu0 0
      %475 = vmatprep.subr.bf16.mxu0 0
      %476 = vmatpush1.bf16.msra.mxu0 0
      %477 = vmatprep.subr.bf16.mxu0 0
      %478 = vmatpush1.bf16.msra.mxu0 0
      %479 = vmatprep.subr.bf16.mxu0 0
      %480 = vmatpush1.bf16.msra.mxu0 0
      %481 = vmatprep.subr.bf16.mxu0 0
      %482 = vmatpush1.bf16.msra.mxu0 0
      %483 = vmatprep.subr.bf16.mxu0 0
      %484 = vmatpush1.bf16.msra.mxu0 0
      %485 = vmatprep.subr.bf16.mxu0 0
      %486 = vmatpush1.bf16.msra.mxu0 0
      %487 = vmatprep.subr.bf16.mxu0 0
      %488 = vmatpush1.bf16.msra.mxu0 0
      %489 = vmatprep.subr.bf16.mxu0 0
      %490 = vmatpush1.bf16.msra.mxu0 0
      %491 = vmatprep.subr.bf16.mxu0 0
      %492 = vmatpush1.bf16.msra.mxu0 0
      %493 = vmatprep.subr.bf16.mxu0 0
      %494 = vmatpush1.bf16.msra.mxu0 0
      %495 = vmatprep.subr.bf16.mxu0 0
      %496 = vmatpush1.bf16.msra.mxu0 0
      %497 = vmatprep.subr.bf16.mxu0 0
      %498 = vmatpush1.bf16.msra.mxu0 0
      %499 = vmatprep.subr.bf16.mxu0 0
      %500 = vmatpush1.bf16.msra.mxu0 0
      %501 = vmatprep.subr.bf16.mxu0 0
      %502 = vmatpush1.bf16.msra.mxu0 0
      %503 = vmatprep.mubr.bf16.mxu0 0
      %504 = vmatmul.mubr.bf16.gmra.mrb[0].mxu0 %v466
      %v505 = vpop.f32.mrb[0].mxu0
      %v506 = vadd.f32 0.0, %v505
      %v507 = vpop.f32.mrb[0].mxu0
      %v508 = vpop.f32.mrb[0].mxu0
      %v509 = vpop.f32.mrb[0].mxu0
      %510 = vdwg.mxu0
      %v511 = vadd.f32 %v454, %v506
      %v512 = vld [vmem:[%s2] sm:$0x1]
      %v514 = vlaneseq
      %v515 = vshrl.u32 %v514, 7
      %v516 = vsub.s32 0, %v515
      %v517 = vrot.slane %v512, %v516
      %v519 = vadd.f32 %v511, %v517
      %v520 = vmul.f32 %v519, %v519
      %v521 = vld [vmem:[%s3] sm:$0xff]
      %v522 = vld [vmem:[%s3 + $0x8] sm:$0xff]
      %v523 = vld [vmem:[%s3 + $0x10] sm:$0xff]
      %v524 = vld [vmem:[%s3 + $0x18] sm:$0xff]
      %v525 = vld [vmem:[%s4] sm:$0x1]
      %v527 = vlaneseq
      %v528 = vshrl.u32 %v527, 7
      %v529 = vsub.s32 0, %v528
      %v530 = vrot.slane %v525, %v529
      %vm532 = vcmask 261120
      %v534 = vsel %vm532, %v520, 0
      %536 = vmatprep.subr.mxu0 0.0
      %537 = vmatpush1.msra.mxu0 %v521
      %538 = vmatprep.subr.mxu0 0.0
      %539 = vmatpush1.msra.mxu0 %v522
      %540 = vmatprep.subr.mxu0 0.0
      %541 = vmatpush1.msra.mxu0 %v523
      %542 = vmatprep.subr.mxu0 0.0
      %543 = vmatpush1.msra.mxu0 %v524
      %544 = vmatprep.subr.mxu0 0.0
      %545 = vmatpush1.msra.mxu0 0.0
      %546 = vmatprep.subr.mxu0 0.0
      %547 = vmatpush1.msra.mxu0 0.0
      %548 = vmatprep.subr.mxu0 0.0
      %549 = vmatpush1.msra.mxu0 0.0
      %550 = vmatprep.subr.mxu0 0.0
      %551 = vmatpush1.msra.mxu0 0.0
      %552 = vmatprep.subr.mxu0 0.0
      %553 = vmatpush1.msra.mxu0 0.0
      %554 = vmatprep.subr.mxu0 0.0
      %555 = vmatpush1.msra.mxu0 0.0
      %556 = vmatprep.subr.mxu0 0.0
      %557 = vmatpush1.msra.mxu0 0.0
      %558 = vmatprep.subr.mxu0 0.0
      %559 = vmatpush1.msra.mxu0 0.0
      %560 = vmatprep.subr.mxu0 0.0
      %561 = vmatpush1.msra.mxu0 0.0
      %562 = vmatprep.subr.mxu0 0.0
      %563 = vmatpush1.msra.mxu0 0.0
      %564 = vmatprep.subr.mxu0 0.0
      %565 = vmatpush1.msra.mxu0 0.0
      %566 = vmatprep.subr.mxu0 0.0
      %567 = vmatpush1.msra.mxu0 0.0
      %568 = vmatprep.subr.mxu0 0.0
      %569 = vmatpush1.msra.mxu0 0.0
      %570 = vmatprep.subr.mxu0 0.0
      %571 = vmatpush1.msra.mxu0 0.0
      %572 = vmatprep.subr.mxu0 0.0
      %573 = vmatpush1.msra.mxu0 0.0
      %574 = vmatprep.subr.mxu0 0.0
      %575 = vmatpush1.msra.mxu0 0.0
      %576 = vmatprep.subr.mxu0 0.0
      %577 = vmatpush1.msra.mxu0 0.0
      %578 = vmatprep.subr.mxu0 0.0
      %579 = vmatpush1.msra.mxu0 0.0
      %580 = vmatprep.subr.mxu0 0.0
      %581 = vmatpush1.msra.mxu0 0.0
      %582 = vmatprep.subr.mxu0 0.0
      %583 = vmatpush1.msra.mxu0 0.0
      %584 = vmatprep.subr.mxu0 0.0
      %585 = vmatpush1.msra.mxu0 0.0
      %586 = vmatprep.subr.mxu0 0.0
      %587 = vmatpush1.msra.mxu0 0.0
      %588 = vmatprep.subr.mxu0 0.0
      %589 = vmatpush1.msra.mxu0 0.0
      %590 = vmatprep.subr.mxu0 0.0
      %591 = vmatpush1.msra.mxu0 0.0
      %592 = vmatprep.subr.mxu0 0.0
      %593 = vmatpush1.msra.mxu0 0.0
      %594 = vmatprep.subr.mxu0 0.0
      %595 = vmatpush1.msra.mxu0 0.0
      %596 = vmatprep.subr.mxu0 0.0
      %597 = vmatpush1.msra.mxu0 0.0
      %598 = vmatprep.subr.mxu0 0.0
      %599 = vmatpush1.msra.mxu0 0.0
      %600 = vmatprep.mubr.f32.mxu0 0.0
      %601 = vmatmul.mubr.f32.gmra.mrb[0].mxu0 %v534
      %v602 = vpop.f32.mrb[0].mxu0
      %v603 = vadd.f32 %v530, %v602
      %v604 = vpop.f32.mrb[0].mxu0
      %605 = vdwg.mxu0
      %v606 = vrsqrt.pop %v603
      %v607 = vmul.f32 %v519, %v606
      %v608 = vpack.c.bf16 %v607, %v607
      %vm609 = vcmask 257024
      %610 = vst.msk [vmem:[%s224] sm:$0xf] %vm609, %v608
      %v611 = vld [vmem:[%s341] sm:$0xf]
      %v612 = vld [vmem:[%s1] sm:$0xf]
      %v613 = vld [vmem:[%s1 + $0x4] sm:$0xf]
      %v614 = vld [vmem:[%s398] sm:$0xf]
      %v615 = vld [vmem:[%s231] sm:$0xf]
      %v616 = vld [vmem:[%s231 + $0x4] sm:$0xf]
      %v619 = vunpack.c.l.b16 %v615
      %v620 = vunpack.c.l.b16 %v616
      %v621 = vpack.c.b16 %v620, %v619
      %v623 = vsel %vm239, %v614, 0
      %v626 = vand.u32 %v621, %v246
      %628 = vmatprep.subr.bf16.mxu0 0
      %629 = vmatpush1.bf16.msra.mxu0 %v626
      %630 = vmatprep.subr.bf16.mxu0 0
      %631 = vmatpush1.bf16.msra.mxu0 0
      %632 = vmatprep.subr.bf16.mxu0 0
      %633 = vmatpush1.bf16.msra.mxu0 0
      %634 = vmatprep.subr.bf16.mxu0 0
      %635 = vmatpush1.bf16.msra.mxu0 0
      %636 = vmatprep.subr.bf16.mxu0 0
      %637 = vmatpush1.bf16.msra.mxu0 0
      %638 = vmatprep.subr.bf16.mxu0 0
      %639 = vmatpush1.bf16.msra.mxu0 0
      %640 = vmatprep.subr.bf16.mxu0 0
      %641 = vmatpush1.bf16.msra.mxu0 0
      %642 = vmatprep.subr.bf16.mxu0 0
      %643 = vmatpush1.bf16.msra.mxu0 0
      %644 = vmatprep.subr.bf16.mxu0 0
      %645 = vmatpush1.bf16.msra.mxu0 0
      %646 = vmatprep.subr.bf16.mxu0 0
      %647 = vmatpush1.bf16.msra.mxu0 0
      %648 = vmatprep.subr.bf16.mxu0 0
      %649 = vmatpush1.bf16.msra.mxu0 0
      %650 = vmatprep.subr.bf16.mxu0 0
      %651 = vmatpush1.bf16.msra.mxu0 0
      %652 = vmatprep.subr.bf16.mxu0 0
      %653 = vmatpush1.bf16.msra.mxu0 0
      %654 = vmatprep.subr.bf16.mxu0 0
      %655 = vmatpush1.bf16.msra.mxu0 0
      %656 = vmatprep.subr.bf16.mxu0 0
      %657 = vmatpush1.bf16.msra.mxu0 0
      %658 = vmatprep.subr.bf16.mxu0 0
      %659 = vmatpush1.bf16.msra.mxu0 0
      %660 = vmatprep.mubr.bf16.mxu0 0
      %661 = vmatmul.mubr.bf16.gmra.mrb[0].mxu0 %v623
      %v662 = vpop.f32.mrb[0].mxu0
      %v663 = vadd.f32 0.0, %v662
      %v664 = vpop.f32.mrb[0].mxu0
      %v665 = vpop.f32.mrb[0].mxu0
      %v666 = vpop.f32.mrb[0].mxu0
      %667 = vdwg.mxu0
      %v670 = vunpack.c.l.b16 %v612
      %v671 = vunpack.c.l.b16 %v613
      %v672 = vpack.c.b16 %v671, %v670
      %v674 = vsel %vm239, %v611, 0
      %v677 = vand.u32 %v672, %v246
      %679 = vmatprep.subr.bf16.mxu0 0
      %680 = vmatpush1.bf16.msra.mxu0 %v677
      %681 = vmatprep.subr.bf16.mxu0 0
      %682 = vmatpush1.bf16.msra.mxu0 0
      %683 = vmatprep.subr.bf16.mxu0 0
      %684 = vmatpush1.bf16.msra.mxu0 0
      %685 = vmatprep.subr.bf16.mxu0 0
      %686 = vmatpush1.bf16.msra.mxu0 0
      %687 = vmatprep.subr.bf16.mxu0 0
      %688 = vmatpush1.bf16.msra.mxu0 0
      %689 = vmatprep.subr.bf16.mxu0 0
      %690 = vmatpush1.bf16.msra.mxu0 0
      %691 = vmatprep.subr.bf16.mxu0 0
      %692 = vmatpush1.bf16.msra.mxu0 0
      %693 = vmatprep.subr.bf16.mxu0 0
      %694 = vmatpush1.bf16.msra.mxu0 0
      %695 = vmatprep.subr.bf16.mxu0 0
      %696 = vmatpush1.bf16.msra.mxu0 0
      %697 = vmatprep.subr.bf16.mxu0 0
      %698 = vmatpush1.bf16.msra.mxu0 0
      %699 = vmatprep.subr.bf16.mxu0 0
      %700 = vmatpush1.bf16.msra.mxu0 0
      %701 = vmatprep.subr.bf16.mxu0 0
      %702 = vmatpush1.bf16.msra.mxu0 0
      %703 = vmatprep.subr.bf16.mxu0 0
      %704 = vmatpush1.bf16.msra.mxu0 0
      %705 = vmatprep.subr.bf16.mxu0 0
      %706 = vmatpush1.bf16.msra.mxu0 0
      %707 = vmatprep.subr.bf16.mxu0 0
      %708 = vmatpush1.bf16.msra.mxu0 0
      %709 = vmatprep.subr.bf16.mxu0 0
      %710 = vmatpush1.bf16.msra.mxu0 0
      %711 = vmatprep.mubr.bf16.mxu0 0
      %712 = vmatmul.mubr.bf16.gmra.mrb[0].mxu0 %v674
      %v713 = vpop.f32.mrb[0].mxu0
      %v714 = vadd.f32 %v663, %v713
      %v715 = vpop.f32.mrb[0].mxu0
      %v716 = vpop.f32.mrb[0].mxu0
      %v717 = vpop.f32.mrb[0].mxu0
      %718 = vdwg.mxu0
      %v719 = vld [vmem:[%s455] sm:$0xf]
      %v720 = vld [vmem:[%s343] sm:$0xf]
      %v721 = vld [vmem:[%s343 + $0x4] sm:$0xf]
      %v724 = vunpack.c.l.b16 %v720
      %v725 = vunpack.c.l.b16 %v721
      %v726 = vpack.c.b16 %v725, %v724
      %v728 = vsel %vm239, %v719, 0
      %v731 = vand.u32 %v726, %v246
      %733 = vmatprep.subr.bf16.mxu0 0
      %734 = vmatpush1.bf16.msra.mxu0 %v731
      %735 = vmatprep.subr.bf16.mxu0 0
      %736 = vmatpush1.bf16.msra.mxu0 0
      %737 = vmatprep.subr.bf16.mxu0 0
      %738 = vmatpush1.bf16.msra.mxu0 0
      %739 = vmatprep.subr.bf16.mxu0 0
      %740 = vmatpush1.bf16.msra.mxu0 0
      %741 = vmatprep.subr.bf16.mxu0 0
      %742 = vmatpush1.bf16.msra.mxu0 0
      %743 = vmatprep.subr.bf16.mxu0 0
      %744 = vmatpush1.bf16.msra.mxu0 0
      %745 = vmatprep.subr.bf16.mxu0 0
      %746 = vmatpush1.bf16.msra.mxu0 0
      %747 = vmatprep.subr.bf16.mxu0 0
      %748 = vmatpush1.bf16.msra.mxu0 0
      %749 = vmatprep.subr.bf16.mxu0 0
      %750 = vmatpush1.bf16.msra.mxu0 0
      %751 = vmatprep.subr.bf16.mxu0 0
      %752 = vmatpush1.bf16.msra.mxu0 0
      %753 = vmatprep.subr.bf16.mxu0 0
      %754 = vmatpush1.bf16.msra.mxu0 0
      %755 = vmatprep.subr.bf16.mxu0 0
      %756 = vmatpush1.bf16.msra.mxu0 0
      %757 = vmatprep.subr.bf16.mxu0 0
      %758 = vmatpush1.bf16.msra.mxu0 0
      %759 = vmatprep.subr.bf16.mxu0 0
      %760 = vmatpush1.bf16.msra.mxu0 0
      %761 = vmatprep.subr.bf16.mxu0 0
      %762 = vmatpush1.bf16.msra.mxu0 0
      %763 = vmatprep.subr.bf16.mxu0 0
      %764 = vmatpush1.bf16.msra.mxu0 0
      %765 = vmatprep.mubr.bf16.mxu0 0
      %766 = vmatmul.mubr.bf16.gmra.mrb[0].mxu0 %v728
      %v767 = vpop.f32.mrb[0].mxu0
      %v768 = vadd.f32 0.0, %v767
      %v769 = vpop.f32.mrb[0].mxu0
      %v770 = vpop.f32.mrb[0].mxu0
      %v771 = vpop.f32.mrb[0].mxu0
      %772 = vdwg.mxu0
      %v773 = vadd.f32 %v714, %v768
      %s774 = scalar_lea.vmem %s219, 20
      %v775 = vld [vmem:[%s774] sm:$0xf]
      %v776 = vld [vmem:[%s400] sm:$0xf]
      %v777 = vld [vmem:[%s400 + $0x4] sm:$0xf]
      %v780 = vunpack.c.l.b16 %v776
      %v781 = vunpack.c.l.b16 %v777
      %v782 = vpack.c.b16 %v781, %v780
      %v784 = vsel %vm239, %v775, 0
      %v787 = vand.u32 %v782, %v246
      %789 = vmatprep.subr.bf16.mxu0 0
      %790 = vmatpush1.bf16.msra.mxu0 %v787
      %791 = vmatprep.subr.bf16.mxu0 0
      %792 = vmatpush1.bf16.msra.mxu0 0
      %793 = vmatprep.subr.bf16.mxu0 0
      %794 = vmatpush1.bf16.msra.mxu0 0
      %795 = vmatprep.subr.bf16.mxu0 0
      %796 = vmatpush1.bf16.msra.mxu0 0
      %797 = vmatprep.subr.bf16.mxu0 0
      %798 = vmatpush1.bf16.msra.mxu0 0
      %799 = vmatprep.subr.bf16.mxu0 0
      %800 = vmatpush1.bf16.msra.mxu0 0
      %801 = vmatprep.subr.bf16.mxu0 0
      %802 = vmatpush1.bf16.msra.mxu0 0
      %803 = vmatprep.subr.bf16.mxu0 0
      %804 = vmatpush1.bf16.msra.mxu0 0
      %805 = vmatprep.subr.bf16.mxu0 0
      %806 = vmatpush1.bf16.msra.mxu0 0
      %807 = vmatprep.subr.bf16.mxu0 0
      %808 = vmatpush1.bf16.msra.mxu0 0
      %809 = vmatprep.subr.bf16.mxu0 0
      %810 = vmatpush1.bf16.msra.mxu0 0
      %811 = vmatprep.subr.bf16.mxu0 0
      %812 = vmatpush1.bf16.msra.mxu0 0
      %813 = vmatprep.subr.bf16.mxu0 0
      %814 = vmatpush1.bf16.msra.mxu0 0
      %815 = vmatprep.subr.bf16.mxu0 0
      %816 = vmatpush1.bf16.msra.mxu0 0
      %817 = vmatprep.subr.bf16.mxu0 0
      %818 = vmatpush1.bf16.msra.mxu0 0
      %819 = vmatprep.subr.bf16.mxu0 0
      %820 = vmatpush1.bf16.msra.mxu0 0
      %821 = vmatprep.mubr.bf16.mxu0 0
      %822 = vmatmul.mubr.bf16.gmra.mrb[0].mxu0 %v784
      %v823 = vpop.f32.mrb[0].mxu0
      %v824 = vadd.f32 0.0, %v823
      %v825 = vpop.f32.mrb[0].mxu0
      %v826 = vpop.f32.mrb[0].mxu0
      %v827 = vpop.f32.mrb[0].mxu0
      %828 = vdwg.mxu0
      %v829 = vadd.f32 %v773, %v824
      %s830 = scalar_lea.vmem %s219, 24
      %v831 = vld [vmem:[%s830] sm:$0xf]
      %v832 = vld [vmem:[%s457] sm:$0xf]
      %v833 = vld [vmem:[%s457 + $0x4] sm:$0xf]
      %v836 = vunpack.c.l.b16 %v832
      %v837 = vunpack.c.l.b16 %v833
      %v838 = vpack.c.b16 %v837, %v836
      %v840 = vsel %vm239, %v831, 0
      %v843 = vand.u32 %v838, %v246
      %845 = vmatprep.subr.bf16.mxu0 0
      %846 = vmatpush1.bf16.msra.mxu0 %v843
      %847 = vmatprep.subr.bf16.mxu0 0
      %848 = vmatpush1.bf16.msra.mxu0 0
      %849 = vmatprep.subr.bf16.mxu0 0
      %850 = vmatpush1.bf16.msra.mxu0 0
      %851 = vmatprep.subr.bf16.mxu0 0
      %852 = vmatpush1.bf16.msra.mxu0 0
      %853 = vmatprep.subr.bf16.mxu0 0
      %854 = vmatpush1.bf16.msra.mxu0 0
      %855 = vmatprep.subr.bf16.mxu0 0
      %856 = vmatpush1.bf16.msra.mxu0 0
      %857 = vmatprep.subr.bf16.mxu0 0
      %858 = vmatpush1.bf16.msra.mxu0 0
      %859 = vmatprep.subr.bf16.mxu0 0
      %860 = vmatpush1.bf16.msra.mxu0 0
      %861 = vmatprep.subr.bf16.mxu0 0
      %862 = vmatpush1.bf16.msra.mxu0 0
      %863 = vmatprep.subr.bf16.mxu0 0
      %864 = vmatpush1.bf16.msra.mxu0 0
      %865 = vmatprep.subr.bf16.mxu0 0
      %866 = vmatpush1.bf16.msra.mxu0 0
      %867 = vmatprep.subr.bf16.mxu0 0
      %868 = vmatpush1.bf16.msra.mxu0 0
      %869 = vmatprep.subr.bf16.mxu0 0
      %870 = vmatpush1.bf16.msra.mxu0 0
      %871 = vmatprep.subr.bf16.mxu0 0
      %872 = vmatpush1.bf16.msra.mxu0 0
      %873 = vmatprep.subr.bf16.mxu0 0
      %874 = vmatpush1.bf16.msra.mxu0 0
      %875 = vmatprep.subr.bf16.mxu0 0
      %876 = vmatpush1.bf16.msra.mxu0 0
      %877 = vmatprep.mubr.bf16.mxu0 0
      %878 = vmatmul.mubr.bf16.gmra.mrb[0].mxu0 %v840
      %v879 = vpop.f32.mrb[0].mxu0
      %v880 = vadd.f32 0.0, %v879
      %v881 = vpop.f32.mrb[0].mxu0
      %v882 = vpop.f32.mrb[0].mxu0
      %v883 = vpop.f32.mrb[0].mxu0
      %884 = vdwg.mxu0
      %v885 = vadd.f32 %v829, %v880
      %v886 = vld [vmem:[%s2] sm:$0x1]
      %v888 = vlaneseq
      %v889 = vshrl.u32 %v888, 7
      %v890 = vsub.s32 0, %v889
      %v891 = vrot.slane %v886, %v890
      %v893 = vadd.f32 %v885, %v891
      %v894 = vmul.f32 %v893, %v893
      %v895 = vld [vmem:[%s3] sm:$0xff]
      %v896 = vld [vmem:[%s3 + $0x8] sm:$0xff]
      %v897 = vld [vmem:[%s3 + $0x10] sm:$0xff]
      %v898 = vld [vmem:[%s3 + $0x18] sm:$0xff]
      %v899 = vld [vmem:[%s4] sm:$0x1]
      %v901 = vlaneseq
      %v902 = vshrl.u32 %v901, 7
      %v903 = vsub.s32 0, %v902
      %v904 = vrot.slane %v899, %v903
      %v907 = vsel %vm532, %v894, 0
      %909 = vmatprep.subr.mxu0 0.0
      %910 = vmatpush1.msra.mxu0 %v895
      %911 = vmatprep.subr.mxu0 0.0
      %912 = vmatpush1.msra.mxu0 %v896
      %913 = vmatprep.subr.mxu0 0.0
      %914 = vmatpush1.msra.mxu0 %v897
      %915 = vmatprep.subr.mxu0 0.0
      %916 = vmatpush1.msra.mxu0 %v898
      %917 = vmatprep.subr.mxu0 0.0
      %918 = vmatpush1.msra.mxu0 0.0
      %919 = vmatprep.subr.mxu0 0.0
      %920 = vmatpush1.msra.mxu0 0.0
      %921 = vmatprep.subr.mxu0 0.0
      %922 = vmatpush1.msra.mxu0 0.0
      %923 = vmatprep.subr.mxu0 0.0
      %924 = vmatpush1.msra.mxu0 0.0
      %925 = vmatprep.subr.mxu0 0.0
      %926 = vmatpush1.msra.mxu0 0.0
      %927 = vmatprep.subr.mxu0 0.0
      %928 = vmatpush1.msra.mxu0 0.0
      %929 = vmatprep.subr.mxu0 0.0
      %930 = vmatpush1.msra.mxu0 0.0
      %931 = vmatprep.subr.mxu0 0.0
      %932 = vmatpush1.msra.mxu0 0.0
      %933 = vmatprep.subr.mxu0 0.0
      %934 = vmatpush1.msra.mxu0 0.0
      %935 = vmatprep.subr.mxu0 0.0
      %936 = vmatpush1.msra.mxu0 0.0
      %937 = vmatprep.subr.mxu0 0.0
      %938 = vmatpush1.msra.mxu0 0.0
      %939 = vmatprep.subr.mxu0 0.0
      %940 = vmatpush1.msra.mxu0 0.0
      %941 = vmatprep.subr.mxu0 0.0
      %942 = vmatpush1.msra.mxu0 0.0
      %943 = vmatprep.subr.mxu0 0.0
      %944 = vmatpush1.msra.mxu0 0.0
      %945 = vmatprep.subr.mxu0 0.0
      %946 = vmatpush1.msra.mxu0 0.0
      %947 = vmatprep.subr.mxu0 0.0
      %948 = vmatpush1.msra.mxu0 0.0
      %949 = vmatprep.subr.mxu0 0.0
      %950 = vmatpush1.msra.mxu0 0.0
      %951 = vmatprep.subr.mxu0 0.0
      %952 = vmatpush1.msra.mxu0 0.0
      %953 = vmatprep.subr.mxu0 0.0
      %954 = vmatpush1.msra.mxu0 0.0
      %955 = vmatprep.subr.mxu0 0.0
      %956 = vmatpush1.msra.mxu0 0.0
      %957 = vmatprep.subr.mxu0 0.0
      %958 = vmatpush1.msra.mxu0 0.0
      %959 = vmatprep.subr.mxu0 0.0
      %960 = vmatpush1.msra.mxu0 0.0
      %961 = vmatprep.subr.mxu0 0.0
      %962 = vmatpush1.msra.mxu0 0.0
      %963 = vmatprep.subr.mxu0 0.0
      %964 = vmatpush1.msra.mxu0 0.0
      %965 = vmatprep.subr.mxu0 0.0
      %966 = vmatpush1.msra.mxu0 0.0
      %967 = vmatprep.subr.mxu0 0.0
      %968 = vmatpush1.msra.mxu0 0.0
      %969 = vmatprep.subr.mxu0 0.0
      %970 = vmatpush1.msra.mxu0 0.0
      %971 = vmatprep.subr.mxu0 0.0
      %972 = vmatpush1.msra.mxu0 0.0
      %973 = vmatprep.mubr.f32.mxu0 0.0
      %974 = vmatmul.mubr.f32.gmra.mrb[0].mxu0 %v907
      %v975 = vpop.f32.mrb[0].mxu0
      %v976 = vadd.f32 %v904, %v975
      %v977 = vpop.f32.mrb[0].mxu0
      %978 = vdwg.mxu0
      %v979 = vrsqrt.pop %v976
      %v980 = vmul.f32 %v893, %v979
      %v981 = vpack.c.bf16 %v980, %v980
      %s982 = scalar_lea.vmem %s224, 4
      %983 = vst.msk [vmem:[%s982] sm:$0xf] %vm609, %v981
      %v984 = vld [vmem:[%s455] sm:$0xf]
      %v985 = vld [vmem:[%s1] sm:$0xf]
      %v986 = vld [vmem:[%s1 + $0x4] sm:$0xf]
      %v987 = vld [vmem:[%s774] sm:$0xf]
      %v988 = vld [vmem:[%s231] sm:$0xf]
      %v989 = vld [vmem:[%s231 + $0x4] sm:$0xf]
      %v992 = vunpack.c.l.b16 %v988
      %v993 = vunpack.c.l.b16 %v989
      %v994 = vpack.c.b16 %v993, %v992
      %v996 = vsel %vm239, %v987, 0
      %v999 = vand.u32 %v994, %v246
      %1001 = vmatprep.subr.bf16.mxu0 0
      %1002 = vmatpush1.bf16.msra.mxu0 %v999
      %1003 = vmatprep.subr.bf16.mxu0 0
      %1004 = vmatpush1.bf16.msra.mxu0 0
      %1005 = vmatprep.subr.bf16.mxu0 0
      %1006 = vmatpush1.bf16.msra.mxu0 0
      %1007 = vmatprep.subr.bf16.mxu0 0
      %1008 = vmatpush1.bf16.msra.mxu0 0
      %1009 = vmatprep.subr.bf16.mxu0 0
      %1010 = vmatpush1.bf16.msra.mxu0 0
      %1011 = vmatprep.subr.bf16.mxu0 0
      %1012 = vmatpush1.bf16.msra.mxu0 0
      %1013 = vmatprep.subr.bf16.mxu0 0
      %1014 = vmatpush1.bf16.msra.mxu0 0
      %1015 = vmatprep.subr.bf16.mxu0 0
      %1016 = vmatpush1.bf16.msra.mxu0 0
      %1017 = vmatprep.subr.bf16.mxu0 0
      %1018 = vmatpush1.bf16.msra.mxu0 0
      %1019 = vmatprep.subr.bf16.mxu0 0
      %1020 = vmatpush1.bf16.msra.mxu0 0
      %1021 = vmatprep.subr.bf16.mxu0 0
      %1022 = vmatpush1.bf16.msra.mxu0 0
      %1023 = vmatprep.subr.bf16.mxu0 0
      %1024 = vmatpush1.bf16.msra.mxu0 0
      %1025 = vmatprep.subr.bf16.mxu0 0
      %1026 = vmatpush1.bf16.msra.mxu0 0
      %1027 = vmatprep.subr.bf16.mxu0 0
      %1028 = vmatpush1.bf16.msra.mxu0 0
      %1029 = vmatprep.subr.bf16.mxu0 0
      %1030 = vmatpush1.bf16.msra.mxu0 0
      %1031 = vmatprep.subr.bf16.mxu0 0
      %1032 = vmatpush1.bf16.msra.mxu0 0
      %1033 = vmatprep.mubr.bf16.mxu0 0
      %1034 = vmatmul.mubr.bf16.gmra.mrb[0].mxu0 %v996
      %v1035 = vpop.f32.mrb[0].mxu0
      %v1036 = vadd.f32 0.0, %v1035
      %v1037 = vpop.f32.mrb[0].mxu0
      %v1038 = vpop.f32.mrb[0].mxu0
      %v1039 = vpop.f32.mrb[0].mxu0
      %1040 = vdwg.mxu0
      %v1043 = vunpack.c.l.b16 %v985
      %v1044 = vunpack.c.l.b16 %v986
      %v1045 = vpack.c.b16 %v1044, %v1043
      %v1047 = vsel %vm239, %v984, 0
      %v1050 = vand.u32 %v1045, %v246
      %1052 = vmatprep.subr.bf16.mxu0 0
      %1053 = vmatpush1.bf16.msra.mxu0 %v1050
      %1054 = vmatprep.subr.bf16.mxu0 0
      %1055 = vmatpush1.bf16.msra.mxu0 0
      %1056 = vmatprep.subr.bf16.mxu0 0
      %1057 = vmatpush1.bf16.msra.mxu0 0
      %1058 = vmatprep.subr.bf16.mxu0 0
      %1059 = vmatpush1.bf16.msra.mxu0 0
      %1060 = vmatprep.subr.bf16.mxu0 0
      %1061 = vmatpush1.bf16.msra.mxu0 0
      %1062 = vmatprep.subr.bf16.mxu0 0
      %1063 = vmatpush1.bf16.msra.mxu0 0
      %1064 = vmatprep.subr.bf16.mxu0 0
      %1065 = vmatpush1.bf16.msra.mxu0 0
      %1066 = vmatprep.subr.bf16.mxu0 0
      %1067 = vmatpush1.bf16.msra.mxu0 0
      %1068 = vmatprep.subr.bf16.mxu0 0
      %1069 = vmatpush1.bf16.msra.mxu0 0
      %1070 = vmatprep.subr.bf16.mxu0 0
      %1071 = vmatpush1.bf16.msra.mxu0 0
      %1072 = vmatprep.subr.bf16.mxu0 0
      %1073 = vmatpush1.bf16.msra.mxu0 0
      %1074 = vmatprep.subr.bf16.mxu0 0
      %1075 = vmatpush1.bf16.msra.mxu0 0
      %1076 = vmatprep.subr.bf16.mxu0 0
      %1077 = vmatpush1.bf16.msra.mxu0 0
      %1078 = vmatprep.subr.bf16.mxu0 0
      %1079 = vmatpush1.bf16.msra.mxu0 0
      %1080 = vmatprep.subr.bf16.mxu0 0
      %1081 = vmatpush1.bf16.msra.mxu0 0
      %1082 = vmatprep.subr.bf16.mxu0 0
      %1083 = vmatpush1.bf16.msra.mxu0 0
      %1084 = vmatprep.mubr.bf16.mxu0 0
      %1085 = vmatmul.mubr.bf16.gmra.mrb[0].mxu0 %v1047
      %v1086 = vpop.f32.mrb[0].mxu0
      %v1087 = vadd.f32 %v1036, %v1086
      %v1088 = vpop.f32.mrb[0].mxu0
      %v1089 = vpop.f32.mrb[0].mxu0
      %v1090 = vpop.f32.mrb[0].mxu0
      %1091 = vdwg.mxu0
      %v1092 = vld [vmem:[%s830] sm:$0xf]
      %v1093 = vld [vmem:[%s343] sm:$0xf]
      %v1094 = vld [vmem:[%s343 + $0x4] sm:$0xf]
      %v1097 = vunpack.c.l.b16 %v1093
      %v1098 = vunpack.c.l.b16 %v1094
      %v1099 = vpack.c.b16 %v1098, %v1097
      %v1101 = vsel %vm239, %v1092, 0
      %v1104 = vand.u32 %v1099, %v246
      %1106 = vmatprep.subr.bf16.mxu0 0
      %1107 = vmatpush1.bf16.msra.mxu0 %v1104
      %1108 = vmatprep.subr.bf16.mxu0 0
      %1109 = vmatpush1.bf16.msra.mxu0 0
      %1110 = vmatprep.subr.bf16.mxu0 0
      %1111 = vmatpush1.bf16.msra.mxu0 0
      %1112 = vmatprep.subr.bf16.mxu0 0
      %1113 = vmatpush1.bf16.msra.mxu0 0
      %1114 = vmatprep.subr.bf16.mxu0 0
      %1115 = vmatpush1.bf16.msra.mxu0 0
      %1116 = vmatprep.subr.bf16.mxu0 0
      %1117 = vmatpush1.bf16.msra.mxu0 0
      %1118 = vmatprep.subr.bf16.mxu0 0
      %1119 = vmatpush1.bf16.msra.mxu0 0
      %1120 = vmatprep.subr.bf16.mxu0 0
      %1121 = vmatpush1.bf16.msra.mxu0 0
      %1122 = vmatprep.subr.bf16.mxu0 0
      %1123 = vmatpush1.bf16.msra.mxu0 0
      %1124 = vmatprep.subr.bf16.mxu0 0
      %1125 = vmatpush1.bf16.msra.mxu0 0
      %1126 = vmatprep.subr.bf16.mxu0 0
      %1127 = vmatpush1.bf16.msra.mxu0 0
      %1128 = vmatprep.subr.bf16.mxu0 0
      %1129 = vmatpush1.bf16.msra.mxu0 0
      %1130 = vmatprep.subr.bf16.mxu0 0
      %1131 = vmatpush1.bf16.msra.mxu0 0
      %1132 = vmatprep.subr.bf16.mxu0 0
      %1133 = vmatpush1.bf16.msra.mxu0 0
      %1134 = vmatprep.subr.bf16.mxu0 0
      %1135 = vmatpush1.bf16.msra.mxu0 0
      %1136 = vmatprep.subr.bf16.mxu0 0
      %1137 = vmatpush1.bf16.msra.mxu0 0
      %1138 = vmatprep.mubr.bf16.mxu0 0
      %1139 = vmatmul.mubr.bf16.gmra.mrb[0].mxu0 %v1101
      %v1140 = vpop.f32.mrb[0].mxu0
      %v1141 = vadd.f32 0.0, %v1140
      %v1142 = vpop.f32.mrb[0].mxu0
      %v1143 = vpop.f32.mrb[0].mxu0
      %v1144 = vpop.f32.mrb[0].mxu0
      %1145 = vdwg.mxu0
      %v1146 = vadd.f32 %v1087, %v1141
      %s1147 = scalar_lea.vmem %s219, 28
      %v1148 = vld [vmem:[%s1147] sm:$0xf]
      %v1149 = vld [vmem:[%s400] sm:$0xf]
      %v1150 = vld [vmem:[%s400 + $0x4] sm:$0xf]
      %v1153 = vunpack.c.l.b16 %v1149
      %v1154 = vunpack.c.l.b16 %v1150
      %v1155 = vpack.c.b16 %v1154, %v1153
      %v1157 = vsel %vm239, %v1148, 0
      %v1160 = vand.u32 %v1155, %v246
      %1162 = vmatprep.subr.bf16.mxu0 0
      %1163 = vmatpush1.bf16.msra.mxu0 %v1160
      %1164 = vmatprep.subr.bf16.mxu0 0
      %1165 = vmatpush1.bf16.msra.mxu0 0
      %1166 = vmatprep.subr.bf16.mxu0 0
      %1167 = vmatpush1.bf16.msra.mxu0 0
      %1168 = vmatprep.subr.bf16.mxu0 0
      %1169 = vmatpush1.bf16.msra.mxu0 0
      %1170 = vmatprep.subr.bf16.mxu0 0
      %1171 = vmatpush1.bf16.msra.mxu0 0
      %1172 = vmatprep.subr.bf16.mxu0 0
      %1173 = vmatpush1.bf16.msra.mxu0 0
      %1174 = vmatprep.subr.bf16.mxu0 0
      %1175 = vmatpush1.bf16.msra.mxu0 0
      %1176 = vmatprep.subr.bf16.mxu0 0
      %1177 = vmatpush1.bf16.msra.mxu0 0
      %1178 = vmatprep.subr.bf16.mxu0 0
      %1179 = vmatpush1.bf16.msra.mxu0 0
      %1180 = vmatprep.subr.bf16.mxu0 0
      %1181 = vmatpush1.bf16.msra.mxu0 0
      %1182 = vmatprep.subr.bf16.mxu0 0
      %1183 = vmatpush1.bf16.msra.mxu0 0
      %1184 = vmatprep.subr.bf16.mxu0 0
      %1185 = vmatpush1.bf16.msra.mxu0 0
      %1186 = vmatprep.subr.bf16.mxu0 0
      %1187 = vmatpush1.bf16.msra.mxu0 0
      %1188 = vmatprep.subr.bf16.mxu0 0
      %1189 = vmatpush1.bf16.msra.mxu0 0
      %1190 = vmatprep.subr.bf16.mxu0 0
      %1191 = vmatpush1.bf16.msra.mxu0 0
      %1192 = vmatprep.subr.bf16.mxu0 0
      %1193 = vmatpush1.bf16.msra.mxu0 0
      %1194 = vmatprep.mubr.bf16.mxu0 0
      %1195 = vmatmul.mubr.bf16.gmra.mrb[0].mxu0 %v1157
      %v1196 = vpop.f32.mrb[0].mxu0
      %v1197 = vadd.f32 0.0, %v1196
      %v1198 = vpop.f32.mrb[0].mxu0
      %v1199 = vpop.f32.mrb[0].mxu0
      %v1200 = vpop.f32.mrb[0].mxu0
      %1201 = vdwg.mxu0
      %v1202 = vadd.f32 %v1146, %v1197
      %s1203 = scalar_lea.vmem %s219, 32
      %v1204 = vld [vmem:[%s1203] sm:$0xf]
      %v1205 = vld [vmem:[%s457] sm:$0xf]
      %v1206 = vld [vmem:[%s457 + $0x4] sm:$0xf]
      %v1209 = vunpack.c.l.b16 %v1205
      %v1210 = vunpack.c.l.b16 %v1206
      %v1211 = vpack.c.b16 %v1210, %v1209
      %v1213 = vsel %vm239, %v1204, 0
      %v1216 = vand.u32 %v1211, %v246
      %1218 = vmatprep.subr.bf16.mxu0 0
      %1219 = vmatpush1.bf16.msra.mxu0 %v1216
      %1220 = vmatprep.subr.bf16.mxu0 0
      %1221 = vmatpush1.bf16.msra.mxu0 0
      %1222 = vmatprep.subr.bf16.mxu0 0
      %1223 = vmatpush1.bf16.msra.mxu0 0
      %1224 = vmatprep.subr.bf16.mxu0 0
      %1225 = vmatpush1.bf16.msra.mxu0 0
      %1226 = vmatprep.subr.bf16.mxu0 0
      %1227 = vmatpush1.bf16.msra.mxu0 0
      %1228 = vmatprep.subr.bf16.mxu0 0
      %1229 = vmatpush1.bf16.msra.mxu0 0
      %1230 = vmatprep.subr.bf16.mxu0 0
      %1231 = vmatpush1.bf16.msra.mxu0 0
      %1232 = vmatprep.subr.bf16.mxu0 0
      %1233 = vmatpush1.bf16.msra.mxu0 0
      %1234 = vmatprep.subr.bf16.mxu0 0
      %1235 = vmatpush1.bf16.msra.mxu0 0
      %1236 = vmatprep.subr.bf16.mxu0 0
      %1237 = vmatpush1.bf16.msra.mxu0 0
      %1238 = vmatprep.subr.bf16.mxu0 0
      %1239 = vmatpush1.bf16.msra.mxu0 0
      %1240 = vmatprep.subr.bf16.mxu0 0
      %1241 = vmatpush1.bf16.msra.mxu0 0
      %1242 = vmatprep.subr.bf16.mxu0 0
      %1243 = vmatpush1.bf16.msra.mxu0 0
      %1244 = vmatprep.subr.bf16.mxu0 0
      %1245 = vmatpush1.bf16.msra.mxu0 0
      %1246 = vmatprep.subr.bf16.mxu0 0
      %1247 = vmatpush1.bf16.msra.mxu0 0
      %1248 = vmatprep.subr.bf16.mxu0 0
      %1249 = vmatpush1.bf16.msra.mxu0 0
      %1250 = vmatprep.mubr.bf16.mxu0 0
      %1251 = vmatmul.mubr.bf16.gmra.mrb[0].mxu0 %v1213
      %v1252 = vpop.f32.mrb[0].mxu0
      %v1253 = vadd.f32 0.0, %v1252
      %v1254 = vpop.f32.mrb[0].mxu0
      %v1255 = vpop.f32.mrb[0].mxu0
      %v1256 = vpop.f32.mrb[0].mxu0
      %1257 = vdwg.mxu0
      %v1258 = vadd.f32 %v1202, %v1253
      %v1259 = vld [vmem:[%s2] sm:$0x1]
      %v1261 = vlaneseq
      %v1262 = vshrl.u32 %v1261, 7
      %v1263 = vsub.s32 0, %v1262
      %v1264 = vrot.slane %v1259, %v1263
      %v1266 = vadd.f32 %v1258, %v1264
      %v1267 = vmul.f32 %v1266, %v1266
      %v1268 = vld [vmem:[%s3] sm:$0xff]
      %v1269 = vld [vmem:[%s3 + $0x8] sm:$0xff]
      %v1270 = vld [vmem:[%s3 + $0x10] sm:$0xff]
      %v1271 = vld [vmem:[%s3 + $0x18] sm:$0xff]
      %v1272 = vld [vmem:[%s4] sm:$0x1]
      %v1274 = vlaneseq
      %v1275 = vshrl.u32 %v1274, 7
      %v1276 = vsub.s32 0, %v1275
      %v1277 = vrot.slane %v1272, %v1276
      %v1280 = vsel %vm532, %v1267, 0
      %1282 = vmatprep.subr.mxu0 0.0
      %1283 = vmatpush1.msra.mxu0 %v1268
      %1284 = vmatprep.subr.mxu0 0.0
      %1285 = vmatpush1.msra.mxu0 %v1269
      %1286 = vmatprep.subr.mxu0 0.0
      %1287 = vmatpush1.msra.mxu0 %v1270
      %1288 = vmatprep.subr.mxu0 0.0
      %1289 = vmatpush1.msra.mxu0 %v1271
      %1290 = vmatprep.subr.mxu0 0.0
      %1291 = vmatpush1.msra.mxu0 0.0
      %1292 = vmatprep.subr.mxu0 0.0
      %1293 = vmatpush1.msra.mxu0 0.0
      %1294 = vmatprep.subr.mxu0 0.0
      %1295 = vmatpush1.msra.mxu0 0.0
      %1296 = vmatprep.subr.mxu0 0.0
      %1297 = vmatpush1.msra.mxu0 0.0
      %1298 = vmatprep.subr.mxu0 0.0
      %1299 = vmatpush1.msra.mxu0 0.0
      %1300 = vmatprep.subr.mxu0 0.0
      %1301 = vmatpush1.msra.mxu0 0.0
      %1302 = vmatprep.subr.mxu0 0.0
      %1303 = vmatpush1.msra.mxu0 0.0
      %1304 = vmatprep.subr.mxu0 0.0
      %1305 = vmatpush1.msra.mxu0 0.0
      %1306 = vmatprep.subr.mxu0 0.0
      %1307 = vmatpush1.msra.mxu0 0.0
      %1308 = vmatprep.subr.mxu0 0.0
      %1309 = vmatpush1.msra.mxu0 0.0
      %1310 = vmatprep.subr.mxu0 0.0
      %1311 = vmatpush1.msra.mxu0 0.0
      %1312 = vmatprep.subr.mxu0 0.0
      %1313 = vmatpush1.msra.mxu0 0.0
      %1314 = vmatprep.subr.mxu0 0.0
      %1315 = vmatpush1.msra.mxu0 0.0
      %1316 = vmatprep.subr.mxu0 0.0
      %1317 = vmatpush1.msra.mxu0 0.0
      %1318 = vmatprep.subr.mxu0 0.0
      %1319 = vmatpush1.msra.mxu0 0.0
      %1320 = vmatprep.subr.mxu0 0.0
      %1321 = vmatpush1.msra.mxu0 0.0
      %1322 = vmatprep.subr.mxu0 0.0
      %1323 = vmatpush1.msra.mxu0 0.0
      %1324 = vmatprep.subr.mxu0 0.0
      %1325 = vmatpush1.msra.mxu0 0.0
      %1326 = vmatprep.subr.mxu0 0.0
      %1327 = vmatpush1.msra.mxu0 0.0
      %1328 = vmatprep.subr.mxu0 0.0
      %1329 = vmatpush1.msra.mxu0 0.0
      %1330 = vmatprep.subr.mxu0 0.0
      %1331 = vmatpush1.msra.mxu0 0.0
      %1332 = vmatprep.subr.mxu0 0.0
      %1333 = vmatpush1.msra.mxu0 0.0
      %1334 = vmatprep.subr.mxu0 0.0
      %1335 = vmatpush1.msra.mxu0 0.0
      %1336 = vmatprep.subr.mxu0 0.0
      %1337 = vmatpush1.msra.mxu0 0.0
      %1338 = vmatprep.subr.mxu0 0.0
      %1339 = vmatpush1.msra.mxu0 0.0
      %1340 = vmatprep.subr.mxu0 0.0
      %1341 = vmatpush1.msra.mxu0 0.0
      %1342 = vmatprep.subr.mxu0 0.0
      %1343 = vmatpush1.msra.mxu0 0.0
      %1344 = vmatprep.subr.mxu0 0.0
      %1345 = vmatpush1.msra.mxu0 0.0
      %1346 = vmatprep.mubr.f32.mxu0 0.0
      %1347 = vmatmul.mubr.f32.gmra.mrb[0].mxu0 %v1280
      %v1348 = vpop.f32.mrb[0].mxu0
      %v1349 = vadd.f32 %v1277, %v1348
      %v1350 = vpop.f32.mrb[0].mxu0
      %1351 = vdwg.mxu0
      %v1352 = vrsqrt.pop %v1349
      %v1353 = vmul.f32 %v1266, %v1352
      %v1354 = vpack.c.bf16 %v1353, %v1353
      %s1355 = scalar_lea.vmem %s224, 8
      %1356 = vst.msk [vmem:[%s1355] sm:$0xf] %vm609, %v1354
      %v1357 = vld [vmem:[%s830] sm:$0xf]
      %v1358 = vld [vmem:[%s1] sm:$0xf]
      %v1359 = vld [vmem:[%s1 + $0x4] sm:$0xf]
      %v1360 = vld [vmem:[%s1147] sm:$0xf]
      %v1361 = vld [vmem:[%s231] sm:$0xf]
      %v1362 = vld [vmem:[%s231 + $0x4] sm:$0xf]
      %v1365 = vunpack.c.l.b16 %v1361
      %v1366 = vunpack.c.l.b16 %v1362
      %v1367 = vpack.c.b16 %v1366, %v1365
      %v1369 = vsel %vm239, %v1360, 0
      %v1372 = vand.u32 %v1367, %v246
      %1374 = vmatprep.subr.bf16.mxu0 0
      %1375 = vmatpush1.bf16.msra.mxu0 %v1372
      %1376 = vmatprep.subr.bf16.mxu0 0
      %1377 = vmatpush1.bf16.msra.mxu0 0
      %1378 = vmatprep.subr.bf16.mxu0 0
      %1379 = vmatpush1.bf16.msra.mxu0 0
      %1380 = vmatprep.subr.bf16.mxu0 0
      %1381 = vmatpush1.bf16.msra.mxu0 0
      %1382 = vmatprep.subr.bf16.mxu0 0
      %1383 = vmatpush1.bf16.msra.mxu0 0
      %1384 = vmatprep.subr.bf16.mxu0 0
      %1385 = vmatpush1.bf16.msra.mxu0 0
      %1386 = vmatprep.subr.bf16.mxu0 0
      %1387 = vmatpush1.bf16.msra.mxu0 0
      %1388 = vmatprep.subr.bf16.mxu0 0
      %1389 = vmatpush1.bf16.msra.mxu0 0
      %1390 = vmatprep.subr.bf16.mxu0 0
      %1391 = vmatpush1.bf16.msra.mxu0 0
      %1392 = vmatprep.subr.bf16.mxu0 0
      %1393 = vmatpush1.bf16.msra.mxu0 0
      %1394 = vmatprep.subr.bf16.mxu0 0
      %1395 = vmatpush1.bf16.msra.mxu0 0
      %1396 = vmatprep.subr.bf16.mxu0 0
      %1397 = vmatpush1.bf16.msra.mxu0 0
      %1398 = vmatprep.subr.bf16.mxu0 0
      %1399 = vmatpush1.bf16.msra.mxu0 0
      %1400 = vmatprep.subr.bf16.mxu0 0
      %1401 = vmatpush1.bf16.msra.mxu0 0
      %1402 = vmatprep.subr.bf16.mxu0 0
      %1403 = vmatpush1.bf16.msra.mxu0 0
      %1404 = vmatprep.subr.bf16.mxu0 0
      %1405 = vmatpush1.bf16.msra.mxu0 0
      %1406 = vmatprep.mubr.bf16.mxu0 0
      %1407 = vmatmul.mubr.bf16.gmra.mrb[0].mxu0 %v1369
      %v1408 = vpop.f32.mrb[0].mxu0
      %v1409 = vadd.f32 0.0, %v1408
      %v1410 = vpop.f32.mrb[0].mxu0
      %v1411 = vpop.f32.mrb[0].mxu0
      %v1412 = vpop.f32.mrb[0].mxu0
      %1413 = vdwg.mxu0
      %v1416 = vunpack.c.l.b16 %v1358
      %v1417 = vunpack.c.l.b16 %v1359
      %v1418 = vpack.c.b16 %v1417, %v1416
      %v1420 = vsel %vm239, %v1357, 0
      %v1423 = vand.u32 %v1418, %v246
      %1425 = vmatprep.subr.bf16.mxu0 0
      %1426 = vmatpush1.bf16.msra.mxu0 %v1423
      %1427 = vmatprep.subr.bf16.mxu0 0
      %1428 = vmatpush1.bf16.msra.mxu0 0
      %1429 = vmatprep.subr.bf16.mxu0 0
      %1430 = vmatpush1.bf16.msra.mxu0 0
      %1431 = vmatprep.subr.bf16.mxu0 0
      %1432 = vmatpush1.bf16.msra.mxu0 0
      %1433 = vmatprep.subr.bf16.mxu0 0
      %1434 = vmatpush1.bf16.msra.mxu0 0
      %1435 = vmatprep.subr.bf16.mxu0 0
      %1436 = vmatpush1.bf16.msra.mxu0 0
      %1437 = vmatprep.subr.bf16.mxu0 0
      %1438 = vmatpush1.bf16.msra.mxu0 0
      %1439 = vmatprep.subr.bf16.mxu0 0
      %1440 = vmatpush1.bf16.msra.mxu0 0
      %1441 = vmatprep.subr.bf16.mxu0 0
      %1442 = vmatpush1.bf16.msra.mxu0 0
      %1443 = vmatprep.subr.bf16.mxu0 0
      %1444 = vmatpush1.bf16.msra.mxu0 0
      %1445 = vmatprep.subr.bf16.mxu0 0
      %1446 = vmatpush1.bf16.msra.mxu0 0
      %1447 = vmatprep.subr.bf16.mxu0 0
      %1448 = vmatpush1.bf16.msra.mxu0 0
      %1449 = vmatprep.subr.bf16.mxu0 0
      %1450 = vmatpush1.bf16.msra.mxu0 0
      %1451 = vmatprep.subr.bf16.mxu0 0
      %1452 = vmatpush1.bf16.msra.mxu0 0
      %1453 = vmatprep.subr.bf16.mxu0 0
      %1454 = vmatpush1.bf16.msra.mxu0 0
      %1455 = vmatprep.subr.bf16.mxu0 0
      %1456 = vmatpush1.bf16.msra.mxu0 0
      %1457 = vmatprep.mubr.bf16.mxu0 0
      %1458 = vmatmul.mubr.bf16.gmra.mrb[0].mxu0 %v1420
      %v1459 = vpop.f32.mrb[0].mxu0
      %v1460 = vadd.f32 %v1409, %v1459
      %v1461 = vpop.f32.mrb[0].mxu0
      %v1462 = vpop.f32.mrb[0].mxu0
      %v1463 = vpop.f32.mrb[0].mxu0
      %1464 = vdwg.mxu0
      %v1465 = vld [vmem:[%s1203] sm:$0xf]
      %v1466 = vld [vmem:[%s343] sm:$0xf]
      %v1467 = vld [vmem:[%s343 + $0x4] sm:$0xf]
      %v1470 = vunpack.c.l.b16 %v1466
      %v1471 = vunpack.c.l.b16 %v1467
      %v1472 = vpack.c.b16 %v1471, %v1470
      %v1474 = vsel %vm239, %v1465, 0
      %v1477 = vand.u32 %v1472, %v246
      %1479 = vmatprep.subr.bf16.mxu0 0
      %1480 = vmatpush1.bf16.msra.mxu0 %v1477
      %1481 = vmatprep.subr.bf16.mxu0 0
      %1482 = vmatpush1.bf16.msra.mxu0 0
      %1483 = vmatprep.subr.bf16.mxu0 0
      %1484 = vmatpush1.bf16.msra.mxu0 0
      %1485 = vmatprep.subr.bf16.mxu0 0
      %1486 = vmatpush1.bf16.msra.mxu0 0
      %1487 = vmatprep.subr.bf16.mxu0 0
      %1488 = vmatpush1.bf16.msra.mxu0 0
      %1489 = vmatprep.subr.bf16.mxu0 0
      %1490 = vmatpush1.bf16.msra.mxu0 0
      %1491 = vmatprep.subr.bf16.mxu0 0
      %1492 = vmatpush1.bf16.msra.mxu0 0
      %1493 = vmatprep.subr.bf16.mxu0 0
      %1494 = vmatpush1.bf16.msra.mxu0 0
      %1495 = vmatprep.subr.bf16.mxu0 0
      %1496 = vmatpush1.bf16.msra.mxu0 0
      %1497 = vmatprep.subr.bf16.mxu0 0
      %1498 = vmatpush1.bf16.msra.mxu0 0
      %1499 = vmatprep.subr.bf16.mxu0 0
      %1500 = vmatpush1.bf16.msra.mxu0 0
      %1501 = vmatprep.subr.bf16.mxu0 0
      %1502 = vmatpush1.bf16.msra.mxu0 0
      %1503 = vmatprep.subr.bf16.mxu0 0
      %1504 = vmatpush1.bf16.msra.mxu0 0
      %1505 = vmatprep.subr.bf16.mxu0 0
      %1506 = vmatpush1.bf16.msra.mxu0 0
      %1507 = vmatprep.subr.bf16.mxu0 0
      %1508 = vmatpush1.bf16.msra.mxu0 0
      %1509 = vmatprep.subr.bf16.mxu0 0
      %1510 = vmatpush1.bf16.msra.mxu0 0
      %1511 = vmatprep.mubr.bf16.mxu0 0
      %1512 = vmatmul.mubr.bf16.gmra.mrb[0].mxu0 %v1474
      %v1513 = vpop.f32.mrb[0].mxu0
      %v1514 = vadd.f32 0.0, %v1513
      %v1515 = vpop.f32.mrb[0].mxu0
      %v1516 = vpop.f32.mrb[0].mxu0
      %v1517 = vpop.f32.mrb[0].mxu0
      %1518 = vdwg.mxu0
      %v1519 = vadd.f32 %v1460, %v1514
      %s1520 = scalar_lea.vmem %s219, 36
      %v1521 = vld [vmem:[%s1520] sm:$0xf]
      %v1522 = vld [vmem:[%s400] sm:$0xf]
      %v1523 = vld [vmem:[%s400 + $0x4] sm:$0xf]
      %v1526 = vunpack.c.l.b16 %v1522
      %v1527 = vunpack.c.l.b16 %v1523
      %v1528 = vpack.c.b16 %v1527, %v1526
      %v1530 = vsel %vm239, %v1521, 0
      %v1533 = vand.u32 %v1528, %v246
      %1535 = vmatprep.subr.bf16.mxu0 0
      %1536 = vmatpush1.bf16.msra.mxu0 %v1533
      %1537 = vmatprep.subr.bf16.mxu0 0
      %1538 = vmatpush1.bf16.msra.mxu0 0
      %1539 = vmatprep.subr.bf16.mxu0 0
      %1540 = vmatpush1.bf16.msra.mxu0 0
      %1541 = vmatprep.subr.bf16.mxu0 0
      %1542 = vmatpush1.bf16.msra.mxu0 0
      %1543 = vmatprep.subr.bf16.mxu0 0
      %1544 = vmatpush1.bf16.msra.mxu0 0
      %1545 = vmatprep.subr.bf16.mxu0 0
      %1546 = vmatpush1.bf16.msra.mxu0 0
      %1547 = vmatprep.subr.bf16.mxu0 0
      %1548 = vmatpush1.bf16.msra.mxu0 0
      %1549 = vmatprep.subr.bf16.mxu0 0
      %1550 = vmatpush1.bf16.msra.mxu0 0
      %1551 = vmatprep.subr.bf16.mxu0 0
      %1552 = vmatpush1.bf16.msra.mxu0 0
      %1553 = vmatprep.subr.bf16.mxu0 0
      %1554 = vmatpush1.bf16.msra.mxu0 0
      %1555 = vmatprep.subr.bf16.mxu0 0
      %1556 = vmatpush1.bf16.msra.mxu0 0
      %1557 = vmatprep.subr.bf16.mxu0 0
      %1558 = vmatpush1.bf16.msra.mxu0 0
      %1559 = vmatprep.subr.bf16.mxu0 0
      %1560 = vmatpush1.bf16.msra.mxu0 0
      %1561 = vmatprep.subr.bf16.mxu0 0
      %1562 = vmatpush1.bf16.msra.mxu0 0
      %1563 = vmatprep.subr.bf16.mxu0 0
      %1564 = vmatpush1.bf16.msra.mxu0 0
      %1565 = vmatprep.subr.bf16.mxu0 0
      %1566 = vmatpush1.bf16.msra.mxu0 0
      %1567 = vmatprep.mubr.bf16.mxu0 0
      %1568 = vmatmul.mubr.bf16.gmra.mrb[0].mxu0 %v1530
      %v1569 = vpop.f32.mrb[0].mxu0
      %v1570 = vadd.f32 0.0, %v1569
      %v1571 = vpop.f32.mrb[0].mxu0
      %v1572 = vpop.f32.mrb[0].mxu0
      %v1573 = vpop.f32.mrb[0].mxu0
      %1574 = vdwg.mxu0
      %v1575 = vadd.f32 %v1519, %v1570
      %s1576 = scalar_lea.vmem %s219, 40
      %v1577 = vld [vmem:[%s1576] sm:$0xf]
      %v1578 = vld [vmem:[%s457] sm:$0xf]
      %v1579 = vld [vmem:[%s457 + $0x4] sm:$0xf]
      %v1582 = vunpack.c.l.b16 %v1578
      %v1583 = vunpack.c.l.b16 %v1579
      %v1584 = vpack.c.b16 %v1583, %v1582
      %v1586 = vsel %vm239, %v1577, 0
      %v1589 = vand.u32 %v1584, %v246
      %1591 = vmatprep.subr.bf16.mxu0 0
      %1592 = vmatpush1.bf16.msra.mxu0 %v1589
      %1593 = vmatprep.subr.bf16.mxu0 0
      %1594 = vmatpush1.bf16.msra.mxu0 0
      %1595 = vmatprep.subr.bf16.mxu0 0
      %1596 = vmatpush1.bf16.msra.mxu0 0
      %1597 = vmatprep.subr.bf16.mxu0 0
      %1598 = vmatpush1.bf16.msra.mxu0 0
      %1599 = vmatprep.subr.bf16.mxu0 0
      %1600 = vmatpush1.bf16.msra.mxu0 0
      %1601 = vmatprep.subr.bf16.mxu0 0
      %1602 = vmatpush1.bf16.msra.mxu0 0
      %1603 = vmatprep.subr.bf16.mxu0 0
      %1604 = vmatpush1.bf16.msra.mxu0 0
      %1605 = vmatprep.subr.bf16.mxu0 0
      %1606 = vmatpush1.bf16.msra.mxu0 0
      %1607 = vmatprep.subr.bf16.mxu0 0
      %1608 = vmatpush1.bf16.msra.mxu0 0
      %1609 = vmatprep.subr.bf16.mxu0 0
      %1610 = vmatpush1.bf16.msra.mxu0 0
      %1611 = vmatprep.subr.bf16.mxu0 0
      %1612 = vmatpush1.bf16.msra.mxu0 0
      %1613 = vmatprep.subr.bf16.mxu0 0
      %1614 = vmatpush1.bf16.msra.mxu0 0
      %1615 = vmatprep.subr.bf16.mxu0 0
      %1616 = vmatpush1.bf16.msra.mxu0 0
      %1617 = vmatprep.subr.bf16.mxu0 0
      %1618 = vmatpush1.bf16.msra.mxu0 0
      %1619 = vmatprep.subr.bf16.mxu0 0
      %1620 = vmatpush1.bf16.msra.mxu0 0
      %1621 = vmatprep.subr.bf16.mxu0 0
      %1622 = vmatpush1.bf16.msra.mxu0 0
      %1623 = vmatprep.mubr.bf16.mxu0 0
      %1624 = vmatmul.mubr.bf16.gmra.mrb[0].mxu0 %v1586
      %v1625 = vpop.f32.mrb[0].mxu0
      %v1626 = vadd.f32 0.0, %v1625
      %v1627 = vpop.f32.mrb[0].mxu0
      %v1628 = vpop.f32.mrb[0].mxu0
      %v1629 = vpop.f32.mrb[0].mxu0
      %1630 = vdwg.mxu0
      %v1631 = vadd.f32 %v1575, %v1626
      %v1632 = vld [vmem:[%s2] sm:$0x1]
      %v1634 = vlaneseq
      %v1635 = vshrl.u32 %v1634, 7
      %v1636 = vsub.s32 0, %v1635
      %v1637 = vrot.slane %v1632, %v1636
      %v1639 = vadd.f32 %v1631, %v1637
      %v1640 = vmul.f32 %v1639, %v1639
      %v1641 = vld [vmem:[%s3] sm:$0xff]
      %v1642 = vld [vmem:[%s3 + $0x8] sm:$0xff]
      %v1643 = vld [vmem:[%s3 + $0x10] sm:$0xff]
      %v1644 = vld [vmem:[%s3 + $0x18] sm:$0xff]
      %v1645 = vld [vmem:[%s4] sm:$0x1]
      %v1647 = vlaneseq
      %v1648 = vshrl.u32 %v1647, 7
      %v1649 = vsub.s32 0, %v1648
      %v1650 = vrot.slane %v1645, %v1649
      %v1653 = vsel %vm532, %v1640, 0
      %1655 = vmatprep.subr.mxu0 0.0
      %1656 = vmatpush1.msra.mxu0 %v1641
      %1657 = vmatprep.subr.mxu0 0.0
      %1658 = vmatpush1.msra.mxu0 %v1642
      %1659 = vmatprep.subr.mxu0 0.0
      %1660 = vmatpush1.msra.mxu0 %v1643
      %1661 = vmatprep.subr.mxu0 0.0
      %1662 = vmatpush1.msra.mxu0 %v1644
      %1663 = vmatprep.subr.mxu0 0.0
      %1664 = vmatpush1.msra.mxu0 0.0
      %1665 = vmatprep.subr.mxu0 0.0
      %1666 = vmatpush1.msra.mxu0 0.0
      %1667 = vmatprep.subr.mxu0 0.0
      %1668 = vmatpush1.msra.mxu0 0.0
      %1669 = vmatprep.subr.mxu0 0.0
      %1670 = vmatpush1.msra.mxu0 0.0
      %1671 = vmatprep.subr.mxu0 0.0
      %1672 = vmatpush1.msra.mxu0 0.0
      %1673 = vmatprep.subr.mxu0 0.0
      %1674 = vmatpush1.msra.mxu0 0.0
      %1675 = vmatprep.subr.mxu0 0.0
      %1676 = vmatpush1.msra.mxu0 0.0
      %1677 = vmatprep.subr.mxu0 0.0
      %1678 = vmatpush1.msra.mxu0 0.0
      %1679 = vmatprep.subr.mxu0 0.0
      %1680 = vmatpush1.msra.mxu0 0.0
      %1681 = vmatprep.subr.mxu0 0.0
      %1682 = vmatpush1.msra.mxu0 0.0
      %1683 = vmatprep.subr.mxu0 0.0
      %1684 = vmatpush1.msra.mxu0 0.0
      %1685 = vmatprep.subr.mxu0 0.0
      %1686 = vmatpush1.msra.mxu0 0.0
      %1687 = vmatprep.subr.mxu0 0.0
      %1688 = vmatpush1.msra.mxu0 0.0
      %1689 = vmatprep.subr.mxu0 0.0
      %1690 = vmatpush1.msra.mxu0 0.0
      %1691 = vmatprep.subr.mxu0 0.0
      %1692 = vmatpush1.msra.mxu0 0.0
      %1693 = vmatprep.subr.mxu0 0.0
      %1694 = vmatpush1.msra.mxu0 0.0
      %1695 = vmatprep.subr.mxu0 0.0
      %1696 = vmatpush1.msra.mxu0 0.0
      %1697 = vmatprep.subr.mxu0 0.0
      %1698 = vmatpush1.msra.mxu0 0.0
      %1699 = vmatprep.subr.mxu0 0.0
      %1700 = vmatpush1.msra.mxu0 0.0
      %1701 = vmatprep.subr.mxu0 0.0
      %1702 = vmatpush1.msra.mxu0 0.0
      %1703 = vmatprep.subr.mxu0 0.0
      %1704 = vmatpush1.msra.mxu0 0.0
      %1705 = vmatprep.subr.mxu0 0.0
      %1706 = vmatpush1.msra.mxu0 0.0
      %1707 = vmatprep.subr.mxu0 0.0
      %1708 = vmatpush1.msra.mxu0 0.0
      %1709 = vmatprep.subr.mxu0 0.0
      %1710 = vmatpush1.msra.mxu0 0.0
      %1711 = vmatprep.subr.mxu0 0.0
      %1712 = vmatpush1.msra.mxu0 0.0
      %1713 = vmatprep.subr.mxu0 0.0
      %1714 = vmatpush1.msra.mxu0 0.0
      %1715 = vmatprep.subr.mxu0 0.0
      %1716 = vmatpush1.msra.mxu0 0.0
      %1717 = vmatprep.subr.mxu0 0.0
      %1718 = vmatpush1.msra.mxu0 0.0
      %1719 = vmatprep.mubr.f32.mxu0 0.0
      %1720 = vmatmul.mubr.f32.gmra.mrb[0].mxu0 %v1653
      %v1721 = vpop.f32.mrb[0].mxu0
      %v1722 = vadd.f32 %v1650, %v1721
      %v1723 = vpop.f32.mrb[0].mxu0
      %1724 = vdwg.mxu0
      %v1725 = vrsqrt.pop %v1722
      %v1726 = vmul.f32 %v1639, %v1725
      %v1727 = vpack.c.bf16 %v1726, %v1726
      %s1728 = scalar_lea.vmem %s224, 12
      %1729 = vst.msk [vmem:[%s1728] sm:$0xf] %vm609, %v1727
      %v1730 = vld [vmem:[%s1203] sm:$0xf]
      %v1731 = vld [vmem:[%s1] sm:$0xf]
      %v1732 = vld [vmem:[%s1 + $0x4] sm:$0xf]
      %v1733 = vld [vmem:[%s1520] sm:$0xf]
      %v1734 = vld [vmem:[%s231] sm:$0xf]
      %v1735 = vld [vmem:[%s231 + $0x4] sm:$0xf]
      %v1738 = vunpack.c.l.b16 %v1734
      %v1739 = vunpack.c.l.b16 %v1735
      %v1740 = vpack.c.b16 %v1739, %v1738
      %v1742 = vsel %vm239, %v1733, 0
      %v1745 = vand.u32 %v1740, %v246
      %1747 = vmatprep.subr.bf16.mxu0 0
      %1748 = vmatpush1.bf16.msra.mxu0 %v1745
      %1749 = vmatprep.subr.bf16.mxu0 0
      %1750 = vmatpush1.bf16.msra.mxu0 0
      %1751 = vmatprep.subr.bf16.mxu0 0
      %1752 = vmatpush1.bf16.msra.mxu0 0
      %1753 = vmatprep.subr.bf16.mxu0 0
      %1754 = vmatpush1.bf16.msra.mxu0 0
      %1755 = vmatprep.subr.bf16.mxu0 0
      %1756 = vmatpush1.bf16.msra.mxu0 0
      %1757 = vmatprep.subr.bf16.mxu0 0
      %1758 = vmatpush1.bf16.msra.mxu0 0
      %1759 = vmatprep.subr.bf16.mxu0 0
      %1760 = vmatpush1.bf16.msra.mxu0 0
      %1761 = vmatprep.subr.bf16.mxu0 0
      %1762 = vmatpush1.bf16.msra.mxu0 0
      %1763 = vmatprep.subr.bf16.mxu0 0
      %1764 = vmatpush1.bf16.msra.mxu0 0
      %1765 = vmatprep.subr.bf16.mxu0 0
      %1766 = vmatpush1.bf16.msra.mxu0 0
      %1767 = vmatprep.subr.bf16.mxu0 0
      %1768 = vmatpush1.bf16.msra.mxu0 0
      %1769 = vmatprep.subr.bf16.mxu0 0
      %1770 = vmatpush1.bf16.msra.mxu0 0
      %1771 = vmatprep.subr.bf16.mxu0 0
      %1772 = vmatpush1.bf16.msra.mxu0 0
      %1773 = vmatprep.subr.bf16.mxu0 0
      %1774 = vmatpush1.bf16.msra.mxu0 0
      %1775 = vmatprep.subr.bf16.mxu0 0
      %1776 = vmatpush1.bf16.msra.mxu0 0
      %1777 = vmatprep.subr.bf16.mxu0 0
      %1778 = vmatpush1.bf16.msra.mxu0 0
      %1779 = vmatprep.mubr.bf16.mxu0 0
      %1780 = vmatmul.mubr.bf16.gmra.mrb[0].mxu0 %v1742
      %v1781 = vpop.f32.mrb[0].mxu0
      %v1782 = vadd.f32 0.0, %v1781
      %v1783 = vpop.f32.mrb[0].mxu0
      %v1784 = vpop.f32.mrb[0].mxu0
      %v1785 = vpop.f32.mrb[0].mxu0
      %1786 = vdwg.mxu0
      %v1789 = vunpack.c.l.b16 %v1731
      %v1790 = vunpack.c.l.b16 %v1732
      %v1791 = vpack.c.b16 %v1790, %v1789
      %v1793 = vsel %vm239, %v1730, 0
      %v1796 = vand.u32 %v1791, %v246
      %1798 = vmatprep.subr.bf16.mxu0 0
      %1799 = vmatpush1.bf16.msra.mxu0 %v1796
      %1800 = vmatprep.subr.bf16.mxu0 0
      %1801 = vmatpush1.bf16.msra.mxu0 0
      %1802 = vmatprep.subr.bf16.mxu0 0
      %1803 = vmatpush1.bf16.msra.mxu0 0
      %1804 = vmatprep.subr.bf16.mxu0 0
      %1805 = vmatpush1.bf16.msra.mxu0 0
      %1806 = vmatprep.subr.bf16.mxu0 0
      %1807 = vmatpush1.bf16.msra.mxu0 0
      %1808 = vmatprep.subr.bf16.mxu0 0
      %1809 = vmatpush1.bf16.msra.mxu0 0
      %1810 = vmatprep.subr.bf16.mxu0 0
      %1811 = vmatpush1.bf16.msra.mxu0 0
      %1812 = vmatprep.subr.bf16.mxu0 0
      %1813 = vmatpush1.bf16.msra.mxu0 0
      %1814 = vmatprep.subr.bf16.mxu0 0
      %1815 = vmatpush1.bf16.msra.mxu0 0
      %1816 = vmatprep.subr.bf16.mxu0 0
      %1817 = vmatpush1.bf16.msra.mxu0 0
      %1818 = vmatprep.subr.bf16.mxu0 0
      %1819 = vmatpush1.bf16.msra.mxu0 0
      %1820 = vmatprep.subr.bf16.mxu0 0
      %1821 = vmatpush1.bf16.msra.mxu0 0
      %1822 = vmatprep.subr.bf16.mxu0 0
      %1823 = vmatpush1.bf16.msra.mxu0 0
      %1824 = vmatprep.subr.bf16.mxu0 0
      %1825 = vmatpush1.bf16.msra.mxu0 0
      %1826 = vmatprep.subr.bf16.mxu0 0
      %1827 = vmatpush1.bf16.msra.mxu0 0
      %1828 = vmatprep.subr.bf16.mxu0 0
      %1829 = vmatpush1.bf16.msra.mxu0 0
      %1830 = vmatprep.mubr.bf16.mxu0 0
      %1831 = vmatmul.mubr.bf16.gmra.mrb[0].mxu0 %v1793
      %v1832 = vpop.f32.mrb[0].mxu0
      %v1833 = vadd.f32 %v1782, %v1832
      %v1834 = vpop.f32.mrb[0].mxu0
      %v1835 = vpop.f32.mrb[0].mxu0
      %v1836 = vpop.f32.mrb[0].mxu0
      %1837 = vdwg.mxu0
      %v1838 = vld [vmem:[%s1576] sm:$0xf]
      %v1839 = vld [vmem:[%s343] sm:$0xf]
      %v1840 = vld [vmem:[%s343 + $0x4] sm:$0xf]
      %v1843 = vunpack.c.l.b16 %v1839
      %v1844 = vunpack.c.l.b16 %v1840
      %v1845 = vpack.c.b16 %v1844, %v1843
      %v1847 = vsel %vm239, %v1838, 0
      %v1850 = vand.u32 %v1845, %v246
      %1852 = vmatprep.subr.bf16.mxu0 0
      %1853 = vmatpush1.bf16.msra.mxu0 %v1850
      %1854 = vmatprep.subr.bf16.mxu0 0
      %1855 = vmatpush1.bf16.msra.mxu0 0
      %1856 = vmatprep.subr.bf16.mxu0 0
      %1857 = vmatpush1.bf16.msra.mxu0 0
      %1858 = vmatprep.subr.bf16.mxu0 0
      %1859 = vmatpush1.bf16.msra.mxu0 0
      %1860 = vmatprep.subr.bf16.mxu0 0
      %1861 = vmatpush1.bf16.msra.mxu0 0
      %1862 = vmatprep.subr.bf16.mxu0 0
      %1863 = vmatpush1.bf16.msra.mxu0 0
      %1864 = vmatprep.subr.bf16.mxu0 0
      %1865 = vmatpush1.bf16.msra.mxu0 0
      %1866 = vmatprep.subr.bf16.mxu0 0
      %1867 = vmatpush1.bf16.msra.mxu0 0
      %1868 = vmatprep.subr.bf16.mxu0 0
      %1869 = vmatpush1.bf16.msra.mxu0 0
      %1870 = vmatprep.subr.bf16.mxu0 0
      %1871 = vmatpush1.bf16.msra.mxu0 0
      %1872 = vmatprep.subr.bf16.mxu0 0
      %1873 = vmatpush1.bf16.msra.mxu0 0
      %1874 = vmatprep.subr.bf16.mxu0 0
      %1875 = vmatpush1.bf16.msra.mxu0 0
      %1876 = vmatprep.subr.bf16.mxu0 0
      %1877 = vmatpush1.bf16.msra.mxu0 0
      %1878 = vmatprep.subr.bf16.mxu0 0
      %1879 = vmatpush1.bf16.msra.mxu0 0
      %1880 = vmatprep.subr.bf16.mxu0 0
      %1881 = vmatpush1.bf16.msra.mxu0 0
      %1882 = vmatprep.subr.bf16.mxu0 0
      %1883 = vmatpush1.bf16.msra.mxu0 0
      %1884 = vmatprep.mubr.bf16.mxu0 0
      %1885 = vmatmul.mubr.bf16.gmra.mrb[0].mxu0 %v1847
      %v1886 = vpop.f32.mrb[0].mxu0
      %v1887 = vadd.f32 0.0, %v1886
      %v1888 = vpop.f32.mrb[0].mxu0
      %v1889 = vpop.f32.mrb[0].mxu0
      %v1890 = vpop.f32.mrb[0].mxu0
      %1891 = vdwg.mxu0
      %v1892 = vadd.f32 %v1833, %v1887
      %s1893 = scalar_lea.vmem %s219, 44
      %v1894 = vld [vmem:[%s1893] sm:$0xf]
      %v1895 = vld [vmem:[%s400] sm:$0xf]
      %v1896 = vld [vmem:[%s400 + $0x4] sm:$0xf]
      %v1899 = vunpack.c.l.b16 %v1895
      %v1900 = vunpack.c.l.b16 %v1896
      %v1901 = vpack.c.b16 %v1900, %v1899
      %v1903 = vsel %vm239, %v1894, 0
      %v1906 = vand.u32 %v1901, %v246
      %1908 = vmatprep.subr.bf16.mxu0 0
      %1909 = vmatpush1.bf16.msra.mxu0 %v1906
      %1910 = vmatprep.subr.bf16.mxu0 0
      %1911 = vmatpush1.bf16.msra.mxu0 0
      %1912 = vmatprep.subr.bf16.mxu0 0
      %1913 = vmatpush1.bf16.msra.mxu0 0
      %1914 = vmatprep.subr.bf16.mxu0 0
      %1915 = vmatpush1.bf16.msra.mxu0 0
      %1916 = vmatprep.subr.bf16.mxu0 0
      %1917 = vmatpush1.bf16.msra.mxu0 0
      %1918 = vmatprep.subr.bf16.mxu0 0
      %1919 = vmatpush1.bf16.msra.mxu0 0
      %1920 = vmatprep.subr.bf16.mxu0 0
      %1921 = vmatpush1.bf16.msra.mxu0 0
      %1922 = vmatprep.subr.bf16.mxu0 0
      %1923 = vmatpush1.bf16.msra.mxu0 0
      %1924 = vmatprep.subr.bf16.mxu0 0
      %1925 = vmatpush1.bf16.msra.mxu0 0
      %1926 = vmatprep.subr.bf16.mxu0 0
      %1927 = vmatpush1.bf16.msra.mxu0 0
      %1928 = vmatprep.subr.bf16.mxu0 0
      %1929 = vmatpush1.bf16.msra.mxu0 0
      %1930 = vmatprep.subr.bf16.mxu0 0
      %1931 = vmatpush1.bf16.msra.mxu0 0
      %1932 = vmatprep.subr.bf16.mxu0 0
      %1933 = vmatpush1.bf16.msra.mxu0 0
      %1934 = vmatprep.subr.bf16.mxu0 0
      %1935 = vmatpush1.bf16.msra.mxu0 0
      %1936 = vmatprep.subr.bf16.mxu0 0
      %1937 = vmatpush1.bf16.msra.mxu0 0
      %1938 = vmatprep.subr.bf16.mxu0 0
      %1939 = vmatpush1.bf16.msra.mxu0 0
      %1940 = vmatprep.mubr.bf16.mxu0 0
      %1941 = vmatmul.mubr.bf16.gmra.mrb[0].mxu0 %v1903
      %v1942 = vpop.f32.mrb[0].mxu0
      %v1943 = vadd.f32 0.0, %v1942
      %v1944 = vpop.f32.mrb[0].mxu0
      %v1945 = vpop.f32.mrb[0].mxu0
      %v1946 = vpop.f32.mrb[0].mxu0
      %1947 = vdwg.mxu0
      %v1948 = vadd.f32 %v1892, %v1943
      %s1949 = scalar_lea.vmem %s219, 48
      %v1950 = vld [vmem:[%s1949] sm:$0xf]
      %v1951 = vld [vmem:[%s457] sm:$0xf]
      %v1952 = vld [vmem:[%s457 + $0x4] sm:$0xf]
      %v1955 = vunpack.c.l.b16 %v1951
      %v1956 = vunpack.c.l.b16 %v1952
      %v1957 = vpack.c.b16 %v1956, %v1955
      %v1959 = vsel %vm239, %v1950, 0
      %v1962 = vand.u32 %v1957, %v246
      %1964 = vmatprep.subr.bf16.mxu0 0
      %1965 = vmatpush1.bf16.msra.mxu0 %v1962
      %1966 = vmatprep.subr.bf16.mxu0 0
      %1967 = vmatpush1.bf16.msra.mxu0 0
      %1968 = vmatprep.subr.bf16.mxu0 0
      %1969 = vmatpush1.bf16.msra.mxu0 0
      %1970 = vmatprep.subr.bf16.mxu0 0
      %1971 = vmatpush1.bf16.msra.mxu0 0
      %1972 = vmatprep.subr.bf16.mxu0 0
      %1973 = vmatpush1.bf16.msra.mxu0 0
      %1974 = vmatprep.subr.bf16.mxu0 0
      %1975 = vmatpush1.bf16.msra.mxu0 0
      %1976 = vmatprep.subr.bf16.mxu0 0
      %1977 = vmatpush1.bf16.msra.mxu0 0
      %1978 = vmatprep.subr.bf16.mxu0 0
      %1979 = vmatpush1.bf16.msra.mxu0 0
      %1980 = vmatprep.subr.bf16.mxu0 0
      %1981 = vmatpush1.bf16.msra.mxu0 0
      %1982 = vmatprep.subr.bf16.mxu0 0
      %1983 = vmatpush1.bf16.msra.mxu0 0
      %1984 = vmatprep.subr.bf16.mxu0 0
      %1985 = vmatpush1.bf16.msra.mxu0 0
      %1986 = vmatprep.subr.bf16.mxu0 0
      %1987 = vmatpush1.bf16.msra.mxu0 0
      %1988 = vmatprep.subr.bf16.mxu0 0
      %1989 = vmatpush1.bf16.msra.mxu0 0
      %1990 = vmatprep.subr.bf16.mxu0 0
      %1991 = vmatpush1.bf16.msra.mxu0 0
      %1992 = vmatprep.subr.bf16.mxu0 0
      %1993 = vmatpush1.bf16.msra.mxu0 0
      %1994 = vmatprep.subr.bf16.mxu0 0
      %1995 = vmatpush1.bf16.msra.mxu0 0
      %1996 = vmatprep.mubr.bf16.mxu0 0
      %1997 = vmatmul.mubr.bf16.gmra.mrb[0].mxu0 %v1959
      %v1998 = vpop.f32.mrb[0].mxu0
      %v1999 = vadd.f32 0.0, %v1998
      %v2000 = vpop.f32.mrb[0].mxu0
      %v2001 = vpop.f32.mrb[0].mxu0
      %v2002 = vpop.f32.mrb[0].mxu0
      %2003 = vdwg.mxu0
      %v2004 = vadd.f32 %v1948, %v1999
      %v2005 = vld [vmem:[%s2] sm:$0x1]
      %v2007 = vlaneseq
      %v2008 = vshrl.u32 %v2007, 7
      %v2009 = vsub.s32 0, %v2008
      %v2010 = vrot.slane %v2005, %v2009
      %v2012 = vadd.f32 %v2004, %v2010
      %v2013 = vmul.f32 %v2012, %v2012
      %v2014 = vld [vmem:[%s3] sm:$0xff]
      %v2015 = vld [vmem:[%s3 + $0x8] sm:$0xff]
      %v2016 = vld [vmem:[%s3 + $0x10] sm:$0xff]
      %v2017 = vld [vmem:[%s3 + $0x18] sm:$0xff]
      %v2018 = vld [vmem:[%s4] sm:$0x1]
      %v2020 = vlaneseq
      %v2021 = vshrl.u32 %v2020, 7
      %v2022 = vsub.s32 0, %v2021
      %v2023 = vrot.slane %v2018, %v2022
      %v2026 = vsel %vm532, %v2013, 0
      %2028 = vmatprep.subr.mxu0 0.0
      %2029 = vmatpush1.msra.mxu0 %v2014
      %2030 = vmatprep.subr.mxu0 0.0
      %2031 = vmatpush1.msra.mxu0 %v2015
      %2032 = vmatprep.subr.mxu0 0.0
      %2033 = vmatpush1.msra.mxu0 %v2016
      %2034 = vmatprep.subr.mxu0 0.0
      %2035 = vmatpush1.msra.mxu0 %v2017
      %2036 = vmatprep.subr.mxu0 0.0
      %2037 = vmatpush1.msra.mxu0 0.0
      %2038 = vmatprep.subr.mxu0 0.0
      %2039 = vmatpush1.msra.mxu0 0.0
      %2040 = vmatprep.subr.mxu0 0.0
      %2041 = vmatpush1.msra.mxu0 0.0
      %2042 = vmatprep.subr.mxu0 0.0
      %2043 = vmatpush1.msra.mxu0 0.0
      %2044 = vmatprep.subr.mxu0 0.0
      %2045 = vmatpush1.msra.mxu0 0.0
      %2046 = vmatprep.subr.mxu0 0.0
      %2047 = vmatpush1.msra.mxu0 0.0
      %2048 = vmatprep.subr.mxu0 0.0
      %2049 = vmatpush1.msra.mxu0 0.0
      %2050 = vmatprep.subr.mxu0 0.0
      %2051 = vmatpush1.msra.mxu0 0.0
      %2052 = vmatprep.subr.mxu0 0.0
      %2053 = vmatpush1.msra.mxu0 0.0
      %2054 = vmatprep.subr.mxu0 0.0
      %2055 = vmatpush1.msra.mxu0 0.0
      %2056 = vmatprep.subr.mxu0 0.0
      %2057 = vmatpush1.msra.mxu0 0.0
      %2058 = vmatprep.subr.mxu0 0.0
      %2059 = vmatpush1.msra.mxu0 0.0
      %2060 = vmatprep.subr.mxu0 0.0
      %2061 = vmatpush1.msra.mxu0 0.0
      %2062 = vmatprep.subr.mxu0 0.0
      %2063 = vmatpush1.msra.mxu0 0.0
      %2064 = vmatprep.subr.mxu0 0.0
      %2065 = vmatpush1.msra.mxu0 0.0
      %2066 = vmatprep.subr.mxu0 0.0
      %2067 = vmatpush1.msra.mxu0 0.0
      %2068 = vmatprep.subr.mxu0 0.0
      %2069 = vmatpush1.msra.mxu0 0.0
      %2070 = vmatprep.subr.mxu0 0.0
      %2071 = vmatpush1.msra.mxu0 0.0
      %2072 = vmatprep.subr.mxu0 0.0
      %2073 = vmatpush1.msra.mxu0 0.0
      %2074 = vmatprep.subr.mxu0 0.0
      %2075 = vmatpush1.msra.mxu0 0.0
      %2076 = vmatprep.subr.mxu0 0.0
      %2077 = vmatpush1.msra.mxu0 0.0
      %2078 = vmatprep.subr.mxu0 0.0
      %2079 = vmatpush1.msra.mxu0 0.0
      %2080 = vmatprep.subr.mxu0 0.0
      %2081 = vmatpush1.msra.mxu0 0.0
      %2082 = vmatprep.subr.mxu0 0.0
      %2083 = vmatpush1.msra.mxu0 0.0
      %2084 = vmatprep.subr.mxu0 0.0
      %2085 = vmatpush1.msra.mxu0 0.0
      %2086 = vmatprep.subr.mxu0 0.0
      %2087 = vmatpush1.msra.mxu0 0.0
      %2088 = vmatprep.subr.mxu0 0.0
      %2089 = vmatpush1.msra.mxu0 0.0
      %2090 = vmatprep.subr.mxu0 0.0
      %2091 = vmatpush1.msra.mxu0 0.0
      %2092 = vmatprep.mubr.f32.mxu0 0.0
      %2093 = vmatmul.mubr.f32.gmra.mrb[0].mxu0 %v2026
      %v2094 = vpop.f32.mrb[0].mxu0
      %v2095 = vadd.f32 %v2023, %v2094
      %v2096 = vpop.f32.mrb[0].mxu0
      %2097 = vdwg.mxu0
      %v2098 = vrsqrt.pop %v2095
      %v2099 = vmul.f32 %v2012, %v2098
      %v2100 = vpack.c.bf16 %v2099, %v2099
      %s2101 = scalar_lea.vmem %s224, 16
      %2102 = vst.msk [vmem:[%s2101] sm:$0xf] %vm609, %v2100
      %v2103 = vld [vmem:[%s1576] sm:$0xf]
      %v2104 = vld [vmem:[%s1] sm:$0xf]
      %v2105 = vld [vmem:[%s1 + $0x4] sm:$0xf]
      %v2106 = vld [vmem:[%s1893] sm:$0xf]
      %v2107 = vld [vmem:[%s231] sm:$0xf]
      %v2108 = vld [vmem:[%s231 + $0x4] sm:$0xf]
      %v2111 = vunpack.c.l.b16 %v2107
      %v2112 = vunpack.c.l.b16 %v2108
      %v2113 = vpack.c.b16 %v2112, %v2111
      %v2115 = vsel %vm239, %v2106, 0
      %v2118 = vand.u32 %v2113, %v246
      %2120 = vmatprep.subr.bf16.mxu0 0
      %2121 = vmatpush1.bf16.msra.mxu0 %v2118
      %2122 = vmatprep.subr.bf16.mxu0 0
      %2123 = vmatpush1.bf16.msra.mxu0 0
      %2124 = vmatprep.subr.bf16.mxu0 0
      %2125 = vmatpush1.bf16.msra.mxu0 0
      %2126 = vmatprep.subr.bf16.mxu0 0
      %2127 = vmatpush1.bf16.msra.mxu0 0
      %2128 = vmatprep.subr.bf16.mxu0 0
      %2129 = vmatpush1.bf16.msra.mxu0 0
      %2130 = vmatprep.subr.bf16.mxu0 0
      %2131 = vmatpush1.bf16.msra.mxu0 0
      %2132 = vmatprep.subr.bf16.mxu0 0
      %2133 = vmatpush1.bf16.msra.mxu0 0
      %2134 = vmatprep.subr.bf16.mxu0 0
      %2135 = vmatpush1.bf16.msra.mxu0 0
      %2136 = vmatprep.subr.bf16.mxu0 0
      %2137 = vmatpush1.bf16.msra.mxu0 0
      %2138 = vmatprep.subr.bf16.mxu0 0
      %2139 = vmatpush1.bf16.msra.mxu0 0
      %2140 = vmatprep.subr.bf16.mxu0 0
      %2141 = vmatpush1.bf16.msra.mxu0 0
      %2142 = vmatprep.subr.bf16.mxu0 0
      %2143 = vmatpush1.bf16.msra.mxu0 0
      %2144 = vmatprep.subr.bf16.mxu0 0
      %2145 = vmatpush1.bf16.msra.mxu0 0
      %2146 = vmatprep.subr.bf16.mxu0 0
      %2147 = vmatpush1.bf16.msra.mxu0 0
      %2148 = vmatprep.subr.bf16.mxu0 0
      %2149 = vmatpush1.bf16.msra.mxu0 0
      %2150 = vmatprep.subr.bf16.mxu0 0
      %2151 = vmatpush1.bf16.msra.mxu0 0
      %2152 = vmatprep.mubr.bf16.mxu0 0
      %2153 = vmatmul.mubr.bf16.gmra.mrb[0].mxu0 %v2115
      %v2154 = vpop.f32.mrb[0].mxu0
      %v2155 = vadd.f32 0.0, %v2154
      %v2156 = vpop.f32.mrb[0].mxu0
      %v2157 = vpop.f32.mrb[0].mxu0
      %v2158 = vpop.f32.mrb[0].mxu0
      %2159 = vdwg.mxu0
      %v2162 = vunpack.c.l.b16 %v2104
      %v2163 = vunpack.c.l.b16 %v2105
      %v2164 = vpack.c.b16 %v2163, %v2162
      %v2166 = vsel %vm239, %v2103, 0
      %v2169 = vand.u32 %v2164, %v246
      %2171 = vmatprep.subr.bf16.mxu0 0
      %2172 = vmatpush1.bf16.msra.mxu0 %v2169
      %2173 = vmatprep.subr.bf16.mxu0 0
      %2174 = vmatpush1.bf16.msra.mxu0 0
      %2175 = vmatprep.subr.bf16.mxu0 0
      %2176 = vmatpush1.bf16.msra.mxu0 0
      %2177 = vmatprep.subr.bf16.mxu0 0
      %2178 = vmatpush1.bf16.msra.mxu0 0
      %2179 = vmatprep.subr.bf16.mxu0 0
      %2180 = vmatpush1.bf16.msra.mxu0 0
      %2181 = vmatprep.subr.bf16.mxu0 0
      %2182 = vmatpush1.bf16.msra.mxu0 0
      %2183 = vmatprep.subr.bf16.mxu0 0
      %2184 = vmatpush1.bf16.msra.mxu0 0
      %2185 = vmatprep.subr.bf16.mxu0 0
      %2186 = vmatpush1.bf16.msra.mxu0 0
      %2187 = vmatprep.subr.bf16.mxu0 0
      %2188 = vmatpush1.bf16.msra.mxu0 0
      %2189 = vmatprep.subr.bf16.mxu0 0
      %2190 = vmatpush1.bf16.msra.mxu0 0
      %2191 = vmatprep.subr.bf16.mxu0 0
      %2192 = vmatpush1.bf16.msra.mxu0 0
      %2193 = vmatprep.subr.bf16.mxu0 0
      %2194 = vmatpush1.bf16.msra.mxu0 0
      %2195 = vmatprep.subr.bf16.mxu0 0
      %2196 = vmatpush1.bf16.msra.mxu0 0
      %2197 = vmatprep.subr.bf16.mxu0 0
      %2198 = vmatpush1.bf16.msra.mxu0 0
      %2199 = vmatprep.subr.bf16.mxu0 0
      %2200 = vmatpush1.bf16.msra.mxu0 0
      %2201 = vmatprep.subr.bf16.mxu0 0
      %2202 = vmatpush1.bf16.msra.mxu0 0
      %2203 = vmatprep.mubr.bf16.mxu0 0
      %2204 = vmatmul.mubr.bf16.gmra.mrb[0].mxu0 %v2166
      %v2205 = vpop.f32.mrb[0].mxu0
      %v2206 = vadd.f32 %v2155, %v2205
      %v2207 = vpop.f32.mrb[0].mxu0
      %v2208 = vpop.f32.mrb[0].mxu0
      %v2209 = vpop.f32.mrb[0].mxu0
      %2210 = vdwg.mxu0
      %v2211 = vld [vmem:[%s1949] sm:$0xf]
      %v2212 = vld [vmem:[%s343] sm:$0xf]
      %v2213 = vld [vmem:[%s343 + $0x4] sm:$0xf]
      %v2216 = vunpack.c.l.b16 %v2212
      %v2217 = vunpack.c.l.b16 %v2213
      %v2218 = vpack.c.b16 %v2217, %v2216
      %v2220 = vsel %vm239, %v2211, 0
      %v2223 = vand.u32 %v2218, %v246
      %2225 = vmatprep.subr.bf16.mxu0 0
      %2226 = vmatpush1.bf16.msra.mxu0 %v2223
      %2227 = vmatprep.subr.bf16.mxu0 0
      %2228 = vmatpush1.bf16.msra.mxu0 0
      %2229 = vmatprep.subr.bf16.mxu0 0
      %2230 = vmatpush1.bf16.msra.mxu0 0
      %2231 = vmatprep.subr.bf16.mxu0 0
      %2232 = vmatpush1.bf16.msra.mxu0 0
      %2233 = vmatprep.subr.bf16.mxu0 0
      %2234 = vmatpush1.bf16.msra.mxu0 0
      %2235 = vmatprep.subr.bf16.mxu0 0
      %2236 = vmatpush1.bf16.msra.mxu0 0
      %2237 = vmatprep.subr.bf16.mxu0 0
      %2238 = vmatpush1.bf16.msra.mxu0 0
      %2239 = vmatprep.subr.bf16.mxu0 0
      %2240 = vmatpush1.bf16.msra.mxu0 0
      %2241 = vmatprep.subr.bf16.mxu0 0
      %2242 = vmatpush1.bf16.msra.mxu0 0
      %2243 = vmatprep.subr.bf16.mxu0 0
      %2244 = vmatpush1.bf16.msra.mxu0 0
      %2245 = vmatprep.subr.bf16.mxu0 0
      %2246 = vmatpush1.bf16.msra.mxu0 0
      %2247 = vmatprep.subr.bf16.mxu0 0
      %2248 = vmatpush1.bf16.msra.mxu0 0
      %2249 = vmatprep.subr.bf16.mxu0 0
      %2250 = vmatpush1.bf16.msra.mxu0 0
      %2251 = vmatprep.subr.bf16.mxu0 0
      %2252 = vmatpush1.bf16.msra.mxu0 0
      %2253 = vmatprep.subr.bf16.mxu0 0
      %2254 = vmatpush1.bf16.msra.mxu0 0
      %2255 = vmatprep.subr.bf16.mxu0 0
      %2256 = vmatpush1.bf16.msra.mxu0 0
      %2257 = vmatprep.mubr.bf16.mxu0 0
      %2258 = vmatmul.mubr.bf16.gmra.mrb[0].mxu0 %v2220
      %v2259 = vpop.f32.mrb[0].mxu0
      %v2260 = vadd.f32 0.0, %v2259
      %v2261 = vpop.f32.mrb[0].mxu0
      %v2262 = vpop.f32.mrb[0].mxu0
      %v2263 = vpop.f32.mrb[0].mxu0
      %2264 = vdwg.mxu0
      %v2265 = vadd.f32 %v2206, %v2260
      %s2266 = scalar_lea.vmem %s219, 52
      %v2267 = vld [vmem:[%s2266] sm:$0xf]
      %v2268 = vld [vmem:[%s400] sm:$0xf]
      %v2269 = vld [vmem:[%s400 + $0x4] sm:$0xf]
      %v2272 = vunpack.c.l.b16 %v2268
      %v2273 = vunpack.c.l.b16 %v2269
      %v2274 = vpack.c.b16 %v2273, %v2272
      %v2276 = vsel %vm239, %v2267, 0
      %v2279 = vand.u32 %v2274, %v246
      %2281 = vmatprep.subr.bf16.mxu0 0
      %2282 = vmatpush1.bf16.msra.mxu0 %v2279
      %2283 = vmatprep.subr.bf16.mxu0 0
      %2284 = vmatpush1.bf16.msra.mxu0 0
      %2285 = vmatprep.subr.bf16.mxu0 0
      %2286 = vmatpush1.bf16.msra.mxu0 0
      %2287 = vmatprep.subr.bf16.mxu0 0
      %2288 = vmatpush1.bf16.msra.mxu0 0
      %2289 = vmatprep.subr.bf16.mxu0 0
      %2290 = vmatpush1.bf16.msra.mxu0 0
      %2291 = vmatprep.subr.bf16.mxu0 0
      %2292 = vmatpush1.bf16.msra.mxu0 0
      %2293 = vmatprep.subr.bf16.mxu0 0
      %2294 = vmatpush1.bf16.msra.mxu0 0
      %2295 = vmatprep.subr.bf16.mxu0 0
      %2296 = vmatpush1.bf16.msra.mxu0 0
      %2297 = vmatprep.subr.bf16.mxu0 0
      %2298 = vmatpush1.bf16.msra.mxu0 0
      %2299 = vmatprep.subr.bf16.mxu0 0
      %2300 = vmatpush1.bf16.msra.mxu0 0
      %2301 = vmatprep.subr.bf16.mxu0 0
      %2302 = vmatpush1.bf16.msra.mxu0 0
      %2303 = vmatprep.subr.bf16.mxu0 0
      %2304 = vmatpush1.bf16.msra.mxu0 0
      %2305 = vmatprep.subr.bf16.mxu0 0
      %2306 = vmatpush1.bf16.msra.mxu0 0
      %2307 = vmatprep.subr.bf16.mxu0 0
      %2308 = vmatpush1.bf16.msra.mxu0 0
      %2309 = vmatprep.subr.bf16.mxu0 0
      %2310 = vmatpush1.bf16.msra.mxu0 0
      %2311 = vmatprep.subr.bf16.mxu0 0
      %2312 = vmatpush1.bf16.msra.mxu0 0
      %2313 = vmatprep.mubr.bf16.mxu0 0
      %2314 = vmatmul.mubr.bf16.gmra.mrb[0].mxu0 %v2276
      %v2315 = vpop.f32.mrb[0].mxu0
      %v2316 = vadd.f32 0.0, %v2315
      %v2317 = vpop.f32.mrb[0].mxu0
      %v2318 = vpop.f32.mrb[0].mxu0
      %v2319 = vpop.f32.mrb[0].mxu0
      %2320 = vdwg.mxu0
      %v2321 = vadd.f32 %v2265, %v2316
      %s2322 = scalar_lea.vmem %s219, 56
      %v2323 = vld [vmem:[%s2322] sm:$0xf]
      %v2324 = vld [vmem:[%s457] sm:$0xf]
      %v2325 = vld [vmem:[%s457 + $0x4] sm:$0xf]
      %v2328 = vunpack.c.l.b16 %v2324
      %v2329 = vunpack.c.l.b16 %v2325
      %v2330 = vpack.c.b16 %v2329, %v2328
      %v2332 = vsel %vm239, %v2323, 0
      %v2335 = vand.u32 %v2330, %v246
      %2337 = vmatprep.subr.bf16.mxu0 0
      %2338 = vmatpush1.bf16.msra.mxu0 %v2335
      %2339 = vmatprep.subr.bf16.mxu0 0
      %2340 = vmatpush1.bf16.msra.mxu0 0
      %2341 = vmatprep.subr.bf16.mxu0 0
      %2342 = vmatpush1.bf16.msra.mxu0 0
      %2343 = vmatprep.subr.bf16.mxu0 0
      %2344 = vmatpush1.bf16.msra.mxu0 0
      %2345 = vmatprep.subr.bf16.mxu0 0
      %2346 = vmatpush1.bf16.msra.mxu0 0
      %2347 = vmatprep.subr.bf16.mxu0 0
      %2348 = vmatpush1.bf16.msra.mxu0 0
      %2349 = vmatprep.subr.bf16.mxu0 0
      %2350 = vmatpush1.bf16.msra.mxu0 0
      %2351 = vmatprep.subr.bf16.mxu0 0
      %2352 = vmatpush1.bf16.msra.mxu0 0
      %2353 = vmatprep.subr.bf16.mxu0 0
      %2354 = vmatpush1.bf16.msra.mxu0 0
      %2355 = vmatprep.subr.bf16.mxu0 0
      %2356 = vmatpush1.bf16.msra.mxu0 0
      %2357 = vmatprep.subr.bf16.mxu0 0
      %2358 = vmatpush1.bf16.msra.mxu0 0
      %2359 = vmatprep.subr.bf16.mxu0 0
      %2360 = vmatpush1.bf16.msra.mxu0 0
      %2361 = vmatprep.subr.bf16.mxu0 0
      %2362 = vmatpush1.bf16.msra.mxu0 0
      %2363 = vmatprep.subr.bf16.mxu0 0
      %2364 = vmatpush1.bf16.msra.mxu0 0
      %2365 = vmatprep.subr.bf16.mxu0 0
      %2366 = vmatpush1.bf16.msra.mxu0 0
      %2367 = vmatprep.subr.bf16.mxu0 0
      %2368 = vmatpush1.bf16.msra.mxu0 0
      %2369 = vmatprep.mubr.bf16.mxu0 0
      %2370 = vmatmul.mubr.bf16.gmra.mrb[0].mxu0 %v2332
      %v2371 = vpop.f32.mrb[0].mxu0
      %v2372 = vadd.f32 0.0, %v2371
      %v2373 = vpop.f32.mrb[0].mxu0
      %v2374 = vpop.f32.mrb[0].mxu0
      %v2375 = vpop.f32.mrb[0].mxu0
      %2376 = vdwg.mxu0
      %v2377 = vadd.f32 %v2321, %v2372
      %v2378 = vld [vmem:[%s2] sm:$0x1]
      %v2380 = vlaneseq
      %v2381 = vshrl.u32 %v2380, 7
      %v2382 = vsub.s32 0, %v2381
      %v2383 = vrot.slane %v2378, %v2382
      %v2385 = vadd.f32 %v2377, %v2383
      %v2386 = vmul.f32 %v2385, %v2385
      %v2387 = vld [vmem:[%s3] sm:$0xff]
      %v2388 = vld [vmem:[%s3 + $0x8] sm:$0xff]
      %v2389 = vld [vmem:[%s3 + $0x10] sm:$0xff]
      %v2390 = vld [vmem:[%s3 + $0x18] sm:$0xff]
      %v2391 = vld [vmem:[%s4] sm:$0x1]
      %v2393 = vlaneseq
      %v2394 = vshrl.u32 %v2393, 7
      %v2395 = vsub.s32 0, %v2394
      %v2396 = vrot.slane %v2391, %v2395
      %v2399 = vsel %vm532, %v2386, 0
      %2401 = vmatprep.subr.mxu0 0.0
      %2402 = vmatpush1.msra.mxu0 %v2387
      %2403 = vmatprep.subr.mxu0 0.0
      %2404 = vmatpush1.msra.mxu0 %v2388
      %2405 = vmatprep.subr.mxu0 0.0
      %2406 = vmatpush1.msra.mxu0 %v2389
      %2407 = vmatprep.subr.mxu0 0.0
      %2408 = vmatpush1.msra.mxu0 %v2390
      %2409 = vmatprep.subr.mxu0 0.0
      %2410 = vmatpush1.msra.mxu0 0.0
      %2411 = vmatprep.subr.mxu0 0.0
      %2412 = vmatpush1.msra.mxu0 0.0
      %2413 = vmatprep.subr.mxu0 0.0
      %2414 = vmatpush1.msra.mxu0 0.0
      %2415 = vmatprep.subr.mxu0 0.0
      %2416 = vmatpush1.msra.mxu0 0.0
      %2417 = vmatprep.subr.mxu0 0.0
      %2418 = vmatpush1.msra.mxu0 0.0
      %2419 = vmatprep.subr.mxu0 0.0
      %2420 = vmatpush1.msra.mxu0 0.0
      %2421 = vmatprep.subr.mxu0 0.0
      %2422 = vmatpush1.msra.mxu0 0.0
      %2423 = vmatprep.subr.mxu0 0.0
      %2424 = vmatpush1.msra.mxu0 0.0
      %2425 = vmatprep.subr.mxu0 0.0
      %2426 = vmatpush1.msra.mxu0 0.0
      %2427 = vmatprep.subr.mxu0 0.0
      %2428 = vmatpush1.msra.mxu0 0.0
      %2429 = vmatprep.subr.mxu0 0.0
      %2430 = vmatpush1.msra.mxu0 0.0
      %2431 = vmatprep.subr.mxu0 0.0
      %2432 = vmatpush1.msra.mxu0 0.0
      %2433 = vmatprep.subr.mxu0 0.0
      %2434 = vmatpush1.msra.mxu0 0.0
      %2435 = vmatprep.subr.mxu0 0.0
      %2436 = vmatpush1.msra.mxu0 0.0
      %2437 = vmatprep.subr.mxu0 0.0
      %2438 = vmatpush1.msra.mxu0 0.0
      %2439 = vmatprep.subr.mxu0 0.0
      %2440 = vmatpush1.msra.mxu0 0.0
      %2441 = vmatprep.subr.mxu0 0.0
      %2442 = vmatpush1.msra.mxu0 0.0
      %2443 = vmatprep.subr.mxu0 0.0
      %2444 = vmatpush1.msra.mxu0 0.0
      %2445 = vmatprep.subr.mxu0 0.0
      %2446 = vmatpush1.msra.mxu0 0.0
      %2447 = vmatprep.subr.mxu0 0.0
      %2448 = vmatpush1.msra.mxu0 0.0
      %2449 = vmatprep.subr.mxu0 0.0
      %2450 = vmatpush1.msra.mxu0 0.0
      %2451 = vmatprep.subr.mxu0 0.0
      %2452 = vmatpush1.msra.mxu0 0.0
      %2453 = vmatprep.subr.mxu0 0.0
      %2454 = vmatpush1.msra.mxu0 0.0
      %2455 = vmatprep.subr.mxu0 0.0
      %2456 = vmatpush1.msra.mxu0 0.0
      %2457 = vmatprep.subr.mxu0 0.0
      %2458 = vmatpush1.msra.mxu0 0.0
      %2459 = vmatprep.subr.mxu0 0.0
      %2460 = vmatpush1.msra.mxu0 0.0
      %2461 = vmatprep.subr.mxu0 0.0
      %2462 = vmatpush1.msra.mxu0 0.0
      %2463 = vmatprep.subr.mxu0 0.0
      %2464 = vmatpush1.msra.mxu0 0.0
      %2465 = vmatprep.mubr.f32.mxu0 0.0
      %2466 = vmatmul.mubr.f32.gmra.mrb[0].mxu0 %v2399
      %v2467 = vpop.f32.mrb[0].mxu0
      %v2468 = vadd.f32 %v2396, %v2467
      %v2469 = vpop.f32.mrb[0].mxu0
      %2470 = vdwg.mxu0
      %v2471 = vrsqrt.pop %v2468
      %v2472 = vmul.f32 %v2385, %v2471
      %v2473 = vpack.c.bf16 %v2472, %v2472
      %s2474 = scalar_lea.vmem %s224, 20
      %2475 = vst.msk [vmem:[%s2474] sm:$0xf] %vm609, %v2473
      %v2476 = vld [vmem:[%s1949] sm:$0xf]
      %v2477 = vld [vmem:[%s1] sm:$0xf]
      %v2478 = vld [vmem:[%s1 + $0x4] sm:$0xf]
      %v2479 = vld [vmem:[%s2266] sm:$0xf]
      %v2480 = vld [vmem:[%s231] sm:$0xf]
      %v2481 = vld [vmem:[%s231 + $0x4] sm:$0xf]
      %v2484 = vunpack.c.l.b16 %v2480
      %v2485 = vunpack.c.l.b16 %v2481
      %v2486 = vpack.c.b16 %v2485, %v2484
      %v2488 = vsel %vm239, %v2479, 0
      %v2491 = vand.u32 %v2486, %v246
      %2493 = vmatprep.subr.bf16.mxu0 0
      %2494 = vmatpush1.bf16.msra.mxu0 %v2491
      %2495 = vmatprep.subr.bf16.mxu0 0
      %2496 = vmatpush1.bf16.msra.mxu0 0
      %2497 = vmatprep.subr.bf16.mxu0 0
      %2498 = vmatpush1.bf16.msra.mxu0 0
      %2499 = vmatprep.subr.bf16.mxu0 0
      %2500 = vmatpush1.bf16.msra.mxu0 0
      %2501 = vmatprep.subr.bf16.mxu0 0
      %2502 = vmatpush1.bf16.msra.mxu0 0
      %2503 = vmatprep.subr.bf16.mxu0 0
      %2504 = vmatpush1.bf16.msra.mxu0 0
      %2505 = vmatprep.subr.bf16.mxu0 0
      %2506 = vmatpush1.bf16.msra.mxu0 0
      %2507 = vmatprep.subr.bf16.mxu0 0
      %2508 = vmatpush1.bf16.msra.mxu0 0
      %2509 = vmatprep.subr.bf16.mxu0 0
      %2510 = vmatpush1.bf16.msra.mxu0 0
      %2511 = vmatprep.subr.bf16.mxu0 0
      %2512 = vmatpush1.bf16.msra.mxu0 0
      %2513 = vmatprep.subr.bf16.mxu0 0
      %2514 = vmatpush1.bf16.msra.mxu0 0
      %2515 = vmatprep.subr.bf16.mxu0 0
      %2516 = vmatpush1.bf16.msra.mxu0 0
      %2517 = vmatprep.subr.bf16.mxu0 0
      %2518 = vmatpush1.bf16.msra.mxu0 0
      %2519 = vmatprep.subr.bf16.mxu0 0
      %2520 = vmatpush1.bf16.msra.mxu0 0
      %2521 = vmatprep.subr.bf16.mxu0 0
      %2522 = vmatpush1.bf16.msra.mxu0 0
      %2523 = vmatprep.subr.bf16.mxu0 0
      %2524 = vmatpush1.bf16.msra.mxu0 0
      %2525 = vmatprep.mubr.bf16.mxu0 0
      %2526 = vmatmul.mubr.bf16.gmra.mrb[0].mxu0 %v2488
      %v2527 = vpop.f32.mrb[0].mxu0
      %v2528 = vadd.f32 0.0, %v2527
      %v2529 = vpop.f32.mrb[0].mxu0
      %v2530 = vpop.f32.mrb[0].mxu0
      %v2531 = vpop.f32.mrb[0].mxu0
      %2532 = vdwg.mxu0
      %v2535 = vunpack.c.l.b16 %v2477
      %v2536 = vunpack.c.l.b16 %v2478
      %v2537 = vpack.c.b16 %v2536, %v2535
      %v2539 = vsel %vm239, %v2476, 0
      %v2542 = vand.u32 %v2537, %v246
      %2544 = vmatprep.subr.bf16.mxu0 0
      %2545 = vmatpush1.bf16.msra.mxu0 %v2542
      %2546 = vmatprep.subr.bf16.mxu0 0
      %2547 = vmatpush1.bf16.msra.mxu0 0
      %2548 = vmatprep.subr.bf16.mxu0 0
      %2549 = vmatpush1.bf16.msra.mxu0 0
      %2550 = vmatprep.subr.bf16.mxu0 0
      %2551 = vmatpush1.bf16.msra.mxu0 0
      %2552 = vmatprep.subr.bf16.mxu0 0
      %2553 = vmatpush1.bf16.msra.mxu0 0
      %2554 = vmatprep.subr.bf16.mxu0 0
      %2555 = vmatpush1.bf16.msra.mxu0 0
      %2556 = vmatprep.subr.bf16.mxu0 0
      %2557 = vmatpush1.bf16.msra.mxu0 0
      %2558 = vmatprep.subr.bf16.mxu0 0
      %2559 = vmatpush1.bf16.msra.mxu0 0
      %2560 = vmatprep.subr.bf16.mxu0 0
      %2561 = vmatpush1.bf16.msra.mxu0 0
      %2562 = vmatprep.subr.bf16.mxu0 0
      %2563 = vmatpush1.bf16.msra.mxu0 0
      %2564 = vmatprep.subr.bf16.mxu0 0
      %2565 = vmatpush1.bf16.msra.mxu0 0
      %2566 = vmatprep.subr.bf16.mxu0 0
      %2567 = vmatpush1.bf16.msra.mxu0 0
      %2568 = vmatprep.subr.bf16.mxu0 0
      %2569 = vmatpush1.bf16.msra.mxu0 0
      %2570 = vmatprep.subr.bf16.mxu0 0
      %2571 = vmatpush1.bf16.msra.mxu0 0
      %2572 = vmatprep.subr.bf16.mxu0 0
      %2573 = vmatpush1.bf16.msra.mxu0 0
      %2574 = vmatprep.subr.bf16.mxu0 0
      %2575 = vmatpush1.bf16.msra.mxu0 0
      %2576 = vmatprep.mubr.bf16.mxu0 0
      %2577 = vmatmul.mubr.bf16.gmra.mrb[0].mxu0 %v2539
      %v2578 = vpop.f32.mrb[0].mxu0
      %v2579 = vadd.f32 %v2528, %v2578
      %v2580 = vpop.f32.mrb[0].mxu0
      %v2581 = vpop.f32.mrb[0].mxu0
      %v2582 = vpop.f32.mrb[0].mxu0
      %2583 = vdwg.mxu0
      %v2584 = vld [vmem:[%s2322] sm:$0xf]
      %v2585 = vld [vmem:[%s343] sm:$0xf]
      %v2586 = vld [vmem:[%s343 + $0x4] sm:$0xf]
      %v2589 = vunpack.c.l.b16 %v2585
      %v2590 = vunpack.c.l.b16 %v2586
      %v2591 = vpack.c.b16 %v2590, %v2589
      %v2593 = vsel %vm239, %v2584, 0
      %v2596 = vand.u32 %v2591, %v246
      %2598 = vmatprep.subr.bf16.mxu0 0
      %2599 = vmatpush1.bf16.msra.mxu0 %v2596
      %2600 = vmatprep.subr.bf16.mxu0 0
      %2601 = vmatpush1.bf16.msra.mxu0 0
      %2602 = vmatprep.subr.bf16.mxu0 0
      %2603 = vmatpush1.bf16.msra.mxu0 0
      %2604 = vmatprep.subr.bf16.mxu0 0
      %2605 = vmatpush1.bf16.msra.mxu0 0
      %2606 = vmatprep.subr.bf16.mxu0 0
      %2607 = vmatpush1.bf16.msra.mxu0 0
      %2608 = vmatprep.subr.bf16.mxu0 0
      %2609 = vmatpush1.bf16.msra.mxu0 0
      %2610 = vmatprep.subr.bf16.mxu0 0
      %2611 = vmatpush1.bf16.msra.mxu0 0
      %2612 = vmatprep.subr.bf16.mxu0 0
      %2613 = vmatpush1.bf16.msra.mxu0 0
      %2614 = vmatprep.subr.bf16.mxu0 0
      %2615 = vmatpush1.bf16.msra.mxu0 0
      %2616 = vmatprep.subr.bf16.mxu0 0
      %2617 = vmatpush1.bf16.msra.mxu0 0
      %2618 = vmatprep.subr.bf16.mxu0 0
      %2619 = vmatpush1.bf16.msra.mxu0 0
      %2620 = vmatprep.subr.bf16.mxu0 0
      %2621 = vmatpush1.bf16.msra.mxu0 0
      %2622 = vmatprep.subr.bf16.mxu0 0
      %2623 = vmatpush1.bf16.msra.mxu0 0
      %2624 = vmatprep.subr.bf16.mxu0 0
      %2625 = vmatpush1.bf16.msra.mxu0 0
      %2626 = vmatprep.subr.bf16.mxu0 0
      %2627 = vmatpush1.bf16.msra.mxu0 0
      %2628 = vmatprep.subr.bf16.mxu0 0
      %2629 = vmatpush1.bf16.msra.mxu0 0
      %2630 = vmatprep.mubr.bf16.mxu0 0
      %2631 = vmatmul.mubr.bf16.gmra.mrb[0].mxu0 %v2593
      %v2632 = vpop.f32.mrb[0].mxu0
      %v2633 = vadd.f32 0.0, %v2632
      %v2634 = vpop.f32.mrb[0].mxu0
      %v2635 = vpop.f32.mrb[0].mxu0
      %v2636 = vpop.f32.mrb[0].mxu0
      %2637 = vdwg.mxu0
      %v2638 = vadd.f32 %v2579, %v2633
      %s2639 = scalar_lea.vmem %s219, 60
      %v2640 = vld [vmem:[%s2639] sm:$0xf]
      %v2641 = vld [vmem:[%s400] sm:$0xf]
      %v2642 = vld [vmem:[%s400 + $0x4] sm:$0xf]
      %v2645 = vunpack.c.l.b16 %v2641
      %v2646 = vunpack.c.l.b16 %v2642
      %v2647 = vpack.c.b16 %v2646, %v2645
      %v2649 = vsel %vm239, %v2640, 0
      %v2652 = vand.u32 %v2647, %v246
      %2654 = vmatprep.subr.bf16.mxu0 0
      %2655 = vmatpush1.bf16.msra.mxu0 %v2652
      %2656 = vmatprep.subr.bf16.mxu0 0
      %2657 = vmatpush1.bf16.msra.mxu0 0
      %2658 = vmatprep.subr.bf16.mxu0 0
      %2659 = vmatpush1.bf16.msra.mxu0 0
      %2660 = vmatprep.subr.bf16.mxu0 0
      %2661 = vmatpush1.bf16.msra.mxu0 0
      %2662 = vmatprep.subr.bf16.mxu0 0
      %2663 = vmatpush1.bf16.msra.mxu0 0
      %2664 = vmatprep.subr.bf16.mxu0 0
      %2665 = vmatpush1.bf16.msra.mxu0 0
      %2666 = vmatprep.subr.bf16.mxu0 0
      %2667 = vmatpush1.bf16.msra.mxu0 0
      %2668 = vmatprep.subr.bf16.mxu0 0
      %2669 = vmatpush1.bf16.msra.mxu0 0
      %2670 = vmatprep.subr.bf16.mxu0 0
      %2671 = vmatpush1.bf16.msra.mxu0 0
      %2672 = vmatprep.subr.bf16.mxu0 0
      %2673 = vmatpush1.bf16.msra.mxu0 0
      %2674 = vmatprep.subr.bf16.mxu0 0
      %2675 = vmatpush1.bf16.msra.mxu0 0
      %2676 = vmatprep.subr.bf16.mxu0 0
      %2677 = vmatpush1.bf16.msra.mxu0 0
      %2678 = vmatprep.subr.bf16.mxu0 0
      %2679 = vmatpush1.bf16.msra.mxu0 0
      %2680 = vmatprep.subr.bf16.mxu0 0
      %2681 = vmatpush1.bf16.msra.mxu0 0
      %2682 = vmatprep.subr.bf16.mxu0 0
      %2683 = vmatpush1.bf16.msra.mxu0 0
      %2684 = vmatprep.subr.bf16.mxu0 0
      %2685 = vmatpush1.bf16.msra.mxu0 0
      %2686 = vmatprep.mubr.bf16.mxu0 0
      %2687 = vmatmul.mubr.bf16.gmra.mrb[0].mxu0 %v2649
      %v2688 = vpop.f32.mrb[0].mxu0
      %v2689 = vadd.f32 0.0, %v2688
      %v2690 = vpop.f32.mrb[0].mxu0
      %v2691 = vpop.f32.mrb[0].mxu0
      %v2692 = vpop.f32.mrb[0].mxu0
      %2693 = vdwg.mxu0
      %v2694 = vadd.f32 %v2638, %v2689
      %s2695 = scalar_lea.vmem %s219, 64
      %v2696 = vld [vmem:[%s2695] sm:$0xf]
      %v2697 = vld [vmem:[%s457] sm:$0xf]
      %v2698 = vld [vmem:[%s457 + $0x4] sm:$0xf]
      %v2701 = vunpack.c.l.b16 %v2697
      %v2702 = vunpack.c.l.b16 %v2698
      %v2703 = vpack.c.b16 %v2702, %v2701
      %v2705 = vsel %vm239, %v2696, 0
      %v2708 = vand.u32 %v2703, %v246
      %2710 = vmatprep.subr.bf16.mxu0 0
      %2711 = vmatpush1.bf16.msra.mxu0 %v2708
      %2712 = vmatprep.subr.bf16.mxu0 0
      %2713 = vmatpush1.bf16.msra.mxu0 0
      %2714 = vmatprep.subr.bf16.mxu0 0
      %2715 = vmatpush1.bf16.msra.mxu0 0
      %2716 = vmatprep.subr.bf16.mxu0 0
      %2717 = vmatpush1.bf16.msra.mxu0 0
      %2718 = vmatprep.subr.bf16.mxu0 0
      %2719 = vmatpush1.bf16.msra.mxu0 0
      %2720 = vmatprep.subr.bf16.mxu0 0
      %2721 = vmatpush1.bf16.msra.mxu0 0
      %2722 = vmatprep.subr.bf16.mxu0 0
      %2723 = vmatpush1.bf16.msra.mxu0 0
      %2724 = vmatprep.subr.bf16.mxu0 0
      %2725 = vmatpush1.bf16.msra.mxu0 0
      %2726 = vmatprep.subr.bf16.mxu0 0
      %2727 = vmatpush1.bf16.msra.mxu0 0
      %2728 = vmatprep.subr.bf16.mxu0 0
      %2729 = vmatpush1.bf16.msra.mxu0 0
      %2730 = vmatprep.subr.bf16.mxu0 0
      %2731 = vmatpush1.bf16.msra.mxu0 0
      %2732 = vmatprep.subr.bf16.mxu0 0
      %2733 = vmatpush1.bf16.msra.mxu0 0
      %2734 = vmatprep.subr.bf16.mxu0 0
      %2735 = vmatpush1.bf16.msra.mxu0 0
      %2736 = vmatprep.subr.bf16.mxu0 0
      %2737 = vmatpush1.bf16.msra.mxu0 0
      %2738 = vmatprep.subr.bf16.mxu0 0
      %2739 = vmatpush1.bf16.msra.mxu0 0
      %2740 = vmatprep.subr.bf16.mxu0 0
      %2741 = vmatpush1.bf16.msra.mxu0 0
      %2742 = vmatprep.mubr.bf16.mxu0 0
      %2743 = vmatmul.mubr.bf16.gmra.mrb[0].mxu0 %v2705
      %v2744 = vpop.f32.mrb[0].mxu0
      %v2745 = vadd.f32 0.0, %v2744
      %v2746 = vpop.f32.mrb[0].mxu0
      %v2747 = vpop.f32.mrb[0].mxu0
      %v2748 = vpop.f32.mrb[0].mxu0
      %2749 = vdwg.mxu0
      %v2750 = vadd.f32 %v2694, %v2745
      %v2751 = vld [vmem:[%s2] sm:$0x1]
      %v2753 = vlaneseq
      %v2754 = vshrl.u32 %v2753, 7
      %v2755 = vsub.s32 0, %v2754
      %v2756 = vrot.slane %v2751, %v2755
      %v2758 = vadd.f32 %v2750, %v2756
      %v2759 = vmul.f32 %v2758, %v2758
      %v2760 = vld [vmem:[%s3] sm:$0xff]
      %v2761 = vld [vmem:[%s3 + $0x8] sm:$0xff]
      %v2762 = vld [vmem:[%s3 + $0x10] sm:$0xff]
      %v2763 = vld [vmem:[%s3 + $0x18] sm:$0xff]
      %v2764 = vld [vmem:[%s4] sm:$0x1]
      %v2766 = vlaneseq
      %v2767 = vshrl.u32 %v2766, 7
      %v2768 = vsub.s32 0, %v2767
      %v2769 = vrot.slane %v2764, %v2768
      %v2772 = vsel %vm532, %v2759, 0
      %2774 = vmatprep.subr.mxu0 0.0
      %2775 = vmatpush1.msra.mxu0 %v2760
      %2776 = vmatprep.subr.mxu0 0.0
      %2777 = vmatpush1.msra.mxu0 %v2761
      %2778 = vmatprep.subr.mxu0 0.0
      %2779 = vmatpush1.msra.mxu0 %v2762
      %2780 = vmatprep.subr.mxu0 0.0
      %2781 = vmatpush1.msra.mxu0 %v2763
      %2782 = vmatprep.subr.mxu0 0.0
      %2783 = vmatpush1.msra.mxu0 0.0
      %2784 = vmatprep.subr.mxu0 0.0
      %2785 = vmatpush1.msra.mxu0 0.0
      %2786 = vmatprep.subr.mxu0 0.0
      %2787 = vmatpush1.msra.mxu0 0.0
      %2788 = vmatprep.subr.mxu0 0.0
      %2789 = vmatpush1.msra.mxu0 0.0
      %2790 = vmatprep.subr.mxu0 0.0
      %2791 = vmatpush1.msra.mxu0 0.0
      %2792 = vmatprep.subr.mxu0 0.0
      %2793 = vmatpush1.msra.mxu0 0.0
      %2794 = vmatprep.subr.mxu0 0.0
      %2795 = vmatpush1.msra.mxu0 0.0
      %2796 = vmatprep.subr.mxu0 0.0
      %2797 = vmatpush1.msra.mxu0 0.0
      %2798 = vmatprep.subr.mxu0 0.0
      %2799 = vmatpush1.msra.mxu0 0.0
      %2800 = vmatprep.subr.mxu0 0.0
      %2801 = vmatpush1.msra.mxu0 0.0
      %2802 = vmatprep.subr.mxu0 0.0
      %2803 = vmatpush1.msra.mxu0 0.0
      %2804 = vmatprep.subr.mxu0 0.0
      %2805 = vmatpush1.msra.mxu0 0.0
      %2806 = vmatprep.subr.mxu0 0.0
      %2807 = vmatpush1.msra.mxu0 0.0
      %2808 = vmatprep.subr.mxu0 0.0
      %2809 = vmatpush1.msra.mxu0 0.0
      %2810 = vmatprep.subr.mxu0 0.0
      %2811 = vmatpush1.msra.mxu0 0.0
      %2812 = vmatprep.subr.mxu0 0.0
      %2813 = vmatpush1.msra.mxu0 0.0
      %2814 = vmatprep.subr.mxu0 0.0
      %2815 = vmatpush1.msra.mxu0 0.0
      %2816 = vmatprep.subr.mxu0 0.0
      %2817 = vmatpush1.msra.mxu0 0.0
      %2818 = vmatprep.subr.mxu0 0.0
      %2819 = vmatpush1.msra.mxu0 0.0
      %2820 = vmatprep.subr.mxu0 0.0
      %2821 = vmatpush1.msra.mxu0 0.0
      %2822 = vmatprep.subr.mxu0 0.0
      %2823 = vmatpush1.msra.mxu0 0.0
      %2824 = vmatprep.subr.mxu0 0.0
      %2825 = vmatpush1.msra.mxu0 0.0
      %2826 = vmatprep.subr.mxu0 0.0
      %2827 = vmatpush1.msra.mxu0 0.0
      %2828 = vmatprep.subr.mxu0 0.0
      %2829 = vmatpush1.msra.mxu0 0.0
      %2830 = vmatprep.subr.mxu0 0.0
      %2831 = vmatpush1.msra.mxu0 0.0
      %2832 = vmatprep.subr.mxu0 0.0
      %2833 = vmatpush1.msra.mxu0 0.0
      %2834 = vmatprep.subr.mxu0 0.0
      %2835 = vmatpush1.msra.mxu0 0.0
      %2836 = vmatprep.subr.mxu0 0.0
      %2837 = vmatpush1.msra.mxu0 0.0
      %2838 = vmatprep.mubr.f32.mxu0 0.0
      %2839 = vmatmul.mubr.f32.gmra.mrb[0].mxu0 %v2772
      %v2840 = vpop.f32.mrb[0].mxu0
      %v2841 = vadd.f32 %v2769, %v2840
      %v2842 = vpop.f32.mrb[0].mxu0
      %2843 = vdwg.mxu0
      %v2844 = vrsqrt.pop %v2841
      %v2845 = vmul.f32 %v2758, %v2844
      %v2846 = vpack.c.bf16 %v2845, %v2845
      %s2847 = scalar_lea.vmem %s224, 24
      %2848 = vst.msk [vmem:[%s2847] sm:$0xf] %vm609, %v2846
      %v2849 = vld [vmem:[%s2322] sm:$0xf]
      %v2850 = vld [vmem:[%s1] sm:$0xf]
      %v2851 = vld [vmem:[%s1 + $0x4] sm:$0xf]
      %v2852 = vld [vmem:[%s2639] sm:$0xf]
      %v2853 = vld [vmem:[%s231] sm:$0xf]
      %v2854 = vld [vmem:[%s231 + $0x4] sm:$0xf]
      %v2857 = vunpack.c.l.b16 %v2853
      %v2858 = vunpack.c.l.b16 %v2854
      %v2859 = vpack.c.b16 %v2858, %v2857
      %v2861 = vsel %vm239, %v2852, 0
      %v2864 = vand.u32 %v2859, %v246
      %2866 = vmatprep.subr.bf16.mxu0 0
      %2867 = vmatpush1.bf16.msra.mxu0 %v2864
      %2868 = vmatprep.subr.bf16.mxu0 0
      %2869 = vmatpush1.bf16.msra.mxu0 0
      %2870 = vmatprep.subr.bf16.mxu0 0
      %2871 = vmatpush1.bf16.msra.mxu0 0
      %2872 = vmatprep.subr.bf16.mxu0 0
      %2873 = vmatpush1.bf16.msra.mxu0 0
      %2874 = vmatprep.subr.bf16.mxu0 0
      %2875 = vmatpush1.bf16.msra.mxu0 0
      %2876 = vmatprep.subr.bf16.mxu0 0
      %2877 = vmatpush1.bf16.msra.mxu0 0
      %2878 = vmatprep.subr.bf16.mxu0 0
      %2879 = vmatpush1.bf16.msra.mxu0 0
      %2880 = vmatprep.subr.bf16.mxu0 0
      %2881 = vmatpush1.bf16.msra.mxu0 0
      %2882 = vmatprep.subr.bf16.mxu0 0
      %2883 = vmatpush1.bf16.msra.mxu0 0
      %2884 = vmatprep.subr.bf16.mxu0 0
      %2885 = vmatpush1.bf16.msra.mxu0 0
      %2886 = vmatprep.subr.bf16.mxu0 0
      %2887 = vmatpush1.bf16.msra.mxu0 0
      %2888 = vmatprep.subr.bf16.mxu0 0
      %2889 = vmatpush1.bf16.msra.mxu0 0
      %2890 = vmatprep.subr.bf16.mxu0 0
      %2891 = vmatpush1.bf16.msra.mxu0 0
      %2892 = vmatprep.subr.bf16.mxu0 0
      %2893 = vmatpush1.bf16.msra.mxu0 0
      %2894 = vmatprep.subr.bf16.mxu0 0
      %2895 = vmatpush1.bf16.msra.mxu0 0
      %2896 = vmatprep.subr.bf16.mxu0 0
      %2897 = vmatpush1.bf16.msra.mxu0 0
      %2898 = vmatprep.mubr.bf16.mxu0 0
      %2899 = vmatmul.mubr.bf16.gmra.mrb[0].mxu0 %v2861
      %v2900 = vpop.f32.mrb[0].mxu0
      %v2901 = vadd.f32 0.0, %v2900
      %v2902 = vpop.f32.mrb[0].mxu0
      %v2903 = vpop.f32.mrb[0].mxu0
      %v2904 = vpop.f32.mrb[0].mxu0
      %2905 = vdwg.mxu0
      %v2908 = vunpack.c.l.b16 %v2850
      %v2909 = vunpack.c.l.b16 %v2851
      %v2910 = vpack.c.b16 %v2909, %v2908
      %v2912 = vsel %vm239, %v2849, 0
      %v2915 = vand.u32 %v2910, %v246
      %2917 = vmatprep.subr.bf16.mxu0 0
      %2918 = vmatpush1.bf16.msra.mxu0 %v2915
      %2919 = vmatprep.subr.bf16.mxu0 0
      %2920 = vmatpush1.bf16.msra.mxu0 0
      %2921 = vmatprep.subr.bf16.mxu0 0
      %2922 = vmatpush1.bf16.msra.mxu0 0
      %2923 = vmatprep.subr.bf16.mxu0 0
      %2924 = vmatpush1.bf16.msra.mxu0 0
      %2925 = vmatprep.subr.bf16.mxu0 0
      %2926 = vmatpush1.bf16.msra.mxu0 0
      %2927 = vmatprep.subr.bf16.mxu0 0
      %2928 = vmatpush1.bf16.msra.mxu0 0
      %2929 = vmatprep.subr.bf16.mxu0 0
      %2930 = vmatpush1.bf16.msra.mxu0 0
      %2931 = vmatprep.subr.bf16.mxu0 0
      %2932 = vmatpush1.bf16.msra.mxu0 0
      %2933 = vmatprep.subr.bf16.mxu0 0
      %2934 = vmatpush1.bf16.msra.mxu0 0
      %2935 = vmatprep.subr.bf16.mxu0 0
      %2936 = vmatpush1.bf16.msra.mxu0 0
      %2937 = vmatprep.subr.bf16.mxu0 0
      %2938 = vmatpush1.bf16.msra.mxu0 0
      %2939 = vmatprep.subr.bf16.mxu0 0
      %2940 = vmatpush1.bf16.msra.mxu0 0
      %2941 = vmatprep.subr.bf16.mxu0 0
      %2942 = vmatpush1.bf16.msra.mxu0 0
      %2943 = vmatprep.subr.bf16.mxu0 0
      %2944 = vmatpush1.bf16.msra.mxu0 0
      %2945 = vmatprep.subr.bf16.mxu0 0
      %2946 = vmatpush1.bf16.msra.mxu0 0
      %2947 = vmatprep.subr.bf16.mxu0 0
      %2948 = vmatpush1.bf16.msra.mxu0 0
      %2949 = vmatprep.mubr.bf16.mxu0 0
      %2950 = vmatmul.mubr.bf16.gmra.mrb[0].mxu0 %v2912
      %v2951 = vpop.f32.mrb[0].mxu0
      %v2952 = vadd.f32 %v2901, %v2951
      %v2953 = vpop.f32.mrb[0].mxu0
      %v2954 = vpop.f32.mrb[0].mxu0
      %v2955 = vpop.f32.mrb[0].mxu0
      %2956 = vdwg.mxu0
      %v2957 = vld [vmem:[%s2695] sm:$0xf]
      %v2958 = vld [vmem:[%s343] sm:$0xf]
      %v2959 = vld [vmem:[%s343 + $0x4] sm:$0xf]
      %v2962 = vunpack.c.l.b16 %v2958
      %v2963 = vunpack.c.l.b16 %v2959
      %v2964 = vpack.c.b16 %v2963, %v2962
      %v2966 = vsel %vm239, %v2957, 0
      %v2969 = vand.u32 %v2964, %v246
      %2971 = vmatprep.subr.bf16.mxu0 0
      %2972 = vmatpush1.bf16.msra.mxu0 %v2969
      %2973 = vmatprep.subr.bf16.mxu0 0
      %2974 = vmatpush1.bf16.msra.mxu0 0
      %2975 = vmatprep.subr.bf16.mxu0 0
      %2976 = vmatpush1.bf16.msra.mxu0 0
      %2977 = vmatprep.subr.bf16.mxu0 0
      %2978 = vmatpush1.bf16.msra.mxu0 0
      %2979 = vmatprep.subr.bf16.mxu0 0
      %2980 = vmatpush1.bf16.msra.mxu0 0
      %2981 = vmatprep.subr.bf16.mxu0 0
      %2982 = vmatpush1.bf16.msra.mxu0 0
      %2983 = vmatprep.subr.bf16.mxu0 0
      %2984 = vmatpush1.bf16.msra.mxu0 0
      %2985 = vmatprep.subr.bf16.mxu0 0
      %2986 = vmatpush1.bf16.msra.mxu0 0
      %2987 = vmatprep.subr.bf16.mxu0 0
      %2988 = vmatpush1.bf16.msra.mxu0 0
      %2989 = vmatprep.subr.bf16.mxu0 0
      %2990 = vmatpush1.bf16.msra.mxu0 0
      %2991 = vmatprep.subr.bf16.mxu0 0
      %2992 = vmatpush1.bf16.msra.mxu0 0
      %2993 = vmatprep.subr.bf16.mxu0 0
      %2994 = vmatpush1.bf16.msra.mxu0 0
      %2995 = vmatprep.subr.bf16.mxu0 0
      %2996 = vmatpush1.bf16.msra.mxu0 0
      %2997 = vmatprep.subr.bf16.mxu0 0
      %2998 = vmatpush1.bf16.msra.mxu0 0
      %2999 = vmatprep.subr.bf16.mxu0 0
      %3000 = vmatpush1.bf16.msra.mxu0 0
      %3001 = vmatprep.subr.bf16.mxu0 0
      %3002 = vmatpush1.bf16.msra.mxu0 0
      %3003 = vmatprep.mubr.bf16.mxu0 0
      %3004 = vmatmul.mubr.bf16.gmra.mrb[0].mxu0 %v2966
      %v3005 = vpop.f32.mrb[0].mxu0
      %v3006 = vadd.f32 0.0, %v3005
      %v3007 = vpop.f32.mrb[0].mxu0
      %v3008 = vpop.f32.mrb[0].mxu0
      %v3009 = vpop.f32.mrb[0].mxu0
      %3010 = vdwg.mxu0
      %v3011 = vadd.f32 %v2952, %v3006
      %s3012 = scalar_lea.vmem %s219, 68
      %v3013 = vld [vmem:[%s3012] sm:$0xf]
      %v3014 = vld [vmem:[%s400] sm:$0xf]
      %v3015 = vld [vmem:[%s400 + $0x4] sm:$0xf]
      %v3018 = vunpack.c.l.b16 %v3014
      %v3019 = vunpack.c.l.b16 %v3015
      %v3020 = vpack.c.b16 %v3019, %v3018
      %v3022 = vsel %vm239, %v3013, 0
      %v3025 = vand.u32 %v3020, %v246
      %3027 = vmatprep.subr.bf16.mxu0 0
      %3028 = vmatpush1.bf16.msra.mxu0 %v3025
      %3029 = vmatprep.subr.bf16.mxu0 0
      %3030 = vmatpush1.bf16.msra.mxu0 0
      %3031 = vmatprep.subr.bf16.mxu0 0
      %3032 = vmatpush1.bf16.msra.mxu0 0
      %3033 = vmatprep.subr.bf16.mxu0 0
      %3034 = vmatpush1.bf16.msra.mxu0 0
      %3035 = vmatprep.subr.bf16.mxu0 0
      %3036 = vmatpush1.bf16.msra.mxu0 0
      %3037 = vmatprep.subr.bf16.mxu0 0
      %3038 = vmatpush1.bf16.msra.mxu0 0
      %3039 = vmatprep.subr.bf16.mxu0 0
      %3040 = vmatpush1.bf16.msra.mxu0 0
      %3041 = vmatprep.subr.bf16.mxu0 0
      %3042 = vmatpush1.bf16.msra.mxu0 0
      %3043 = vmatprep.subr.bf16.mxu0 0
      %3044 = vmatpush1.bf16.msra.mxu0 0
      %3045 = vmatprep.subr.bf16.mxu0 0
      %3046 = vmatpush1.bf16.msra.mxu0 0
      %3047 = vmatprep.subr.bf16.mxu0 0
      %3048 = vmatpush1.bf16.msra.mxu0 0
      %3049 = vmatprep.subr.bf16.mxu0 0
      %3050 = vmatpush1.bf16.msra.mxu0 0
      %3051 = vmatprep.subr.bf16.mxu0 0
      %3052 = vmatpush1.bf16.msra.mxu0 0
      %3053 = vmatprep.subr.bf16.mxu0 0
      %3054 = vmatpush1.bf16.msra.mxu0 0
      %3055 = vmatprep.subr.bf16.mxu0 0
      %3056 = vmatpush1.bf16.msra.mxu0 0
      %3057 = vmatprep.subr.bf16.mxu0 0
      %3058 = vmatpush1.bf16.msra.mxu0 0
      %3059 = vmatprep.mubr.bf16.mxu0 0
      %3060 = vmatmul.mubr.bf16.gmra.mrb[0].mxu0 %v3022
      %v3061 = vpop.f32.mrb[0].mxu0
      %v3062 = vadd.f32 0.0, %v3061
      %v3063 = vpop.f32.mrb[0].mxu0
      %v3064 = vpop.f32.mrb[0].mxu0
      %v3065 = vpop.f32.mrb[0].mxu0
      %3066 = vdwg.mxu0
      %v3067 = vadd.f32 %v3011, %v3062
      %s3068 = scalar_lea.vmem %s219, 72
      %v3069 = vld [vmem:[%s3068] sm:$0xf]
      %v3070 = vld [vmem:[%s457] sm:$0xf]
      %v3071 = vld [vmem:[%s457 + $0x4] sm:$0xf]
      %v3074 = vunpack.c.l.b16 %v3070
      %v3075 = vunpack.c.l.b16 %v3071
      %v3076 = vpack.c.b16 %v3075, %v3074
      %v3078 = vsel %vm239, %v3069, 0
      %v3081 = vand.u32 %v3076, %v246
      %3083 = vmatprep.subr.bf16.mxu0 0
      %3084 = vmatpush1.bf16.msra.mxu0 %v3081
      %3085 = vmatprep.subr.bf16.mxu0 0
      %3086 = vmatpush1.bf16.msra.mxu0 0
      %3087 = vmatprep.subr.bf16.mxu0 0
      %3088 = vmatpush1.bf16.msra.mxu0 0
      %3089 = vmatprep.subr.bf16.mxu0 0
      %3090 = vmatpush1.bf16.msra.mxu0 0
      %3091 = vmatprep.subr.bf16.mxu0 0
      %3092 = vmatpush1.bf16.msra.mxu0 0
      %3093 = vmatprep.subr.bf16.mxu0 0
      %3094 = vmatpush1.bf16.msra.mxu0 0
      %3095 = vmatprep.subr.bf16.mxu0 0
      %3096 = vmatpush1.bf16.msra.mxu0 0
      %3097 = vmatprep.subr.bf16.mxu0 0
      %3098 = vmatpush1.bf16.msra.mxu0 0
      %3099 = vmatprep.subr.bf16.mxu0 0
      %3100 = vmatpush1.bf16.msra.mxu0 0
      %3101 = vmatprep.subr.bf16.mxu0 0
      %3102 = vmatpush1.bf16.msra.mxu0 0
      %3103 = vmatprep.subr.bf16.mxu0 0
      %3104 = vmatpush1.bf16.msra.mxu0 0
      %3105 = vmatprep.subr.bf16.mxu0 0
      %3106 = vmatpush1.bf16.msra.mxu0 0
      %3107 = vmatprep.subr.bf16.mxu0 0
      %3108 = vmatpush1.bf16.msra.mxu0 0
      %3109 = vmatprep.subr.bf16.mxu0 0
      %3110 = vmatpush1.bf16.msra.mxu0 0
      %3111 = vmatprep.subr.bf16.mxu0 0
      %3112 = vmatpush1.bf16.msra.mxu0 0
      %3113 = vmatprep.subr.bf16.mxu0 0
      %3114 = vmatpush1.bf16.msra.mxu0 0
      %3115 = vmatprep.mubr.bf16.mxu0 0
      %3116 = vmatmul.mubr.bf16.gmra.mrb[0].mxu0 %v3078
      %v3117 = vpop.f32.mrb[0].mxu0
      %v3118 = vadd.f32 0.0, %v3117
      %v3119 = vpop.f32.mrb[0].mxu0
      %v3120 = vpop.f32.mrb[0].mxu0
      %v3121 = vpop.f32.mrb[0].mxu0
      %3122 = vdwg.mxu0
      %v3123 = vadd.f32 %v3067, %v3118
      %v3124 = vld [vmem:[%s2] sm:$0x1]
      %v3126 = vlaneseq
      %v3127 = vshrl.u32 %v3126, 7
      %v3128 = vsub.s32 0, %v3127
      %v3129 = vrot.slane %v3124, %v3128
      %v3131 = vadd.f32 %v3123, %v3129
      %v3132 = vmul.f32 %v3131, %v3131
      %v3133 = vld [vmem:[%s3] sm:$0xff]
      %v3134 = vld [vmem:[%s3 + $0x8] sm:$0xff]
      %v3135 = vld [vmem:[%s3 + $0x10] sm:$0xff]
      %v3136 = vld [vmem:[%s3 + $0x18] sm:$0xff]
      %v3137 = vld [vmem:[%s4] sm:$0x1]
      %v3139 = vlaneseq
      %v3140 = vshrl.u32 %v3139, 7
      %v3141 = vsub.s32 0, %v3140
      %v3142 = vrot.slane %v3137, %v3141
      %v3145 = vsel %vm532, %v3132, 0
      %3147 = vmatprep.subr.mxu0 0.0
      %3148 = vmatpush1.msra.mxu0 %v3133
      %3149 = vmatprep.subr.mxu0 0.0
      %3150 = vmatpush1.msra.mxu0 %v3134
      %3151 = vmatprep.subr.mxu0 0.0
      %3152 = vmatpush1.msra.mxu0 %v3135
      %3153 = vmatprep.subr.mxu0 0.0
      %3154 = vmatpush1.msra.mxu0 %v3136
      %3155 = vmatprep.subr.mxu0 0.0
      %3156 = vmatpush1.msra.mxu0 0.0
      %3157 = vmatprep.subr.mxu0 0.0
      %3158 = vmatpush1.msra.mxu0 0.0
      %3159 = vmatprep.subr.mxu0 0.0
      %3160 = vmatpush1.msra.mxu0 0.0
      %3161 = vmatprep.subr.mxu0 0.0
      %3162 = vmatpush1.msra.mxu0 0.0
      %3163 = vmatprep.subr.mxu0 0.0
      %3164 = vmatpush1.msra.mxu0 0.0
      %3165 = vmatprep.subr.mxu0 0.0
      %3166 = vmatpush1.msra.mxu0 0.0
      %3167 = vmatprep.subr.mxu0 0.0
      %3168 = vmatpush1.msra.mxu0 0.0
      %3169 = vmatprep.subr.mxu0 0.0
      %3170 = vmatpush1.msra.mxu0 0.0
      %3171 = vmatprep.subr.mxu0 0.0
      %3172 = vmatpush1.msra.mxu0 0.0
      %3173 = vmatprep.subr.mxu0 0.0
      %3174 = vmatpush1.msra.mxu0 0.0
      %3175 = vmatprep.subr.mxu0 0.0
      %3176 = vmatpush1.msra.mxu0 0.0
      %3177 = vmatprep.subr.mxu0 0.0
      %3178 = vmatpush1.msra.mxu0 0.0
      %3179 = vmatprep.subr.mxu0 0.0
      %3180 = vmatpush1.msra.mxu0 0.0
      %3181 = vmatprep.subr.mxu0 0.0
      %3182 = vmatpush1.msra.mxu0 0.0
      %3183 = vmatprep.subr.mxu0 0.0
      %3184 = vmatpush1.msra.mxu0 0.0
      %3185 = vmatprep.subr.mxu0 0.0
      %3186 = vmatpush1.msra.mxu0 0.0
      %3187 = vmatprep.subr.mxu0 0.0
      %3188 = vmatpush1.msra.mxu0 0.0
      %3189 = vmatprep.subr.mxu0 0.0
      %3190 = vmatpush1.msra.mxu0 0.0
      %3191 = vmatprep.subr.mxu0 0.0
      %3192 = vmatpush1.msra.mxu0 0.0
      %3193 = vmatprep.subr.mxu0 0.0
      %3194 = vmatpush1.msra.mxu0 0.0
      %3195 = vmatprep.subr.mxu0 0.0
      %3196 = vmatpush1.msra.mxu0 0.0
      %3197 = vmatprep.subr.mxu0 0.0
      %3198 = vmatpush1.msra.mxu0 0.0
      %3199 = vmatprep.subr.mxu0 0.0
      %3200 = vmatpush1.msra.mxu0 0.0
      %3201 = vmatprep.subr.mxu0 0.0
      %3202 = vmatpush1.msra.mxu0 0.0
      %3203 = vmatprep.subr.mxu0 0.0
      %3204 = vmatpush1.msra.mxu0 0.0
      %3205 = vmatprep.subr.mxu0 0.0
      %3206 = vmatpush1.msra.mxu0 0.0
      %3207 = vmatprep.subr.mxu0 0.0
      %3208 = vmatpush1.msra.mxu0 0.0
      %3209 = vmatprep.subr.mxu0 0.0
      %3210 = vmatpush1.msra.mxu0 0.0
      %3211 = vmatprep.mubr.f32.mxu0 0.0
      %3212 = vmatmul.mubr.f32.gmra.mrb[0].mxu0 %v3145
      %v3213 = vpop.f32.mrb[0].mxu0
      %v3214 = vadd.f32 %v3142, %v3213
      %v3215 = vpop.f32.mrb[0].mxu0
      %3216 = vdwg.mxu0
      %v3217 = vrsqrt.pop %v3214
      %v3218 = vmul.f32 %v3131, %v3217
      %v3219 = vpack.c.bf16 %v3218, %v3218
      %s3220 = scalar_lea.vmem %s224, 28
      %3221 = vst.msk [vmem:[%s3220] sm:$0xf] %vm609, %v3219
      %p3222 = scmp.lt.s32.totalorder %s16, 1
      %s3223 = scalar_select %p3222, %s16, 1
      %s3224 = smul.addr %s3223, 8
      %s3225 = smul.addr %s3224, 4
      %s3226 = scalar_lea.vmem %s5, %s3225
      // Predicated region
      $region41: #{analysis_forward.4} parent=39 // pred_check
        %p3227 = pneg %p144
      $region42: #{analysis_forward.4} parent=39 // pred_check_branch
        %3229 = sbr.rel (%p3227) target = $region44
      $region43: #{analysis_forward.4} parent=39 // pred_region
        _
      $region44: #{analysis_forward.4} parent=39 // pred_fallthru
        _
    $region40: #{analysis_forward.4} parent=5 // pred_fallthru
      _
    %p3230 = scmp.le.s32.totalorder 2, %s11
    // Predicated region
    $region45: #{analysis_forward.4} parent=5 // pred_check
      %p3231 = pneg %p3230
    $region46: #{analysis_forward.4} parent=5 // pred_check_branch
      %3233 = sbr.rel (%p3231) target = $region48
    $region47: #{analysis_forward.4} parent=5 // pred_region
      %s3234 = ssub.s32 %s11, 2
      // Predicated region
      $region49: #{analysis_forward.4} parent=47 // pred_check
        %p3235 = pneg %p150
      $region50: #{analysis_forward.4} parent=47 // pred_check_branch
        %3237 = sbr.rel (%p3235) target = $region52
      $region51: #{analysis_forward.4} parent=47 // pred_region
        %p3238 = scmp.lt.s32.totalorder %s17, 1
        %s3239 = scalar_select %p3238, %s17, 1
        %s3240 = smul.addr %s3239, 8
        %s3241 = smul.addr %s3240, 4
        %s3242 = scalar_lea.vmem %s5, %s3241
      $region52: #{analysis_forward.4} parent=47 // pred_fallthru
        _
    $region48: #{analysis_forward.4} parent=5 // pred_fallthru
      _
  $region6: #{analysis_forward.4} parent=0 // loop_footer
    %s15 = sadd.s32 1, %s11
  $region7: #{analysis_forward.4} parent=0 // loop_footer_branch
    %10 = sbr.rel target = $region3
  $region8: #{analysis_forward.4} parent=0 // loop_exit
    _

// kernel: analysis_forward.5
$region0: #{analysis_forward.5}
  #allocation0 [shape = 'u32[]', space=smem, size = 0x4, offset = 0x4, fixed_abs, tag = 'smem constant byte address 0x4 - core index']
  #allocation1 [shape = 'u32[144,128]{1,0:T(1,128)}', space=vmem, size = 0x12000, scoped, tag = 'internal scratch']
  %s0 = inlined_call_operand.vmem [shape: bf16[2,12,4,160], index: 0, kind: input, shape index: {}]
  %s1 = inlined_call_operand.vmem [shape: bf16[5,160,32], index: 1, kind: input, shape index: {}]
  %s2 = inlined_call_operand.vmem [shape: f32[1,32], index: 2, kind: input, shape index: {}]
  %s3 = inlined_call_operand.vmem [shape: f32[32,32], index: 3, kind: input, shape index: {}]
  %s4 = inlined_call_operand.vmem [shape: f32[1,32], index: 4, kind: input, shape index: {}]
  %s5 = inlined_call_operand.vmem [shape: bf16[2,4,4,32], index: 5, kind: output, shape index: {}]
  %s6 = sld [smem:[#allocation0]]
  $region53: #{analysis_forward.5} parent=0
    _
  %s8 = ssub.s32 1, %s6
  %s9 = scalar_select 0, %s8, %s6
  loop: start=0, step=1, limit=4
  $region2: #{analysis_forward.5} parent=0 // loop_pre_header
    _
  $region3: #{analysis_forward.5} parent=0 // loop_header
    %s11 = sphi 0, %s15
    %p12 = scmp.ge.s32.totalorder %s11, 4
    %s21 = sphi 0, %s23
    %s24 = sphi 0, %s21
    %s25 = sphi 0, %s24
    %s41 = sphi 0, %s25
    %s45 = sphi 0, %s45
    %s47 = sphi 0, %s45
    %s48 = sphi 0, %s47
    %s62 = sphi 0, %s48
    %s66 = sphi 0, %s66
    %s68 = sphi 0, %s66
    %s69 = sphi 0, %s68
    %s83 = sphi 0, %s69
    %s87 = sphi 0, %s87
    %s89 = sphi 0, %s87
    %s90 = sphi 0, %s89
    %s104 = sphi 0, %s90
    %s108 = sphi 0, %s108
    %s110 = sphi 0, %s108
    %s111 = sphi 0, %s110
    %s125 = sphi 0, %s111
    %s131 = sphi 0, %s133
    %s134 = sphi 0, %s131
    %s135 = sphi 0, %s134
    %s151 = sphi 0, %s135
  $region4: #{analysis_forward.5} parent=0 // loop_header_branch
    %14 = sbr.rel (%p12) target = $region8
  $region5: #{analysis_forward.5} parent=0 // loop_body
    %s16 = ssub.s32 %s11, 1
    %s17 = ssub.s32 %s11, 2
    %s18 = sadd.s32 %s11, 1
    %s19 = ssub.s32 %s11, %s18
    %p20 = scmp.eq.s32.totalorder %s19, 0
    %s22 = sadd.s32 %s21, 1
    %s23 = scalar_select %p20, %s21, %s22
    %p26 = pneg %p20
    %p27 = scmp.eq.s32.totalorder %s11, 1
    %p28 = por %p26, %p27
    %p29 = scmp.ne.s32.totalorder %s21, %s24
    %p30 = scmp.eq.s32.totalorder %s11, 0
    %p31 = por %p29, %p30
    %p32 = scmp.ne.s32.totalorder %s21, %s24
    %p33 = scmp.eq.s32.totalorder %s16, 1
    %p34 = por %p32, %p33
    %p35 = scmp.ne.s32.totalorder %s24, %s25
    %p36 = scmp.eq.s32.totalorder %s16, 0
    %p37 = por %p35, %p36
    %p38 = scmp.ne.s32.totalorder %s24, %s25
    %p39 = scmp.eq.s32.totalorder %s17, 1
    %p40 = por %p38, %p39
    %p42 = scmp.ne.s32.totalorder %s25, %s41
    %p43 = scmp.eq.s32.totalorder %s17, 0
    %p44 = por %p42, %p43
    %s46 = sadd.s32 %s45, 1
    %p49 = scmp.eq.s32.totalorder %s11, 1
    %p50 = scmp.ne.s32.totalorder %s45, %s47
    %p51 = scmp.eq.s32.totalorder %s11, 0
    %p52 = por %p50, %p51
    %p53 = scmp.ne.s32.totalorder %s45, %s47
    %p54 = scmp.eq.s32.totalorder %s16, 1
    %p55 = por %p53, %p54
    %p56 = scmp.ne.s32.totalorder %s47, %s48
    %p57 = scmp.eq.s32.totalorder %s16, 0
    %p58 = por %p56, %p57
    %p59 = scmp.ne.s32.totalorder %s47, %s48
    %p60 = scmp.eq.s32.totalorder %s17, 1
    %p61 = por %p59, %p60
    %p63 = scmp.ne.s32.totalorder %s48, %s62
    %p64 = scmp.eq.s32.totalorder %s17, 0
    %p65 = por %p63, %p64
    %s67 = sadd.s32 %s66, 1
    %p70 = scmp.eq.s32.totalorder %s11, 1
    %p71 = scmp.ne.s32.totalorder %s66, %s68
    %p72 = scmp.eq.s32.totalorder %s11, 0
    %p73 = por %p71, %p72
    %p74 = scmp.ne.s32.totalorder %s66, %s68
    %p75 = scmp.eq.s32.totalorder %s16, 1
    %p76 = por %p74, %p75
    %p77 = scmp.ne.s32.totalorder %s68, %s69
    %p78 = scmp.eq.s32.totalorder %s16, 0
    %p79 = por %p77, %p78
    %p80 = scmp.ne.s32.totalorder %s68, %s69
    %p81 = scmp.eq.s32.totalorder %s17, 1
    %p82 = por %p80, %p81
    %p84 = scmp.ne.s32.totalorder %s69, %s83
    %p85 = scmp.eq.s32.totalorder %s17, 0
    %p86 = por %p84, %p85
    %s88 = sadd.s32 %s87, 1
    %p91 = scmp.eq.s32.totalorder %s11, 1
    %p92 = scmp.ne.s32.totalorder %s87, %s89
    %p93 = scmp.eq.s32.totalorder %s11, 0
    %p94 = por %p92, %p93
    %p95 = scmp.ne.s32.totalorder %s87, %s89
    %p96 = scmp.eq.s32.totalorder %s16, 1
    %p97 = por %p95, %p96
    %p98 = scmp.ne.s32.totalorder %s89, %s90
    %p99 = scmp.eq.s32.totalorder %s16, 0
    %p100 = por %p98, %p99
    %p101 = scmp.ne.s32.totalorder %s89, %s90
    %p102 = scmp.eq.s32.totalorder %s17, 1
    %p103 = por %p101, %p102
    %p105 = scmp.ne.s32.totalorder %s90, %s104
    %p106 = scmp.eq.s32.totalorder %s17, 0
    %p107 = por %p105, %p106
    %s109 = sadd.s32 %s108, 1
    %p112 = scmp.eq.s32.totalorder %s11, 1
    %p113 = scmp.ne.s32.totalorder %s108, %s110
    %p114 = scmp.eq.s32.totalorder %s11, 0
    %p115 = por %p113, %p114
    %p116 = scmp.ne.s32.totalorder %s108, %s110
    %p117 = scmp.eq.s32.totalorder %s16, 1
    %p118 = por %p116, %p117
    %p119 = scmp.ne.s32.totalorder %s110, %s111
    %p120 = scmp.eq.s32.totalorder %s16, 0
    %p121 = por %p119, %p120
    %p122 = scmp.ne.s32.totalorder %s110, %s111
    %p123 = scmp.eq.s32.totalorder %s17, 1
    %p124 = por %p122, %p123
    %p126 = scmp.ne.s32.totalorder %s111, %s125
    %p127 = scmp.eq.s32.totalorder %s17, 0
    %p128 = por %p126, %p127
    %s129 = ssub.s32 %s11, %s18
    %p130 = scmp.eq.s32.totalorder %s129, 0
    %s132 = sadd.s32 %s131, 1
    %s133 = scalar_select %p130, %s131, %s132
    %p136 = pneg %p130
    %p137 = scmp.eq.s32.totalorder %s11, 1
    %p138 = por %p136, %p137
    %p139 = scmp.ne.s32.totalorder %s131, %s134
    %p140 = scmp.eq.s32.totalorder %s11, 0
    %p141 = por %p139, %p140
    %p142 = scmp.ne.s32.totalorder %s131, %s134
    %p143 = scmp.eq.s32.totalorder %s16, 1
    %p144 = por %p142, %p143
    %p145 = scmp.ne.s32.totalorder %s134, %s135
    %p146 = scmp.eq.s32.totalorder %s16, 0
    %p147 = por %p145, %p146
    %p148 = scmp.ne.s32.totalorder %s134, %s135
    %p149 = scmp.eq.s32.totalorder %s17, 1
    %p150 = por %p148, %p149
    %p152 = scmp.ne.s32.totalorder %s135, %s151
    %p153 = scmp.eq.s32.totalorder %s17, 0
    %p154 = por %p152, %p153
    %p155 = scmp.le.s32.totalorder 1, %s11
    %p156 = scmp.lt.s32.totalorder %s11, 3
    %p157 = pnand %p155, %p156
    %p158 = pneg %p157
    // Predicated region
    $region9: #{analysis_forward.5} parent=5 // pred_check
      _
    $region10: #{analysis_forward.5} parent=5 // pred_check_branch
      %160 = sbr.rel (%p157) target = $region12
    $region11: #{analysis_forward.5} parent=5 // pred_region
      %s161 = ssub.s32 %s11, 1
      // Predicated region
      $region13: #{analysis_forward.5} parent=11 // pred_check
        %p162 = pneg %p58
      $region14: #{analysis_forward.5} parent=11 // pred_check_branch
        %164 = sbr.rel (%p162) target = $region16
      $region15: #{analysis_forward.5} parent=11 // pred_region
        _
      $region16: #{analysis_forward.5} parent=11 // pred_fallthru
        _
      // Predicated region
      $region17: #{analysis_forward.5} parent=11 // pred_check
        %p165 = pneg %p79
      $region18: #{analysis_forward.5} parent=11 // pred_check_branch
        %167 = sbr.rel (%p165) target = $region20
      $region19: #{analysis_forward.5} parent=11 // pred_region
        _
      $region20: #{analysis_forward.5} parent=11 // pred_fallthru
        _
      // Predicated region
      $region21: #{analysis_forward.5} parent=11 // pred_check
        %p168 = pneg %p100
      $region22: #{analysis_forward.5} parent=11 // pred_check_branch
        %170 = sbr.rel (%p168) target = $region24
      $region23: #{analysis_forward.5} parent=11 // pred_region
        _
      $region24: #{analysis_forward.5} parent=11 // pred_fallthru
        _
      // Predicated region
      $region25: #{analysis_forward.5} parent=11 // pred_check
        %p171 = pneg %p121
      $region26: #{analysis_forward.5} parent=11 // pred_check_branch
        %173 = sbr.rel (%p171) target = $region28
      $region27: #{analysis_forward.5} parent=11 // pred_region
        _
      $region28: #{analysis_forward.5} parent=11 // pred_fallthru
        _
    $region12: #{analysis_forward.5} parent=5 // pred_fallthru
      _
    %p174 = scmp.lt.s32.totalorder %s11, 2
    // Predicated region
    $region29: #{analysis_forward.5} parent=5 // pred_check
      %p175 = pneg %p174
    $region30: #{analysis_forward.5} parent=5 // pred_check_branch
      %177 = sbr.rel (%p175) target = $region32
    $region31: #{analysis_forward.5} parent=5 // pred_region
      // Predicated region
      $region33: #{analysis_forward.5} parent=31 // pred_check
        %p178 = pneg %p31
      $region34: #{analysis_forward.5} parent=31 // pred_check_branch
        %180 = sbr.rel (%p178) target = $region36
      $region35: #{analysis_forward.5} parent=31 // pred_region
        %p181 = scmp.lt.s32.totalorder %s11, 1
        %s182 = scalar_select %p181, %s11, 1
        %s183 = smul.addr %s182, 24
        %s184 = smul.addr %s183, 2
        %s185 = scalar_lea.vmem %s0, %s184
      $region36: #{analysis_forward.5} parent=31 // pred_fallthru
        _
    $region32: #{analysis_forward.5} parent=5 // pred_fallthru
      _
    %p186 = scmp.le.s32.totalorder 1, %s11
    %p187 = scmp.lt.s32.totalorder %s11, 3
    %p188 = pnand %p186, %p187
    %p189 = pneg %p188
    // Predicated region
    $region37: #{analysis_forward.5} parent=5 // pred_check
      _
    $region38: #{analysis_forward.5} parent=5 // pred_check_branch
      %191 = sbr.rel (%p188) target = $region40
    $region39: #{analysis_forward.5} parent=5 // pred_region
      %s192 = ssub.s32 %s11, 1
      %p193 = scmp.lt.s32.totalorder %s16, 1
      %s194 = scalar_select %p193, %s16, 1
      %s195 = smul.addr %s194, 24
      %s196 = smul.addr %s195, 2
      %s197 = scalar_lea.vmem %s0, %s196
      %p198 = pneg %p37
      %p199 = pneg %p34
      %p200 = pneg %p58
      %p201 = pneg %p55
      %p202 = pneg %p79
      %p203 = pneg %p76
      %p204 = pneg %p100
      %p205 = pneg %p97
      %p206 = pneg %p121
      %p207 = pneg %p118
      %p208 = pneg %p147
      %p209 = pneg %p144
      %p210 = scmp.lt.s32.totalorder %s16, 1
      %s211 = scalar_select %p210, %s16, 1
      %s212 = smul.addr %s211, 4
      %s213 = smul.addr %s212, 2
      %s214 = scalar_lea.vmem %s5, %s213
      %p215 = scmp.lt.s32.totalorder %s16, 1
      %s216 = scalar_select %p215, %s16, 1
      %s217 = smul.addr %s216, 24
      %s218 = smul.addr %s217, 2
      %s219 = scalar_lea.vmem %s0, %s218
      %p220 = scmp.lt.s32.totalorder %s16, 1
      %s221 = scalar_select %p220, %s16, 1
      %s222 = smul.addr %s221, 4
      %s223 = smul.addr %s222, 2
      %s224 = scalar_lea.vmem %s5, %s223
      %v226 = vld [vmem:[%s219] sm:$0xf]
      %v227 = vld [vmem:[%s1] sm:$0xf]
      %v228 = vld [vmem:[%s1 + $0x4] sm:$0xf]
      %v229 = vld [vmem:[%s1 + $0x8] sm:$0xf]
      %v230 = vld [vmem:[%s1 + $0xc] sm:$0xf]
      %v231 = vld [vmem:[%s1 + $0x10] sm:$0xf]
      %v232 = vld [vmem:[%s1 + $0x14] sm:$0xf]
      %v233 = vld [vmem:[%s1 + $0x18] sm:$0xf]
      %v234 = vld [vmem:[%s1 + $0x1c] sm:$0xf]
      %v235 = vld [vmem:[%s1 + $0x20] sm:$0xf]
      %v236 = vld [vmem:[%s1 + $0x24] sm:$0xf]
      %v237 = vld [vmem:[%s1 + $0x28] sm:$0xf]
      %v238 = vld [vmem:[%s1 + $0x2c] sm:$0xf]
      %v239 = vld [vmem:[%s1 + $0x30] sm:$0xf]
      %v240 = vld [vmem:[%s1 + $0x34] sm:$0xf]
      %v241 = vld [vmem:[%s1 + $0x38] sm:$0xf]
      %v242 = vld [vmem:[%s1 + $0x3c] sm:$0xf]
      %v243 = vld [vmem:[%s1 + $0x40] sm:$0xf]
      %v244 = vld [vmem:[%s1 + $0x44] sm:$0xf]
      %v245 = vld [vmem:[%s1 + $0x48] sm:$0xf]
      %v246 = vld [vmem:[%s1 + $0x4c] sm:$0xf]
      %s247 = scalar_lea.vmem %s219, 4
      %v248 = vld [vmem:[%s247] sm:$0xf]
      %s249 = scalar_lea.vmem %s1, 80
      %v250 = vld [vmem:[%s249] sm:$0xf]
      %v251 = vld [vmem:[%s249 + $0x4] sm:$0xf]
      %v252 = vld [vmem:[%s249 + $0x8] sm:$0xf]
      %v253 = vld [vmem:[%s249 + $0xc] sm:$0xf]
      %v254 = vld [vmem:[%s249 + $0x10] sm:$0xf]
      %v255 = vld [vmem:[%s249 + $0x14] sm:$0xf]
      %v256 = vld [vmem:[%s249 + $0x18] sm:$0xf]
      %v257 = vld [vmem:[%s249 + $0x1c] sm:$0xf]
      %v258 = vld [vmem:[%s249 + $0x20] sm:$0xf]
      %v259 = vld [vmem:[%s249 + $0x24] sm:$0xf]
      %v260 = vld [vmem:[%s249 + $0x28] sm:$0xf]
      %v261 = vld [vmem:[%s249 + $0x2c] sm:$0xf]
      %v262 = vld [vmem:[%s249 + $0x30] sm:$0xf]
      %v263 = vld [vmem:[%s249 + $0x34] sm:$0xf]
      %v264 = vld [vmem:[%s249 + $0x38] sm:$0xf]
      %v265 = vld [vmem:[%s249 + $0x3c] sm:$0xf]
      %v266 = vld [vmem:[%s249 + $0x40] sm:$0xf]
      %v267 = vld [vmem:[%s249 + $0x44] sm:$0xf]
      %v268 = vld [vmem:[%s249 + $0x48] sm:$0xf]
      %v269 = vld [vmem:[%s249 + $0x4c] sm:$0xf]
      %v272 = vunpack.c.l.s4 1983009808
      %v273 = vunpack.c.0.s8 %v272
      %v274 = vlaneseq
      %v275 = vshrl.u32 %v274, 7
      %v276 = vsub.s32 %v273, %v275
      %v277 = vrot.slane %v248, %v276
      %v278 = vcombine.high %v277, %v277
      %v300 = vunpack.c.l.b16 %v250
      %v301 = vunpack.c.l.b16 %v251
      %v302 = vunpack.c.l.b16 %v252
      %v303 = vunpack.c.l.b16 %v253
      %v304 = vunpack.c.l.b16 %v254
      %v305 = vunpack.c.l.b16 %v255
      %v306 = vunpack.c.l.b16 %v256
      %v307 = vunpack.c.l.b16 %v257
      %v308 = vunpack.c.l.b16 %v258
      %v309 = vunpack.c.l.b16 %v259
      %v310 = vunpack.c.l.b16 %v260
      %v311 = vunpack.c.l.b16 %v261
      %v312 = vunpack.c.l.b16 %v262
      %v313 = vunpack.c.l.b16 %v263
      %v314 = vunpack.c.l.b16 %v264
      %v315 = vunpack.c.l.b16 %v265
      %v316 = vunpack.c.l.b16 %v266
      %v317 = vunpack.c.l.b16 %v267
      %v318 = vunpack.c.l.b16 %v268
      %v319 = vunpack.c.l.b16 %v269
      %v320 = vpack.c.b16 %v301, %v300
      %v321 = vpack.c.b16 %v303, %v302
      %v322 = vpack.c.b16 %v305, %v304
      %v323 = vpack.c.b16 %v307, %v306
      %v324 = vpack.c.b16 %v309, %v308
      %v325 = vpack.c.b16 %v311, %v310
      %v326 = vpack.c.b16 %v313, %v312
      %v327 = vpack.c.b16 %v315, %v314
      %v328 = vpack.c.b16 %v317, %v316
      %v329 = vpack.c.b16 %v319, %v318
      %vm340 = vcmask 261120
      %v342 = vsel %vm340, %v278, 0
      %344 = vmatprep.subr.bf16.mxu0 0
      %345 = vmatpush1.bf16.msra.mxu0 %v320
      %346 = vmatprep.subr.bf16.mxu0 0
      %347 = vmatpush1.bf16.msra.mxu0 %v321
      %348 = vmatprep.subr.bf16.mxu0 0
      %349 = vmatpush1.bf16.msra.mxu0 %v322
      %350 = vmatprep.subr.bf16.mxu0 0
      %351 = vmatpush1.bf16.msra.mxu0 %v323
      %352 = vmatprep.subr.bf16.mxu0 0
      %353 = vmatpush1.bf16.msra.mxu0 %v324
      %354 = vmatprep.subr.bf16.mxu0 0
      %355 = vmatpush1.bf16.msra.mxu0 %v325
      %356 = vmatprep.subr.bf16.mxu0 0
      %357 = vmatpush1.bf16.msra.mxu0 %v326
      %358 = vmatprep.subr.bf16.mxu0 0
      %359 = vmatpush1.bf16.msra.mxu0 %v327
      %360 = vmatprep.subr.bf16.mxu0 0
      %361 = vmatpush1.bf16.msra.mxu0 %v328
      %362 = vmatprep.subr.bf16.mxu0 0
      %363 = vmatpush1.bf16.msra.mxu0 %v329
      %364 = vmatprep.subr.bf16.mxu0 0
      %365 = vmatpush1.bf16.msra.mxu0 0
      %366 = vmatprep.subr.bf16.mxu0 0
      %367 = vmatpush1.bf16.msra.mxu0 0
      %368 = vmatprep.subr.bf16.mxu0 0
      %369 = vmatpush1.bf16.msra.mxu0 0
      %370 = vmatprep.subr.bf16.mxu0 0
      %371 = vmatpush1.bf16.msra.mxu0 0
      %372 = vmatprep.subr.bf16.mxu0 0
      %373 = vmatpush1.bf16.msra.mxu0 0
      %374 = vmatprep.subr.bf16.mxu0 0
      %375 = vmatpush1.bf16.msra.mxu0 0
      %376 = vmatprep.mubr.bf16.mxu0 %v342
      %377 = vmatmul.mubr.bf16.gmra.mrb[0].mxu0 %v277
      %v378 = vpop.f32.mrb[0].mxu0
      %v379 = vadd.f32 0.0, %v378
      %v380 = vpop.f32.mrb[0].mxu0
      %v381 = vpop.f32.mrb[0].mxu0
      %v382 = vpop.f32.mrb[0].mxu0
      %383 = vdwg.mxu0
      %v386 = vunpack.c.l.s4 1983009808
      %v387 = vunpack.c.0.s8 %v386
      %v388 = vlaneseq
      %v389 = vshrl.u32 %v388, 7
      %v390 = vsub.s32 %v387, %v389
      %v391 = vrot.slane %v226, %v390
      %v392 = vcombine.high %v391, %v391
      %v414 = vunpack.c.l.b16 %v227
      %v415 = vunpack.c.l.b16 %v228
      %v416 = vunpack.c.l.b16 %v229
      %v417 = vunpack.c.l.b16 %v230
      %v418 = vunpack.c.l.b16 %v231
      %v419 = vunpack.c.l.b16 %v232
      %v420 = vunpack.c.l.b16 %v233
      %v421 = vunpack.c.l.b16 %v234
      %v422 = vunpack.c.l.b16 %v235
      %v423 = vunpack.c.l.b16 %v236
      %v424 = vunpack.c.l.b16 %v237
      %v425 = vunpack.c.l.b16 %v238
      %v426 = vunpack.c.l.b16 %v239
      %v427 = vunpack.c.l.b16 %v240
      %v428 = vunpack.c.l.b16 %v241
      %v429 = vunpack.c.l.b16 %v242
      %v430 = vunpack.c.l.b16 %v243
      %v431 = vunpack.c.l.b16 %v244
      %v432 = vunpack.c.l.b16 %v245
      %v433 = vunpack.c.l.b16 %v246
      %v434 = vpack.c.b16 %v415, %v414
      %v435 = vpack.c.b16 %v417, %v416
      %v436 = vpack.c.b16 %v419, %v418
      %v437 = vpack.c.b16 %v421, %v420
      %v438 = vpack.c.b16 %v423, %v422
      %v439 = vpack.c.b16 %v425, %v424
      %v440 = vpack.c.b16 %v427, %v426
      %v441 = vpack.c.b16 %v429, %v428
      %v442 = vpack.c.b16 %v431, %v430
      %v443 = vpack.c.b16 %v433, %v432
      %v455 = vsel %vm340, %v392, 0
      %457 = vmatprep.subr.bf16.mxu0 0
      %458 = vmatpush1.bf16.msra.mxu0 %v434
      %459 = vmatprep.subr.bf16.mxu0 0
      %460 = vmatpush1.bf16.msra.mxu0 %v435
      %461 = vmatprep.subr.bf16.mxu0 0
      %462 = vmatpush1.bf16.msra.mxu0 %v436
      %463 = vmatprep.subr.bf16.mxu0 0
      %464 = vmatpush1.bf16.msra.mxu0 %v437
      %465 = vmatprep.subr.bf16.mxu0 0
      %466 = vmatpush1.bf16.msra.mxu0 %v438
      %467 = vmatprep.subr.bf16.mxu0 0
      %468 = vmatpush1.bf16.msra.mxu0 %v439
      %469 = vmatprep.subr.bf16.mxu0 0
      %470 = vmatpush1.bf16.msra.mxu0 %v440
      %471 = vmatprep.subr.bf16.mxu0 0
      %472 = vmatpush1.bf16.msra.mxu0 %v441
      %473 = vmatprep.subr.bf16.mxu0 0
      %474 = vmatpush1.bf16.msra.mxu0 %v442
      %475 = vmatprep.subr.bf16.mxu0 0
      %476 = vmatpush1.bf16.msra.mxu0 %v443
      %477 = vmatprep.subr.bf16.mxu0 0
      %478 = vmatpush1.bf16.msra.mxu0 0
      %479 = vmatprep.subr.bf16.mxu0 0
      %480 = vmatpush1.bf16.msra.mxu0 0
      %481 = vmatprep.subr.bf16.mxu0 0
      %482 = vmatpush1.bf16.msra.mxu0 0
      %483 = vmatprep.subr.bf16.mxu0 0
      %484 = vmatpush1.bf16.msra.mxu0 0
      %485 = vmatprep.subr.bf16.mxu0 0
      %486 = vmatpush1.bf16.msra.mxu0 0
      %487 = vmatprep.subr.bf16.mxu0 0
      %488 = vmatpush1.bf16.msra.mxu0 0
      %489 = vmatprep.mubr.bf16.mxu0 %v455
      %490 = vmatmul.mubr.bf16.gmra.mrb[0].mxu0 %v391
      %v491 = vpop.f32.mrb[0].mxu0
      %v492 = vadd.f32 %v379, %v491
      %v493 = vpop.f32.mrb[0].mxu0
      %v494 = vpop.f32.mrb[0].mxu0
      %v495 = vpop.f32.mrb[0].mxu0
      %496 = vdwg.mxu0
      %s497 = scalar_lea.vmem %s219, 8
      %v498 = vld [vmem:[%s497] sm:$0xf]
      %s499 = scalar_lea.vmem %s1, 160
      %v500 = vld [vmem:[%s499] sm:$0xf]
      %v501 = vld [vmem:[%s499 + $0x4] sm:$0xf]
      %v502 = vld [vmem:[%s499 + $0x8] sm:$0xf]
      %v503 = vld [vmem:[%s499 + $0xc] sm:$0xf]
      %v504 = vld [vmem:[%s499 + $0x10] sm:$0xf]
      %v505 = vld [vmem:[%s499 + $0x14] sm:$0xf]
      %v506 = vld [vmem:[%s499 + $0x18] sm:$0xf]
      %v507 = vld [vmem:[%s499 + $0x1c] sm:$0xf]
      %v508 = vld [vmem:[%s499 + $0x20] sm:$0xf]
      %v509 = vld [vmem:[%s499 + $0x24] sm:$0xf]
      %v510 = vld [vmem:[%s499 + $0x28] sm:$0xf]
      %v511 = vld [vmem:[%s499 + $0x2c] sm:$0xf]
      %v512 = vld [vmem:[%s499 + $0x30] sm:$0xf]
      %v513 = vld [vmem:[%s499 + $0x34] sm:$0xf]
      %v514 = vld [vmem:[%s499 + $0x38] sm:$0xf]
      %v515 = vld [vmem:[%s499 + $0x3c] sm:$0xf]
      %v516 = vld [vmem:[%s499 + $0x40] sm:$0xf]
      %v517 = vld [vmem:[%s499 + $0x44] sm:$0xf]
      %v518 = vld [vmem:[%s499 + $0x48] sm:$0xf]
      %v519 = vld [vmem:[%s499 + $0x4c] sm:$0xf]
      %v522 = vunpack.c.l.s4 1983009808
      %v523 = vunpack.c.0.s8 %v522
      %v524 = vlaneseq
      %v525 = vshrl.u32 %v524, 7
      %v526 = vsub.s32 %v523, %v525
      %v527 = vrot.slane %v498, %v526
      %v528 = vcombine.high %v527, %v527
      %v550 = vunpack.c.l.b16 %v500
      %v551 = vunpack.c.l.b16 %v501
      %v552 = vunpack.c.l.b16 %v502
      %v553 = vunpack.c.l.b16 %v503
      %v554 = vunpack.c.l.b16 %v504
      %v555 = vunpack.c.l.b16 %v505
      %v556 = vunpack.c.l.b16 %v506
      %v557 = vunpack.c.l.b16 %v507
      %v558 = vunpack.c.l.b16 %v508
      %v559 = vunpack.c.l.b16 %v509
      %v560 = vunpack.c.l.b16 %v510
      %v561 = vunpack.c.l.b16 %v511
      %v562 = vunpack.c.l.b16 %v512
      %v563 = vunpack.c.l.b16 %v513
      %v564 = vunpack.c.l.b16 %v514
      %v565 = vunpack.c.l.b16 %v515
      %v566 = vunpack.c.l.b16 %v516
      %v567 = vunpack.c.l.b16 %v517
      %v568 = vunpack.c.l.b16 %v518
      %v569 = vunpack.c.l.b16 %v519
      %v570 = vpack.c.b16 %v551, %v550
      %v571 = vpack.c.b16 %v553, %v552
      %v572 = vpack.c.b16 %v555, %v554
      %v573 = vpack.c.b16 %v557, %v556
      %v574 = vpack.c.b16 %v559, %v558
      %v575 = vpack.c.b16 %v561, %v560
      %v576 = vpack.c.b16 %v563, %v562
      %v577 = vpack.c.b16 %v565, %v564
      %v578 = vpack.c.b16 %v567, %v566
      %v579 = vpack.c.b16 %v569, %v568
      %v591 = vsel %vm340, %v528, 0
      %593 = vmatprep.subr.bf16.mxu0 0
      %594 = vmatpush1.bf16.msra.mxu0 %v570
      %595 = vmatprep.subr.bf16.mxu0 0
      %596 = vmatpush1.bf16.msra.mxu0 %v571
      %597 = vmatprep.subr.bf16.mxu0 0
      %598 = vmatpush1.bf16.msra.mxu0 %v572
      %599 = vmatprep.subr.bf16.mxu0 0
      %600 = vmatpush1.bf16.msra.mxu0 %v573
      %601 = vmatprep.subr.bf16.mxu0 0
      %602 = vmatpush1.bf16.msra.mxu0 %v574
      %603 = vmatprep.subr.bf16.mxu0 0
      %604 = vmatpush1.bf16.msra.mxu0 %v575
      %605 = vmatprep.subr.bf16.mxu0 0
      %606 = vmatpush1.bf16.msra.mxu0 %v576
      %607 = vmatprep.subr.bf16.mxu0 0
      %608 = vmatpush1.bf16.msra.mxu0 %v577
      %609 = vmatprep.subr.bf16.mxu0 0
      %610 = vmatpush1.bf16.msra.mxu0 %v578
      %611 = vmatprep.subr.bf16.mxu0 0
      %612 = vmatpush1.bf16.msra.mxu0 %v579
      %613 = vmatprep.subr.bf16.mxu0 0
      %614 = vmatpush1.bf16.msra.mxu0 0
      %615 = vmatprep.subr.bf16.mxu0 0
      %616 = vmatpush1.bf16.msra.mxu0 0
      %617 = vmatprep.subr.bf16.mxu0 0
      %618 = vmatpush1.bf16.msra.mxu0 0
      %619 = vmatprep.subr.bf16.mxu0 0
      %620 = vmatpush1.bf16.msra.mxu0 0
      %621 = vmatprep.subr.bf16.mxu0 0
      %622 = vmatpush1.bf16.msra.mxu0 0
      %623 = vmatprep.subr.bf16.mxu0 0
      %624 = vmatpush1.bf16.msra.mxu0 0
      %625 = vmatprep.mubr.bf16.mxu0 %v591
      %626 = vmatmul.mubr.bf16.gmra.mrb[0].mxu0 %v527
      %v627 = vpop.f32.mrb[0].mxu0
      %v628 = vadd.f32 0.0, %v627
      %v629 = vpop.f32.mrb[0].mxu0
      %v630 = vpop.f32.mrb[0].mxu0
      %v631 = vpop.f32.mrb[0].mxu0
      %632 = vdwg.mxu0
      %v633 = vadd.f32 %v492, %v628
      %s634 = scalar_lea.vmem %s219, 12
      %v635 = vld [vmem:[%s634] sm:$0xf]
      %s636 = scalar_lea.vmem %s1, 240
      %v637 = vld [vmem:[%s636] sm:$0xf]
      %v638 = vld [vmem:[%s636 + $0x4] sm:$0xf]
      %v639 = vld [vmem:[%s636 + $0x8] sm:$0xf]
      %v640 = vld [vmem:[%s636 + $0xc] sm:$0xf]
      %v641 = vld [vmem:[%s636 + $0x10] sm:$0xf]
      %v642 = vld [vmem:[%s636 + $0x14] sm:$0xf]
      %v643 = vld [vmem:[%s636 + $0x18] sm:$0xf]
      %v644 = vld [vmem:[%s636 + $0x1c] sm:$0xf]
      %v645 = vld [vmem:[%s636 + $0x20] sm:$0xf]
      %v646 = vld [vmem:[%s636 + $0x24] sm:$0xf]
      %v647 = vld [vmem:[%s636 + $0x28] sm:$0xf]
      %v648 = vld [vmem:[%s636 + $0x2c] sm:$0xf]
      %v649 = vld [vmem:[%s636 + $0x30] sm:$0xf]
      %v650 = vld [vmem:[%s636 + $0x34] sm:$0xf]
      %v651 = vld [vmem:[%s636 + $0x38] sm:$0xf]
      %v652 = vld [vmem:[%s636 + $0x3c] sm:$0xf]
      %v653 = vld [vmem:[%s636 + $0x40] sm:$0xf]
      %v654 = vld [vmem:[%s636 + $0x44] sm:$0xf]
      %v655 = vld [vmem:[%s636 + $0x48] sm:$0xf]
      %v656 = vld [vmem:[%s636 + $0x4c] sm:$0xf]
      %v659 = vunpack.c.l.s4 1983009808
      %v660 = vunpack.c.0.s8 %v659
      %v661 = vlaneseq
      %v662 = vshrl.u32 %v661, 7
      %v663 = vsub.s32 %v660, %v662
      %v664 = vrot.slane %v635, %v663
      %v665 = vcombine.high %v664, %v664
      %v687 = vunpack.c.l.b16 %v637
      %v688 = vunpack.c.l.b16 %v638
      %v689 = vunpack.c.l.b16 %v639
      %v690 = vunpack.c.l.b16 %v640
      %v691 = vunpack.c.l.b16 %v641
      %v692 = vunpack.c.l.b16 %v642
      %v693 = vunpack.c.l.b16 %v643
      %v694 = vunpack.c.l.b16 %v644
      %v695 = vunpack.c.l.b16 %v645
      %v696 = vunpack.c.l.b16 %v646
      %v697 = vunpack.c.l.b16 %v647
      %v698 = vunpack.c.l.b16 %v648
      %v699 = vunpack.c.l.b16 %v649
      %v700 = vunpack.c.l.b16 %v650
      %v701 = vunpack.c.l.b16 %v651
      %v702 = vunpack.c.l.b16 %v652
      %v703 = vunpack.c.l.b16 %v653
      %v704 = vunpack.c.l.b16 %v654
      %v705 = vunpack.c.l.b16 %v655
      %v706 = vunpack.c.l.b16 %v656
      %v707 = vpack.c.b16 %v688, %v687
      %v708 = vpack.c.b16 %v690, %v689
      %v709 = vpack.c.b16 %v692, %v691
      %v710 = vpack.c.b16 %v694, %v693
      %v711 = vpack.c.b16 %v696, %v695
      %v712 = vpack.c.b16 %v698, %v697
      %v713 = vpack.c.b16 %v700, %v699
      %v714 = vpack.c.b16 %v702, %v701
      %v715 = vpack.c.b16 %v704, %v703
      %v716 = vpack.c.b16 %v706, %v705
      %v728 = vsel %vm340, %v665, 0
      %730 = vmatprep.subr.bf16.mxu0 0
      %731 = vmatpush1.bf16.msra.mxu0 %v707
      %732 = vmatprep.subr.bf16.mxu0 0
      %733 = vmatpush1.bf16.msra.mxu0 %v708
      %734 = vmatprep.subr.bf16.mxu0 0
      %735 = vmatpush1.bf16.msra.mxu0 %v709
      %736 = vmatprep.subr.bf16.mxu0 0
      %737 = vmatpush1.bf16.msra.mxu0 %v710
      %738 = vmatprep.subr.bf16.mxu0 0
      %739 = vmatpush1.bf16.msra.mxu0 %v711
      %740 = vmatprep.subr.bf16.mxu0 0
      %741 = vmatpush1.bf16.msra.mxu0 %v712
      %742 = vmatprep.subr.bf16.mxu0 0
      %743 = vmatpush1.bf16.msra.mxu0 %v713
      %744 = vmatprep.subr.bf16.mxu0 0
      %745 = vmatpush1.bf16.msra.mxu0 %v714
      %746 = vmatprep.subr.bf16.mxu0 0
      %747 = vmatpush1.bf16.msra.mxu0 %v715
      %748 = vmatprep.subr.bf16.mxu0 0
      %749 = vmatpush1.bf16.msra.mxu0 %v716
      %750 = vmatprep.subr.bf16.mxu0 0
      %751 = vmatpush1.bf16.msra.mxu0 0
      %752 = vmatprep.subr.bf16.mxu0 0
      %753 = vmatpush1.bf16.msra.mxu0 0
      %754 = vmatprep.subr.bf16.mxu0 0
      %755 = vmatpush1.bf16.msra.mxu0 0
      %756 = vmatprep.subr.bf16.mxu0 0
      %757 = vmatpush1.bf16.msra.mxu0 0
      %758 = vmatprep.subr.bf16.mxu0 0
      %759 = vmatpush1.bf16.msra.mxu0 0
      %760 = vmatprep.subr.bf16.mxu0 0
      %761 = vmatpush1.bf16.msra.mxu0 0
      %762 = vmatprep.mubr.bf16.mxu0 %v728
      %763 = vmatmul.mubr.bf16.gmra.mrb[0].mxu0 %v664
      %v764 = vpop.f32.mrb[0].mxu0
      %v765 = vadd.f32 0.0, %v764
      %v766 = vpop.f32.mrb[0].mxu0
      %v767 = vpop.f32.mrb[0].mxu0
      %v768 = vpop.f32.mrb[0].mxu0
      %769 = vdwg.mxu0
      %v770 = vadd.f32 %v633, %v765
      %s771 = scalar_lea.vmem %s219, 16
      %v772 = vld [vmem:[%s771] sm:$0xf]
      %s773 = scalar_lea.vmem %s1, 320
      %v774 = vld [vmem:[%s773] sm:$0xf]
      %v775 = vld [vmem:[%s773 + $0x4] sm:$0xf]
      %v776 = vld [vmem:[%s773 + $0x8] sm:$0xf]
      %v777 = vld [vmem:[%s773 + $0xc] sm:$0xf]
      %v778 = vld [vmem:[%s773 + $0x10] sm:$0xf]
      %v779 = vld [vmem:[%s773 + $0x14] sm:$0xf]
      %v780 = vld [vmem:[%s773 + $0x18] sm:$0xf]
      %v781 = vld [vmem:[%s773 + $0x1c] sm:$0xf]
      %v782 = vld [vmem:[%s773 + $0x20] sm:$0xf]
      %v783 = vld [vmem:[%s773 + $0x24] sm:$0xf]
      %v784 = vld [vmem:[%s773 + $0x28] sm:$0xf]
      %v785 = vld [vmem:[%s773 + $0x2c] sm:$0xf]
      %v786 = vld [vmem:[%s773 + $0x30] sm:$0xf]
      %v787 = vld [vmem:[%s773 + $0x34] sm:$0xf]
      %v788 = vld [vmem:[%s773 + $0x38] sm:$0xf]
      %v789 = vld [vmem:[%s773 + $0x3c] sm:$0xf]
      %v790 = vld [vmem:[%s773 + $0x40] sm:$0xf]
      %v791 = vld [vmem:[%s773 + $0x44] sm:$0xf]
      %v792 = vld [vmem:[%s773 + $0x48] sm:$0xf]
      %v793 = vld [vmem:[%s773 + $0x4c] sm:$0xf]
      %v796 = vunpack.c.l.s4 1983009808
      %v797 = vunpack.c.0.s8 %v796
      %v798 = vlaneseq
      %v799 = vshrl.u32 %v798, 7
      %v800 = vsub.s32 %v797, %v799
      %v801 = vrot.slane %v772, %v800
      %v802 = vcombine.high %v801, %v801
      %v824 = vunpack.c.l.b16 %v774
      %v825 = vunpack.c.l.b16 %v775
      %v826 = vunpack.c.l.b16 %v776
      %v827 = vunpack.c.l.b16 %v777
      %v828 = vunpack.c.l.b16 %v778
      %v829 = vunpack.c.l.b16 %v779
      %v830 = vunpack.c.l.b16 %v780
      %v831 = vunpack.c.l.b16 %v781
      %v832 = vunpack.c.l.b16 %v782
      %v833 = vunpack.c.l.b16 %v783
      %v834 = vunpack.c.l.b16 %v784
      %v835 = vunpack.c.l.b16 %v785
      %v836 = vunpack.c.l.b16 %v786
      %v837 = vunpack.c.l.b16 %v787
      %v838 = vunpack.c.l.b16 %v788
      %v839 = vunpack.c.l.b16 %v789
      %v840 = vunpack.c.l.b16 %v790
      %v841 = vunpack.c.l.b16 %v791
      %v842 = vunpack.c.l.b16 %v792
      %v843 = vunpack.c.l.b16 %v793
      %v844 = vpack.c.b16 %v825, %v824
      %v845 = vpack.c.b16 %v827, %v826
      %v846 = vpack.c.b16 %v829, %v828
      %v847 = vpack.c.b16 %v831, %v830
      %v848 = vpack.c.b16 %v833, %v832
      %v849 = vpack.c.b16 %v835, %v834
      %v850 = vpack.c.b16 %v837, %v836
      %v851 = vpack.c.b16 %v839, %v838
      %v852 = vpack.c.b16 %v841, %v840
      %v853 = vpack.c.b16 %v843, %v842
      %v865 = vsel %vm340, %v802, 0
      %867 = vmatprep.subr.bf16.mxu0 0
      %868 = vmatpush1.bf16.msra.mxu0 %v844
      %869 = vmatprep.subr.bf16.mxu0 0
      %870 = vmatpush1.bf16.msra.mxu0 %v845
      %871 = vmatprep.subr.bf16.mxu0 0
      %872 = vmatpush1.bf16.msra.mxu0 %v846
      %873 = vmatprep.subr.bf16.mxu0 0
      %874 = vmatpush1.bf16.msra.mxu0 %v847
      %875 = vmatprep.subr.bf16.mxu0 0
      %876 = vmatpush1.bf16.msra.mxu0 %v848
      %877 = vmatprep.subr.bf16.mxu0 0
      %878 = vmatpush1.bf16.msra.mxu0 %v849
      %879 = vmatprep.subr.bf16.mxu0 0
      %880 = vmatpush1.bf16.msra.mxu0 %v850
      %881 = vmatprep.subr.bf16.mxu0 0
      %882 = vmatpush1.bf16.msra.mxu0 %v851
      %883 = vmatprep.subr.bf16.mxu0 0
      %884 = vmatpush1.bf16.msra.mxu0 %v852
      %885 = vmatprep.subr.bf16.mxu0 0
      %886 = vmatpush1.bf16.msra.mxu0 %v853
      %887 = vmatprep.subr.bf16.mxu0 0
      %888 = vmatpush1.bf16.msra.mxu0 0
      %889 = vmatprep.subr.bf16.mxu0 0
      %890 = vmatpush1.bf16.msra.mxu0 0
      %891 = vmatprep.subr.bf16.mxu0 0
      %892 = vmatpush1.bf16.msra.mxu0 0
      %893 = vmatprep.subr.bf16.mxu0 0
      %894 = vmatpush1.bf16.msra.mxu0 0
      %895 = vmatprep.subr.bf16.mxu0 0
      %896 = vmatpush1.bf16.msra.mxu0 0
      %897 = vmatprep.subr.bf16.mxu0 0
      %898 = vmatpush1.bf16.msra.mxu0 0
      %899 = vmatprep.mubr.bf16.mxu0 %v865
      %900 = vmatmul.mubr.bf16.gmra.mrb[0].mxu0 %v801
      %v901 = vpop.f32.mrb[0].mxu0
      %v902 = vadd.f32 0.0, %v901
      %v903 = vpop.f32.mrb[0].mxu0
      %v904 = vpop.f32.mrb[0].mxu0
      %v905 = vpop.f32.mrb[0].mxu0
      %906 = vdwg.mxu0
      %v907 = vadd.f32 %v770, %v902
      %v908 = vld [vmem:[%s2] sm:$0x1]
      %v910 = vlaneseq
      %v911 = vshrl.u32 %v910, 7
      %v912 = vsub.s32 0, %v911
      %v913 = vrot.slane %v908, %v912
      %v915 = vadd.f32 %v907, %v913
      %v916 = vmul.f32 %v915, %v915
      %v917 = vld [vmem:[%s3] sm:$0xff]
      %v918 = vld [vmem:[%s3 + $0x8] sm:$0xff]
      %v919 = vld [vmem:[%s3 + $0x10] sm:$0xff]
      %v920 = vld [vmem:[%s3 + $0x18] sm:$0xff]
      %v921 = vld [vmem:[%s4] sm:$0x1]
      %v923 = vlaneseq
      %v924 = vshrl.u32 %v923, 7
      %v925 = vsub.s32 0, %v924
      %v926 = vrot.slane %v921, %v925
      %v929 = vsel %vm340, %v916, 0
      %931 = vmatprep.subr.mxu0 0.0
      %932 = vmatpush1.msra.mxu0 %v917
      %933 = vmatprep.subr.mxu0 0.0
      %934 = vmatpush1.msra.mxu0 %v918
      %935 = vmatprep.subr.mxu0 0.0
      %936 = vmatpush1.msra.mxu0 %v919
      %937 = vmatprep.subr.mxu0 0.0
      %938 = vmatpush1.msra.mxu0 %v920
      %939 = vmatprep.subr.mxu0 0.0
      %940 = vmatpush1.msra.mxu0 0.0
      %941 = vmatprep.subr.mxu0 0.0
      %942 = vmatpush1.msra.mxu0 0.0
      %943 = vmatprep.subr.mxu0 0.0
      %944 = vmatpush1.msra.mxu0 0.0
      %945 = vmatprep.subr.mxu0 0.0
      %946 = vmatpush1.msra.mxu0 0.0
      %947 = vmatprep.subr.mxu0 0.0
      %948 = vmatpush1.msra.mxu0 0.0
      %949 = vmatprep.subr.mxu0 0.0
      %950 = vmatpush1.msra.mxu0 0.0
      %951 = vmatprep.subr.mxu0 0.0
      %952 = vmatpush1.msra.mxu0 0.0
      %953 = vmatprep.subr.mxu0 0.0
      %954 = vmatpush1.msra.mxu0 0.0
      %955 = vmatprep.subr.mxu0 0.0
      %956 = vmatpush1.msra.mxu0 0.0
      %957 = vmatprep.subr.mxu0 0.0
      %958 = vmatpush1.msra.mxu0 0.0
      %959 = vmatprep.subr.mxu0 0.0
      %960 = vmatpush1.msra.mxu0 0.0
      %961 = vmatprep.subr.mxu0 0.0
      %962 = vmatpush1.msra.mxu0 0.0
      %963 = vmatprep.subr.mxu0 0.0
      %964 = vmatpush1.msra.mxu0 0.0
      %965 = vmatprep.subr.mxu0 0.0
      %966 = vmatpush1.msra.mxu0 0.0
      %967 = vmatprep.subr.mxu0 0.0
      %968 = vmatpush1.msra.mxu0 0.0
      %969 = vmatprep.subr.mxu0 0.0
      %970 = vmatpush1.msra.mxu0 0.0
      %971 = vmatprep.subr.mxu0 0.0
      %972 = vmatpush1.msra.mxu0 0.0
      %973 = vmatprep.subr.mxu0 0.0
      %974 = vmatpush1.msra.mxu0 0.0
      %975 = vmatprep.subr.mxu0 0.0
      %976 = vmatpush1.msra.mxu0 0.0
      %977 = vmatprep.subr.mxu0 0.0
      %978 = vmatpush1.msra.mxu0 0.0
      %979 = vmatprep.subr.mxu0 0.0
      %980 = vmatpush1.msra.mxu0 0.0
      %981 = vmatprep.subr.mxu0 0.0
      %982 = vmatpush1.msra.mxu0 0.0
      %983 = vmatprep.subr.mxu0 0.0
      %984 = vmatpush1.msra.mxu0 0.0
      %985 = vmatprep.subr.mxu0 0.0
      %986 = vmatpush1.msra.mxu0 0.0
      %987 = vmatprep.subr.mxu0 0.0
      %988 = vmatpush1.msra.mxu0 0.0
      %989 = vmatprep.subr.mxu0 0.0
      %990 = vmatpush1.msra.mxu0 0.0
      %991 = vmatprep.subr.mxu0 0.0
      %992 = vmatpush1.msra.mxu0 0.0
      %993 = vmatprep.subr.mxu0 0.0
      %994 = vmatpush1.msra.mxu0 0.0
      %995 = vmatprep.mubr.f32.mxu0 0.0
      %996 = vmatmul.mubr.f32.gmra.mrb[0].mxu0 %v929
      %v997 = vpop.f32.mrb[0].mxu0
      %v998 = vadd.f32 %v926, %v997
      %v999 = vpop.f32.mrb[0].mxu0
      %1000 = vdwg.mxu0
      %v1001 = vrsqrt.pop %v998
      %v1002 = vmul.f32 %v915, %v1001
      %v1003 = vpack.c.bf16 %v1002, %v1002
      %vm1004 = vcmask 254976
      %1005 = vst.msk [vmem:[%s224] sm:$0x3] %vm1004, %v1003
      %v1006 = vld [vmem:[%s497] sm:$0xf]
      %v1007 = vld [vmem:[%s1] sm:$0xf]
      %v1008 = vld [vmem:[%s1 + $0x4] sm:$0xf]
      %v1009 = vld [vmem:[%s1 + $0x8] sm:$0xf]
      %v1010 = vld [vmem:[%s1 + $0xc] sm:$0xf]
      %v1011 = vld [vmem:[%s1 + $0x10] sm:$0xf]
      %v1012 = vld [vmem:[%s1 + $0x14] sm:$0xf]
      %v1013 = vld [vmem:[%s1 + $0x18] sm:$0xf]
      %v1014 = vld [vmem:[%s1 + $0x1c] sm:$0xf]
      %v1015 = vld [vmem:[%s1 + $0x20] sm:$0xf]
      %v1016 = vld [vmem:[%s1 + $0x24] sm:$0xf]
      %v1017 = vld [vmem:[%s1 + $0x28] sm:$0xf]
      %v1018 = vld [vmem:[%s1 + $0x2c] sm:$0xf]
      %v1019 = vld [vmem:[%s1 + $0x30] sm:$0xf]
      %v1020 = vld [vmem:[%s1 + $0x34] sm:$0xf]
      %v1021 = vld [vmem:[%s1 + $0x38] sm:$0xf]
      %v1022 = vld [vmem:[%s1 + $0x3c] sm:$0xf]
      %v1023 = vld [vmem:[%s1 + $0x40] sm:$0xf]
      %v1024 = vld [vmem:[%s1 + $0x44] sm:$0xf]
      %v1025 = vld [vmem:[%s1 + $0x48] sm:$0xf]
      %v1026 = vld [vmem:[%s1 + $0x4c] sm:$0xf]
      %v1027 = vld [vmem:[%s634] sm:$0xf]
      %v1028 = vld [vmem:[%s249] sm:$0xf]
      %v1029 = vld [vmem:[%s249 + $0x4] sm:$0xf]
      %v1030 = vld [vmem:[%s249 + $0x8] sm:$0xf]
      %v1031 = vld [vmem:[%s249 + $0xc] sm:$0xf]
      %v1032 = vld [vmem:[%s249 + $0x10] sm:$0xf]
      %v1033 = vld [vmem:[%s249 + $0x14] sm:$0xf]
      %v1034 = vld [vmem:[%s249 + $0x18] sm:$0xf]
      %v1035 = vld [vmem:[%s249 + $0x1c] sm:$0xf]
      %v1036 = vld [vmem:[%s249 + $0x20] sm:$0xf]
      %v1037 = vld [vmem:[%s249 + $0x24] sm:$0xf]
      %v1038 = vld [vmem:[%s249 + $0x28] sm:$0xf]
      %v1039 = vld [vmem:[%s249 + $0x2c] sm:$0xf]
      %v1040 = vld [vmem:[%s249 + $0x30] sm:$0xf]
      %v1041 = vld [vmem:[%s249 + $0x34] sm:$0xf]
      %v1042 = vld [vmem:[%s249 + $0x38] sm:$0xf]
      %v1043 = vld [vmem:[%s249 + $0x3c] sm:$0xf]
      %v1044 = vld [vmem:[%s249 + $0x40] sm:$0xf]
      %v1045 = vld [vmem:[%s249 + $0x44] sm:$0xf]
      %v1046 = vld [vmem:[%s249 + $0x48] sm:$0xf]
      %v1047 = vld [vmem:[%s249 + $0x4c] sm:$0xf]
      %v1050 = vunpack.c.l.s4 1983009808
      %v1051 = vunpack.c.0.s8 %v1050
      %v1052 = vlaneseq
      %v1053 = vshrl.u32 %v1052, 7
      %v1054 = vsub.s32 %v1051, %v1053
      %v1055 = vrot.slane %v1027, %v1054
      %v1056 = vcombine.high %v1055, %v1055
      %v1078 = vunpack.c.l.b16 %v1028
      %v1079 = vunpack.c.l.b16 %v1029
      %v1080 = vunpack.c.l.b16 %v1030
      %v1081 = vunpack.c.l.b16 %v1031
      %v1082 = vunpack.c.l.b16 %v1032
      %v1083 = vunpack.c.l.b16 %v1033
      %v1084 = vunpack.c.l.b16 %v1034
      %v1085 = vunpack.c.l.b16 %v1035
      %v1086 = vunpack.c.l.b16 %v1036
      %v1087 = vunpack.c.l.b16 %v1037
      %v1088 = vunpack.c.l.b16 %v1038
      %v1089 = vunpack.c.l.b16 %v1039
      %v1090 = vunpack.c.l.b16 %v1040
      %v1091 = vunpack.c.l.b16 %v1041
      %v1092 = vunpack.c.l.b16 %v1042
      %v1093 = vunpack.c.l.b16 %v1043
      %v1094 = vunpack.c.l.b16 %v1044
      %v1095 = vunpack.c.l.b16 %v1045
      %v1096 = vunpack.c.l.b16 %v1046
      %v1097 = vunpack.c.l.b16 %v1047
      %v1098 = vpack.c.b16 %v1079, %v1078
      %v1099 = vpack.c.b16 %v1081, %v1080
      %v1100 = vpack.c.b16 %v1083, %v1082
      %v1101 = vpack.c.b16 %v1085, %v1084
      %v1102 = vpack.c.b16 %v1087, %v1086
      %v1103 = vpack.c.b16 %v1089, %v1088
      %v1104 = vpack.c.b16 %v1091, %v1090
      %v1105 = vpack.c.b16 %v1093, %v1092
      %v1106 = vpack.c.b16 %v1095, %v1094
      %v1107 = vpack.c.b16 %v1097, %v1096
      %v1119 = vsel %vm340, %v1056, 0
      %1121 = vmatprep.subr.bf16.mxu0 0
      %1122 = vmatpush1.bf16.msra.mxu0 %v1098
      %1123 = vmatprep.subr.bf16.mxu0 0
      %1124 = vmatpush1.bf16.msra.mxu0 %v1099
      %1125 = vmatprep.subr.bf16.mxu0 0
      %1126 = vmatpush1.bf16.msra.mxu0 %v1100
      %1127 = vmatprep.subr.bf16.mxu0 0
      %1128 = vmatpush1.bf16.msra.mxu0 %v1101
      %1129 = vmatprep.subr.bf16.mxu0 0
      %1130 = vmatpush1.bf16.msra.mxu0 %v1102
      %1131 = vmatprep.subr.bf16.mxu0 0
      %1132 = vmatpush1.bf16.msra.mxu0 %v1103
      %1133 = vmatprep.subr.bf16.mxu0 0
      %1134 = vmatpush1.bf16.msra.mxu0 %v1104
      %1135 = vmatprep.subr.bf16.mxu0 0
      %1136 = vmatpush1.bf16.msra.mxu0 %v1105
      %1137 = vmatprep.subr.bf16.mxu0 0
      %1138 = vmatpush1.bf16.msra.mxu0 %v1106
      %1139 = vmatprep.subr.bf16.mxu0 0
      %1140 = vmatpush1.bf16.msra.mxu0 %v1107
      %1141 = vmatprep.subr.bf16.mxu0 0
      %1142 = vmatpush1.bf16.msra.mxu0 0
      %1143 = vmatprep.subr.bf16.mxu0 0
      %1144 = vmatpush1.bf16.msra.mxu0 0
      %1145 = vmatprep.subr.bf16.mxu0 0
      %1146 = vmatpush1.bf16.msra.mxu0 0
      %1147 = vmatprep.subr.bf16.mxu0 0
      %1148 = vmatpush1.bf16.msra.mxu0 0
      %1149 = vmatprep.subr.bf16.mxu0 0
      %1150 = vmatpush1.bf16.msra.mxu0 0
      %1151 = vmatprep.subr.bf16.mxu0 0
      %1152 = vmatpush1.bf16.msra.mxu0 0
      %1153 = vmatprep.mubr.bf16.mxu0 %v1119
      %1154 = vmatmul.mubr.bf16.gmra.mrb[0].mxu0 %v1055
      %v1155 = vpop.f32.mrb[0].mxu0
      %v1156 = vadd.f32 0.0, %v1155
      %v1157 = vpop.f32.mrb[0].mxu0
      %v1158 = vpop.f32.mrb[0].mxu0
      %v1159 = vpop.f32.mrb[0].mxu0
      %1160 = vdwg.mxu0
      %v1163 = vunpack.c.l.s4 1983009808
      %v1164 = vunpack.c.0.s8 %v1163
      %v1165 = vlaneseq
      %v1166 = vshrl.u32 %v1165, 7
      %v1167 = vsub.s32 %v1164, %v1166
      %v1168 = vrot.slane %v1006, %v1167
      %v1169 = vcombine.high %v1168, %v1168
      %v1191 = vunpack.c.l.b16 %v1007
      %v1192 = vunpack.c.l.b16 %v1008
      %v1193 = vunpack.c.l.b16 %v1009
      %v1194 = vunpack.c.l.b16 %v1010
      %v1195 = vunpack.c.l.b16 %v1011
      %v1196 = vunpack.c.l.b16 %v1012
      %v1197 = vunpack.c.l.b16 %v1013
      %v1198 = vunpack.c.l.b16 %v1014
      %v1199 = vunpack.c.l.b16 %v1015
      %v1200 = vunpack.c.l.b16 %v1016
      %v1201 = vunpack.c.l.b16 %v1017
      %v1202 = vunpack.c.l.b16 %v1018
      %v1203 = vunpack.c.l.b16 %v1019
      %v1204 = vunpack.c.l.b16 %v1020
      %v1205 = vunpack.c.l.b16 %v1021
      %v1206 = vunpack.c.l.b16 %v1022
      %v1207 = vunpack.c.l.b16 %v1023
      %v1208 = vunpack.c.l.b16 %v1024
      %v1209 = vunpack.c.l.b16 %v1025
      %v1210 = vunpack.c.l.b16 %v1026
      %v1211 = vpack.c.b16 %v1192, %v1191
      %v1212 = vpack.c.b16 %v1194, %v1193
      %v1213 = vpack.c.b16 %v1196, %v1195
      %v1214 = vpack.c.b16 %v1198, %v1197
      %v1215 = vpack.c.b16 %v1200, %v1199
      %v1216 = vpack.c.b16 %v1202, %v1201
      %v1217 = vpack.c.b16 %v1204, %v1203
      %v1218 = vpack.c.b16 %v1206, %v1205
      %v1219 = vpack.c.b16 %v1208, %v1207
      %v1220 = vpack.c.b16 %v1210, %v1209
      %v1232 = vsel %vm340, %v1169, 0
      %1234 = vmatprep.subr.bf16.mxu0 0
      %1235 = vmatpush1.bf16.msra.mxu0 %v1211
      %1236 = vmatprep.subr.bf16.mxu0 0
      %1237 = vmatpush1.bf16.msra.mxu0 %v1212
      %1238 = vmatprep.subr.bf16.mxu0 0
      %1239 = vmatpush1.bf16.msra.mxu0 %v1213
      %1240 = vmatprep.subr.bf16.mxu0 0
      %1241 = vmatpush1.bf16.msra.mxu0 %v1214
      %1242 = vmatprep.subr.bf16.mxu0 0
      %1243 = vmatpush1.bf16.msra.mxu0 %v1215
      %1244 = vmatprep.subr.bf16.mxu0 0
      %1245 = vmatpush1.bf16.msra.mxu0 %v1216
      %1246 = vmatprep.subr.bf16.mxu0 0
      %1247 = vmatpush1.bf16.msra.mxu0 %v1217
      %1248 = vmatprep.subr.bf16.mxu0 0
      %1249 = vmatpush1.bf16.msra.mxu0 %v1218
      %1250 = vmatprep.subr.bf16.mxu0 0
      %1251 = vmatpush1.bf16.msra.mxu0 %v1219
      %1252 = vmatprep.subr.bf16.mxu0 0
      %1253 = vmatpush1.bf16.msra.mxu0 %v1220
      %1254 = vmatprep.subr.bf16.mxu0 0
      %1255 = vmatpush1.bf16.msra.mxu0 0
      %1256 = vmatprep.subr.bf16.mxu0 0
      %1257 = vmatpush1.bf16.msra.mxu0 0
      %1258 = vmatprep.subr.bf16.mxu0 0
      %1259 = vmatpush1.bf16.msra.mxu0 0
      %1260 = vmatprep.subr.bf16.mxu0 0
      %1261 = vmatpush1.bf16.msra.mxu0 0
      %1262 = vmatprep.subr.bf16.mxu0 0
      %1263 = vmatpush1.bf16.msra.mxu0 0
      %1264 = vmatprep.subr.bf16.mxu0 0
      %1265 = vmatpush1.bf16.msra.mxu0 0
      %1266 = vmatprep.mubr.bf16.mxu0 %v1232
      %1267 = vmatmul.mubr.bf16.gmra.mrb[0].mxu0 %v1168
      %v1268 = vpop.f32.mrb[0].mxu0
      %v1269 = vadd.f32 %v1156, %v1268
      %v1270 = vpop.f32.mrb[0].mxu0
      %v1271 = vpop.f32.mrb[0].mxu0
      %v1272 = vpop.f32.mrb[0].mxu0
      %1273 = vdwg.mxu0
      %v1274 = vld [vmem:[%s771] sm:$0xf]
      %v1275 = vld [vmem:[%s499] sm:$0xf]
      %v1276 = vld [vmem:[%s499 + $0x4] sm:$0xf]
      %v1277 = vld [vmem:[%s499 + $0x8] sm:$0xf]
      %v1278 = vld [vmem:[%s499 + $0xc] sm:$0xf]
      %v1279 = vld [vmem:[%s499 + $0x10] sm:$0xf]
      %v1280 = vld [vmem:[%s499 + $0x14] sm:$0xf]
      %v1281 = vld [vmem:[%s499 + $0x18] sm:$0xf]
      %v1282 = vld [vmem:[%s499 + $0x1c] sm:$0xf]
      %v1283 = vld [vmem:[%s499 + $0x20] sm:$0xf]
      %v1284 = vld [vmem:[%s499 + $0x24] sm:$0xf]
      %v1285 = vld [vmem:[%s499 + $0x28] sm:$0xf]
      %v1286 = vld [vmem:[%s499 + $0x2c] sm:$0xf]
      %v1287 = vld [vmem:[%s499 + $0x30] sm:$0xf]
      %v1288 = vld [vmem:[%s499 + $0x34] sm:$0xf]
      %v1289 = vld [vmem:[%s499 + $0x38] sm:$0xf]
      %v1290 = vld [vmem:[%s499 + $0x3c] sm:$0xf]
      %v1291 = vld [vmem:[%s499 + $0x40] sm:$0xf]
      %v1292 = vld [vmem:[%s499 + $0x44] sm:$0xf]
      %v1293 = vld [vmem:[%s499 + $0x48] sm:$0xf]
      %v1294 = vld [vmem:[%s499 + $0x4c] sm:$0xf]
      %v1297 = vunpack.c.l.s4 1983009808
      %v1298 = vunpack.c.0.s8 %v1297
      %v1299 = vlaneseq
      %v1300 = vshrl.u32 %v1299, 7
      %v1301 = vsub.s32 %v1298, %v1300
      %v1302 = vrot.slane %v1274, %v1301
      %v1303 = vcombine.high %v1302, %v1302
      %v1325 = vunpack.c.l.b16 %v1275
      %v1326 = vunpack.c.l.b16 %v1276
      %v1327 = vunpack.c.l.b16 %v1277
      %v1328 = vunpack.c.l.b16 %v1278
      %v1329 = vunpack.c.l.b16 %v1279
      %v1330 = vunpack.c.l.b16 %v1280
      %v1331 = vunpack.c.l.b16 %v1281
      %v1332 = vunpack.c.l.b16 %v1282
      %v1333 = vunpack.c.l.b16 %v1283
      %v1334 = vunpack.c.l.b16 %v1284
      %v1335 = vunpack.c.l.b16 %v1285
      %v1336 = vunpack.c.l.b16 %v1286
      %v1337 = vunpack.c.l.b16 %v1287
      %v1338 = vunpack.c.l.b16 %v1288
      %v1339 = vunpack.c.l.b16 %v1289
      %v1340 = vunpack.c.l.b16 %v1290
      %v1341 = vunpack.c.l.b16 %v1291
      %v1342 = vunpack.c.l.b16 %v1292
      %v1343 = vunpack.c.l.b16 %v1293
      %v1344 = vunpack.c.l.b16 %v1294
      %v1345 = vpack.c.b16 %v1326, %v1325
      %v1346 = vpack.c.b16 %v1328, %v1327
      %v1347 = vpack.c.b16 %v1330, %v1329
      %v1348 = vpack.c.b16 %v1332, %v1331
      %v1349 = vpack.c.b16 %v1334, %v1333
      %v1350 = vpack.c.b16 %v1336, %v1335
      %v1351 = vpack.c.b16 %v1338, %v1337
      %v1352 = vpack.c.b16 %v1340, %v1339
      %v1353 = vpack.c.b16 %v1342, %v1341
      %v1354 = vpack.c.b16 %v1344, %v1343
      %v1366 = vsel %vm340, %v1303, 0
      %1368 = vmatprep.subr.bf16.mxu0 0
      %1369 = vmatpush1.bf16.msra.mxu0 %v1345
      %1370 = vmatprep.subr.bf16.mxu0 0
      %1371 = vmatpush1.bf16.msra.mxu0 %v1346
      %1372 = vmatprep.subr.bf16.mxu0 0
      %1373 = vmatpush1.bf16.msra.mxu0 %v1347
      %1374 = vmatprep.subr.bf16.mxu0 0
      %1375 = vmatpush1.bf16.msra.mxu0 %v1348
      %1376 = vmatprep.subr.bf16.mxu0 0
      %1377 = vmatpush1.bf16.msra.mxu0 %v1349
      %1378 = vmatprep.subr.bf16.mxu0 0
      %1379 = vmatpush1.bf16.msra.mxu0 %v1350
      %1380 = vmatprep.subr.bf16.mxu0 0
      %1381 = vmatpush1.bf16.msra.mxu0 %v1351
      %1382 = vmatprep.subr.bf16.mxu0 0
      %1383 = vmatpush1.bf16.msra.mxu0 %v1352
      %1384 = vmatprep.subr.bf16.mxu0 0
      %1385 = vmatpush1.bf16.msra.mxu0 %v1353
      %1386 = vmatprep.subr.bf16.mxu0 0
      %1387 = vmatpush1.bf16.msra.mxu0 %v1354
      %1388 = vmatprep.subr.bf16.mxu0 0
      %1389 = vmatpush1.bf16.msra.mxu0 0
      %1390 = vmatprep.subr.bf16.mxu0 0
      %1391 = vmatpush1.bf16.msra.mxu0 0
      %1392 = vmatprep.subr.bf16.mxu0 0
      %1393 = vmatpush1.bf16.msra.mxu0 0
      %1394 = vmatprep.subr.bf16.mxu0 0
      %1395 = vmatpush1.bf16.msra.mxu0 0
      %1396 = vmatprep.subr.bf16.mxu0 0
      %1397 = vmatpush1.bf16.msra.mxu0 0
      %1398 = vmatprep.subr.bf16.mxu0 0
      %1399 = vmatpush1.bf16.msra.mxu0 0
      %1400 = vmatprep.mubr.bf16.mxu0 %v1366
      %1401 = vmatmul.mubr.bf16.gmra.mrb[0].mxu0 %v1302
      %v1402 = vpop.f32.mrb[0].mxu0
      %v1403 = vadd.f32 0.0, %v1402
      %v1404 = vpop.f32.mrb[0].mxu0
      %v1405 = vpop.f32.mrb[0].mxu0
      %v1406 = vpop.f32.mrb[0].mxu0
      %1407 = vdwg.mxu0
      %v1408 = vadd.f32 %v1269, %v1403
      %s1409 = scalar_lea.vmem %s219, 20
      %v1410 = vld [vmem:[%s1409] sm:$0xf]
      %v1411 = vld [vmem:[%s636] sm:$0xf]
      %v1412 = vld [vmem:[%s636 + $0x4] sm:$0xf]
      %v1413 = vld [vmem:[%s636 + $0x8] sm:$0xf]
      %v1414 = vld [vmem:[%s636 + $0xc] sm:$0xf]
      %v1415 = vld [vmem:[%s636 + $0x10] sm:$0xf]
      %v1416 = vld [vmem:[%s636 + $0x14] sm:$0xf]
      %v1417 = vld [vmem:[%s636 + $0x18] sm:$0xf]
      %v1418 = vld [vmem:[%s636 + $0x1c] sm:$0xf]
      %v1419 = vld [vmem:[%s636 + $0x20] sm:$0xf]
      %v1420 = vld [vmem:[%s636 + $0x24] sm:$0xf]
      %v1421 = vld [vmem:[%s636 + $0x28] sm:$0xf]
      %v1422 = vld [vmem:[%s636 + $0x2c] sm:$0xf]
      %v1423 = vld [vmem:[%s636 + $0x30] sm:$0xf]
      %v1424 = vld [vmem:[%s636 + $0x34] sm:$0xf]
      %v1425 = vld [vmem:[%s636 + $0x38] sm:$0xf]
      %v1426 = vld [vmem:[%s636 + $0x3c] sm:$0xf]
      %v1427 = vld [vmem:[%s636 + $0x40] sm:$0xf]
      %v1428 = vld [vmem:[%s636 + $0x44] sm:$0xf]
      %v1429 = vld [vmem:[%s636 + $0x48] sm:$0xf]
      %v1430 = vld [vmem:[%s636 + $0x4c] sm:$0xf]
      %v1433 = vunpack.c.l.s4 1983009808
      %v1434 = vunpack.c.0.s8 %v1433
      %v1435 = vlaneseq
      %v1436 = vshrl.u32 %v1435, 7
      %v1437 = vsub.s32 %v1434, %v1436
      %v1438 = vrot.slane %v1410, %v1437
      %v1439 = vcombine.high %v1438, %v1438
      %v1461 = vunpack.c.l.b16 %v1411
      %v1462 = vunpack.c.l.b16 %v1412
      %v1463 = vunpack.c.l.b16 %v1413
      %v1464 = vunpack.c.l.b16 %v1414
      %v1465 = vunpack.c.l.b16 %v1415
      %v1466 = vunpack.c.l.b16 %v1416
      %v1467 = vunpack.c.l.b16 %v1417
      %v1468 = vunpack.c.l.b16 %v1418
      %v1469 = vunpack.c.l.b16 %v1419
      %v1470 = vunpack.c.l.b16 %v1420
      %v1471 = vunpack.c.l.b16 %v1421
      %v1472 = vunpack.c.l.b16 %v1422
      %v1473 = vunpack.c.l.b16 %v1423
      %v1474 = vunpack.c.l.b16 %v1424
      %v1475 = vunpack.c.l.b16 %v1425
      %v1476 = vunpack.c.l.b16 %v1426
      %v1477 = vunpack.c.l.b16 %v1427
      %v1478 = vunpack.c.l.b16 %v1428
      %v1479 = vunpack.c.l.b16 %v1429
      %v1480 = vunpack.c.l.b16 %v1430
      %v1481 = vpack.c.b16 %v1462, %v1461
      %v1482 = vpack.c.b16 %v1464, %v1463
      %v1483 = vpack.c.b16 %v1466, %v1465
      %v1484 = vpack.c.b16 %v1468, %v1467
      %v1485 = vpack.c.b16 %v1470, %v1469
      %v1486 = vpack.c.b16 %v1472, %v1471
      %v1487 = vpack.c.b16 %v1474, %v1473
      %v1488 = vpack.c.b16 %v1476, %v1475
      %v1489 = vpack.c.b16 %v1478, %v1477
      %v1490 = vpack.c.b16 %v1480, %v1479
      %v1502 = vsel %vm340, %v1439, 0
      %1504 = vmatprep.subr.bf16.mxu0 0
      %1505 = vmatpush1.bf16.msra.mxu0 %v1481
      %1506 = vmatprep.subr.bf16.mxu0 0
      %1507 = vmatpush1.bf16.msra.mxu0 %v1482
      %1508 = vmatprep.subr.bf16.mxu0 0
      %1509 = vmatpush1.bf16.msra.mxu0 %v1483
      %1510 = vmatprep.subr.bf16.mxu0 0
      %1511 = vmatpush1.bf16.msra.mxu0 %v1484
      %1512 = vmatprep.subr.bf16.mxu0 0
      %1513 = vmatpush1.bf16.msra.mxu0 %v1485
      %1514 = vmatprep.subr.bf16.mxu0 0
      %1515 = vmatpush1.bf16.msra.mxu0 %v1486
      %1516 = vmatprep.subr.bf16.mxu0 0
      %1517 = vmatpush1.bf16.msra.mxu0 %v1487
      %1518 = vmatprep.subr.bf16.mxu0 0
      %1519 = vmatpush1.bf16.msra.mxu0 %v1488
      %1520 = vmatprep.subr.bf16.mxu0 0
      %1521 = vmatpush1.bf16.msra.mxu0 %v1489
      %1522 = vmatprep.subr.bf16.mxu0 0
      %1523 = vmatpush1.bf16.msra.mxu0 %v1490
      %1524 = vmatprep.subr.bf16.mxu0 0
      %1525 = vmatpush1.bf16.msra.mxu0 0
      %1526 = vmatprep.subr.bf16.mxu0 0
      %1527 = vmatpush1.bf16.msra.mxu0 0
      %1528 = vmatprep.subr.bf16.mxu0 0
      %1529 = vmatpush1.bf16.msra.mxu0 0
      %1530 = vmatprep.subr.bf16.mxu0 0
      %1531 = vmatpush1.bf16.msra.mxu0 0
      %1532 = vmatprep.subr.bf16.mxu0 0
      %1533 = vmatpush1.bf16.msra.mxu0 0
      %1534 = vmatprep.subr.bf16.mxu0 0
      %1535 = vmatpush1.bf16.msra.mxu0 0
      %1536 = vmatprep.mubr.bf16.mxu0 %v1502
      %1537 = vmatmul.mubr.bf16.gmra.mrb[0].mxu0 %v1438
      %v1538 = vpop.f32.mrb[0].mxu0
      %v1539 = vadd.f32 0.0, %v1538
      %v1540 = vpop.f32.mrb[0].mxu0
      %v1541 = vpop.f32.mrb[0].mxu0
      %v1542 = vpop.f32.mrb[0].mxu0
      %1543 = vdwg.mxu0
      %v1544 = vadd.f32 %v1408, %v1539
      %s1545 = scalar_lea.vmem %s219, 24
      %v1546 = vld [vmem:[%s1545] sm:$0xf]
      %v1547 = vld [vmem:[%s773] sm:$0xf]
      %v1548 = vld [vmem:[%s773 + $0x4] sm:$0xf]
      %v1549 = vld [vmem:[%s773 + $0x8] sm:$0xf]
      %v1550 = vld [vmem:[%s773 + $0xc] sm:$0xf]
      %v1551 = vld [vmem:[%s773 + $0x10] sm:$0xf]
      %v1552 = vld [vmem:[%s773 + $0x14] sm:$0xf]
      %v1553 = vld [vmem:[%s773 + $0x18] sm:$0xf]
      %v1554 = vld [vmem:[%s773 + $0x1c] sm:$0xf]
      %v1555 = vld [vmem:[%s773 + $0x20] sm:$0xf]
      %v1556 = vld [vmem:[%s773 + $0x24] sm:$0xf]
      %v1557 = vld [vmem:[%s773 + $0x28] sm:$0xf]
      %v1558 = vld [vmem:[%s773 + $0x2c] sm:$0xf]
      %v1559 = vld [vmem:[%s773 + $0x30] sm:$0xf]
      %v1560 = vld [vmem:[%s773 + $0x34] sm:$0xf]
      %v1561 = vld [vmem:[%s773 + $0x38] sm:$0xf]
      %v1562 = vld [vmem:[%s773 + $0x3c] sm:$0xf]
      %v1563 = vld [vmem:[%s773 + $0x40] sm:$0xf]
      %v1564 = vld [vmem:[%s773 + $0x44] sm:$0xf]
      %v1565 = vld [vmem:[%s773 + $0x48] sm:$0xf]
      %v1566 = vld [vmem:[%s773 + $0x4c] sm:$0xf]
      %v1569 = vunpack.c.l.s4 1983009808
      %v1570 = vunpack.c.0.s8 %v1569
      %v1571 = vlaneseq
      %v1572 = vshrl.u32 %v1571, 7
      %v1573 = vsub.s32 %v1570, %v1572
      %v1574 = vrot.slane %v1546, %v1573
      %v1575 = vcombine.high %v1574, %v1574
      %v1597 = vunpack.c.l.b16 %v1547
      %v1598 = vunpack.c.l.b16 %v1548
      %v1599 = vunpack.c.l.b16 %v1549
      %v1600 = vunpack.c.l.b16 %v1550
      %v1601 = vunpack.c.l.b16 %v1551
      %v1602 = vunpack.c.l.b16 %v1552
      %v1603 = vunpack.c.l.b16 %v1553
      %v1604 = vunpack.c.l.b16 %v1554
      %v1605 = vunpack.c.l.b16 %v1555
      %v1606 = vunpack.c.l.b16 %v1556
      %v1607 = vunpack.c.l.b16 %v1557
      %v1608 = vunpack.c.l.b16 %v1558
      %v1609 = vunpack.c.l.b16 %v1559
      %v1610 = vunpack.c.l.b16 %v1560
      %v1611 = vunpack.c.l.b16 %v1561
      %v1612 = vunpack.c.l.b16 %v1562
      %v1613 = vunpack.c.l.b16 %v1563
      %v1614 = vunpack.c.l.b16 %v1564
      %v1615 = vunpack.c.l.b16 %v1565
      %v1616 = vunpack.c.l.b16 %v1566
      %v1617 = vpack.c.b16 %v1598, %v1597
      %v1618 = vpack.c.b16 %v1600, %v1599
      %v1619 = vpack.c.b16 %v1602, %v1601
      %v1620 = vpack.c.b16 %v1604, %v1603
      %v1621 = vpack.c.b16 %v1606, %v1605
      %v1622 = vpack.c.b16 %v1608, %v1607
      %v1623 = vpack.c.b16 %v1610, %v1609
      %v1624 = vpack.c.b16 %v1612, %v1611
      %v1625 = vpack.c.b16 %v1614, %v1613
      %v1626 = vpack.c.b16 %v1616, %v1615
      %v1638 = vsel %vm340, %v1575, 0
      %1640 = vmatprep.subr.bf16.mxu0 0
      %1641 = vmatpush1.bf16.msra.mxu0 %v1617
      %1642 = vmatprep.subr.bf16.mxu0 0
      %1643 = vmatpush1.bf16.msra.mxu0 %v1618
      %1644 = vmatprep.subr.bf16.mxu0 0
      %1645 = vmatpush1.bf16.msra.mxu0 %v1619
      %1646 = vmatprep.subr.bf16.mxu0 0
      %1647 = vmatpush1.bf16.msra.mxu0 %v1620
      %1648 = vmatprep.subr.bf16.mxu0 0
      %1649 = vmatpush1.bf16.msra.mxu0 %v1621
      %1650 = vmatprep.subr.bf16.mxu0 0
      %1651 = vmatpush1.bf16.msra.mxu0 %v1622
      %1652 = vmatprep.subr.bf16.mxu0 0
      %1653 = vmatpush1.bf16.msra.mxu0 %v1623
      %1654 = vmatprep.subr.bf16.mxu0 0
      %1655 = vmatpush1.bf16.msra.mxu0 %v1624
      %1656 = vmatprep.subr.bf16.mxu0 0
      %1657 = vmatpush1.bf16.msra.mxu0 %v1625
      %1658 = vmatprep.subr.bf16.mxu0 0
      %1659 = vmatpush1.bf16.msra.mxu0 %v1626
      %1660 = vmatprep.subr.bf16.mxu0 0
      %1661 = vmatpush1.bf16.msra.mxu0 0
      %1662 = vmatprep.subr.bf16.mxu0 0
      %1663 = vmatpush1.bf16.msra.mxu0 0
      %1664 = vmatprep.subr.bf16.mxu0 0
      %1665 = vmatpush1.bf16.msra.mxu0 0
      %1666 = vmatprep.subr.bf16.mxu0 0
      %1667 = vmatpush1.bf16.msra.mxu0 0
      %1668 = vmatprep.subr.bf16.mxu0 0
      %1669 = vmatpush1.bf16.msra.mxu0 0
      %1670 = vmatprep.subr.bf16.mxu0 0
      %1671 = vmatpush1.bf16.msra.mxu0 0
      %1672 = vmatprep.mubr.bf16.mxu0 %v1638
      %1673 = vmatmul.mubr.bf16.gmra.mrb[0].mxu0 %v1574
      %v1674 = vpop.f32.mrb[0].mxu0
      %v1675 = vadd.f32 0.0, %v1674
      %v1676 = vpop.f32.mrb[0].mxu0
      %v1677 = vpop.f32.mrb[0].mxu0
      %v1678 = vpop.f32.mrb[0].mxu0
      %1679 = vdwg.mxu0
      %v1680 = vadd.f32 %v1544, %v1675
      %v1681 = vld [vmem:[%s2] sm:$0x1]
      %v1683 = vlaneseq
      %v1684 = vshrl.u32 %v1683, 7
      %v1685 = vsub.s32 0, %v1684
      %v1686 = vrot.slane %v1681, %v1685
      %v1688 = vadd.f32 %v1680, %v1686
      %v1689 = vmul.f32 %v1688, %v1688
      %v1690 = vld [vmem:[%s3] sm:$0xff]
      %v1691 = vld [vmem:[%s3 + $0x8] sm:$0xff]
      %v1692 = vld [vmem:[%s3 + $0x10] sm:$0xff]
      %v1693 = vld [vmem:[%s3 + $0x18] sm:$0xff]
      %v1694 = vld [vmem:[%s4] sm:$0x1]
      %v1696 = vlaneseq
      %v1697 = vshrl.u32 %v1696, 7
      %v1698 = vsub.s32 0, %v1697
      %v1699 = vrot.slane %v1694, %v1698
      %v1702 = vsel %vm340, %v1689, 0
      %1704 = vmatprep.subr.mxu0 0.0
      %1705 = vmatpush1.msra.mxu0 %v1690
      %1706 = vmatprep.subr.mxu0 0.0
      %1707 = vmatpush1.msra.mxu0 %v1691
      %1708 = vmatprep.subr.mxu0 0.0
      %1709 = vmatpush1.msra.mxu0 %v1692
      %1710 = vmatprep.subr.mxu0 0.0
      %1711 = vmatpush1.msra.mxu0 %v1693
      %1712 = vmatprep.subr.mxu0 0.0
      %1713 = vmatpush1.msra.mxu0 0.0
      %1714 = vmatprep.subr.mxu0 0.0
      %1715 = vmatpush1.msra.mxu0 0.0
      %1716 = vmatprep.subr.mxu0 0.0
      %1717 = vmatpush1.msra.mxu0 0.0
      %1718 = vmatprep.subr.mxu0 0.0
      %1719 = vmatpush1.msra.mxu0 0.0
      %1720 = vmatprep.subr.mxu0 0.0
      %1721 = vmatpush1.msra.mxu0 0.0
      %1722 = vmatprep.subr.mxu0 0.0
      %1723 = vmatpush1.msra.mxu0 0.0
      %1724 = vmatprep.subr.mxu0 0.0
      %1725 = vmatpush1.msra.mxu0 0.0
      %1726 = vmatprep.subr.mxu0 0.0
      %1727 = vmatpush1.msra.mxu0 0.0
      %1728 = vmatprep.subr.mxu0 0.0
      %1729 = vmatpush1.msra.mxu0 0.0
      %1730 = vmatprep.subr.mxu0 0.0
      %1731 = vmatpush1.msra.mxu0 0.0
      %1732 = vmatprep.subr.mxu0 0.0
      %1733 = vmatpush1.msra.mxu0 0.0
      %1734 = vmatprep.subr.mxu0 0.0
      %1735 = vmatpush1.msra.mxu0 0.0
      %1736 = vmatprep.subr.mxu0 0.0
      %1737 = vmatpush1.msra.mxu0 0.0
      %1738 = vmatprep.subr.mxu0 0.0
      %1739 = vmatpush1.msra.mxu0 0.0
      %1740 = vmatprep.subr.mxu0 0.0
      %1741 = vmatpush1.msra.mxu0 0.0
      %1742 = vmatprep.subr.mxu0 0.0
      %1743 = vmatpush1.msra.mxu0 0.0
      %1744 = vmatprep.subr.mxu0 0.0
      %1745 = vmatpush1.msra.mxu0 0.0
      %1746 = vmatprep.subr.mxu0 0.0
      %1747 = vmatpush1.msra.mxu0 0.0
      %1748 = vmatprep.subr.mxu0 0.0
      %1749 = vmatpush1.msra.mxu0 0.0
      %1750 = vmatprep.subr.mxu0 0.0
      %1751 = vmatpush1.msra.mxu0 0.0
      %1752 = vmatprep.subr.mxu0 0.0
      %1753 = vmatpush1.msra.mxu0 0.0
      %1754 = vmatprep.subr.mxu0 0.0
      %1755 = vmatpush1.msra.mxu0 0.0
      %1756 = vmatprep.subr.mxu0 0.0
      %1757 = vmatpush1.msra.mxu0 0.0
      %1758 = vmatprep.subr.mxu0 0.0
      %1759 = vmatpush1.msra.mxu0 0.0
      %1760 = vmatprep.subr.mxu0 0.0
      %1761 = vmatpush1.msra.mxu0 0.0
      %1762 = vmatprep.subr.mxu0 0.0
      %1763 = vmatpush1.msra.mxu0 0.0
      %1764 = vmatprep.subr.mxu0 0.0
      %1765 = vmatpush1.msra.mxu0 0.0
      %1766 = vmatprep.subr.mxu0 0.0
      %1767 = vmatpush1.msra.mxu0 0.0
      %1768 = vmatprep.mubr.f32.mxu0 0.0
      %1769 = vmatmul.mubr.f32.gmra.mrb[0].mxu0 %v1702
      %v1770 = vpop.f32.mrb[0].mxu0
      %v1771 = vadd.f32 %v1699, %v1770
      %v1772 = vpop.f32.mrb[0].mxu0
      %1773 = vdwg.mxu0
      %v1774 = vrsqrt.pop %v1771
      %v1775 = vmul.f32 %v1688, %v1774
      %v1776 = vpack.c.bf16 %v1775, %v1775
      %s1777 = scalar_lea.vmem %s224, 2
      %1778 = vst.msk [vmem:[%s1777] sm:$0x3] %vm1004, %v1776
      %v1779 = vld [vmem:[%s771] sm:$0xf]
      %v1780 = vld [vmem:[%s1] sm:$0xf]
      %v1781 = vld [vmem:[%s1 + $0x4] sm:$0xf]
      %v1782 = vld [vmem:[%s1 + $0x8] sm:$0xf]
      %v1783 = vld [vmem:[%s1 + $0xc] sm:$0xf]
      %v1784 = vld [vmem:[%s1 + $0x10] sm:$0xf]
      %v1785 = vld [vmem:[%s1 + $0x14] sm:$0xf]
      %v1786 = vld [vmem:[%s1 + $0x18] sm:$0xf]
      %v1787 = vld [vmem:[%s1 + $0x1c] sm:$0xf]
      %v1788 = vld [vmem:[%s1 + $0x20] sm:$0xf]
      %v1789 = vld [vmem:[%s1 + $0x24] sm:$0xf]
      %v1790 = vld [vmem:[%s1 + $0x28] sm:$0xf]
      %v1791 = vld [vmem:[%s1 + $0x2c] sm:$0xf]
      %v1792 = vld [vmem:[%s1 + $0x30] sm:$0xf]
      %v1793 = vld [vmem:[%s1 + $0x34] sm:$0xf]
      %v1794 = vld [vmem:[%s1 + $0x38] sm:$0xf]
      %v1795 = vld [vmem:[%s1 + $0x3c] sm:$0xf]
      %v1796 = vld [vmem:[%s1 + $0x40] sm:$0xf]
      %v1797 = vld [vmem:[%s1 + $0x44] sm:$0xf]
      %v1798 = vld [vmem:[%s1 + $0x48] sm:$0xf]
      %v1799 = vld [vmem:[%s1 + $0x4c] sm:$0xf]
      %v1800 = vld [vmem:[%s1409] sm:$0xf]
      %v1801 = vld [vmem:[%s249] sm:$0xf]
      %v1802 = vld [vmem:[%s249 + $0x4] sm:$0xf]
      %v1803 = vld [vmem:[%s249 + $0x8] sm:$0xf]
      %v1804 = vld [vmem:[%s249 + $0xc] sm:$0xf]
      %v1805 = vld [vmem:[%s249 + $0x10] sm:$0xf]
      %v1806 = vld [vmem:[%s249 + $0x14] sm:$0xf]
      %v1807 = vld [vmem:[%s249 + $0x18] sm:$0xf]
      %v1808 = vld [vmem:[%s249 + $0x1c] sm:$0xf]
      %v1809 = vld [vmem:[%s249 + $0x20] sm:$0xf]
      %v1810 = vld [vmem:[%s249 + $0x24] sm:$0xf]
      %v1811 = vld [vmem:[%s249 + $0x28] sm:$0xf]
      %v1812 = vld [vmem:[%s249 + $0x2c] sm:$0xf]
      %v1813 = vld [vmem:[%s249 + $0x30] sm:$0xf]
      %v1814 = vld [vmem:[%s249 + $0x34] sm:$0xf]
      %v1815 = vld [vmem:[%s249 + $0x38] sm:$0xf]
      %v1816 = vld [vmem:[%s249 + $0x3c] sm:$0xf]
      %v1817 = vld [vmem:[%s249 + $0x40] sm:$0xf]
      %v1818 = vld [vmem:[%s249 + $0x44] sm:$0xf]
      %v1819 = vld [vmem:[%s249 + $0x48] sm:$0xf]
      %v1820 = vld [vmem:[%s249 + $0x4c] sm:$0xf]
      %v1823 = vunpack.c.l.s4 1983009808
      %v1824 = vunpack.c.0.s8 %v1823
      %v1825 = vlaneseq
      %v1826 = vshrl.u32 %v1825, 7
      %v1827 = vsub.s32 %v1824, %v1826
      %v1828 = vrot.slane %v1800, %v1827
      %v1829 = vcombine.high %v1828, %v1828
      %v1851 = vunpack.c.l.b16 %v1801
      %v1852 = vunpack.c.l.b16 %v1802
      %v1853 = vunpack.c.l.b16 %v1803
      %v1854 = vunpack.c.l.b16 %v1804
      %v1855 = vunpack.c.l.b16 %v1805
      %v1856 = vunpack.c.l.b16 %v1806
      %v1857 = vunpack.c.l.b16 %v1807
      %v1858 = vunpack.c.l.b16 %v1808
      %v1859 = vunpack.c.l.b16 %v1809
      %v1860 = vunpack.c.l.b16 %v1810
      %v1861 = vunpack.c.l.b16 %v1811
      %v1862 = vunpack.c.l.b16 %v1812
      %v1863 = vunpack.c.l.b16 %v1813
      %v1864 = vunpack.c.l.b16 %v1814
      %v1865 = vunpack.c.l.b16 %v1815
      %v1866 = vunpack.c.l.b16 %v1816
      %v1867 = vunpack.c.l.b16 %v1817
      %v1868 = vunpack.c.l.b16 %v1818
      %v1869 = vunpack.c.l.b16 %v1819
      %v1870 = vunpack.c.l.b16 %v1820
      %v1871 = vpack.c.b16 %v1852, %v1851
      %v1872 = vpack.c.b16 %v1854, %v1853
      %v1873 = vpack.c.b16 %v1856, %v1855
      %v1874 = vpack.c.b16 %v1858, %v1857
      %v1875 = vpack.c.b16 %v1860, %v1859
      %v1876 = vpack.c.b16 %v1862, %v1861
      %v1877 = vpack.c.b16 %v1864, %v1863
      %v1878 = vpack.c.b16 %v1866, %v1865
      %v1879 = vpack.c.b16 %v1868, %v1867
      %v1880 = vpack.c.b16 %v1870, %v1869
      %v1892 = vsel %vm340, %v1829, 0
      %1894 = vmatprep.subr.bf16.mxu0 0
      %1895 = vmatpush1.bf16.msra.mxu0 %v1871
      %1896 = vmatprep.subr.bf16.mxu0 0
      %1897 = vmatpush1.bf16.msra.mxu0 %v1872
      %1898 = vmatprep.subr.bf16.mxu0 0
      %1899 = vmatpush1.bf16.msra.mxu0 %v1873
      %1900 = vmatprep.subr.bf16.mxu0 0
      %1901 = vmatpush1.bf16.msra.mxu0 %v1874
      %1902 = vmatprep.subr.bf16.mxu0 0
      %1903 = vmatpush1.bf16.msra.mxu0 %v1875
      %1904 = vmatprep.subr.bf16.mxu0 0
      %1905 = vmatpush1.bf16.msra.mxu0 %v1876
      %1906 = vmatprep.subr.bf16.mxu0 0
      %1907 = vmatpush1.bf16.msra.mxu0 %v1877
      %1908 = vmatprep.subr.bf16.mxu0 0
      %1909 = vmatpush1.bf16.msra.mxu0 %v1878
      %1910 = vmatprep.subr.bf16.mxu0 0
      %1911 = vmatpush1.bf16.msra.mxu0 %v1879
      %1912 = vmatprep.subr.bf16.mxu0 0
      %1913 = vmatpush1.bf16.msra.mxu0 %v1880
      %1914 = vmatprep.subr.bf16.mxu0 0
      %1915 = vmatpush1.bf16.msra.mxu0 0
      %1916 = vmatprep.subr.bf16.mxu0 0
      %1917 = vmatpush1.bf16.msra.mxu0 0
      %1918 = vmatprep.subr.bf16.mxu0 0
      %1919 = vmatpush1.bf16.msra.mxu0 0
      %1920 = vmatprep.subr.bf16.mxu0 0
      %1921 = vmatpush1.bf16.msra.mxu0 0
      %1922 = vmatprep.subr.bf16.mxu0 0
      %1923 = vmatpush1.bf16.msra.mxu0 0
      %1924 = vmatprep.subr.bf16.mxu0 0
      %1925 = vmatpush1.bf16.msra.mxu0 0
      %1926 = vmatprep.mubr.bf16.mxu0 %v1892
      %1927 = vmatmul.mubr.bf16.gmra.mrb[0].mxu0 %v1828
      %v1928 = vpop.f32.mrb[0].mxu0
      %v1929 = vadd.f32 0.0, %v1928
      %v1930 = vpop.f32.mrb[0].mxu0
      %v1931 = vpop.f32.mrb[0].mxu0
      %v1932 = vpop.f32.mrb[0].mxu0
      %1933 = vdwg.mxu0
      %v1936 = vunpack.c.l.s4 1983009808
      %v1937 = vunpack.c.0.s8 %v1936
      %v1938 = vlaneseq
      %v1939 = vshrl.u32 %v1938, 7
      %v1940 = vsub.s32 %v1937, %v1939
      %v1941 = vrot.slane %v1779, %v1940
      %v1942 = vcombine.high %v1941, %v1941
      %v1964 = vunpack.c.l.b16 %v1780
      %v1965 = vunpack.c.l.b16 %v1781
      %v1966 = vunpack.c.l.b16 %v1782
      %v1967 = vunpack.c.l.b16 %v1783
      %v1968 = vunpack.c.l.b16 %v1784
      %v1969 = vunpack.c.l.b16 %v1785
      %v1970 = vunpack.c.l.b16 %v1786
      %v1971 = vunpack.c.l.b16 %v1787
      %v1972 = vunpack.c.l.b16 %v1788
      %v1973 = vunpack.c.l.b16 %v1789
      %v1974 = vunpack.c.l.b16 %v1790
      %v1975 = vunpack.c.l.b16 %v1791
      %v1976 = vunpack.c.l.b16 %v1792
      %v1977 = vunpack.c.l.b16 %v1793
      %v1978 = vunpack.c.l.b16 %v1794
      %v1979 = vunpack.c.l.b16 %v1795
      %v1980 = vunpack.c.l.b16 %v1796
      %v1981 = vunpack.c.l.b16 %v1797
      %v1982 = vunpack.c.l.b16 %v1798
      %v1983 = vunpack.c.l.b16 %v1799
      %v1984 = vpack.c.b16 %v1965, %v1964
      %v1985 = vpack.c.b16 %v1967, %v1966
      %v1986 = vpack.c.b16 %v1969, %v1968
      %v1987 = vpack.c.b16 %v1971, %v1970
      %v1988 = vpack.c.b16 %v1973, %v1972
      %v1989 = vpack.c.b16 %v1975, %v1974
      %v1990 = vpack.c.b16 %v1977, %v1976
      %v1991 = vpack.c.b16 %v1979, %v1978
      %v1992 = vpack.c.b16 %v1981, %v1980
      %v1993 = vpack.c.b16 %v1983, %v1982
      %v2005 = vsel %vm340, %v1942, 0
      %2007 = vmatprep.subr.bf16.mxu0 0
      %2008 = vmatpush1.bf16.msra.mxu0 %v1984
      %2009 = vmatprep.subr.bf16.mxu0 0
      %2010 = vmatpush1.bf16.msra.mxu0 %v1985
      %2011 = vmatprep.subr.bf16.mxu0 0
      %2012 = vmatpush1.bf16.msra.mxu0 %v1986
      %2013 = vmatprep.subr.bf16.mxu0 0
      %2014 = vmatpush1.bf16.msra.mxu0 %v1987
      %2015 = vmatprep.subr.bf16.mxu0 0
      %2016 = vmatpush1.bf16.msra.mxu0 %v1988
      %2017 = vmatprep.subr.bf16.mxu0 0
      %2018 = vmatpush1.bf16.msra.mxu0 %v1989
      %2019 = vmatprep.subr.bf16.mxu0 0
      %2020 = vmatpush1.bf16.msra.mxu0 %v1990
      %2021 = vmatprep.subr.bf16.mxu0 0
      %2022 = vmatpush1.bf16.msra.mxu0 %v1991
      %2023 = vmatprep.subr.bf16.mxu0 0
      %2024 = vmatpush1.bf16.msra.mxu0 %v1992
      %2025 = vmatprep.subr.bf16.mxu0 0
      %2026 = vmatpush1.bf16.msra.mxu0 %v1993
      %2027 = vmatprep.subr.bf16.mxu0 0
      %2028 = vmatpush1.bf16.msra.mxu0 0
      %2029 = vmatprep.subr.bf16.mxu0 0
      %2030 = vmatpush1.bf16.msra.mxu0 0
      %2031 = vmatprep.subr.bf16.mxu0 0
      %2032 = vmatpush1.bf16.msra.mxu0 0
      %2033 = vmatprep.subr.bf16.mxu0 0
      %2034 = vmatpush1.bf16.msra.mxu0 0
      %2035 = vmatprep.subr.bf16.mxu0 0
      %2036 = vmatpush1.bf16.msra.mxu0 0
      %2037 = vmatprep.subr.bf16.mxu0 0
      %2038 = vmatpush1.bf16.msra.mxu0 0
      %2039 = vmatprep.mubr.bf16.mxu0 %v2005
      %2040 = vmatmul.mubr.bf16.gmra.mrb[0].mxu0 %v1941
      %v2041 = vpop.f32.mrb[0].mxu0
      %v2042 = vadd.f32 %v1929, %v2041
      %v2043 = vpop.f32.mrb[0].mxu0
      %v2044 = vpop.f32.mrb[0].mxu0
      %v2045 = vpop.f32.mrb[0].mxu0
      %2046 = vdwg.mxu0
      %v2047 = vld [vmem:[%s1545] sm:$0xf]
      %v2048 = vld [vmem:[%s499] sm:$0xf]
      %v2049 = vld [vmem:[%s499 + $0x4] sm:$0xf]
      %v2050 = vld [vmem:[%s499 + $0x8] sm:$0xf]
      %v2051 = vld [vmem:[%s499 + $0xc] sm:$0xf]
      %v2052 = vld [vmem:[%s499 + $0x10] sm:$0xf]
      %v2053 = vld [vmem:[%s499 + $0x14] sm:$0xf]
      %v2054 = vld [vmem:[%s499 + $0x18] sm:$0xf]
      %v2055 = vld [vmem:[%s499 + $0x1c] sm:$0xf]
      %v2056 = vld [vmem:[%s499 + $0x20] sm:$0xf]
      %v2057 = vld [vmem:[%s499 + $0x24] sm:$0xf]
      %v2058 = vld [vmem:[%s499 + $0x28] sm:$0xf]
      %v2059 = vld [vmem:[%s499 + $0x2c] sm:$0xf]
      %v2060 = vld [vmem:[%s499 + $0x30] sm:$0xf]
      %v2061 = vld [vmem:[%s499 + $0x34] sm:$0xf]
      %v2062 = vld [vmem:[%s499 + $0x38] sm:$0xf]
      %v2063 = vld [vmem:[%s499 + $0x3c] sm:$0xf]
      %v2064 = vld [vmem:[%s499 + $0x40] sm:$0xf]
      %v2065 = vld [vmem:[%s499 + $0x44] sm:$0xf]
      %v2066 = vld [vmem:[%s499 + $0x48] sm:$0xf]
      %v2067 = vld [vmem:[%s499 + $0x4c] sm:$0xf]
      %v2070 = vunpack.c.l.s4 1983009808
      %v2071 = vunpack.c.0.s8 %v2070
      %v2072 = vlaneseq
      %v2073 = vshrl.u32 %v2072, 7
      %v2074 = vsub.s32 %v2071, %v2073
      %v2075 = vrot.slane %v2047, %v2074
      %v2076 = vcombine.high %v2075, %v2075
      %v2098 = vunpack.c.l.b16 %v2048
      %v2099 = vunpack.c.l.b16 %v2049
      %v2100 = vunpack.c.l.b16 %v2050
      %v2101 = vunpack.c.l.b16 %v2051
      %v2102 = vunpack.c.l.b16 %v2052
      %v2103 = vunpack.c.l.b16 %v2053
      %v2104 = vunpack.c.l.b16 %v2054
      %v2105 = vunpack.c.l.b16 %v2055
      %v2106 = vunpack.c.l.b16 %v2056
      %v2107 = vunpack.c.l.b16 %v2057
      %v2108 = vunpack.c.l.b16 %v2058
      %v2109 = vunpack.c.l.b16 %v2059
      %v2110 = vunpack.c.l.b16 %v2060
      %v2111 = vunpack.c.l.b16 %v2061
      %v2112 = vunpack.c.l.b16 %v2062
      %v2113 = vunpack.c.l.b16 %v2063
      %v2114 = vunpack.c.l.b16 %v2064
      %v2115 = vunpack.c.l.b16 %v2065
      %v2116 = vunpack.c.l.b16 %v2066
      %v2117 = vunpack.c.l.b16 %v2067
      %v2118 = vpack.c.b16 %v2099, %v2098
      %v2119 = vpack.c.b16 %v2101, %v2100
      %v2120 = vpack.c.b16 %v2103, %v2102
      %v2121 = vpack.c.b16 %v2105, %v2104
      %v2122 = vpack.c.b16 %v2107, %v2106
      %v2123 = vpack.c.b16 %v2109, %v2108
      %v2124 = vpack.c.b16 %v2111, %v2110
      %v2125 = vpack.c.b16 %v2113, %v2112
      %v2126 = vpack.c.b16 %v2115, %v2114
      %v2127 = vpack.c.b16 %v2117, %v2116
      %v2139 = vsel %vm340, %v2076, 0
      %2141 = vmatprep.subr.bf16.mxu0 0
      %2142 = vmatpush1.bf16.msra.mxu0 %v2118
      %2143 = vmatprep.subr.bf16.mxu0 0
      %2144 = vmatpush1.bf16.msra.mxu0 %v2119
      %2145 = vmatprep.subr.bf16.mxu0 0
      %2146 = vmatpush1.bf16.msra.mxu0 %v2120
      %2147 = vmatprep.subr.bf16.mxu0 0
      %2148 = vmatpush1.bf16.msra.mxu0 %v2121
      %2149 = vmatprep.subr.bf16.mxu0 0
      %2150 = vmatpush1.bf16.msra.mxu0 %v2122
      %2151 = vmatprep.subr.bf16.mxu0 0
      %2152 = vmatpush1.bf16.msra.mxu0 %v2123
      %2153 = vmatprep.subr.bf16.mxu0 0
      %2154 = vmatpush1.bf16.msra.mxu0 %v2124
      %2155 = vmatprep.subr.bf16.mxu0 0
      %2156 = vmatpush1.bf16.msra.mxu0 %v2125
      %2157 = vmatprep.subr.bf16.mxu0 0
      %2158 = vmatpush1.bf16.msra.mxu0 %v2126
      %2159 = vmatprep.subr.bf16.mxu0 0
      %2160 = vmatpush1.bf16.msra.mxu0 %v2127
      %2161 = vmatprep.subr.bf16.mxu0 0
      %2162 = vmatpush1.bf16.msra.mxu0 0
      %2163 = vmatprep.subr.bf16.mxu0 0
      %2164 = vmatpush1.bf16.msra.mxu0 0
      %2165 = vmatprep.subr.bf16.mxu0 0
      %2166 = vmatpush1.bf16.msra.mxu0 0
      %2167 = vmatprep.subr.bf16.mxu0 0
      %2168 = vmatpush1.bf16.msra.mxu0 0
      %2169 = vmatprep.subr.bf16.mxu0 0
      %2170 = vmatpush1.bf16.msra.mxu0 0
      %2171 = vmatprep.subr.bf16.mxu0 0
      %2172 = vmatpush1.bf16.msra.mxu0 0
      %2173 = vmatprep.mubr.bf16.mxu0 %v2139
      %2174 = vmatmul.mubr.bf16.gmra.mrb[0].mxu0 %v2075
      %v2175 = vpop.f32.mrb[0].mxu0
      %v2176 = vadd.f32 0.0, %v2175
      %v2177 = vpop.f32.mrb[0].mxu0
      %v2178 = vpop.f32.mrb[0].mxu0
      %v2179 = vpop.f32.mrb[0].mxu0
      %2180 = vdwg.mxu0
      %v2181 = vadd.f32 %v2042, %v2176
      %s2182 = scalar_lea.vmem %s219, 28
      %v2183 = vld [vmem:[%s2182] sm:$0xf]
      %v2184 = vld [vmem:[%s636] sm:$0xf]
      %v2185 = vld [vmem:[%s636 + $0x4] sm:$0xf]
      %v2186 = vld [vmem:[%s636 + $0x8] sm:$0xf]
      %v2187 = vld [vmem:[%s636 + $0xc] sm:$0xf]
      %v2188 = vld [vmem:[%s636 + $0x10] sm:$0xf]
      %v2189 = vld [vmem:[%s636 + $0x14] sm:$0xf]
      %v2190 = vld [vmem:[%s636 + $0x18] sm:$0xf]
      %v2191 = vld [vmem:[%s636 + $0x1c] sm:$0xf]
      %v2192 = vld [vmem:[%s636 + $0x20] sm:$0xf]
      %v2193 = vld [vmem:[%s636 + $0x24] sm:$0xf]
      %v2194 = vld [vmem:[%s636 + $0x28] sm:$0xf]
      %v2195 = vld [vmem:[%s636 + $0x2c] sm:$0xf]
      %v2196 = vld [vmem:[%s636 + $0x30] sm:$0xf]
      %v2197 = vld [vmem:[%s636 + $0x34] sm:$0xf]
      %v2198 = vld [vmem:[%s636 + $0x38] sm:$0xf]
      %v2199 = vld [vmem:[%s636 + $0x3c] sm:$0xf]
      %v2200 = vld [vmem:[%s636 + $0x40] sm:$0xf]
      %v2201 = vld [vmem:[%s636 + $0x44] sm:$0xf]
      %v2202 = vld [vmem:[%s636 + $0x48] sm:$0xf]
      %v2203 = vld [vmem:[%s636 + $0x4c] sm:$0xf]
      %v2206 = vunpack.c.l.s4 1983009808
      %v2207 = vunpack.c.0.s8 %v2206
      %v2208 = vlaneseq
      %v2209 = vshrl.u32 %v2208, 7
      %v2210 = vsub.s32 %v2207, %v2209
      %v2211 = vrot.slane %v2183, %v2210
      %v2212 = vcombine.high %v2211, %v2211
      %v2234 = vunpack.c.l.b16 %v2184
      %v2235 = vunpack.c.l.b16 %v2185
      %v2236 = vunpack.c.l.b16 %v2186
      %v2237 = vunpack.c.l.b16 %v2187
      %v2238 = vunpack.c.l.b16 %v2188
      %v2239 = vunpack.c.l.b16 %v2189
      %v2240 = vunpack.c.l.b16 %v2190
      %v2241 = vunpack.c.l.b16 %v2191
      %v2242 = vunpack.c.l.b16 %v2192
      %v2243 = vunpack.c.l.b16 %v2193
      %v2244 = vunpack.c.l.b16 %v2194
      %v2245 = vunpack.c.l.b16 %v2195
      %v2246 = vunpack.c.l.b16 %v2196
      %v2247 = vunpack.c.l.b16 %v2197
      %v2248 = vunpack.c.l.b16 %v2198
      %v2249 = vunpack.c.l.b16 %v2199
      %v2250 = vunpack.c.l.b16 %v2200
      %v2251 = vunpack.c.l.b16 %v2201
      %v2252 = vunpack.c.l.b16 %v2202
      %v2253 = vunpack.c.l.b16 %v2203
      %v2254 = vpack.c.b16 %v2235, %v2234
      %v2255 = vpack.c.b16 %v2237, %v2236
      %v2256 = vpack.c.b16 %v2239, %v2238
      %v2257 = vpack.c.b16 %v2241, %v2240
      %v2258 = vpack.c.b16 %v2243, %v2242
      %v2259 = vpack.c.b16 %v2245, %v2244
      %v2260 = vpack.c.b16 %v2247, %v2246
      %v2261 = vpack.c.b16 %v2249, %v2248
      %v2262 = vpack.c.b16 %v2251, %v2250
      %v2263 = vpack.c.b16 %v2253, %v2252
      %v2275 = vsel %vm340, %v2212, 0
      %2277 = vmatprep.subr.bf16.mxu0 0
      %2278 = vmatpush1.bf16.msra.mxu0 %v2254
      %2279 = vmatprep.subr.bf16.mxu0 0
      %2280 = vmatpush1.bf16.msra.mxu0 %v2255
      %2281 = vmatprep.subr.bf16.mxu0 0
      %2282 = vmatpush1.bf16.msra.mxu0 %v2256
      %2283 = vmatprep.subr.bf16.mxu0 0
      %2284 = vmatpush1.bf16.msra.mxu0 %v2257
      %2285 = vmatprep.subr.bf16.mxu0 0
      %2286 = vmatpush1.bf16.msra.mxu0 %v2258
      %2287 = vmatprep.subr.bf16.mxu0 0
      %2288 = vmatpush1.bf16.msra.mxu0 %v2259
      %2289 = vmatprep.subr.bf16.mxu0 0
      %2290 = vmatpush1.bf16.msra.mxu0 %v2260
      %2291 = vmatprep.subr.bf16.mxu0 0
      %2292 = vmatpush1.bf16.msra.mxu0 %v2261
      %2293 = vmatprep.subr.bf16.mxu0 0
      %2294 = vmatpush1.bf16.msra.mxu0 %v2262
      %2295 = vmatprep.subr.bf16.mxu0 0
      %2296 = vmatpush1.bf16.msra.mxu0 %v2263
      %2297 = vmatprep.subr.bf16.mxu0 0
      %2298 = vmatpush1.bf16.msra.mxu0 0
      %2299 = vmatprep.subr.bf16.mxu0 0
      %2300 = vmatpush1.bf16.msra.mxu0 0
      %2301 = vmatprep.subr.bf16.mxu0 0
      %2302 = vmatpush1.bf16.msra.mxu0 0
      %2303 = vmatprep.subr.bf16.mxu0 0
      %2304 = vmatpush1.bf16.msra.mxu0 0
      %2305 = vmatprep.subr.bf16.mxu0 0
      %2306 = vmatpush1.bf16.msra.mxu0 0
      %2307 = vmatprep.subr.bf16.mxu0 0
      %2308 = vmatpush1.bf16.msra.mxu0 0
      %2309 = vmatprep.mubr.bf16.mxu0 %v2275
      %2310 = vmatmul.mubr.bf16.gmra.mrb[0].mxu0 %v2211
      %v2311 = vpop.f32.mrb[0].mxu0
      %v2312 = vadd.f32 0.0, %v2311
      %v2313 = vpop.f32.mrb[0].mxu0
      %v2314 = vpop.f32.mrb[0].mxu0
      %v2315 = vpop.f32.mrb[0].mxu0
      %2316 = vdwg.mxu0
      %v2317 = vadd.f32 %v2181, %v2312
      %s2318 = scalar_lea.vmem %s219, 32
      %v2319 = vld [vmem:[%s2318] sm:$0xf]
      %v2320 = vld [vmem:[%s773] sm:$0xf]
      %v2321 = vld [vmem:[%s773 + $0x4] sm:$0xf]
      %v2322 = vld [vmem:[%s773 + $0x8] sm:$0xf]
      %v2323 = vld [vmem:[%s773 + $0xc] sm:$0xf]
      %v2324 = vld [vmem:[%s773 + $0x10] sm:$0xf]
      %v2325 = vld [vmem:[%s773 + $0x14] sm:$0xf]
      %v2326 = vld [vmem:[%s773 + $0x18] sm:$0xf]
      %v2327 = vld [vmem:[%s773 + $0x1c] sm:$0xf]
      %v2328 = vld [vmem:[%s773 + $0x20] sm:$0xf]
      %v2329 = vld [vmem:[%s773 + $0x24] sm:$0xf]
      %v2330 = vld [vmem:[%s773 + $0x28] sm:$0xf]
      %v2331 = vld [vmem:[%s773 + $0x2c] sm:$0xf]
      %v2332 = vld [vmem:[%s773 + $0x30] sm:$0xf]
      %v2333 = vld [vmem:[%s773 + $0x34] sm:$0xf]
      %v2334 = vld [vmem:[%s773 + $0x38] sm:$0xf]
      %v2335 = vld [vmem:[%s773 + $0x3c] sm:$0xf]
      %v2336 = vld [vmem:[%s773 + $0x40] sm:$0xf]
      %v2337 = vld [vmem:[%s773 + $0x44] sm:$0xf]
      %v2338 = vld [vmem:[%s773 + $0x48] sm:$0xf]
      %v2339 = vld [vmem:[%s773 + $0x4c] sm:$0xf]
      %v2342 = vunpack.c.l.s4 1983009808
      %v2343 = vunpack.c.0.s8 %v2342
      %v2344 = vlaneseq
      %v2345 = vshrl.u32 %v2344, 7
      %v2346 = vsub.s32 %v2343, %v2345
      %v2347 = vrot.slane %v2319, %v2346
      %v2348 = vcombine.high %v2347, %v2347
      %v2370 = vunpack.c.l.b16 %v2320
      %v2371 = vunpack.c.l.b16 %v2321
      %v2372 = vunpack.c.l.b16 %v2322
      %v2373 = vunpack.c.l.b16 %v2323
      %v2374 = vunpack.c.l.b16 %v2324
      %v2375 = vunpack.c.l.b16 %v2325
      %v2376 = vunpack.c.l.b16 %v2326
      %v2377 = vunpack.c.l.b16 %v2327
      %v2378 = vunpack.c.l.b16 %v2328
      %v2379 = vunpack.c.l.b16 %v2329
      %v2380 = vunpack.c.l.b16 %v2330
      %v2381 = vunpack.c.l.b16 %v2331
      %v2382 = vunpack.c.l.b16 %v2332
      %v2383 = vunpack.c.l.b16 %v2333
      %v2384 = vunpack.c.l.b16 %v2334
      %v2385 = vunpack.c.l.b16 %v2335
      %v2386 = vunpack.c.l.b16 %v2336
      %v2387 = vunpack.c.l.b16 %v2337
      %v2388 = vunpack.c.l.b16 %v2338
      %v2389 = vunpack.c.l.b16 %v2339
      %v2390 = vpack.c.b16 %v2371, %v2370
      %v2391 = vpack.c.b16 %v2373, %v2372
      %v2392 = vpack.c.b16 %v2375, %v2374
      %v2393 = vpack.c.b16 %v2377, %v2376
      %v2394 = vpack.c.b16 %v2379, %v2378
      %v2395 = vpack.c.b16 %v2381, %v2380
      %v2396 = vpack.c.b16 %v2383, %v2382
      %v2397 = vpack.c.b16 %v2385, %v2384
      %v2398 = vpack.c.b16 %v2387, %v2386
      %v2399 = vpack.c.b16 %v2389, %v2388
      %v2411 = vsel %vm340, %v2348, 0
      %2413 = vmatprep.subr.bf16.mxu0 0
      %2414 = vmatpush1.bf16.msra.mxu0 %v2390
      %2415 = vmatprep.subr.bf16.mxu0 0
      %2416 = vmatpush1.bf16.msra.mxu0 %v2391
      %2417 = vmatprep.subr.bf16.mxu0 0
      %2418 = vmatpush1.bf16.msra.mxu0 %v2392
      %2419 = vmatprep.subr.bf16.mxu0 0
      %2420 = vmatpush1.bf16.msra.mxu0 %v2393
      %2421 = vmatprep.subr.bf16.mxu0 0
      %2422 = vmatpush1.bf16.msra.mxu0 %v2394
      %2423 = vmatprep.subr.bf16.mxu0 0
      %2424 = vmatpush1.bf16.msra.mxu0 %v2395
      %2425 = vmatprep.subr.bf16.mxu0 0
      %2426 = vmatpush1.bf16.msra.mxu0 %v2396
      %2427 = vmatprep.subr.bf16.mxu0 0
      %2428 = vmatpush1.bf16.msra.mxu0 %v2397
      %2429 = vmatprep.subr.bf16.mxu0 0
      %2430 = vmatpush1.bf16.msra.mxu0 %v2398
      %2431 = vmatprep.subr.bf16.mxu0 0
      %2432 = vmatpush1.bf16.msra.mxu0 %v2399
      %2433 = vmatprep.subr.bf16.mxu0 0
      %2434 = vmatpush1.bf16.msra.mxu0 0
      %2435 = vmatprep.subr.bf16.mxu0 0
      %2436 = vmatpush1.bf16.msra.mxu0 0
      %2437 = vmatprep.subr.bf16.mxu0 0
      %2438 = vmatpush1.bf16.msra.mxu0 0
      %2439 = vmatprep.subr.bf16.mxu0 0
      %2440 = vmatpush1.bf16.msra.mxu0 0
      %2441 = vmatprep.subr.bf16.mxu0 0
      %2442 = vmatpush1.bf16.msra.mxu0 0
      %2443 = vmatprep.subr.bf16.mxu0 0
      %2444 = vmatpush1.bf16.msra.mxu0 0
      %2445 = vmatprep.mubr.bf16.mxu0 %v2411
      %2446 = vmatmul.mubr.bf16.gmra.mrb[0].mxu0 %v2347
      %v2447 = vpop.f32.mrb[0].mxu0
      %v2448 = vadd.f32 0.0, %v2447
      %v2449 = vpop.f32.mrb[0].mxu0
      %v2450 = vpop.f32.mrb[0].mxu0
      %v2451 = vpop.f32.mrb[0].mxu0
      %2452 = vdwg.mxu0
      %v2453 = vadd.f32 %v2317, %v2448
      %v2454 = vld [vmem:[%s2] sm:$0x1]
      %v2456 = vlaneseq
      %v2457 = vshrl.u32 %v2456, 7
      %v2458 = vsub.s32 0, %v2457
      %v2459 = vrot.slane %v2454, %v2458
      %v2461 = vadd.f32 %v2453, %v2459
      %v2462 = vmul.f32 %v2461, %v2461
      %v2463 = vld [vmem:[%s3] sm:$0xff]
      %v2464 = vld [vmem:[%s3 + $0x8] sm:$0xff]
      %v2465 = vld [vmem:[%s3 + $0x10] sm:$0xff]
      %v2466 = vld [vmem:[%s3 + $0x18] sm:$0xff]
      %v2467 = vld [vmem:[%s4] sm:$0x1]
      %v2469 = vlaneseq
      %v2470 = vshrl.u32 %v2469, 7
      %v2471 = vsub.s32 0, %v2470
      %v2472 = vrot.slane %v2467, %v2471
      %v2475 = vsel %vm340, %v2462, 0
      %2477 = vmatprep.subr.mxu0 0.0
      %2478 = vmatpush1.msra.mxu0 %v2463
      %2479 = vmatprep.subr.mxu0 0.0
      %2480 = vmatpush1.msra.mxu0 %v2464
      %2481 = vmatprep.subr.mxu0 0.0
      %2482 = vmatpush1.msra.mxu0 %v2465
      %2483 = vmatprep.subr.mxu0 0.0
      %2484 = vmatpush1.msra.mxu0 %v2466
      %2485 = vmatprep.subr.mxu0 0.0
      %2486 = vmatpush1.msra.mxu0 0.0
      %2487 = vmatprep.subr.mxu0 0.0
      %2488 = vmatpush1.msra.mxu0 0.0
      %2489 = vmatprep.subr.mxu0 0.0
      %2490 = vmatpush1.msra.mxu0 0.0
      %2491 = vmatprep.subr.mxu0 0.0
      %2492 = vmatpush1.msra.mxu0 0.0
      %2493 = vmatprep.subr.mxu0 0.0
      %2494 = vmatpush1.msra.mxu0 0.0
      %2495 = vmatprep.subr.mxu0 0.0
      %2496 = vmatpush1.msra.mxu0 0.0
      %2497 = vmatprep.subr.mxu0 0.0
      %2498 = vmatpush1.msra.mxu0 0.0
      %2499 = vmatprep.subr.mxu0 0.0
      %2500 = vmatpush1.msra.mxu0 0.0
      %2501 = vmatprep.subr.mxu0 0.0
      %2502 = vmatpush1.msra.mxu0 0.0
      %2503 = vmatprep.subr.mxu0 0.0
      %2504 = vmatpush1.msra.mxu0 0.0
      %2505 = vmatprep.subr.mxu0 0.0
      %2506 = vmatpush1.msra.mxu0 0.0
      %2507 = vmatprep.subr.mxu0 0.0
      %2508 = vmatpush1.msra.mxu0 0.0
      %2509 = vmatprep.subr.mxu0 0.0
      %2510 = vmatpush1.msra.mxu0 0.0
      %2511 = vmatprep.subr.mxu0 0.0
      %2512 = vmatpush1.msra.mxu0 0.0
      %2513 = vmatprep.subr.mxu0 0.0
      %2514 = vmatpush1.msra.mxu0 0.0
      %2515 = vmatprep.subr.mxu0 0.0
      %2516 = vmatpush1.msra.mxu0 0.0
      %2517 = vmatprep.subr.mxu0 0.0
      %2518 = vmatpush1.msra.mxu0 0.0
      %2519 = vmatprep.subr.mxu0 0.0
      %2520 = vmatpush1.msra.mxu0 0.0
      %2521 = vmatprep.subr.mxu0 0.0
      %2522 = vmatpush1.msra.mxu0 0.0
      %2523 = vmatprep.subr.mxu0 0.0
      %2524 = vmatpush1.msra.mxu0 0.0
      %2525 = vmatprep.subr.mxu0 0.0
      %2526 = vmatpush1.msra.mxu0 0.0
      %2527 = vmatprep.subr.mxu0 0.0
      %2528 = vmatpush1.msra.mxu0 0.0
      %2529 = vmatprep.subr.mxu0 0.0
      %2530 = vmatpush1.msra.mxu0 0.0
      %2531 = vmatprep.subr.mxu0 0.0
      %2532 = vmatpush1.msra.mxu0 0.0
      %2533 = vmatprep.subr.mxu0 0.0
      %2534 = vmatpush1.msra.mxu0 0.0
      %2535 = vmatprep.subr.mxu0 0.0
      %2536 = vmatpush1.msra.mxu0 0.0
      %2537 = vmatprep.subr.mxu0 0.0
      %2538 = vmatpush1.msra.mxu0 0.0
      %2539 = vmatprep.subr.mxu0 0.0
      %2540 = vmatpush1.msra.mxu0 0.0
      %2541 = vmatprep.mubr.f32.mxu0 0.0
      %2542 = vmatmul.mubr.f32.gmra.mrb[0].mxu0 %v2475
      %v2543 = vpop.f32.mrb[0].mxu0
      %v2544 = vadd.f32 %v2472, %v2543
      %v2545 = vpop.f32.mrb[0].mxu0
      %2546 = vdwg.mxu0
      %v2547 = vrsqrt.pop %v2544
      %v2548 = vmul.f32 %v2461, %v2547
      %v2549 = vpack.c.bf16 %v2548, %v2548
      %s2550 = scalar_lea.vmem %s224, 4
      %2551 = vst.msk [vmem:[%s2550] sm:$0x3] %vm1004, %v2549
      %v2552 = vld [vmem:[%s1545] sm:$0xf]
      %v2553 = vld [vmem:[%s1] sm:$0xf]
      %v2554 = vld [vmem:[%s1 + $0x4] sm:$0xf]
      %v2555 = vld [vmem:[%s1 + $0x8] sm:$0xf]
      %v2556 = vld [vmem:[%s1 + $0xc] sm:$0xf]
      %v2557 = vld [vmem:[%s1 + $0x10] sm:$0xf]
      %v2558 = vld [vmem:[%s1 + $0x14] sm:$0xf]
      %v2559 = vld [vmem:[%s1 + $0x18] sm:$0xf]
      %v2560 = vld [vmem:[%s1 + $0x1c] sm:$0xf]
      %v2561 = vld [vmem:[%s1 + $0x20] sm:$0xf]
      %v2562 = vld [vmem:[%s1 + $0x24] sm:$0xf]
      %v2563 = vld [vmem:[%s1 + $0x28] sm:$0xf]
      %v2564 = vld [vmem:[%s1 + $0x2c] sm:$0xf]
      %v2565 = vld [vmem:[%s1 + $0x30] sm:$0xf]
      %v2566 = vld [vmem:[%s1 + $0x34] sm:$0xf]
      %v2567 = vld [vmem:[%s1 + $0x38] sm:$0xf]
      %v2568 = vld [vmem:[%s1 + $0x3c] sm:$0xf]
      %v2569 = vld [vmem:[%s1 + $0x40] sm:$0xf]
      %v2570 = vld [vmem:[%s1 + $0x44] sm:$0xf]
      %v2571 = vld [vmem:[%s1 + $0x48] sm:$0xf]
      %v2572 = vld [vmem:[%s1 + $0x4c] sm:$0xf]
      %v2573 = vld [vmem:[%s2182] sm:$0xf]
      %v2574 = vld [vmem:[%s249] sm:$0xf]
      %v2575 = vld [vmem:[%s249 + $0x4] sm:$0xf]
      %v2576 = vld [vmem:[%s249 + $0x8] sm:$0xf]
      %v2577 = vld [vmem:[%s249 + $0xc] sm:$0xf]
      %v2578 = vld [vmem:[%s249 + $0x10] sm:$0xf]
      %v2579 = vld [vmem:[%s249 + $0x14] sm:$0xf]
      %v2580 = vld [vmem:[%s249 + $0x18] sm:$0xf]
      %v2581 = vld [vmem:[%s249 + $0x1c] sm:$0xf]
      %v2582 = vld [vmem:[%s249 + $0x20] sm:$0xf]
      %v2583 = vld [vmem:[%s249 + $0x24] sm:$0xf]
      %v2584 = vld [vmem:[%s249 + $0x28] sm:$0xf]
      %v2585 = vld [vmem:[%s249 + $0x2c] sm:$0xf]
      %v2586 = vld [vmem:[%s249 + $0x30] sm:$0xf]
      %v2587 = vld [vmem:[%s249 + $0x34] sm:$0xf]
      %v2588 = vld [vmem:[%s249 + $0x38] sm:$0xf]
      %v2589 = vld [vmem:[%s249 + $0x3c] sm:$0xf]
      %v2590 = vld [vmem:[%s249 + $0x40] sm:$0xf]
      %v2591 = vld [vmem:[%s249 + $0x44] sm:$0xf]
      %v2592 = vld [vmem:[%s249 + $0x48] sm:$0xf]
      %v2593 = vld [vmem:[%s249 + $0x4c] sm:$0xf]
      %v2596 = vunpack.c.l.s4 1983009808
      %v2597 = vunpack.c.0.s8 %v2596
      %v2598 = vlaneseq
      %v2599 = vshrl.u32 %v2598, 7
      %v2600 = vsub.s32 %v2597, %v2599
      %v2601 = vrot.slane %v2573, %v2600
      %v2602 = vcombine.high %v2601, %v2601
      %v2624 = vunpack.c.l.b16 %v2574
      %v2625 = vunpack.c.l.b16 %v2575
      %v2626 = vunpack.c.l.b16 %v2576
      %v2627 = vunpack.c.l.b16 %v2577
      %v2628 = vunpack.c.l.b16 %v2578
      %v2629 = vunpack.c.l.b16 %v2579
      %v2630 = vunpack.c.l.b16 %v2580
      %v2631 = vunpack.c.l.b16 %v2581
      %v2632 = vunpack.c.l.b16 %v2582
      %v2633 = vunpack.c.l.b16 %v2583
      %v2634 = vunpack.c.l.b16 %v2584
      %v2635 = vunpack.c.l.b16 %v2585
      %v2636 = vunpack.c.l.b16 %v2586
      %v2637 = vunpack.c.l.b16 %v2587
      %v2638 = vunpack.c.l.b16 %v2588
      %v2639 = vunpack.c.l.b16 %v2589
      %v2640 = vunpack.c.l.b16 %v2590
      %v2641 = vunpack.c.l.b16 %v2591
      %v2642 = vunpack.c.l.b16 %v2592
      %v2643 = vunpack.c.l.b16 %v2593
      %v2644 = vpack.c.b16 %v2625, %v2624
      %v2645 = vpack.c.b16 %v2627, %v2626
      %v2646 = vpack.c.b16 %v2629, %v2628
      %v2647 = vpack.c.b16 %v2631, %v2630
      %v2648 = vpack.c.b16 %v2633, %v2632
      %v2649 = vpack.c.b16 %v2635, %v2634
      %v2650 = vpack.c.b16 %v2637, %v2636
      %v2651 = vpack.c.b16 %v2639, %v2638
      %v2652 = vpack.c.b16 %v2641, %v2640
      %v2653 = vpack.c.b16 %v2643, %v2642
      %v2665 = vsel %vm340, %v2602, 0
      %2667 = vmatprep.subr.bf16.mxu0 0
      %2668 = vmatpush1.bf16.msra.mxu0 %v2644
      %2669 = vmatprep.subr.bf16.mxu0 0
      %2670 = vmatpush1.bf16.msra.mxu0 %v2645
      %2671 = vmatprep.subr.bf16.mxu0 0
      %2672 = vmatpush1.bf16.msra.mxu0 %v2646
      %2673 = vmatprep.subr.bf16.mxu0 0
      %2674 = vmatpush1.bf16.msra.mxu0 %v2647
      %2675 = vmatprep.subr.bf16.mxu0 0
      %2676 = vmatpush1.bf16.msra.mxu0 %v2648
      %2677 = vmatprep.subr.bf16.mxu0 0
      %2678 = vmatpush1.bf16.msra.mxu0 %v2649
      %2679 = vmatprep.subr.bf16.mxu0 0
      %2680 = vmatpush1.bf16.msra.mxu0 %v2650
      %2681 = vmatprep.subr.bf16.mxu0 0
      %2682 = vmatpush1.bf16.msra.mxu0 %v2651
      %2683 = vmatprep.subr.bf16.mxu0 0
      %2684 = vmatpush1.bf16.msra.mxu0 %v2652
      %2685 = vmatprep.subr.bf16.mxu0 0
      %2686 = vmatpush1.bf16.msra.mxu0 %v2653
      %2687 = vmatprep.subr.bf16.mxu0 0
      %2688 = vmatpush1.bf16.msra.mxu0 0
      %2689 = vmatprep.subr.bf16.mxu0 0
      %2690 = vmatpush1.bf16.msra.mxu0 0
      %2691 = vmatprep.subr.bf16.mxu0 0
      %2692 = vmatpush1.bf16.msra.mxu0 0
      %2693 = vmatprep.subr.bf16.mxu0 0
      %2694 = vmatpush1.bf16.msra.mxu0 0
      %2695 = vmatprep.subr.bf16.mxu0 0
      %2696 = vmatpush1.bf16.msra.mxu0 0
      %2697 = vmatprep.subr.bf16.mxu0 0
      %2698 = vmatpush1.bf16.msra.mxu0 0
      %2699 = vmatprep.mubr.bf16.mxu0 %v2665
      %2700 = vmatmul.mubr.bf16.gmra.mrb[0].mxu0 %v2601
      %v2701 = vpop.f32.mrb[0].mxu0
      %v2702 = vadd.f32 0.0, %v2701
      %v2703 = vpop.f32.mrb[0].mxu0
      %v2704 = vpop.f32.mrb[0].mxu0
      %v2705 = vpop.f32.mrb[0].mxu0
      %2706 = vdwg.mxu0
      %v2709 = vunpack.c.l.s4 1983009808
      %v2710 = vunpack.c.0.s8 %v2709
      %v2711 = vlaneseq
      %v2712 = vshrl.u32 %v2711, 7
      %v2713 = vsub.s32 %v2710, %v2712
      %v2714 = vrot.slane %v2552, %v2713
      %v2715 = vcombine.high %v2714, %v2714
      %v2737 = vunpack.c.l.b16 %v2553
      %v2738 = vunpack.c.l.b16 %v2554
      %v2739 = vunpack.c.l.b16 %v2555
      %v2740 = vunpack.c.l.b16 %v2556
      %v2741 = vunpack.c.l.b16 %v2557
      %v2742 = vunpack.c.l.b16 %v2558
      %v2743 = vunpack.c.l.b16 %v2559
      %v2744 = vunpack.c.l.b16 %v2560
      %v2745 = vunpack.c.l.b16 %v2561
      %v2746 = vunpack.c.l.b16 %v2562
      %v2747 = vunpack.c.l.b16 %v2563
      %v2748 = vunpack.c.l.b16 %v2564
      %v2749 = vunpack.c.l.b16 %v2565
      %v2750 = vunpack.c.l.b16 %v2566
      %v2751 = vunpack.c.l.b16 %v2567
      %v2752 = vunpack.c.l.b16 %v2568
      %v2753 = vunpack.c.l.b16 %v2569
      %v2754 = vunpack.c.l.b16 %v2570
      %v2755 = vunpack.c.l.b16 %v2571
      %v2756 = vunpack.c.l.b16 %v2572
      %v2757 = vpack.c.b16 %v2738, %v2737
      %v2758 = vpack.c.b16 %v2740, %v2739
      %v2759 = vpack.c.b16 %v2742, %v2741
      %v2760 = vpack.c.b16 %v2744, %v2743
      %v2761 = vpack.c.b16 %v2746, %v2745
      %v2762 = vpack.c.b16 %v2748, %v2747
      %v2763 = vpack.c.b16 %v2750, %v2749
      %v2764 = vpack.c.b16 %v2752, %v2751
      %v2765 = vpack.c.b16 %v2754, %v2753
      %v2766 = vpack.c.b16 %v2756, %v2755
      %v2778 = vsel %vm340, %v2715, 0
      %2780 = vmatprep.subr.bf16.mxu0 0
      %2781 = vmatpush1.bf16.msra.mxu0 %v2757
      %2782 = vmatprep.subr.bf16.mxu0 0
      %2783 = vmatpush1.bf16.msra.mxu0 %v2758
      %2784 = vmatprep.subr.bf16.mxu0 0
      %2785 = vmatpush1.bf16.msra.mxu0 %v2759
      %2786 = vmatprep.subr.bf16.mxu0 0
      %2787 = vmatpush1.bf16.msra.mxu0 %v2760
      %2788 = vmatprep.subr.bf16.mxu0 0
      %2789 = vmatpush1.bf16.msra.mxu0 %v2761
      %2790 = vmatprep.subr.bf16.mxu0 0
      %2791 = vmatpush1.bf16.msra.mxu0 %v2762
      %2792 = vmatprep.subr.bf16.mxu0 0
      %2793 = vmatpush1.bf16.msra.mxu0 %v2763
      %2794 = vmatprep.subr.bf16.mxu0 0
      %2795 = vmatpush1.bf16.msra.mxu0 %v2764
      %2796 = vmatprep.subr.bf16.mxu0 0
      %2797 = vmatpush1.bf16.msra.mxu0 %v2765
      %2798 = vmatprep.subr.bf16.mxu0 0
      %2799 = vmatpush1.bf16.msra.mxu0 %v2766
      %2800 = vmatprep.subr.bf16.mxu0 0
      %2801 = vmatpush1.bf16.msra.mxu0 0
      %2802 = vmatprep.subr.bf16.mxu0 0
      %2803 = vmatpush1.bf16.msra.mxu0 0
      %2804 = vmatprep.subr.bf16.mxu0 0
      %2805 = vmatpush1.bf16.msra.mxu0 0
      %2806 = vmatprep.subr.bf16.mxu0 0
      %2807 = vmatpush1.bf16.msra.mxu0 0
      %2808 = vmatprep.subr.bf16.mxu0 0
      %2809 = vmatpush1.bf16.msra.mxu0 0
      %2810 = vmatprep.subr.bf16.mxu0 0
      %2811 = vmatpush1.bf16.msra.mxu0 0
      %2812 = vmatprep.mubr.bf16.mxu0 %v2778
      %2813 = vmatmul.mubr.bf16.gmra.mrb[0].mxu0 %v2714
      %v2814 = vpop.f32.mrb[0].mxu0
      %v2815 = vadd.f32 %v2702, %v2814
      %v2816 = vpop.f32.mrb[0].mxu0
      %v2817 = vpop.f32.mrb[0].mxu0
      %v2818 = vpop.f32.mrb[0].mxu0
      %2819 = vdwg.mxu0
      %v2820 = vld [vmem:[%s2318] sm:$0xf]
      %v2821 = vld [vmem:[%s499] sm:$0xf]
      %v2822 = vld [vmem:[%s499 + $0x4] sm:$0xf]
      %v2823 = vld [vmem:[%s499 + $0x8] sm:$0xf]
      %v2824 = vld [vmem:[%s499 + $0xc] sm:$0xf]
      %v2825 = vld [vmem:[%s499 + $0x10] sm:$0xf]
      %v2826 = vld [vmem:[%s499 + $0x14] sm:$0xf]
      %v2827 = vld [vmem:[%s499 + $0x18] sm:$0xf]
      %v2828 = vld [vmem:[%s499 + $0x1c] sm:$0xf]
      %v2829 = vld [vmem:[%s499 + $0x20] sm:$0xf]
      %v2830 = vld [vmem:[%s499 + $0x24] sm:$0xf]
      %v2831 = vld [vmem:[%s499 + $0x28] sm:$0xf]
      %v2832 = vld [vmem:[%s499 + $0x2c] sm:$0xf]
      %v2833 = vld [vmem:[%s499 + $0x30] sm:$0xf]
      %v2834 = vld [vmem:[%s499 + $0x34] sm:$0xf]
      %v2835 = vld [vmem:[%s499 + $0x38] sm:$0xf]
      %v2836 = vld [vmem:[%s499 + $0x3c] sm:$0xf]
      %v2837 = vld [vmem:[%s499 + $0x40] sm:$0xf]
      %v2838 = vld [vmem:[%s499 + $0x44] sm:$0xf]
      %v2839 = vld [vmem:[%s499 + $0x48] sm:$0xf]
      %v2840 = vld [vmem:[%s499 + $0x4c] sm:$0xf]
      %v2843 = vunpack.c.l.s4 1983009808
      %v2844 = vunpack.c.0.s8 %v2843
      %v2845 = vlaneseq
      %v2846 = vshrl.u32 %v2845, 7
      %v2847 = vsub.s32 %v2844, %v2846
      %v2848 = vrot.slane %v2820, %v2847
      %v2849 = vcombine.high %v2848, %v2848
      %v2871 = vunpack.c.l.b16 %v2821
      %v2872 = vunpack.c.l.b16 %v2822
      %v2873 = vunpack.c.l.b16 %v2823
      %v2874 = vunpack.c.l.b16 %v2824
      %v2875 = vunpack.c.l.b16 %v2825
      %v2876 = vunpack.c.l.b16 %v2826
      %v2877 = vunpack.c.l.b16 %v2827
      %v2878 = vunpack.c.l.b16 %v2828
      %v2879 = vunpack.c.l.b16 %v2829
      %v2880 = vunpack.c.l.b16 %v2830
      %v2881 = vunpack.c.l.b16 %v2831
      %v2882 = vunpack.c.l.b16 %v2832
      %v2883 = vunpack.c.l.b16 %v2833
      %v2884 = vunpack.c.l.b16 %v2834
      %v2885 = vunpack.c.l.b16 %v2835
      %v2886 = vunpack.c.l.b16 %v2836
      %v2887 = vunpack.c.l.b16 %v2837
      %v2888 = vunpack.c.l.b16 %v2838
      %v2889 = vunpack.c.l.b16 %v2839
      %v2890 = vunpack.c.l.b16 %v2840
      %v2891 = vpack.c.b16 %v2872, %v2871
      %v2892 = vpack.c.b16 %v2874, %v2873
      %v2893 = vpack.c.b16 %v2876, %v2875
      %v2894 = vpack.c.b16 %v2878, %v2877
      %v2895 = vpack.c.b16 %v2880, %v2879
      %v2896 = vpack.c.b16 %v2882, %v2881
      %v2897 = vpack.c.b16 %v2884, %v2883
      %v2898 = vpack.c.b16 %v2886, %v2885
      %v2899 = vpack.c.b16 %v2888, %v2887
      %v2900 = vpack.c.b16 %v2890, %v2889
      %v2912 = vsel %vm340, %v2849, 0
      %2914 = vmatprep.subr.bf16.mxu0 0
      %2915 = vmatpush1.bf16.msra.mxu0 %v2891
      %2916 = vmatprep.subr.bf16.mxu0 0
      %2917 = vmatpush1.bf16.msra.mxu0 %v2892
      %2918 = vmatprep.subr.bf16.mxu0 0
      %2919 = vmatpush1.bf16.msra.mxu0 %v2893
      %2920 = vmatprep.subr.bf16.mxu0 0
      %2921 = vmatpush1.bf16.msra.mxu0 %v2894
      %2922 = vmatprep.subr.bf16.mxu0 0
      %2923 = vmatpush1.bf16.msra.mxu0 %v2895
      %2924 = vmatprep.subr.bf16.mxu0 0
      %2925 = vmatpush1.bf16.msra.mxu0 %v2896
      %2926 = vmatprep.subr.bf16.mxu0 0
      %2927 = vmatpush1.bf16.msra.mxu0 %v2897
      %2928 = vmatprep.subr.bf16.mxu0 0
      %2929 = vmatpush1.bf16.msra.mxu0 %v2898
      %2930 = vmatprep.subr.bf16.mxu0 0
      %2931 = vmatpush1.bf16.msra.mxu0 %v2899
      %2932 = vmatprep.subr.bf16.mxu0 0
      %2933 = vmatpush1.bf16.msra.mxu0 %v2900
      %2934 = vmatprep.subr.bf16.mxu0 0
      %2935 = vmatpush1.bf16.msra.mxu0 0
      %2936 = vmatprep.subr.bf16.mxu0 0
      %2937 = vmatpush1.bf16.msra.mxu0 0
      %2938 = vmatprep.subr.bf16.mxu0 0
      %2939 = vmatpush1.bf16.msra.mxu0 0
      %2940 = vmatprep.subr.bf16.mxu0 0
      %2941 = vmatpush1.bf16.msra.mxu0 0
      %2942 = vmatprep.subr.bf16.mxu0 0
      %2943 = vmatpush1.bf16.msra.mxu0 0
      %2944 = vmatprep.subr.bf16.mxu0 0
      %2945 = vmatpush1.bf16.msra.mxu0 0
      %2946 = vmatprep.mubr.bf16.mxu0 %v2912
      %2947 = vmatmul.mubr.bf16.gmra.mrb[0].mxu0 %v2848
      %v2948 = vpop.f32.mrb[0].mxu0
      %v2949 = vadd.f32 0.0, %v2948
      %v2950 = vpop.f32.mrb[0].mxu0
      %v2951 = vpop.f32.mrb[0].mxu0
      %v2952 = vpop.f32.mrb[0].mxu0
      %2953 = vdwg.mxu0
      %v2954 = vadd.f32 %v2815, %v2949
      %s2955 = scalar_lea.vmem %s219, 36
      %v2956 = vld [vmem:[%s2955] sm:$0xf]
      %v2957 = vld [vmem:[%s636] sm:$0xf]
      %v2958 = vld [vmem:[%s636 + $0x4] sm:$0xf]
      %v2959 = vld [vmem:[%s636 + $0x8] sm:$0xf]
      %v2960 = vld [vmem:[%s636 + $0xc] sm:$0xf]
      %v2961 = vld [vmem:[%s636 + $0x10] sm:$0xf]
      %v2962 = vld [vmem:[%s636 + $0x14] sm:$0xf]
      %v2963 = vld [vmem:[%s636 + $0x18] sm:$0xf]
      %v2964 = vld [vmem:[%s636 + $0x1c] sm:$0xf]
      %v2965 = vld [vmem:[%s636 + $0x20] sm:$0xf]
      %v2966 = vld [vmem:[%s636 + $0x24] sm:$0xf]
      %v2967 = vld [vmem:[%s636 + $0x28] sm:$0xf]
      %v2968 = vld [vmem:[%s636 + $0x2c] sm:$0xf]
      %v2969 = vld [vmem:[%s636 + $0x30] sm:$0xf]
      %v2970 = vld [vmem:[%s636 + $0x34] sm:$0xf]
      %v2971 = vld [vmem:[%s636 + $0x38] sm:$0xf]
      %v2972 = vld [vmem:[%s636 + $0x3c] sm:$0xf]
      %v2973 = vld [vmem:[%s636 + $0x40] sm:$0xf]
      %v2974 = vld [vmem:[%s636 + $0x44] sm:$0xf]
      %v2975 = vld [vmem:[%s636 + $0x48] sm:$0xf]
      %v2976 = vld [vmem:[%s636 + $0x4c] sm:$0xf]
      %v2979 = vunpack.c.l.s4 1983009808
      %v2980 = vunpack.c.0.s8 %v2979
      %v2981 = vlaneseq
      %v2982 = vshrl.u32 %v2981, 7
      %v2983 = vsub.s32 %v2980, %v2982
      %v2984 = vrot.slane %v2956, %v2983
      %v2985 = vcombine.high %v2984, %v2984
      %v3007 = vunpack.c.l.b16 %v2957
      %v3008 = vunpack.c.l.b16 %v2958
      %v3009 = vunpack.c.l.b16 %v2959
      %v3010 = vunpack.c.l.b16 %v2960
      %v3011 = vunpack.c.l.b16 %v2961
      %v3012 = vunpack.c.l.b16 %v2962
      %v3013 = vunpack.c.l.b16 %v2963
      %v3014 = vunpack.c.l.b16 %v2964
      %v3015 = vunpack.c.l.b16 %v2965
      %v3016 = vunpack.c.l.b16 %v2966
      %v3017 = vunpack.c.l.b16 %v2967
      %v3018 = vunpack.c.l.b16 %v2968
      %v3019 = vunpack.c.l.b16 %v2969
      %v3020 = vunpack.c.l.b16 %v2970
      %v3021 = vunpack.c.l.b16 %v2971
      %v3022 = vunpack.c.l.b16 %v2972
      %v3023 = vunpack.c.l.b16 %v2973
      %v3024 = vunpack.c.l.b16 %v2974
      %v3025 = vunpack.c.l.b16 %v2975
      %v3026 = vunpack.c.l.b16 %v2976
      %v3027 = vpack.c.b16 %v3008, %v3007
      %v3028 = vpack.c.b16 %v3010, %v3009
      %v3029 = vpack.c.b16 %v3012, %v3011
      %v3030 = vpack.c.b16 %v3014, %v3013
      %v3031 = vpack.c.b16 %v3016, %v3015
      %v3032 = vpack.c.b16 %v3018, %v3017
      %v3033 = vpack.c.b16 %v3020, %v3019
      %v3034 = vpack.c.b16 %v3022, %v3021
      %v3035 = vpack.c.b16 %v3024, %v3023
      %v3036 = vpack.c.b16 %v3026, %v3025
      %v3048 = vsel %vm340, %v2985, 0
      %3050 = vmatprep.subr.bf16.mxu0 0
      %3051 = vmatpush1.bf16.msra.mxu0 %v3027
      %3052 = vmatprep.subr.bf16.mxu0 0
      %3053 = vmatpush1.bf16.msra.mxu0 %v3028
      %3054 = vmatprep.subr.bf16.mxu0 0
      %3055 = vmatpush1.bf16.msra.mxu0 %v3029
      %3056 = vmatprep.subr.bf16.mxu0 0
      %3057 = vmatpush1.bf16.msra.mxu0 %v3030
      %3058 = vmatprep.subr.bf16.mxu0 0
      %3059 = vmatpush1.bf16.msra.mxu0 %v3031
      %3060 = vmatprep.subr.bf16.mxu0 0
      %3061 = vmatpush1.bf16.msra.mxu0 %v3032
      %3062 = vmatprep.subr.bf16.mxu0 0
      %3063 = vmatpush1.bf16.msra.mxu0 %v3033
      %3064 = vmatprep.subr.bf16.mxu0 0
      %3065 = vmatpush1.bf16.msra.mxu0 %v3034
      %3066 = vmatprep.subr.bf16.mxu0 0
      %3067 = vmatpush1.bf16.msra.mxu0 %v3035
      %3068 = vmatprep.subr.bf16.mxu0 0
      %3069 = vmatpush1.bf16.msra.mxu0 %v3036
      %3070 = vmatprep.subr.bf16.mxu0 0
      %3071 = vmatpush1.bf16.msra.mxu0 0
      %3072 = vmatprep.subr.bf16.mxu0 0
      %3073 = vmatpush1.bf16.msra.mxu0 0
      %3074 = vmatprep.subr.bf16.mxu0 0
      %3075 = vmatpush1.bf16.msra.mxu0 0
      %3076 = vmatprep.subr.bf16.mxu0 0
      %3077 = vmatpush1.bf16.msra.mxu0 0
      %3078 = vmatprep.subr.bf16.mxu0 0
      %3079 = vmatpush1.bf16.msra.mxu0 0
      %3080 = vmatprep.subr.bf16.mxu0 0
      %3081 = vmatpush1.bf16.msra.mxu0 0
      %3082 = vmatprep.mubr.bf16.mxu0 %v3048
      %3083 = vmatmul.mubr.bf16.gmra.mrb[0].mxu0 %v2984
      %v3084 = vpop.f32.mrb[0].mxu0
      %v3085 = vadd.f32 0.0, %v3084
      %v3086 = vpop.f32.mrb[0].mxu0
      %v3087 = vpop.f32.mrb[0].mxu0
      %v3088 = vpop.f32.mrb[0].mxu0
      %3089 = vdwg.mxu0
      %v3090 = vadd.f32 %v2954, %v3085
      %s3091 = scalar_lea.vmem %s219, 40
      %v3092 = vld [vmem:[%s3091] sm:$0xf]
      %v3093 = vld [vmem:[%s773] sm:$0xf]
      %v3094 = vld [vmem:[%s773 + $0x4] sm:$0xf]
      %v3095 = vld [vmem:[%s773 + $0x8] sm:$0xf]
      %v3096 = vld [vmem:[%s773 + $0xc] sm:$0xf]
      %v3097 = vld [vmem:[%s773 + $0x10] sm:$0xf]
      %v3098 = vld [vmem:[%s773 + $0x14] sm:$0xf]
      %v3099 = vld [vmem:[%s773 + $0x18] sm:$0xf]
      %v3100 = vld [vmem:[%s773 + $0x1c] sm:$0xf]
      %v3101 = vld [vmem:[%s773 + $0x20] sm:$0xf]
      %v3102 = vld [vmem:[%s773 + $0x24] sm:$0xf]
      %v3103 = vld [vmem:[%s773 + $0x28] sm:$0xf]
      %v3104 = vld [vmem:[%s773 + $0x2c] sm:$0xf]
      %v3105 = vld [vmem:[%s773 + $0x30] sm:$0xf]
      %v3106 = vld [vmem:[%s773 + $0x34] sm:$0xf]
      %v3107 = vld [vmem:[%s773 + $0x38] sm:$0xf]
      %v3108 = vld [vmem:[%s773 + $0x3c] sm:$0xf]
      %v3109 = vld [vmem:[%s773 + $0x40] sm:$0xf]
      %v3110 = vld [vmem:[%s773 + $0x44] sm:$0xf]
      %v3111 = vld [vmem:[%s773 + $0x48] sm:$0xf]
      %v3112 = vld [vmem:[%s773 + $0x4c] sm:$0xf]
      %v3115 = vunpack.c.l.s4 1983009808
      %v3116 = vunpack.c.0.s8 %v3115
      %v3117 = vlaneseq
      %v3118 = vshrl.u32 %v3117, 7
      %v3119 = vsub.s32 %v3116, %v3118
      %v3120 = vrot.slane %v3092, %v3119
      %v3121 = vcombine.high %v3120, %v3120
      %v3143 = vunpack.c.l.b16 %v3093
      %v3144 = vunpack.c.l.b16 %v3094
      %v3145 = vunpack.c.l.b16 %v3095
      %v3146 = vunpack.c.l.b16 %v3096
      %v3147 = vunpack.c.l.b16 %v3097
      %v3148 = vunpack.c.l.b16 %v3098
      %v3149 = vunpack.c.l.b16 %v3099
      %v3150 = vunpack.c.l.b16 %v3100
      %v3151 = vunpack.c.l.b16 %v3101
      %v3152 = vunpack.c.l.b16 %v3102
      %v3153 = vunpack.c.l.b16 %v3103
      %v3154 = vunpack.c.l.b16 %v3104
      %v3155 = vunpack.c.l.b16 %v3105
      %v3156 = vunpack.c.l.b16 %v3106
      %v3157 = vunpack.c.l.b16 %v3107
      %v3158 = vunpack.c.l.b16 %v3108
      %v3159 = vunpack.c.l.b16 %v3109
      %v3160 = vunpack.c.l.b16 %v3110
      %v3161 = vunpack.c.l.b16 %v3111
      %v3162 = vunpack.c.l.b16 %v3112
      %v3163 = vpack.c.b16 %v3144, %v3143
      %v3164 = vpack.c.b16 %v3146, %v3145
      %v3165 = vpack.c.b16 %v3148, %v3147
      %v3166 = vpack.c.b16 %v3150, %v3149
      %v3167 = vpack.c.b16 %v3152, %v3151
      %v3168 = vpack.c.b16 %v3154, %v3153
      %v3169 = vpack.c.b16 %v3156, %v3155
      %v3170 = vpack.c.b16 %v3158, %v3157
      %v3171 = vpack.c.b16 %v3160, %v3159
      %v3172 = vpack.c.b16 %v3162, %v3161
      %v3184 = vsel %vm340, %v3121, 0
      %3186 = vmatprep.subr.bf16.mxu0 0
      %3187 = vmatpush1.bf16.msra.mxu0 %v3163
      %3188 = vmatprep.subr.bf16.mxu0 0
      %3189 = vmatpush1.bf16.msra.mxu0 %v3164
      %3190 = vmatprep.subr.bf16.mxu0 0
      %3191 = vmatpush1.bf16.msra.mxu0 %v3165
      %3192 = vmatprep.subr.bf16.mxu0 0
      %3193 = vmatpush1.bf16.msra.mxu0 %v3166
      %3194 = vmatprep.subr.bf16.mxu0 0
      %3195 = vmatpush1.bf16.msra.mxu0 %v3167
      %3196 = vmatprep.subr.bf16.mxu0 0
      %3197 = vmatpush1.bf16.msra.mxu0 %v3168
      %3198 = vmatprep.subr.bf16.mxu0 0
      %3199 = vmatpush1.bf16.msra.mxu0 %v3169
      %3200 = vmatprep.subr.bf16.mxu0 0
      %3201 = vmatpush1.bf16.msra.mxu0 %v3170
      %3202 = vmatprep.subr.bf16.mxu0 0
      %3203 = vmatpush1.bf16.msra.mxu0 %v3171
      %3204 = vmatprep.subr.bf16.mxu0 0
      %3205 = vmatpush1.bf16.msra.mxu0 %v3172
      %3206 = vmatprep.subr.bf16.mxu0 0
      %3207 = vmatpush1.bf16.msra.mxu0 0
      %3208 = vmatprep.subr.bf16.mxu0 0
      %3209 = vmatpush1.bf16.msra.mxu0 0
      %3210 = vmatprep.subr.bf16.mxu0 0
      %3211 = vmatpush1.bf16.msra.mxu0 0
      %3212 = vmatprep.subr.bf16.mxu0 0
      %3213 = vmatpush1.bf16.msra.mxu0 0
      %3214 = vmatprep.subr.bf16.mxu0 0
      %3215 = vmatpush1.bf16.msra.mxu0 0
      %3216 = vmatprep.subr.bf16.mxu0 0
      %3217 = vmatpush1.bf16.msra.mxu0 0
      %3218 = vmatprep.mubr.bf16.mxu0 %v3184
      %3219 = vmatmul.mubr.bf16.gmra.mrb[0].mxu0 %v3120
      %v3220 = vpop.f32.mrb[0].mxu0
      %v3221 = vadd.f32 0.0, %v3220
      %v3222 = vpop.f32.mrb[0].mxu0
      %v3223 = vpop.f32.mrb[0].mxu0
      %v3224 = vpop.f32.mrb[0].mxu0
      %3225 = vdwg.mxu0
      %v3226 = vadd.f32 %v3090, %v3221
      %v3227 = vld [vmem:[%s2] sm:$0x1]
      %v3229 = vlaneseq
      %v3230 = vshrl.u32 %v3229, 7
      %v3231 = vsub.s32 0, %v3230
      %v3232 = vrot.slane %v3227, %v3231
      %v3234 = vadd.f32 %v3226, %v3232
      %v3235 = vmul.f32 %v3234, %v3234
      %v3236 = vld [vmem:[%s3] sm:$0xff]
      %v3237 = vld [vmem:[%s3 + $0x8] sm:$0xff]
      %v3238 = vld [vmem:[%s3 + $0x10] sm:$0xff]
      %v3239 = vld [vmem:[%s3 + $0x18] sm:$0xff]
      %v3240 = vld [vmem:[%s4] sm:$0x1]
      %v3242 = vlaneseq
      %v3243 = vshrl.u32 %v3242, 7
      %v3244 = vsub.s32 0, %v3243
      %v3245 = vrot.slane %v3240, %v3244
      %v3248 = vsel %vm340, %v3235, 0
      %3250 = vmatprep.subr.mxu0 0.0
      %3251 = vmatpush1.msra.mxu0 %v3236
      %3252 = vmatprep.subr.mxu0 0.0
      %3253 = vmatpush1.msra.mxu0 %v3237
      %3254 = vmatprep.subr.mxu0 0.0
      %3255 = vmatpush1.msra.mxu0 %v3238
      %3256 = vmatprep.subr.mxu0 0.0
      %3257 = vmatpush1.msra.mxu0 %v3239
      %3258 = vmatprep.subr.mxu0 0.0
      %3259 = vmatpush1.msra.mxu0 0.0
      %3260 = vmatprep.subr.mxu0 0.0
      %3261 = vmatpush1.msra.mxu0 0.0
      %3262 = vmatprep.subr.mxu0 0.0
      %3263 = vmatpush1.msra.mxu0 0.0
      %3264 = vmatprep.subr.mxu0 0.0
      %3265 = vmatpush1.msra.mxu0 0.0
      %3266 = vmatprep.subr.mxu0 0.0
      %3267 = vmatpush1.msra.mxu0 0.0
      %3268 = vmatprep.subr.mxu0 0.0
      %3269 = vmatpush1.msra.mxu0 0.0
      %3270 = vmatprep.subr.mxu0 0.0
      %3271 = vmatpush1.msra.mxu0 0.0
      %3272 = vmatprep.subr.mxu0 0.0
      %3273 = vmatpush1.msra.mxu0 0.0
      %3274 = vmatprep.subr.mxu0 0.0
      %3275 = vmatpush1.msra.mxu0 0.0
      %3276 = vmatprep.subr.mxu0 0.0
      %3277 = vmatpush1.msra.mxu0 0.0
      %3278 = vmatprep.subr.mxu0 0.0
      %3279 = vmatpush1.msra.mxu0 0.0
      %3280 = vmatprep.subr.mxu0 0.0
      %3281 = vmatpush1.msra.mxu0 0.0
      %3282 = vmatprep.subr.mxu0 0.0
      %3283 = vmatpush1.msra.mxu0 0.0
      %3284 = vmatprep.subr.mxu0 0.0
      %3285 = vmatpush1.msra.mxu0 0.0
      %3286 = vmatprep.subr.mxu0 0.0
      %3287 = vmatpush1.msra.mxu0 0.0
      %3288 = vmatprep.subr.mxu0 0.0
      %3289 = vmatpush1.msra.mxu0 0.0
      %3290 = vmatprep.subr.mxu0 0.0
      %3291 = vmatpush1.msra.mxu0 0.0
      %3292 = vmatprep.subr.mxu0 0.0
      %3293 = vmatpush1.msra.mxu0 0.0
      %3294 = vmatprep.subr.mxu0 0.0
      %3295 = vmatpush1.msra.mxu0 0.0
      %3296 = vmatprep.subr.mxu0 0.0
      %3297 = vmatpush1.msra.mxu0 0.0
      %3298 = vmatprep.subr.mxu0 0.0
      %3299 = vmatpush1.msra.mxu0 0.0
      %3300 = vmatprep.subr.mxu0 0.0
      %3301 = vmatpush1.msra.mxu0 0.0
      %3302 = vmatprep.subr.mxu0 0.0
      %3303 = vmatpush1.msra.mxu0 0.0
      %3304 = vmatprep.subr.mxu0 0.0
      %3305 = vmatpush1.msra.mxu0 0.0
      %3306 = vmatprep.subr.mxu0 0.0
      %3307 = vmatpush1.msra.mxu0 0.0
      %3308 = vmatprep.subr.mxu0 0.0
      %3309 = vmatpush1.msra.mxu0 0.0
      %3310 = vmatprep.subr.mxu0 0.0
      %3311 = vmatpush1.msra.mxu0 0.0
      %3312 = vmatprep.subr.mxu0 0.0
      %3313 = vmatpush1.msra.mxu0 0.0
      %3314 = vmatprep.mubr.f32.mxu0 0.0
      %3315 = vmatmul.mubr.f32.gmra.mrb[0].mxu0 %v3248
      %v3316 = vpop.f32.mrb[0].mxu0
      %v3317 = vadd.f32 %v3245, %v3316
      %v3318 = vpop.f32.mrb[0].mxu0
      %3319 = vdwg.mxu0
      %v3320 = vrsqrt.pop %v3317
      %v3321 = vmul.f32 %v3234, %v3320
      %v3322 = vpack.c.bf16 %v3321, %v3321
      %s3323 = scalar_lea.vmem %s224, 6
      %3324 = vst.msk [vmem:[%s3323] sm:$0x3] %vm1004, %v3322
      %p3325 = scmp.lt.s32.totalorder %s16, 1
      %s3326 = scalar_select %p3325, %s16, 1
      %s3327 = smul.addr %s3326, 4
      %s3328 = smul.addr %s3327, 2
      %s3329 = scalar_lea.vmem %s5, %s3328
      // Predicated region
      $region41: #{analysis_forward.5} parent=39 // pred_check
        %p3330 = pneg %p144
      $region42: #{analysis_forward.5} parent=39 // pred_check_branch
        %3332 = sbr.rel (%p3330) target = $region44
      $region43: #{analysis_forward.5} parent=39 // pred_region
        _
      $region44: #{analysis_forward.5} parent=39 // pred_fallthru
        _
    $region40: #{analysis_forward.5} parent=5 // pred_fallthru
      _
    %p3333 = scmp.le.s32.totalorder 2, %s11
    // Predicated region
    $region45: #{analysis_forward.5} parent=5 // pred_check
      %p3334 = pneg %p3333
    $region46: #{analysis_forward.5} parent=5 // pred_check_branch
      %3336 = sbr.rel (%p3334) target = $region48
    $region47: #{analysis_forward.5} parent=5 // pred_region
      %s3337 = ssub.s32 %s11, 2
      // Predicated region
      $region49: #{analysis_forward.5} parent=47 // pred_check
        %p3338 = pneg %p150
      $region50: #{analysis_forward.5} parent=47 // pred_check_branch
        %3340 = sbr.rel (%p3338) target = $region52
      $region51: #{analysis_forward.5} parent=47 // pred_region
        %p3341 = scmp.lt.s32.totalorder %s17, 1
        %s3342 = scalar_select %p3341, %s17, 1
        %s3343 = smul.addr %s3342, 4
        %s3344 = smul.addr %s3343, 2
        %s3345 = scalar_lea.vmem %s5, %s3344
      $region52: #{analysis_forward.5} parent=47 // pred_fallthru
        _
    $region48: #{analysis_forward.5} parent=5 // pred_fallthru
      _
  $region6: #{analysis_forward.5} parent=0 // loop_footer
    %s15 = sadd.s32 1, %s11
  $region7: #{analysis_forward.5} parent=0 // loop_footer_branch
    %10 = sbr.rel target = $region3
  $region8: #{analysis_forward.5} parent=0 // loop_exit
    _

// kernel: analysis_forward.6
$region0: #{analysis_forward.6}
  #allocation0 [shape = 'u32[]', space=smem, size = 0x4, offset = 0x4, fixed_abs, tag = 'smem constant byte address 0x4 - core index']
  #allocation1 [shape = 'u32[144,128]{1,0:T(1,128)}', space=vmem, size = 0x12000, scoped, tag = 'internal scratch']
  %s0 = inlined_call_operand.vmem [shape: bf16[2,8,2,160], index: 0, kind: input, shape index: {}]
  %s1 = inlined_call_operand.vmem [shape: bf16[5,160,32], index: 1, kind: input, shape index: {}]
  %s2 = inlined_call_operand.vmem [shape: f32[1,32], index: 2, kind: input, shape index: {}]
  %s3 = inlined_call_operand.vmem [shape: f32[32,32], index: 3, kind: input, shape index: {}]
  %s4 = inlined_call_operand.vmem [shape: f32[1,32], index: 4, kind: input, shape index: {}]
  %s5 = inlined_call_operand.vmem [shape: bf16[2,2,2,32], index: 5, kind: output, shape index: {}]
  %s6 = sld [smem:[#allocation0]]
  $region53: #{analysis_forward.6} parent=0
    _
  %s8 = ssub.s32 1, %s6
  %s9 = scalar_select 0, %s8, %s6
  loop: start=0, step=1, limit=4
  $region2: #{analysis_forward.6} parent=0 // loop_pre_header
    _
  $region3: #{analysis_forward.6} parent=0 // loop_header
    %s11 = sphi 0, %s15
    %p12 = scmp.ge.s32.totalorder %s11, 4
    %s21 = sphi 0, %s23
    %s24 = sphi 0, %s21
    %s25 = sphi 0, %s24
    %s41 = sphi 0, %s25
    %s45 = sphi 0, %s45
    %s47 = sphi 0, %s45
    %s48 = sphi 0, %s47
    %s62 = sphi 0, %s48
    %s66 = sphi 0, %s66
    %s68 = sphi 0, %s66
    %s69 = sphi 0, %s68
    %s83 = sphi 0, %s69
    %s87 = sphi 0, %s87
    %s89 = sphi 0, %s87
    %s90 = sphi 0, %s89
    %s104 = sphi 0, %s90
    %s108 = sphi 0, %s108
    %s110 = sphi 0, %s108
    %s111 = sphi 0, %s110
    %s125 = sphi 0, %s111
    %s131 = sphi 0, %s133
    %s134 = sphi 0, %s131
    %s135 = sphi 0, %s134
    %s151 = sphi 0, %s135
  $region4: #{analysis_forward.6} parent=0 // loop_header_branch
    %14 = sbr.rel (%p12) target = $region8
  $region5: #{analysis_forward.6} parent=0 // loop_body
    %s16 = ssub.s32 %s11, 1
    %s17 = ssub.s32 %s11, 2
    %s18 = sadd.s32 %s11, 1
    %s19 = ssub.s32 %s11, %s18
    %p20 = scmp.eq.s32.totalorder %s19, 0
    %s22 = sadd.s32 %s21, 1
    %s23 = scalar_select %p20, %s21, %s22
    %p26 = pneg %p20
    %p27 = scmp.eq.s32.totalorder %s11, 1
    %p28 = por %p26, %p27
    %p29 = scmp.ne.s32.totalorder %s21, %s24
    %p30 = scmp.eq.s32.totalorder %s11, 0
    %p31 = por %p29, %p30
    %p32 = scmp.ne.s32.totalorder %s21, %s24
    %p33 = scmp.eq.s32.totalorder %s16, 1
    %p34 = por %p32, %p33
    %p35 = scmp.ne.s32.totalorder %s24, %s25
    %p36 = scmp.eq.s32.totalorder %s16, 0
    %p37 = por %p35, %p36
    %p38 = scmp.ne.s32.totalorder %s24, %s25
    %p39 = scmp.eq.s32.totalorder %s17, 1
    %p40 = por %p38, %p39
    %p42 = scmp.ne.s32.totalorder %s25, %s41
    %p43 = scmp.eq.s32.totalorder %s17, 0
    %p44 = por %p42, %p43
    %s46 = sadd.s32 %s45, 1
    %p49 = scmp.eq.s32.totalorder %s11, 1
    %p50 = scmp.ne.s32.totalorder %s45, %s47
    %p51 = scmp.eq.s32.totalorder %s11, 0
    %p52 = por %p50, %p51
    %p53 = scmp.ne.s32.totalorder %s45, %s47
    %p54 = scmp.eq.s32.totalorder %s16, 1
    %p55 = por %p53, %p54
    %p56 = scmp.ne.s32.totalorder %s47, %s48
    %p57 = scmp.eq.s32.totalorder %s16, 0
    %p58 = por %p56, %p57
    %p59 = scmp.ne.s32.totalorder %s47, %s48
    %p60 = scmp.eq.s32.totalorder %s17, 1
    %p61 = por %p59, %p60
    %p63 = scmp.ne.s32.totalorder %s48, %s62
    %p64 = scmp.eq.s32.totalorder %s17, 0
    %p65 = por %p63, %p64
    %s67 = sadd.s32 %s66, 1
    %p70 = scmp.eq.s32.totalorder %s11, 1
    %p71 = scmp.ne.s32.totalorder %s66, %s68
    %p72 = scmp.eq.s32.totalorder %s11, 0
    %p73 = por %p71, %p72
    %p74 = scmp.ne.s32.totalorder %s66, %s68
    %p75 = scmp.eq.s32.totalorder %s16, 1
    %p76 = por %p74, %p75
    %p77 = scmp.ne.s32.totalorder %s68, %s69
    %p78 = scmp.eq.s32.totalorder %s16, 0
    %p79 = por %p77, %p78
    %p80 = scmp.ne.s32.totalorder %s68, %s69
    %p81 = scmp.eq.s32.totalorder %s17, 1
    %p82 = por %p80, %p81
    %p84 = scmp.ne.s32.totalorder %s69, %s83
    %p85 = scmp.eq.s32.totalorder %s17, 0
    %p86 = por %p84, %p85
    %s88 = sadd.s32 %s87, 1
    %p91 = scmp.eq.s32.totalorder %s11, 1
    %p92 = scmp.ne.s32.totalorder %s87, %s89
    %p93 = scmp.eq.s32.totalorder %s11, 0
    %p94 = por %p92, %p93
    %p95 = scmp.ne.s32.totalorder %s87, %s89
    %p96 = scmp.eq.s32.totalorder %s16, 1
    %p97 = por %p95, %p96
    %p98 = scmp.ne.s32.totalorder %s89, %s90
    %p99 = scmp.eq.s32.totalorder %s16, 0
    %p100 = por %p98, %p99
    %p101 = scmp.ne.s32.totalorder %s89, %s90
    %p102 = scmp.eq.s32.totalorder %s17, 1
    %p103 = por %p101, %p102
    %p105 = scmp.ne.s32.totalorder %s90, %s104
    %p106 = scmp.eq.s32.totalorder %s17, 0
    %p107 = por %p105, %p106
    %s109 = sadd.s32 %s108, 1
    %p112 = scmp.eq.s32.totalorder %s11, 1
    %p113 = scmp.ne.s32.totalorder %s108, %s110
    %p114 = scmp.eq.s32.totalorder %s11, 0
    %p115 = por %p113, %p114
    %p116 = scmp.ne.s32.totalorder %s108, %s110
    %p117 = scmp.eq.s32.totalorder %s16, 1
    %p118 = por %p116, %p117
    %p119 = scmp.ne.s32.totalorder %s110, %s111
    %p120 = scmp.eq.s32.totalorder %s16, 0
    %p121 = por %p119, %p120
    %p122 = scmp.ne.s32.totalorder %s110, %s111
    %p123 = scmp.eq.s32.totalorder %s17, 1
    %p124 = por %p122, %p123
    %p126 = scmp.ne.s32.totalorder %s111, %s125
    %p127 = scmp.eq.s32.totalorder %s17, 0
    %p128 = por %p126, %p127
    %s129 = ssub.s32 %s11, %s18
    %p130 = scmp.eq.s32.totalorder %s129, 0
    %s132 = sadd.s32 %s131, 1
    %s133 = scalar_select %p130, %s131, %s132
    %p136 = pneg %p130
    %p137 = scmp.eq.s32.totalorder %s11, 1
    %p138 = por %p136, %p137
    %p139 = scmp.ne.s32.totalorder %s131, %s134
    %p140 = scmp.eq.s32.totalorder %s11, 0
    %p141 = por %p139, %p140
    %p142 = scmp.ne.s32.totalorder %s131, %s134
    %p143 = scmp.eq.s32.totalorder %s16, 1
    %p144 = por %p142, %p143
    %p145 = scmp.ne.s32.totalorder %s134, %s135
    %p146 = scmp.eq.s32.totalorder %s16, 0
    %p147 = por %p145, %p146
    %p148 = scmp.ne.s32.totalorder %s134, %s135
    %p149 = scmp.eq.s32.totalorder %s17, 1
    %p150 = por %p148, %p149
    %p152 = scmp.ne.s32.totalorder %s135, %s151
    %p153 = scmp.eq.s32.totalorder %s17, 0
    %p154 = por %p152, %p153
    %p155 = scmp.le.s32.totalorder 1, %s11
    %p156 = scmp.lt.s32.totalorder %s11, 3
    %p157 = pnand %p155, %p156
    %p158 = pneg %p157
    // Predicated region
    $region9: #{analysis_forward.6} parent=5 // pred_check
      _
    $region10: #{analysis_forward.6} parent=5 // pred_check_branch
      %160 = sbr.rel (%p157) target = $region12
    $region11: #{analysis_forward.6} parent=5 // pred_region
      %s161 = ssub.s32 %s11, 1
      // Predicated region
      $region13: #{analysis_forward.6} parent=11 // pred_check
        %p162 = pneg %p58
      $region14: #{analysis_forward.6} parent=11 // pred_check_branch
        %164 = sbr.rel (%p162) target = $region16
      $region15: #{analysis_forward.6} parent=11 // pred_region
        _
      $region16: #{analysis_forward.6} parent=11 // pred_fallthru
        _
      // Predicated region
      $region17: #{analysis_forward.6} parent=11 // pred_check
        %p165 = pneg %p79
      $region18: #{analysis_forward.6} parent=11 // pred_check_branch
        %167 = sbr.rel (%p165) target = $region20
      $region19: #{analysis_forward.6} parent=11 // pred_region
        _
      $region20: #{analysis_forward.6} parent=11 // pred_fallthru
        _
      // Predicated region
      $region21: #{analysis_forward.6} parent=11 // pred_check
        %p168 = pneg %p100
      $region22: #{analysis_forward.6} parent=11 // pred_check_branch
        %170 = sbr.rel (%p168) target = $region24
      $region23: #{analysis_forward.6} parent=11 // pred_region
        _
      $region24: #{analysis_forward.6} parent=11 // pred_fallthru
        _
      // Predicated region
      $region25: #{analysis_forward.6} parent=11 // pred_check
        %p171 = pneg %p121
      $region26: #{analysis_forward.6} parent=11 // pred_check_branch
        %173 = sbr.rel (%p171) target = $region28
      $region27: #{analysis_forward.6} parent=11 // pred_region
        _
      $region28: #{analysis_forward.6} parent=11 // pred_fallthru
        _
    $region12: #{analysis_forward.6} parent=5 // pred_fallthru
      _
    %p174 = scmp.lt.s32.totalorder %s11, 2
    // Predicated region
    $region29: #{analysis_forward.6} parent=5 // pred_check
      %p175 = pneg %p174
    $region30: #{analysis_forward.6} parent=5 // pred_check_branch
      %177 = sbr.rel (%p175) target = $region32
    $region31: #{analysis_forward.6} parent=5 // pred_region
      // Predicated region
      $region33: #{analysis_forward.6} parent=31 // pred_check
        %p178 = pneg %p31
      $region34: #{analysis_forward.6} parent=31 // pred_check_branch
        %180 = sbr.rel (%p178) target = $region36
      $region35: #{analysis_forward.6} parent=31 // pred_region
        %p181 = scmp.lt.s32.totalorder %s11, 1
        %s182 = scalar_select %p181, %s11, 1
        %s183 = smul.addr %s182, 16
        %s184 = scalar_lea.vmem %s0, %s183
      $region36: #{analysis_forward.6} parent=31 // pred_fallthru
        _
    $region32: #{analysis_forward.6} parent=5 // pred_fallthru
      _
    %p185 = scmp.le.s32.totalorder 1, %s11
    %p186 = scmp.lt.s32.totalorder %s11, 3
    %p187 = pnand %p185, %p186
    %p188 = pneg %p187
    // Predicated region
    $region37: #{analysis_forward.6} parent=5 // pred_check
      _
    $region38: #{analysis_forward.6} parent=5 // pred_check_branch
      %190 = sbr.rel (%p187) target = $region40
    $region39: #{analysis_forward.6} parent=5 // pred_region
      %s191 = ssub.s32 %s11, 1
      %p192 = scmp.lt.s32.totalorder %s16, 1
      %s193 = scalar_select %p192, %s16, 1
      %s194 = smul.addr %s193, 16
      %s195 = scalar_lea.vmem %s0, %s194
      %p196 = pneg %p37
      %p197 = pneg %p34
      %p198 = pneg %p58
      %p199 = pneg %p55
      %p200 = pneg %p79
      %p201 = pneg %p76
      %p202 = pneg %p100
      %p203 = pneg %p97
      %p204 = pneg %p121
      %p205 = pneg %p118
      %p206 = pneg %p147
      %p207 = pneg %p144
      %p208 = scmp.lt.s32.totalorder %s16, 1
      %s209 = scalar_select %p208, %s16, 1
      %s210 = smul.addr %s209, 2
      %s211 = scalar_lea.vmem %s5, %s210
      %p212 = scmp.lt.s32.totalorder %s16, 1
      %s213 = scalar_select %p212, %s16, 1
      %s214 = smul.addr %s213, 16
      %s215 = scalar_lea.vmem %s0, %s214
      %p216 = scmp.lt.s32.totalorder %s16, 1
      %s217 = scalar_select %p216, %s16, 1
      %s218 = smul.addr %s217, 2
      %s219 = scalar_lea.vmem %s5, %s218
      %v221 = vld [vmem:[%s215] sm:$0x3]
      %v222 = vld [vmem:[%s1] sm:$0xf]
      %v223 = vld [vmem:[%s1 + $0x4] sm:$0xf]
      %v224 = vld [vmem:[%s1 + $0x8] sm:$0xf]
      %v225 = vld [vmem:[%s1 + $0xc] sm:$0xf]
      %v226 = vld [vmem:[%s1 + $0x10] sm:$0xf]
      %v227 = vld [vmem:[%s1 + $0x14] sm:$0xf]
      %v228 = vld [vmem:[%s1 + $0x18] sm:$0xf]
      %v229 = vld [vmem:[%s1 + $0x1c] sm:$0xf]
      %v230 = vld [vmem:[%s1 + $0x20] sm:$0xf]
      %v231 = vld [vmem:[%s1 + $0x24] sm:$0xf]
      %v232 = vld [vmem:[%s1 + $0x28] sm:$0xf]
      %v233 = vld [vmem:[%s1 + $0x2c] sm:$0xf]
      %v234 = vld [vmem:[%s1 + $0x30] sm:$0xf]
      %v235 = vld [vmem:[%s1 + $0x34] sm:$0xf]
      %v236 = vld [vmem:[%s1 + $0x38] sm:$0xf]
      %v237 = vld [vmem:[%s1 + $0x3c] sm:$0xf]
      %v238 = vld [vmem:[%s1 + $0x40] sm:$0xf]
      %v239 = vld [vmem:[%s1 + $0x44] sm:$0xf]
      %v240 = vld [vmem:[%s1 + $0x48] sm:$0xf]
      %v241 = vld [vmem:[%s1 + $0x4c] sm:$0xf]
      %s242 = scalar_lea.vmem %s215, 2
      %v243 = vld [vmem:[%s242] sm:$0x3]
      %s244 = scalar_lea.vmem %s1, 80
      %v245 = vld [vmem:[%s244] sm:$0xf]
      %v246 = vld [vmem:[%s244 + $0x4] sm:$0xf]
      %v247 = vld [vmem:[%s244 + $0x8] sm:$0xf]
      %v248 = vld [vmem:[%s244 + $0xc] sm:$0xf]
      %v249 = vld [vmem:[%s244 + $0x10] sm:$0xf]
      %v250 = vld [vmem:[%s244 + $0x14] sm:$0xf]
      %v251 = vld [vmem:[%s244 + $0x18] sm:$0xf]
      %v252 = vld [vmem:[%s244 + $0x1c] sm:$0xf]
      %v253 = vld [vmem:[%s244 + $0x20] sm:$0xf]
      %v254 = vld [vmem:[%s244 + $0x24] sm:$0xf]
      %v255 = vld [vmem:[%s244 + $0x28] sm:$0xf]
      %v256 = vld [vmem:[%s244 + $0x2c] sm:$0xf]
      %v257 = vld [vmem:[%s244 + $0x30] sm:$0xf]
      %v258 = vld [vmem:[%s244 + $0x34] sm:$0xf]
      %v259 = vld [vmem:[%s244 + $0x38] sm:$0xf]
      %v260 = vld [vmem:[%s244 + $0x3c] sm:$0xf]
      %v261 = vld [vmem:[%s244 + $0x40] sm:$0xf]
      %v262 = vld [vmem:[%s244 + $0x44] sm:$0xf]
      %v263 = vld [vmem:[%s244 + $0x48] sm:$0xf]
      %v264 = vld [vmem:[%s244 + $0x4c] sm:$0xf]
      %v267 = vunpack.c.l.s4 1966171168
      %v268 = vunpack.c.0.s8 %v267
      %v269 = vlaneseq
      %v270 = vshrl.u32 %v269, 7
      %v271 = vsub.s32 %v268, %v270
      %v272 = vrot.slane %v243, %v271
      %v273 = vcombine.high %v272, %v272
      %v275 = vunpack.c.l.s4 1966171168
      %v276 = vunpack.c.0.s8 %v275
      %v277 = vlaneseq
      %v278 = vshrl.u32 %v277, 7
      %v279 = vsub.s32 %v276, %v278
      %v280 = vrot.slane %v272, %v279
      %v282 = vunpack.c.l.s4 1966171168
      %v283 = vunpack.c.0.s8 %v282
      %v284 = vlaneseq
      %v285 = vshrl.u32 %v284, 7
      %v286 = vsub.s32 %v283, %v285
      %v287 = vrot.slane %v273, %v286
      %v309 = vunpack.c.l.b16 %v245
      %v310 = vunpack.c.l.b16 %v246
      %v311 = vunpack.c.l.b16 %v247
      %v312 = vunpack.c.l.b16 %v248
      %v313 = vunpack.c.l.b16 %v249
      %v314 = vunpack.c.l.b16 %v250
      %v315 = vunpack.c.l.b16 %v251
      %v316 = vunpack.c.l.b16 %v252
      %v317 = vunpack.c.l.b16 %v253
      %v318 = vunpack.c.l.b16 %v254
      %v319 = vunpack.c.l.b16 %v255
      %v320 = vunpack.c.l.b16 %v256
      %v321 = vunpack.c.l.b16 %v257
      %v322 = vunpack.c.l.b16 %v258
      %v323 = vunpack.c.l.b16 %v259
      %v324 = vunpack.c.l.b16 %v260
      %v325 = vunpack.c.l.b16 %v261
      %v326 = vunpack.c.l.b16 %v262
      %v327 = vunpack.c.l.b16 %v263
      %v328 = vunpack.c.l.b16 %v264
      %v329 = vpack.c.b16 %v310, %v309
      %v330 = vpack.c.b16 %v312, %v311
      %v331 = vpack.c.b16 %v314, %v313
      %v332 = vpack.c.b16 %v316, %v315
      %v333 = vpack.c.b16 %v318, %v317
      %v334 = vpack.c.b16 %v320, %v319
      %v335 = vpack.c.b16 %v322, %v321
      %v336 = vpack.c.b16 %v324, %v323
      %v337 = vpack.c.b16 %v326, %v325
      %v338 = vpack.c.b16 %v328, %v327
      %vm349 = vcmask 261120
      %v351 = vsel %vm349, %v287, 0
      %353 = vmatprep.subr.bf16.mxu0 0
      %354 = vmatpush1.bf16.msra.mxu0 %v329
      %355 = vmatprep.subr.bf16.mxu0 0
      %356 = vmatpush1.bf16.msra.mxu0 %v330
      %357 = vmatprep.subr.bf16.mxu0 0
      %358 = vmatpush1.bf16.msra.mxu0 %v331
      %359 = vmatprep.subr.bf16.mxu0 0
      %360 = vmatpush1.bf16.msra.mxu0 %v332
      %361 = vmatprep.subr.bf16.mxu0 0
      %362 = vmatpush1.bf16.msra.mxu0 %v333
      %363 = vmatprep.subr.bf16.mxu0 0
      %364 = vmatpush1.bf16.msra.mxu0 %v334
      %365 = vmatprep.subr.bf16.mxu0 0
      %366 = vmatpush1.bf16.msra.mxu0 %v335
      %367 = vmatprep.subr.bf16.mxu0 0
      %368 = vmatpush1.bf16.msra.mxu0 %v336
      %369 = vmatprep.subr.bf16.mxu0 0
      %370 = vmatpush1.bf16.msra.mxu0 %v337
      %371 = vmatprep.subr.bf16.mxu0 0
      %372 = vmatpush1.bf16.msra.mxu0 %v338
      %373 = vmatprep.subr.bf16.mxu0 0
      %374 = vmatpush1.bf16.msra.mxu0 0
      %375 = vmatprep.subr.bf16.mxu0 0
      %376 = vmatpush1.bf16.msra.mxu0 0
      %377 = vmatprep.subr.bf16.mxu0 0
      %378 = vmatpush1.bf16.msra.mxu0 0
      %379 = vmatprep.subr.bf16.mxu0 0
      %380 = vmatpush1.bf16.msra.mxu0 0
      %381 = vmatprep.subr.bf16.mxu0 0
      %382 = vmatpush1.bf16.msra.mxu0 0
      %383 = vmatprep.subr.bf16.mxu0 0
      %384 = vmatpush1.bf16.msra.mxu0 0
      %385 = vmatprep.mubr.bf16.mxu0 %v351
      %386 = vmatmul.mubr.bf16.gmra.mrb[0].mxu0 %v280
      %v387 = vpop.f32.mrb[0].mxu0
      %v388 = vadd.f32 0.0, %v387
      %v389 = vpop.f32.mrb[0].mxu0
      %v390 = vpop.f32.mrb[0].mxu0
      %v391 = vpop.f32.mrb[0].mxu0
      %392 = vdwg.mxu0
      %v395 = vunpack.c.l.s4 1966171168
      %v396 = vunpack.c.0.s8 %v395
      %v397 = vlaneseq
      %v398 = vshrl.u32 %v397, 7
      %v399 = vsub.s32 %v396, %v398
      %v400 = vrot.slane %v221, %v399
      %v401 = vcombine.high %v400, %v400
      %v403 = vunpack.c.l.s4 1966171168
      %v404 = vunpack.c.0.s8 %v403
      %v405 = vlaneseq
      %v406 = vshrl.u32 %v405, 7
      %v407 = vsub.s32 %v404, %v406
      %v408 = vrot.slane %v400, %v407
      %v410 = vunpack.c.l.s4 1966171168
      %v411 = vunpack.c.0.s8 %v410
      %v412 = vlaneseq
      %v413 = vshrl.u32 %v412, 7
      %v414 = vsub.s32 %v411, %v413
      %v415 = vrot.slane %v401, %v414
      %v437 = vunpack.c.l.b16 %v222
      %v438 = vunpack.c.l.b16 %v223
      %v439 = vunpack.c.l.b16 %v224
      %v440 = vunpack.c.l.b16 %v225
      %v441 = vunpack.c.l.b16 %v226
      %v442 = vunpack.c.l.b16 %v227
      %v443 = vunpack.c.l.b16 %v228
      %v444 = vunpack.c.l.b16 %v229
      %v445 = vunpack.c.l.b16 %v230
      %v446 = vunpack.c.l.b16 %v231
      %v447 = vunpack.c.l.b16 %v232
      %v448 = vunpack.c.l.b16 %v233
      %v449 = vunpack.c.l.b16 %v234
      %v450 = vunpack.c.l.b16 %v235
      %v451 = vunpack.c.l.b16 %v236
      %v452 = vunpack.c.l.b16 %v237
      %v453 = vunpack.c.l.b16 %v238
      %v454 = vunpack.c.l.b16 %v239
      %v455 = vunpack.c.l.b16 %v240
      %v456 = vunpack.c.l.b16 %v241
      %v457 = vpack.c.b16 %v438, %v437
      %v458 = vpack.c.b16 %v440, %v439
      %v459 = vpack.c.b16 %v442, %v441
      %v460 = vpack.c.b16 %v444, %v443
      %v461 = vpack.c.b16 %v446, %v445
      %v462 = vpack.c.b16 %v448, %v447
      %v463 = vpack.c.b16 %v450, %v449
      %v464 = vpack.c.b16 %v452, %v451
      %v465 = vpack.c.b16 %v454, %v453
      %v466 = vpack.c.b16 %v456, %v455
      %v478 = vsel %vm349, %v415, 0
      %480 = vmatprep.subr.bf16.mxu0 0
      %481 = vmatpush1.bf16.msra.mxu0 %v457
      %482 = vmatprep.subr.bf16.mxu0 0
      %483 = vmatpush1.bf16.msra.mxu0 %v458
      %484 = vmatprep.subr.bf16.mxu0 0
      %485 = vmatpush1.bf16.msra.mxu0 %v459
      %486 = vmatprep.subr.bf16.mxu0 0
      %487 = vmatpush1.bf16.msra.mxu0 %v460
      %488 = vmatprep.subr.bf16.mxu0 0
      %489 = vmatpush1.bf16.msra.mxu0 %v461
      %490 = vmatprep.subr.bf16.mxu0 0
      %491 = vmatpush1.bf16.msra.mxu0 %v462
      %492 = vmatprep.subr.bf16.mxu0 0
      %493 = vmatpush1.bf16.msra.mxu0 %v463
      %494 = vmatprep.subr.bf16.mxu0 0
      %495 = vmatpush1.bf16.msra.mxu0 %v464
      %496 = vmatprep.subr.bf16.mxu0 0
      %497 = vmatpush1.bf16.msra.mxu0 %v465
      %498 = vmatprep.subr.bf16.mxu0 0
      %499 = vmatpush1.bf16.msra.mxu0 %v466
      %500 = vmatprep.subr.bf16.mxu0 0
      %501 = vmatpush1.bf16.msra.mxu0 0
      %502 = vmatprep.subr.bf16.mxu0 0
      %503 = vmatpush1.bf16.msra.mxu0 0
      %504 = vmatprep.subr.bf16.mxu0 0
      %505 = vmatpush1.bf16.msra.mxu0 0
      %506 = vmatprep.subr.bf16.mxu0 0
      %507 = vmatpush1.bf16.msra.mxu0 0
      %508 = vmatprep.subr.bf16.mxu0 0
      %509 = vmatpush1.bf16.msra.mxu0 0
      %510 = vmatprep.subr.bf16.mxu0 0
      %511 = vmatpush1.bf16.msra.mxu0 0
      %512 = vmatprep.mubr.bf16.mxu0 %v478
      %513 = vmatmul.mubr.bf16.gmra.mrb[0].mxu0 %v408
      %v514 = vpop.f32.mrb[0].mxu0
      %v515 = vadd.f32 %v388, %v514
      %v516 = vpop.f32.mrb[0].mxu0
      %v517 = vpop.f32.mrb[0].mxu0
      %v518 = vpop.f32.mrb[0].mxu0
      %519 = vdwg.mxu0
      %s520 = scalar_lea.vmem %s215, 4
      %v521 = vld [vmem:[%s520] sm:$0x3]
      %s522 = scalar_lea.vmem %s1, 160
      %v523 = vld [vmem:[%s522] sm:$0xf]
      %v524 = vld [vmem:[%s522 + $0x4] sm:$0xf]
      %v525 = vld [vmem:[%s522 + $0x8] sm:$0xf]
      %v526 = vld [vmem:[%s522 + $0xc] sm:$0xf]
      %v527 = vld [vmem:[%s522 + $0x10] sm:$0xf]
      %v528 = vld [vmem:[%s522 + $0x14] sm:$0xf]
      %v529 = vld [vmem:[%s522 + $0x18] sm:$0xf]
      %v530 = vld [vmem:[%s522 + $0x1c] sm:$0xf]
      %v531 = vld [vmem:[%s522 + $0x20] sm:$0xf]
      %v532 = vld [vmem:[%s522 + $0x24] sm:$0xf]
      %v533 = vld [vmem:[%s522 + $0x28] sm:$0xf]
      %v534 = vld [vmem:[%s522 + $0x2c] sm:$0xf]
      %v535 = vld [vmem:[%s522 + $0x30] sm:$0xf]
      %v536 = vld [vmem:[%s522 + $0x34] sm:$0xf]
      %v537 = vld [vmem:[%s522 + $0x38] sm:$0xf]
      %v538 = vld [vmem:[%s522 + $0x3c] sm:$0xf]
      %v539 = vld [vmem:[%s522 + $0x40] sm:$0xf]
      %v540 = vld [vmem:[%s522 + $0x44] sm:$0xf]
      %v541 = vld [vmem:[%s522 + $0x48] sm:$0xf]
      %v542 = vld [vmem:[%s522 + $0x4c] sm:$0xf]
      %v545 = vunpack.c.l.s4 1966171168
      %v546 = vunpack.c.0.s8 %v545
      %v547 = vlaneseq
      %v548 = vshrl.u32 %v547, 7
      %v549 = vsub.s32 %v546, %v548
      %v550 = vrot.slane %v521, %v549
      %v551 = vcombine.high %v550, %v550
      %v553 = vunpack.c.l.s4 1966171168
      %v554 = vunpack.c.0.s8 %v553
      %v555 = vlaneseq
      %v556 = vshrl.u32 %v555, 7
      %v557 = vsub.s32 %v554, %v556
      %v558 = vrot.slane %v550, %v557
      %v560 = vunpack.c.l.s4 1966171168
      %v561 = vunpack.c.0.s8 %v560
      %v562 = vlaneseq
      %v563 = vshrl.u32 %v562, 7
      %v564 = vsub.s32 %v561, %v563
      %v565 = vrot.slane %v551, %v564
      %v587 = vunpack.c.l.b16 %v523
      %v588 = vunpack.c.l.b16 %v524
      %v589 = vunpack.c.l.b16 %v525
      %v590 = vunpack.c.l.b16 %v526
      %v591 = vunpack.c.l.b16 %v527
      %v592 = vunpack.c.l.b16 %v528
      %v593 = vunpack.c.l.b16 %v529
      %v594 = vunpack.c.l.b16 %v530
      %v595 = vunpack.c.l.b16 %v531
      %v596 = vunpack.c.l.b16 %v532
      %v597 = vunpack.c.l.b16 %v533
      %v598 = vunpack.c.l.b16 %v534
      %v599 = vunpack.c.l.b16 %v535
      %v600 = vunpack.c.l.b16 %v536
      %v601 = vunpack.c.l.b16 %v537
      %v602 = vunpack.c.l.b16 %v538
      %v603 = vunpack.c.l.b16 %v539
      %v604 = vunpack.c.l.b16 %v540
      %v605 = vunpack.c.l.b16 %v541
      %v606 = vunpack.c.l.b16 %v542
      %v607 = vpack.c.b16 %v588, %v587
      %v608 = vpack.c.b16 %v590, %v589
      %v609 = vpack.c.b16 %v592, %v591
      %v610 = vpack.c.b16 %v594, %v593
      %v611 = vpack.c.b16 %v596, %v595
      %v612 = vpack.c.b16 %v598, %v597
      %v613 = vpack.c.b16 %v600, %v599
      %v614 = vpack.c.b16 %v602, %v601
      %v615 = vpack.c.b16 %v604, %v603
      %v616 = vpack.c.b16 %v606, %v605
      %v628 = vsel %vm349, %v565, 0
      %630 = vmatprep.subr.bf16.mxu0 0
      %631 = vmatpush1.bf16.msra.mxu0 %v607
      %632 = vmatprep.subr.bf16.mxu0 0
      %633 = vmatpush1.bf16.msra.mxu0 %v608
      %634 = vmatprep.subr.bf16.mxu0 0
      %635 = vmatpush1.bf16.msra.mxu0 %v609
      %636 = vmatprep.subr.bf16.mxu0 0
      %637 = vmatpush1.bf16.msra.mxu0 %v610
      %638 = vmatprep.subr.bf16.mxu0 0
      %639 = vmatpush1.bf16.msra.mxu0 %v611
      %640 = vmatprep.subr.bf16.mxu0 0
      %641 = vmatpush1.bf16.msra.mxu0 %v612
      %642 = vmatprep.subr.bf16.mxu0 0
      %643 = vmatpush1.bf16.msra.mxu0 %v613
      %644 = vmatprep.subr.bf16.mxu0 0
      %645 = vmatpush1.bf16.msra.mxu0 %v614
      %646 = vmatprep.subr.bf16.mxu0 0
      %647 = vmatpush1.bf16.msra.mxu0 %v615
      %648 = vmatprep.subr.bf16.mxu0 0
      %649 = vmatpush1.bf16.msra.mxu0 %v616
      %650 = vmatprep.subr.bf16.mxu0 0
      %651 = vmatpush1.bf16.msra.mxu0 0
      %652 = vmatprep.subr.bf16.mxu0 0
      %653 = vmatpush1.bf16.msra.mxu0 0
      %654 = vmatprep.subr.bf16.mxu0 0
      %655 = vmatpush1.bf16.msra.mxu0 0
      %656 = vmatprep.subr.bf16.mxu0 0
      %657 = vmatpush1.bf16.msra.mxu0 0
      %658 = vmatprep.subr.bf16.mxu0 0
      %659 = vmatpush1.bf16.msra.mxu0 0
      %660 = vmatprep.subr.bf16.mxu0 0
      %661 = vmatpush1.bf16.msra.mxu0 0
      %662 = vmatprep.mubr.bf16.mxu0 %v628
      %663 = vmatmul.mubr.bf16.gmra.mrb[0].mxu0 %v558
      %v664 = vpop.f32.mrb[0].mxu0
      %v665 = vadd.f32 0.0, %v664
      %v666 = vpop.f32.mrb[0].mxu0
      %v667 = vpop.f32.mrb[0].mxu0
      %v668 = vpop.f32.mrb[0].mxu0
      %669 = vdwg.mxu0
      %v670 = vadd.f32 %v515, %v665
      %s671 = scalar_lea.vmem %s215, 6
      %v672 = vld [vmem:[%s671] sm:$0x3]
      %s673 = scalar_lea.vmem %s1, 240
      %v674 = vld [vmem:[%s673] sm:$0xf]
      %v675 = vld [vmem:[%s673 + $0x4] sm:$0xf]
      %v676 = vld [vmem:[%s673 + $0x8] sm:$0xf]
      %v677 = vld [vmem:[%s673 + $0xc] sm:$0xf]
      %v678 = vld [vmem:[%s673 + $0x10] sm:$0xf]
      %v679 = vld [vmem:[%s673 + $0x14] sm:$0xf]
      %v680 = vld [vmem:[%s673 + $0x18] sm:$0xf]
      %v681 = vld [vmem:[%s673 + $0x1c] sm:$0xf]
      %v682 = vld [vmem:[%s673 + $0x20] sm:$0xf]
      %v683 = vld [vmem:[%s673 + $0x24] sm:$0xf]
      %v684 = vld [vmem:[%s673 + $0x28] sm:$0xf]
      %v685 = vld [vmem:[%s673 + $0x2c] sm:$0xf]
      %v686 = vld [vmem:[%s673 + $0x30] sm:$0xf]
      %v687 = vld [vmem:[%s673 + $0x34] sm:$0xf]
      %v688 = vld [vmem:[%s673 + $0x38] sm:$0xf]
      %v689 = vld [vmem:[%s673 + $0x3c] sm:$0xf]
      %v690 = vld [vmem:[%s673 + $0x40] sm:$0xf]
      %v691 = vld [vmem:[%s673 + $0x44] sm:$0xf]
      %v692 = vld [vmem:[%s673 + $0x48] sm:$0xf]
      %v693 = vld [vmem:[%s673 + $0x4c] sm:$0xf]
      %v696 = vunpack.c.l.s4 1966171168
      %v697 = vunpack.c.0.s8 %v696
      %v698 = vlaneseq
      %v699 = vshrl.u32 %v698, 7
      %v700 = vsub.s32 %v697, %v699
      %v701 = vrot.slane %v672, %v700
      %v702 = vcombine.high %v701, %v701
      %v704 = vunpack.c.l.s4 1966171168
      %v705 = vunpack.c.0.s8 %v704
      %v706 = vlaneseq
      %v707 = vshrl.u32 %v706, 7
      %v708 = vsub.s32 %v705, %v707
      %v709 = vrot.slane %v701, %v708
      %v711 = vunpack.c.l.s4 1966171168
      %v712 = vunpack.c.0.s8 %v711
      %v713 = vlaneseq
      %v714 = vshrl.u32 %v713, 7
      %v715 = vsub.s32 %v712, %v714
      %v716 = vrot.slane %v702, %v715
      %v738 = vunpack.c.l.b16 %v674
      %v739 = vunpack.c.l.b16 %v675
      %v740 = vunpack.c.l.b16 %v676
      %v741 = vunpack.c.l.b16 %v677
      %v742 = vunpack.c.l.b16 %v678
      %v743 = vunpack.c.l.b16 %v679
      %v744 = vunpack.c.l.b16 %v680
      %v745 = vunpack.c.l.b16 %v681
      %v746 = vunpack.c.l.b16 %v682
      %v747 = vunpack.c.l.b16 %v683
      %v748 = vunpack.c.l.b16 %v684
      %v749 = vunpack.c.l.b16 %v685
      %v750 = vunpack.c.l.b16 %v686
      %v751 = vunpack.c.l.b16 %v687
      %v752 = vunpack.c.l.b16 %v688
      %v753 = vunpack.c.l.b16 %v689
      %v754 = vunpack.c.l.b16 %v690
      %v755 = vunpack.c.l.b16 %v691
      %v756 = vunpack.c.l.b16 %v692
      %v757 = vunpack.c.l.b16 %v693
      %v758 = vpack.c.b16 %v739, %v738
      %v759 = vpack.c.b16 %v741, %v740
      %v760 = vpack.c.b16 %v743, %v742
      %v761 = vpack.c.b16 %v745, %v744
      %v762 = vpack.c.b16 %v747, %v746
      %v763 = vpack.c.b16 %v749, %v748
      %v764 = vpack.c.b16 %v751, %v750
      %v765 = vpack.c.b16 %v753, %v752
      %v766 = vpack.c.b16 %v755, %v754
      %v767 = vpack.c.b16 %v757, %v756
      %v779 = vsel %vm349, %v716, 0
      %781 = vmatprep.subr.bf16.mxu0 0
      %782 = vmatpush1.bf16.msra.mxu0 %v758
      %783 = vmatprep.subr.bf16.mxu0 0
      %784 = vmatpush1.bf16.msra.mxu0 %v759
      %785 = vmatprep.subr.bf16.mxu0 0
      %786 = vmatpush1.bf16.msra.mxu0 %v760
      %787 = vmatprep.subr.bf16.mxu0 0
      %788 = vmatpush1.bf16.msra.mxu0 %v761
      %789 = vmatprep.subr.bf16.mxu0 0
      %790 = vmatpush1.bf16.msra.mxu0 %v762
      %791 = vmatprep.subr.bf16.mxu0 0
      %792 = vmatpush1.bf16.msra.mxu0 %v763
      %793 = vmatprep.subr.bf16.mxu0 0
      %794 = vmatpush1.bf16.msra.mxu0 %v764
      %795 = vmatprep.subr.bf16.mxu0 0
      %796 = vmatpush1.bf16.msra.mxu0 %v765
      %797 = vmatprep.subr.bf16.mxu0 0
      %798 = vmatpush1.bf16.msra.mxu0 %v766
      %799 = vmatprep.subr.bf16.mxu0 0
      %800 = vmatpush1.bf16.msra.mxu0 %v767
      %801 = vmatprep.subr.bf16.mxu0 0
      %802 = vmatpush1.bf16.msra.mxu0 0
      %803 = vmatprep.subr.bf16.mxu0 0
      %804 = vmatpush1.bf16.msra.mxu0 0
      %805 = vmatprep.subr.bf16.mxu0 0
      %806 = vmatpush1.bf16.msra.mxu0 0
      %807 = vmatprep.subr.bf16.mxu0 0
      %808 = vmatpush1.bf16.msra.mxu0 0
      %809 = vmatprep.subr.bf16.mxu0 0
      %810 = vmatpush1.bf16.msra.mxu0 0
      %811 = vmatprep.subr.bf16.mxu0 0
      %812 = vmatpush1.bf16.msra.mxu0 0
      %813 = vmatprep.mubr.bf16.mxu0 %v779
      %814 = vmatmul.mubr.bf16.gmra.mrb[0].mxu0 %v709
      %v815 = vpop.f32.mrb[0].mxu0
      %v816 = vadd.f32 0.0, %v815
      %v817 = vpop.f32.mrb[0].mxu0
      %v818 = vpop.f32.mrb[0].mxu0
      %v819 = vpop.f32.mrb[0].mxu0
      %820 = vdwg.mxu0
      %v821 = vadd.f32 %v670, %v816
      %s822 = scalar_lea.vmem %s215, 8
      %v823 = vld [vmem:[%s822] sm:$0x3]
      %s824 = scalar_lea.vmem %s1, 320
      %v825 = vld [vmem:[%s824] sm:$0xf]
      %v826 = vld [vmem:[%s824 + $0x4] sm:$0xf]
      %v827 = vld [vmem:[%s824 + $0x8] sm:$0xf]
      %v828 = vld [vmem:[%s824 + $0xc] sm:$0xf]
      %v829 = vld [vmem:[%s824 + $0x10] sm:$0xf]
      %v830 = vld [vmem:[%s824 + $0x14] sm:$0xf]
      %v831 = vld [vmem:[%s824 + $0x18] sm:$0xf]
      %v832 = vld [vmem:[%s824 + $0x1c] sm:$0xf]
      %v833 = vld [vmem:[%s824 + $0x20] sm:$0xf]
      %v834 = vld [vmem:[%s824 + $0x24] sm:$0xf]
      %v835 = vld [vmem:[%s824 + $0x28] sm:$0xf]
      %v836 = vld [vmem:[%s824 + $0x2c] sm:$0xf]
      %v837 = vld [vmem:[%s824 + $0x30] sm:$0xf]
      %v838 = vld [vmem:[%s824 + $0x34] sm:$0xf]
      %v839 = vld [vmem:[%s824 + $0x38] sm:$0xf]
      %v840 = vld [vmem:[%s824 + $0x3c] sm:$0xf]
      %v841 = vld [vmem:[%s824 + $0x40] sm:$0xf]
      %v842 = vld [vmem:[%s824 + $0x44] sm:$0xf]
      %v843 = vld [vmem:[%s824 + $0x48] sm:$0xf]
      %v844 = vld [vmem:[%s824 + $0x4c] sm:$0xf]
      %v847 = vunpack.c.l.s4 1966171168
      %v848 = vunpack.c.0.s8 %v847
      %v849 = vlaneseq
      %v850 = vshrl.u32 %v849, 7
      %v851 = vsub.s32 %v848, %v850
      %v852 = vrot.slane %v823, %v851
      %v853 = vcombine.high %v852, %v852
      %v855 = vunpack.c.l.s4 1966171168
      %v856 = vunpack.c.0.s8 %v855
      %v857 = vlaneseq
      %v858 = vshrl.u32 %v857, 7
      %v859 = vsub.s32 %v856, %v858
      %v860 = vrot.slane %v852, %v859
      %v862 = vunpack.c.l.s4 1966171168
      %v863 = vunpack.c.0.s8 %v862
      %v864 = vlaneseq
      %v865 = vshrl.u32 %v864, 7
      %v866 = vsub.s32 %v863, %v865
      %v867 = vrot.slane %v853, %v866
      %v889 = vunpack.c.l.b16 %v825
      %v890 = vunpack.c.l.b16 %v826
      %v891 = vunpack.c.l.b16 %v827
      %v892 = vunpack.c.l.b16 %v828
      %v893 = vunpack.c.l.b16 %v829
      %v894 = vunpack.c.l.b16 %v830
      %v895 = vunpack.c.l.b16 %v831
      %v896 = vunpack.c.l.b16 %v832
      %v897 = vunpack.c.l.b16 %v833
      %v898 = vunpack.c.l.b16 %v834
      %v899 = vunpack.c.l.b16 %v835
      %v900 = vunpack.c.l.b16 %v836
      %v901 = vunpack.c.l.b16 %v837
      %v902 = vunpack.c.l.b16 %v838
      %v903 = vunpack.c.l.b16 %v839
      %v904 = vunpack.c.l.b16 %v840
      %v905 = vunpack.c.l.b16 %v841
      %v906 = vunpack.c.l.b16 %v842
      %v907 = vunpack.c.l.b16 %v843
      %v908 = vunpack.c.l.b16 %v844
      %v909 = vpack.c.b16 %v890, %v889
      %v910 = vpack.c.b16 %v892, %v891
      %v911 = vpack.c.b16 %v894, %v893
      %v912 = vpack.c.b16 %v896, %v895
      %v913 = vpack.c.b16 %v898, %v897
      %v914 = vpack.c.b16 %v900, %v899
      %v915 = vpack.c.b16 %v902, %v901
      %v916 = vpack.c.b16 %v904, %v903
      %v917 = vpack.c.b16 %v906, %v905
      %v918 = vpack.c.b16 %v908, %v907
      %v930 = vsel %vm349, %v867, 0
      %932 = vmatprep.subr.bf16.mxu0 0
      %933 = vmatpush1.bf16.msra.mxu0 %v909
      %934 = vmatprep.subr.bf16.mxu0 0
      %935 = vmatpush1.bf16.msra.mxu0 %v910
      %936 = vmatprep.subr.bf16.mxu0 0
      %937 = vmatpush1.bf16.msra.mxu0 %v911
      %938 = vmatprep.subr.bf16.mxu0 0
      %939 = vmatpush1.bf16.msra.mxu0 %v912
      %940 = vmatprep.subr.bf16.mxu0 0
      %941 = vmatpush1.bf16.msra.mxu0 %v913
      %942 = vmatprep.subr.bf16.mxu0 0
      %943 = vmatpush1.bf16.msra.mxu0 %v914
      %944 = vmatprep.subr.bf16.mxu0 0
      %945 = vmatpush1.bf16.msra.mxu0 %v915
      %946 = vmatprep.subr.bf16.mxu0 0
      %947 = vmatpush1.bf16.msra.mxu0 %v916
      %948 = vmatprep.subr.bf16.mxu0 0
      %949 = vmatpush1.bf16.msra.mxu0 %v917
      %950 = vmatprep.subr.bf16.mxu0 0
      %951 = vmatpush1.bf16.msra.mxu0 %v918
      %952 = vmatprep.subr.bf16.mxu0 0
      %953 = vmatpush1.bf16.msra.mxu0 0
      %954 = vmatprep.subr.bf16.mxu0 0
      %955 = vmatpush1.bf16.msra.mxu0 0
      %956 = vmatprep.subr.bf16.mxu0 0
      %957 = vmatpush1.bf16.msra.mxu0 0
      %958 = vmatprep.subr.bf16.mxu0 0
      %959 = vmatpush1.bf16.msra.mxu0 0
      %960 = vmatprep.subr.bf16.mxu0 0
      %961 = vmatpush1.bf16.msra.mxu0 0
      %962 = vmatprep.subr.bf16.mxu0 0
      %963 = vmatpush1.bf16.msra.mxu0 0
      %964 = vmatprep.mubr.bf16.mxu0 %v930
      %965 = vmatmul.mubr.bf16.gmra.mrb[0].mxu0 %v860
      %v966 = vpop.f32.mrb[0].mxu0
      %v967 = vadd.f32 0.0, %v966
      %v968 = vpop.f32.mrb[0].mxu0
      %v969 = vpop.f32.mrb[0].mxu0
      %v970 = vpop.f32.mrb[0].mxu0
      %971 = vdwg.mxu0
      %v972 = vadd.f32 %v821, %v967
      %v973 = vld [vmem:[%s2] sm:$0x1]
      %v975 = vlaneseq
      %v976 = vshrl.u32 %v975, 7
      %v977 = vsub.s32 0, %v976
      %v978 = vrot.slane %v973, %v977
      %v980 = vadd.f32 %v972, %v978
      %v981 = vmul.f32 %v980, %v980
      %v982 = vld [vmem:[%s3] sm:$0xff]
      %v983 = vld [vmem:[%s3 + $0x8] sm:$0xff]
      %v984 = vld [vmem:[%s3 + $0x10] sm:$0xff]
      %v985 = vld [vmem:[%s3 + $0x18] sm:$0xff]
      %v986 = vld [vmem:[%s4] sm:$0x1]
      %v988 = vlaneseq
      %v989 = vshrl.u32 %v988, 7
      %v990 = vsub.s32 0, %v989
      %v991 = vrot.slane %v986, %v990
      %v994 = vsel %vm349, %v981, 0
      %996 = vmatprep.subr.mxu0 0.0
      %997 = vmatpush1.msra.mxu0 %v982
      %998 = vmatprep.subr.mxu0 0.0
      %999 = vmatpush1.msra.mxu0 %v983
      %1000 = vmatprep.subr.mxu0 0.0
      %1001 = vmatpush1.msra.mxu0 %v984
      %1002 = vmatprep.subr.mxu0 0.0
      %1003 = vmatpush1.msra.mxu0 %v985
      %1004 = vmatprep.subr.mxu0 0.0
      %1005 = vmatpush1.msra.mxu0 0.0
      %1006 = vmatprep.subr.mxu0 0.0
      %1007 = vmatpush1.msra.mxu0 0.0
      %1008 = vmatprep.subr.mxu0 0.0
      %1009 = vmatpush1.msra.mxu0 0.0
      %1010 = vmatprep.subr.mxu0 0.0
      %1011 = vmatpush1.msra.mxu0 0.0
      %1012 = vmatprep.subr.mxu0 0.0
      %1013 = vmatpush1.msra.mxu0 0.0
      %1014 = vmatprep.subr.mxu0 0.0
      %1015 = vmatpush1.msra.mxu0 0.0
      %1016 = vmatprep.subr.mxu0 0.0
      %1017 = vmatpush1.msra.mxu0 0.0
      %1018 = vmatprep.subr.mxu0 0.0
      %1019 = vmatpush1.msra.mxu0 0.0
      %1020 = vmatprep.subr.mxu0 0.0
      %1021 = vmatpush1.msra.mxu0 0.0
      %1022 = vmatprep.subr.mxu0 0.0
      %1023 = vmatpush1.msra.mxu0 0.0
      %1024 = vmatprep.subr.mxu0 0.0
      %1025 = vmatpush1.msra.mxu0 0.0
      %1026 = vmatprep.subr.mxu0 0.0
      %1027 = vmatpush1.msra.mxu0 0.0
      %1028 = vmatprep.subr.mxu0 0.0
      %1029 = vmatpush1.msra.mxu0 0.0
      %1030 = vmatprep.subr.mxu0 0.0
      %1031 = vmatpush1.msra.mxu0 0.0
      %1032 = vmatprep.subr.mxu0 0.0
      %1033 = vmatpush1.msra.mxu0 0.0
      %1034 = vmatprep.subr.mxu0 0.0
      %1035 = vmatpush1.msra.mxu0 0.0
      %1036 = vmatprep.subr.mxu0 0.0
      %1037 = vmatpush1.msra.mxu0 0.0
      %1038 = vmatprep.subr.mxu0 0.0
      %1039 = vmatpush1.msra.mxu0 0.0
      %1040 = vmatprep.subr.mxu0 0.0
      %1041 = vmatpush1.msra.mxu0 0.0
      %1042 = vmatprep.subr.mxu0 0.0
      %1043 = vmatpush1.msra.mxu0 0.0
      %1044 = vmatprep.subr.mxu0 0.0
      %1045 = vmatpush1.msra.mxu0 0.0
      %1046 = vmatprep.subr.mxu0 0.0
      %1047 = vmatpush1.msra.mxu0 0.0
      %1048 = vmatprep.subr.mxu0 0.0
      %1049 = vmatpush1.msra.mxu0 0.0
      %1050 = vmatprep.subr.mxu0 0.0
      %1051 = vmatpush1.msra.mxu0 0.0
      %1052 = vmatprep.subr.mxu0 0.0
      %1053 = vmatpush1.msra.mxu0 0.0
      %1054 = vmatprep.subr.mxu0 0.0
      %1055 = vmatpush1.msra.mxu0 0.0
      %1056 = vmatprep.subr.mxu0 0.0
      %1057 = vmatpush1.msra.mxu0 0.0
      %1058 = vmatprep.subr.mxu0 0.0
      %1059 = vmatpush1.msra.mxu0 0.0
      %1060 = vmatprep.mubr.f32.mxu0 0.0
      %1061 = vmatmul.mubr.f32.gmra.mrb[0].mxu0 %v994
      %v1062 = vpop.f32.mrb[0].mxu0
      %v1063 = vadd.f32 %v991, %v1062
      %v1064 = vpop.f32.mrb[0].mxu0
      %1065 = vdwg.mxu0
      %v1066 = vrsqrt.pop %v1063
      %v1067 = vmul.f32 %v980, %v1066
      %v1068 = vpack.c.bf16 %v1067, %v1067
      %vm1069 = vcmask 253952
      %1070 = vst.msk [vmem:[%s219] sm:$0x1] %vm1069, %v1068
      %v1071 = vld [vmem:[%s520] sm:$0x3]
      %v1072 = vld [vmem:[%s1] sm:$0xf]
      %v1073 = vld [vmem:[%s1 + $0x4] sm:$0xf]
      %v1074 = vld [vmem:[%s1 + $0x8] sm:$0xf]
      %v1075 = vld [vmem:[%s1 + $0xc] sm:$0xf]
      %v1076 = vld [vmem:[%s1 + $0x10] sm:$0xf]
      %v1077 = vld [vmem:[%s1 + $0x14] sm:$0xf]
      %v1078 = vld [vmem:[%s1 + $0x18] sm:$0xf]
      %v1079 = vld [vmem:[%s1 + $0x1c] sm:$0xf]
      %v1080 = vld [vmem:[%s1 + $0x20] sm:$0xf]
      %v1081 = vld [vmem:[%s1 + $0x24] sm:$0xf]
      %v1082 = vld [vmem:[%s1 + $0x28] sm:$0xf]
      %v1083 = vld [vmem:[%s1 + $0x2c] sm:$0xf]
      %v1084 = vld [vmem:[%s1 + $0x30] sm:$0xf]
      %v1085 = vld [vmem:[%s1 + $0x34] sm:$0xf]
      %v1086 = vld [vmem:[%s1 + $0x38] sm:$0xf]
      %v1087 = vld [vmem:[%s1 + $0x3c] sm:$0xf]
      %v1088 = vld [vmem:[%s1 + $0x40] sm:$0xf]
      %v1089 = vld [vmem:[%s1 + $0x44] sm:$0xf]
      %v1090 = vld [vmem:[%s1 + $0x48] sm:$0xf]
      %v1091 = vld [vmem:[%s1 + $0x4c] sm:$0xf]
      %v1092 = vld [vmem:[%s671] sm:$0x3]
      %v1093 = vld [vmem:[%s244] sm:$0xf]
      %v1094 = vld [vmem:[%s244 + $0x4] sm:$0xf]
      %v1095 = vld [vmem:[%s244 + $0x8] sm:$0xf]
      %v1096 = vld [vmem:[%s244 + $0xc] sm:$0xf]
      %v1097 = vld [vmem:[%s244 + $0x10] sm:$0xf]
      %v1098 = vld [vmem:[%s244 + $0x14] sm:$0xf]
      %v1099 = vld [vmem:[%s244 + $0x18] sm:$0xf]
      %v1100 = vld [vmem:[%s244 + $0x1c] sm:$0xf]
      %v1101 = vld [vmem:[%s244 + $0x20] sm:$0xf]
      %v1102 = vld [vmem:[%s244 + $0x24] sm:$0xf]
      %v1103 = vld [vmem:[%s244 + $0x28] sm:$0xf]
      %v1104 = vld [vmem:[%s244 + $0x2c] sm:$0xf]
      %v1105 = vld [vmem:[%s244 + $0x30] sm:$0xf]
      %v1106 = vld [vmem:[%s244 + $0x34] sm:$0xf]
      %v1107 = vld [vmem:[%s244 + $0x38] sm:$0xf]
      %v1108 = vld [vmem:[%s244 + $0x3c] sm:$0xf]
      %v1109 = vld [vmem:[%s244 + $0x40] sm:$0xf]
      %v1110 = vld [vmem:[%s244 + $0x44] sm:$0xf]
      %v1111 = vld [vmem:[%s244 + $0x48] sm:$0xf]
      %v1112 = vld [vmem:[%s244 + $0x4c] sm:$0xf]
      %v1115 = vunpack.c.l.s4 1966171168
      %v1116 = vunpack.c.0.s8 %v1115
      %v1117 = vlaneseq
      %v1118 = vshrl.u32 %v1117, 7
      %v1119 = vsub.s32 %v1116, %v1118
      %v1120 = vrot.slane %v1092, %v1119
      %v1121 = vcombine.high %v1120, %v1120
      %v1123 = vunpack.c.l.s4 1966171168
      %v1124 = vunpack.c.0.s8 %v1123
      %v1125 = vlaneseq
      %v1126 = vshrl.u32 %v1125, 7
      %v1127 = vsub.s32 %v1124, %v1126
      %v1128 = vrot.slane %v1120, %v1127
      %v1130 = vunpack.c.l.s4 1966171168
      %v1131 = vunpack.c.0.s8 %v1130
      %v1132 = vlaneseq
      %v1133 = vshrl.u32 %v1132, 7
      %v1134 = vsub.s32 %v1131, %v1133
      %v1135 = vrot.slane %v1121, %v1134
      %v1157 = vunpack.c.l.b16 %v1093
      %v1158 = vunpack.c.l.b16 %v1094
      %v1159 = vunpack.c.l.b16 %v1095
      %v1160 = vunpack.c.l.b16 %v1096
      %v1161 = vunpack.c.l.b16 %v1097
      %v1162 = vunpack.c.l.b16 %v1098
      %v1163 = vunpack.c.l.b16 %v1099
      %v1164 = vunpack.c.l.b16 %v1100
      %v1165 = vunpack.c.l.b16 %v1101
      %v1166 = vunpack.c.l.b16 %v1102
      %v1167 = vunpack.c.l.b16 %v1103
      %v1168 = vunpack.c.l.b16 %v1104
      %v1169 = vunpack.c.l.b16 %v1105
      %v1170 = vunpack.c.l.b16 %v1106
      %v1171 = vunpack.c.l.b16 %v1107
      %v1172 = vunpack.c.l.b16 %v1108
      %v1173 = vunpack.c.l.b16 %v1109
      %v1174 = vunpack.c.l.b16 %v1110
      %v1175 = vunpack.c.l.b16 %v1111
      %v1176 = vunpack.c.l.b16 %v1112
      %v1177 = vpack.c.b16 %v1158, %v1157
      %v1178 = vpack.c.b16 %v1160, %v1159
      %v1179 = vpack.c.b16 %v1162, %v1161
      %v1180 = vpack.c.b16 %v1164, %v1163
      %v1181 = vpack.c.b16 %v1166, %v1165
      %v1182 = vpack.c.b16 %v1168, %v1167
      %v1183 = vpack.c.b16 %v1170, %v1169
      %v1184 = vpack.c.b16 %v1172, %v1171
      %v1185 = vpack.c.b16 %v1174, %v1173
      %v1186 = vpack.c.b16 %v1176, %v1175
      %v1198 = vsel %vm349, %v1135, 0
      %1200 = vmatprep.subr.bf16.mxu0 0
      %1201 = vmatpush1.bf16.msra.mxu0 %v1177
      %1202 = vmatprep.subr.bf16.mxu0 0
      %1203 = vmatpush1.bf16.msra.mxu0 %v1178
      %1204 = vmatprep.subr.bf16.mxu0 0
      %1205 = vmatpush1.bf16.msra.mxu0 %v1179
      %1206 = vmatprep.subr.bf16.mxu0 0
      %1207 = vmatpush1.bf16.msra.mxu0 %v1180
      %1208 = vmatprep.subr.bf16.mxu0 0
      %1209 = vmatpush1.bf16.msra.mxu0 %v1181
      %1210 = vmatprep.subr.bf16.mxu0 0
      %1211 = vmatpush1.bf16.msra.mxu0 %v1182
      %1212 = vmatprep.subr.bf16.mxu0 0
      %1213 = vmatpush1.bf16.msra.mxu0 %v1183
      %1214 = vmatprep.subr.bf16.mxu0 0
      %1215 = vmatpush1.bf16.msra.mxu0 %v1184
      %1216 = vmatprep.subr.bf16.mxu0 0
      %1217 = vmatpush1.bf16.msra.mxu0 %v1185
      %1218 = vmatprep.subr.bf16.mxu0 0
      %1219 = vmatpush1.bf16.msra.mxu0 %v1186
      %1220 = vmatprep.subr.bf16.mxu0 0
      %1221 = vmatpush1.bf16.msra.mxu0 0
      %1222 = vmatprep.subr.bf16.mxu0 0
      %1223 = vmatpush1.bf16.msra.mxu0 0
      %1224 = vmatprep.subr.bf16.mxu0 0
      %1225 = vmatpush1.bf16.msra.mxu0 0
      %1226 = vmatprep.subr.bf16.mxu0 0
      %1227 = vmatpush1.bf16.msra.mxu0 0
      %1228 = vmatprep.subr.bf16.mxu0 0
      %1229 = vmatpush1.bf16.msra.mxu0 0
      %1230 = vmatprep.subr.bf16.mxu0 0
      %1231 = vmatpush1.bf16.msra.mxu0 0
      %1232 = vmatprep.mubr.bf16.mxu0 %v1198
      %1233 = vmatmul.mubr.bf16.gmra.mrb[0].mxu0 %v1128
      %v1234 = vpop.f32.mrb[0].mxu0
      %v1235 = vadd.f32 0.0, %v1234
      %v1236 = vpop.f32.mrb[0].mxu0
      %v1237 = vpop.f32.mrb[0].mxu0
      %v1238 = vpop.f32.mrb[0].mxu0
      %1239 = vdwg.mxu0
      %v1242 = vunpack.c.l.s4 1966171168
      %v1243 = vunpack.c.0.s8 %v1242
      %v1244 = vlaneseq
      %v1245 = vshrl.u32 %v1244, 7
      %v1246 = vsub.s32 %v1243, %v1245
      %v1247 = vrot.slane %v1071, %v1246
      %v1248 = vcombine.high %v1247, %v1247
      %v1250 = vunpack.c.l.s4 1966171168
      %v1251 = vunpack.c.0.s8 %v1250
      %v1252 = vlaneseq
      %v1253 = vshrl.u32 %v1252, 7
      %v1254 = vsub.s32 %v1251, %v1253
      %v1255 = vrot.slane %v1247, %v1254
      %v1257 = vunpack.c.l.s4 1966171168
      %v1258 = vunpack.c.0.s8 %v1257
      %v1259 = vlaneseq
      %v1260 = vshrl.u32 %v1259, 7
      %v1261 = vsub.s32 %v1258, %v1260
      %v1262 = vrot.slane %v1248, %v1261
      %v1284 = vunpack.c.l.b16 %v1072
      %v1285 = vunpack.c.l.b16 %v1073
      %v1286 = vunpack.c.l.b16 %v1074
      %v1287 = vunpack.c.l.b16 %v1075
      %v1288 = vunpack.c.l.b16 %v1076
      %v1289 = vunpack.c.l.b16 %v1077
      %v1290 = vunpack.c.l.b16 %v1078
      %v1291 = vunpack.c.l.b16 %v1079
      %v1292 = vunpack.c.l.b16 %v1080
      %v1293 = vunpack.c.l.b16 %v1081
      %v1294 = vunpack.c.l.b16 %v1082
      %v1295 = vunpack.c.l.b16 %v1083
      %v1296 = vunpack.c.l.b16 %v1084
      %v1297 = vunpack.c.l.b16 %v1085
      %v1298 = vunpack.c.l.b16 %v1086
      %v1299 = vunpack.c.l.b16 %v1087
      %v1300 = vunpack.c.l.b16 %v1088
      %v1301 = vunpack.c.l.b16 %v1089
      %v1302 = vunpack.c.l.b16 %v1090
      %v1303 = vunpack.c.l.b16 %v1091
      %v1304 = vpack.c.b16 %v1285, %v1284
      %v1305 = vpack.c.b16 %v1287, %v1286
      %v1306 = vpack.c.b16 %v1289, %v1288
      %v1307 = vpack.c.b16 %v1291, %v1290
      %v1308 = vpack.c.b16 %v1293, %v1292
      %v1309 = vpack.c.b16 %v1295, %v1294
      %v1310 = vpack.c.b16 %v1297, %v1296
      %v1311 = vpack.c.b16 %v1299, %v1298
      %v1312 = vpack.c.b16 %v1301, %v1300
      %v1313 = vpack.c.b16 %v1303, %v1302
      %v1325 = vsel %vm349, %v1262, 0
      %1327 = vmatprep.subr.bf16.mxu0 0
      %1328 = vmatpush1.bf16.msra.mxu0 %v1304
      %1329 = vmatprep.subr.bf16.mxu0 0
      %1330 = vmatpush1.bf16.msra.mxu0 %v1305
      %1331 = vmatprep.subr.bf16.mxu0 0
      %1332 = vmatpush1.bf16.msra.mxu0 %v1306
      %1333 = vmatprep.subr.bf16.mxu0 0
      %1334 = vmatpush1.bf16.msra.mxu0 %v1307
      %1335 = vmatprep.subr.bf16.mxu0 0
      %1336 = vmatpush1.bf16.msra.mxu0 %v1308
      %1337 = vmatprep.subr.bf16.mxu0 0
      %1338 = vmatpush1.bf16.msra.mxu0 %v1309
      %1339 = vmatprep.subr.bf16.mxu0 0
      %1340 = vmatpush1.bf16.msra.mxu0 %v1310
      %1341 = vmatprep.subr.bf16.mxu0 0
      %1342 = vmatpush1.bf16.msra.mxu0 %v1311
      %1343 = vmatprep.subr.bf16.mxu0 0
      %1344 = vmatpush1.bf16.msra.mxu0 %v1312
      %1345 = vmatprep.subr.bf16.mxu0 0
      %1346 = vmatpush1.bf16.msra.mxu0 %v1313
      %1347 = vmatprep.subr.bf16.mxu0 0
      %1348 = vmatpush1.bf16.msra.mxu0 0
      %1349 = vmatprep.subr.bf16.mxu0 0
      %1350 = vmatpush1.bf16.msra.mxu0 0
      %1351 = vmatprep.subr.bf16.mxu0 0
      %1352 = vmatpush1.bf16.msra.mxu0 0
      %1353 = vmatprep.subr.bf16.mxu0 0
      %1354 = vmatpush1.bf16.msra.mxu0 0
      %1355 = vmatprep.subr.bf16.mxu0 0
      %1356 = vmatpush1.bf16.msra.mxu0 0
      %1357 = vmatprep.subr.bf16.mxu0 0
      %1358 = vmatpush1.bf16.msra.mxu0 0
      %1359 = vmatprep.mubr.bf16.mxu0 %v1325
      %1360 = vmatmul.mubr.bf16.gmra.mrb[0].mxu0 %v1255
      %v1361 = vpop.f32.mrb[0].mxu0
      %v1362 = vadd.f32 %v1235, %v1361
      %v1363 = vpop.f32.mrb[0].mxu0
      %v1364 = vpop.f32.mrb[0].mxu0
      %v1365 = vpop.f32.mrb[0].mxu0
      %1366 = vdwg.mxu0
      %v1367 = vld [vmem:[%s822] sm:$0x3]
      %v1368 = vld [vmem:[%s522] sm:$0xf]
      %v1369 = vld [vmem:[%s522 + $0x4] sm:$0xf]
      %v1370 = vld [vmem:[%s522 + $0x8] sm:$0xf]
      %v1371 = vld [vmem:[%s522 + $0xc] sm:$0xf]
      %v1372 = vld [vmem:[%s522 + $0x10] sm:$0xf]
      %v1373 = vld [vmem:[%s522 + $0x14] sm:$0xf]
      %v1374 = vld [vmem:[%s522 + $0x18] sm:$0xf]
      %v1375 = vld [vmem:[%s522 + $0x1c] sm:$0xf]
      %v1376 = vld [vmem:[%s522 + $0x20] sm:$0xf]
      %v1377 = vld [vmem:[%s522 + $0x24] sm:$0xf]
      %v1378 = vld [vmem:[%s522 + $0x28] sm:$0xf]
      %v1379 = vld [vmem:[%s522 + $0x2c] sm:$0xf]
      %v1380 = vld [vmem:[%s522 + $0x30] sm:$0xf]
      %v1381 = vld [vmem:[%s522 + $0x34] sm:$0xf]
      %v1382 = vld [vmem:[%s522 + $0x38] sm:$0xf]
      %v1383 = vld [vmem:[%s522 + $0x3c] sm:$0xf]
      %v1384 = vld [vmem:[%s522 + $0x40] sm:$0xf]
      %v1385 = vld [vmem:[%s522 + $0x44] sm:$0xf]
      %v1386 = vld [vmem:[%s522 + $0x48] sm:$0xf]
      %v1387 = vld [vmem:[%s522 + $0x4c] sm:$0xf]
      %v1390 = vunpack.c.l.s4 1966171168
      %v1391 = vunpack.c.0.s8 %v1390
      %v1392 = vlaneseq
      %v1393 = vshrl.u32 %v1392, 7
      %v1394 = vsub.s32 %v1391, %v1393
      %v1395 = vrot.slane %v1367, %v1394
      %v1396 = vcombine.high %v1395, %v1395
      %v1398 = vunpack.c.l.s4 1966171168
      %v1399 = vunpack.c.0.s8 %v1398
      %v1400 = vlaneseq
      %v1401 = vshrl.u32 %v1400, 7
      %v1402 = vsub.s32 %v1399, %v1401
      %v1403 = vrot.slane %v1395, %v1402
      %v1405 = vunpack.c.l.s4 1966171168
      %v1406 = vunpack.c.0.s8 %v1405
      %v1407 = vlaneseq
      %v1408 = vshrl.u32 %v1407, 7
      %v1409 = vsub.s32 %v1406, %v1408
      %v1410 = vrot.slane %v1396, %v1409
      %v1432 = vunpack.c.l.b16 %v1368
      %v1433 = vunpack.c.l.b16 %v1369
      %v1434 = vunpack.c.l.b16 %v1370
      %v1435 = vunpack.c.l.b16 %v1371
      %v1436 = vunpack.c.l.b16 %v1372
      %v1437 = vunpack.c.l.b16 %v1373
      %v1438 = vunpack.c.l.b16 %v1374
      %v1439 = vunpack.c.l.b16 %v1375
      %v1440 = vunpack.c.l.b16 %v1376
      %v1441 = vunpack.c.l.b16 %v1377
      %v1442 = vunpack.c.l.b16 %v1378
      %v1443 = vunpack.c.l.b16 %v1379
      %v1444 = vunpack.c.l.b16 %v1380
      %v1445 = vunpack.c.l.b16 %v1381
      %v1446 = vunpack.c.l.b16 %v1382
      %v1447 = vunpack.c.l.b16 %v1383
      %v1448 = vunpack.c.l.b16 %v1384
      %v1449 = vunpack.c.l.b16 %v1385
      %v1450 = vunpack.c.l.b16 %v1386
      %v1451 = vunpack.c.l.b16 %v1387
      %v1452 = vpack.c.b16 %v1433, %v1432
      %v1453 = vpack.c.b16 %v1435, %v1434
      %v1454 = vpack.c.b16 %v1437, %v1436
      %v1455 = vpack.c.b16 %v1439, %v1438
      %v1456 = vpack.c.b16 %v1441, %v1440
      %v1457 = vpack.c.b16 %v1443, %v1442
      %v1458 = vpack.c.b16 %v1445, %v1444
      %v1459 = vpack.c.b16 %v1447, %v1446
      %v1460 = vpack.c.b16 %v1449, %v1448
      %v1461 = vpack.c.b16 %v1451, %v1450
      %v1473 = vsel %vm349, %v1410, 0
      %1475 = vmatprep.subr.bf16.mxu0 0
      %1476 = vmatpush1.bf16.msra.mxu0 %v1452
      %1477 = vmatprep.subr.bf16.mxu0 0
      %1478 = vmatpush1.bf16.msra.mxu0 %v1453
      %1479 = vmatprep.subr.bf16.mxu0 0
      %1480 = vmatpush1.bf16.msra.mxu0 %v1454
      %1481 = vmatprep.subr.bf16.mxu0 0
      %1482 = vmatpush1.bf16.msra.mxu0 %v1455
      %1483 = vmatprep.subr.bf16.mxu0 0
      %1484 = vmatpush1.bf16.msra.mxu0 %v1456
      %1485 = vmatprep.subr.bf16.mxu0 0
      %1486 = vmatpush1.bf16.msra.mxu0 %v1457
      %1487 = vmatprep.subr.bf16.mxu0 0
      %1488 = vmatpush1.bf16.msra.mxu0 %v1458
      %1489 = vmatprep.subr.bf16.mxu0 0
      %1490 = vmatpush1.bf16.msra.mxu0 %v1459
      %1491 = vmatprep.subr.bf16.mxu0 0
      %1492 = vmatpush1.bf16.msra.mxu0 %v1460
      %1493 = vmatprep.subr.bf16.mxu0 0
      %1494 = vmatpush1.bf16.msra.mxu0 %v1461
      %1495 = vmatprep.subr.bf16.mxu0 0
      %1496 = vmatpush1.bf16.msra.mxu0 0
      %1497 = vmatprep.subr.bf16.mxu0 0
      %1498 = vmatpush1.bf16.msra.mxu0 0
      %1499 = vmatprep.subr.bf16.mxu0 0
      %1500 = vmatpush1.bf16.msra.mxu0 0
      %1501 = vmatprep.subr.bf16.mxu0 0
      %1502 = vmatpush1.bf16.msra.mxu0 0
      %1503 = vmatprep.subr.bf16.mxu0 0
      %1504 = vmatpush1.bf16.msra.mxu0 0
      %1505 = vmatprep.subr.bf16.mxu0 0
      %1506 = vmatpush1.bf16.msra.mxu0 0
      %1507 = vmatprep.mubr.bf16.mxu0 %v1473
      %1508 = vmatmul.mubr.bf16.gmra.mrb[0].mxu0 %v1403
      %v1509 = vpop.f32.mrb[0].mxu0
      %v1510 = vadd.f32 0.0, %v1509
      %v1511 = vpop.f32.mrb[0].mxu0
      %v1512 = vpop.f32.mrb[0].mxu0
      %v1513 = vpop.f32.mrb[0].mxu0
      %1514 = vdwg.mxu0
      %v1515 = vadd.f32 %v1362, %v1510
      %s1516 = scalar_lea.vmem %s215, 10
      %v1517 = vld [vmem:[%s1516] sm:$0x3]
      %v1518 = vld [vmem:[%s673] sm:$0xf]
      %v1519 = vld [vmem:[%s673 + $0x4] sm:$0xf]
      %v1520 = vld [vmem:[%s673 + $0x8] sm:$0xf]
      %v1521 = vld [vmem:[%s673 + $0xc] sm:$0xf]
      %v1522 = vld [vmem:[%s673 + $0x10] sm:$0xf]
      %v1523 = vld [vmem:[%s673 + $0x14] sm:$0xf]
      %v1524 = vld [vmem:[%s673 + $0x18] sm:$0xf]
      %v1525 = vld [vmem:[%s673 + $0x1c] sm:$0xf]
      %v1526 = vld [vmem:[%s673 + $0x20] sm:$0xf]
      %v1527 = vld [vmem:[%s673 + $0x24] sm:$0xf]
      %v1528 = vld [vmem:[%s673 + $0x28] sm:$0xf]
      %v1529 = vld [vmem:[%s673 + $0x2c] sm:$0xf]
      %v1530 = vld [vmem:[%s673 + $0x30] sm:$0xf]
      %v1531 = vld [vmem:[%s673 + $0x34] sm:$0xf]
      %v1532 = vld [vmem:[%s673 + $0x38] sm:$0xf]
      %v1533 = vld [vmem:[%s673 + $0x3c] sm:$0xf]
      %v1534 = vld [vmem:[%s673 + $0x40] sm:$0xf]
      %v1535 = vld [vmem:[%s673 + $0x44] sm:$0xf]
      %v1536 = vld [vmem:[%s673 + $0x48] sm:$0xf]
      %v1537 = vld [vmem:[%s673 + $0x4c] sm:$0xf]
      %v1540 = vunpack.c.l.s4 1966171168
      %v1541 = vunpack.c.0.s8 %v1540
      %v1542 = vlaneseq
      %v1543 = vshrl.u32 %v1542, 7
      %v1544 = vsub.s32 %v1541, %v1543
      %v1545 = vrot.slane %v1517, %v1544
      %v1546 = vcombine.high %v1545, %v1545
      %v1548 = vunpack.c.l.s4 1966171168
      %v1549 = vunpack.c.0.s8 %v1548
      %v1550 = vlaneseq
      %v1551 = vshrl.u32 %v1550, 7
      %v1552 = vsub.s32 %v1549, %v1551
      %v1553 = vrot.slane %v1545, %v1552
      %v1555 = vunpack.c.l.s4 1966171168
      %v1556 = vunpack.c.0.s8 %v1555
      %v1557 = vlaneseq
      %v1558 = vshrl.u32 %v1557, 7
      %v1559 = vsub.s32 %v1556, %v1558
      %v1560 = vrot.slane %v1546, %v1559
      %v1582 = vunpack.c.l.b16 %v1518
      %v1583 = vunpack.c.l.b16 %v1519
      %v1584 = vunpack.c.l.b16 %v1520
      %v1585 = vunpack.c.l.b16 %v1521
      %v1586 = vunpack.c.l.b16 %v1522
      %v1587 = vunpack.c.l.b16 %v1523
      %v1588 = vunpack.c.l.b16 %v1524
      %v1589 = vunpack.c.l.b16 %v1525
      %v1590 = vunpack.c.l.b16 %v1526
      %v1591 = vunpack.c.l.b16 %v1527
      %v1592 = vunpack.c.l.b16 %v1528
      %v1593 = vunpack.c.l.b16 %v1529
      %v1594 = vunpack.c.l.b16 %v1530
      %v1595 = vunpack.c.l.b16 %v1531
      %v1596 = vunpack.c.l.b16 %v1532
      %v1597 = vunpack.c.l.b16 %v1533
      %v1598 = vunpack.c.l.b16 %v1534
      %v1599 = vunpack.c.l.b16 %v1535
      %v1600 = vunpack.c.l.b16 %v1536
      %v1601 = vunpack.c.l.b16 %v1537
      %v1602 = vpack.c.b16 %v1583, %v1582
      %v1603 = vpack.c.b16 %v1585, %v1584
      %v1604 = vpack.c.b16 %v1587, %v1586
      %v1605 = vpack.c.b16 %v1589, %v1588
      %v1606 = vpack.c.b16 %v1591, %v1590
      %v1607 = vpack.c.b16 %v1593, %v1592
      %v1608 = vpack.c.b16 %v1595, %v1594
      %v1609 = vpack.c.b16 %v1597, %v1596
      %v1610 = vpack.c.b16 %v1599, %v1598
      %v1611 = vpack.c.b16 %v1601, %v1600
      %v1623 = vsel %vm349, %v1560, 0
      %1625 = vmatprep.subr.bf16.mxu0 0
      %1626 = vmatpush1.bf16.msra.mxu0 %v1602
      %1627 = vmatprep.subr.bf16.mxu0 0
      %1628 = vmatpush1.bf16.msra.mxu0 %v1603
      %1629 = vmatprep.subr.bf16.mxu0 0
      %1630 = vmatpush1.bf16.msra.mxu0 %v1604
      %1631 = vmatprep.subr.bf16.mxu0 0
      %1632 = vmatpush1.bf16.msra.mxu0 %v1605
      %1633 = vmatprep.subr.bf16.mxu0 0
      %1634 = vmatpush1.bf16.msra.mxu0 %v1606
      %1635 = vmatprep.subr.bf16.mxu0 0
      %1636 = vmatpush1.bf16.msra.mxu0 %v1607
      %1637 = vmatprep.subr.bf16.mxu0 0
      %1638 = vmatpush1.bf16.msra.mxu0 %v1608
      %1639 = vmatprep.subr.bf16.mxu0 0
      %1640 = vmatpush1.bf16.msra.mxu0 %v1609
      %1641 = vmatprep.subr.bf16.mxu0 0
      %1642 = vmatpush1.bf16.msra.mxu0 %v1610
      %1643 = vmatprep.subr.bf16.mxu0 0
      %1644 = vmatpush1.bf16.msra.mxu0 %v1611
      %1645 = vmatprep.subr.bf16.mxu0 0
      %1646 = vmatpush1.bf16.msra.mxu0 0
      %1647 = vmatprep.subr.bf16.mxu0 0
      %1648 = vmatpush1.bf16.msra.mxu0 0
      %1649 = vmatprep.subr.bf16.mxu0 0
      %1650 = vmatpush1.bf16.msra.mxu0 0
      %1651 = vmatprep.subr.bf16.mxu0 0
      %1652 = vmatpush1.bf16.msra.mxu0 0
      %1653 = vmatprep.subr.bf16.mxu0 0
      %1654 = vmatpush1.bf16.msra.mxu0 0
      %1655 = vmatprep.subr.bf16.mxu0 0
      %1656 = vmatpush1.bf16.msra.mxu0 0
      %1657 = vmatprep.mubr.bf16.mxu0 %v1623
      %1658 = vmatmul.mubr.bf16.gmra.mrb[0].mxu0 %v1553
      %v1659 = vpop.f32.mrb[0].mxu0
      %v1660 = vadd.f32 0.0, %v1659
      %v1661 = vpop.f32.mrb[0].mxu0
      %v1662 = vpop.f32.mrb[0].mxu0
      %v1663 = vpop.f32.mrb[0].mxu0
      %1664 = vdwg.mxu0
      %v1665 = vadd.f32 %v1515, %v1660
      %s1666 = scalar_lea.vmem %s215, 12
      %v1667 = vld [vmem:[%s1666] sm:$0x3]
      %v1668 = vld [vmem:[%s824] sm:$0xf]
      %v1669 = vld [vmem:[%s824 + $0x4] sm:$0xf]
      %v1670 = vld [vmem:[%s824 + $0x8] sm:$0xf]
      %v1671 = vld [vmem:[%s824 + $0xc] sm:$0xf]
      %v1672 = vld [vmem:[%s824 + $0x10] sm:$0xf]
      %v1673 = vld [vmem:[%s824 + $0x14] sm:$0xf]
      %v1674 = vld [vmem:[%s824 + $0x18] sm:$0xf]
      %v1675 = vld [vmem:[%s824 + $0x1c] sm:$0xf]
      %v1676 = vld [vmem:[%s824 + $0x20] sm:$0xf]
      %v1677 = vld [vmem:[%s824 + $0x24] sm:$0xf]
      %v1678 = vld [vmem:[%s824 + $0x28] sm:$0xf]
      %v1679 = vld [vmem:[%s824 + $0x2c] sm:$0xf]
      %v1680 = vld [vmem:[%s824 + $0x30] sm:$0xf]
      %v1681 = vld [vmem:[%s824 + $0x34] sm:$0xf]
      %v1682 = vld [vmem:[%s824 + $0x38] sm:$0xf]
      %v1683 = vld [vmem:[%s824 + $0x3c] sm:$0xf]
      %v1684 = vld [vmem:[%s824 + $0x40] sm:$0xf]
      %v1685 = vld [vmem:[%s824 + $0x44] sm:$0xf]
      %v1686 = vld [vmem:[%s824 + $0x48] sm:$0xf]
      %v1687 = vld [vmem:[%s824 + $0x4c] sm:$0xf]
      %v1690 = vunpack.c.l.s4 1966171168
      %v1691 = vunpack.c.0.s8 %v1690
      %v1692 = vlaneseq
      %v1693 = vshrl.u32 %v1692, 7
      %v1694 = vsub.s32 %v1691, %v1693
      %v1695 = vrot.slane %v1667, %v1694
      %v1696 = vcombine.high %v1695, %v1695
      %v1698 = vunpack.c.l.s4 1966171168
      %v1699 = vunpack.c.0.s8 %v1698
      %v1700 = vlaneseq
      %v1701 = vshrl.u32 %v1700, 7
      %v1702 = vsub.s32 %v1699, %v1701
      %v1703 = vrot.slane %v1695, %v1702
      %v1705 = vunpack.c.l.s4 1966171168
      %v1706 = vunpack.c.0.s8 %v1705
      %v1707 = vlaneseq
      %v1708 = vshrl.u32 %v1707, 7
      %v1709 = vsub.s32 %v1706, %v1708
      %v1710 = vrot.slane %v1696, %v1709
      %v1732 = vunpack.c.l.b16 %v1668
      %v1733 = vunpack.c.l.b16 %v1669
      %v1734 = vunpack.c.l.b16 %v1670
      %v1735 = vunpack.c.l.b16 %v1671
      %v1736 = vunpack.c.l.b16 %v1672
      %v1737 = vunpack.c.l.b16 %v1673
      %v1738 = vunpack.c.l.b16 %v1674
      %v1739 = vunpack.c.l.b16 %v1675
      %v1740 = vunpack.c.l.b16 %v1676
      %v1741 = vunpack.c.l.b16 %v1677
      %v1742 = vunpack.c.l.b16 %v1678
      %v1743 = vunpack.c.l.b16 %v1679
      %v1744 = vunpack.c.l.b16 %v1680
      %v1745 = vunpack.c.l.b16 %v1681
      %v1746 = vunpack.c.l.b16 %v1682
      %v1747 = vunpack.c.l.b16 %v1683
      %v1748 = vunpack.c.l.b16 %v1684
      %v1749 = vunpack.c.l.b16 %v1685
      %v1750 = vunpack.c.l.b16 %v1686
      %v1751 = vunpack.c.l.b16 %v1687
      %v1752 = vpack.c.b16 %v1733, %v1732
      %v1753 = vpack.c.b16 %v1735, %v1734
      %v1754 = vpack.c.b16 %v1737, %v1736
      %v1755 = vpack.c.b16 %v1739, %v1738
      %v1756 = vpack.c.b16 %v1741, %v1740
      %v1757 = vpack.c.b16 %v1743, %v1742
      %v1758 = vpack.c.b16 %v1745, %v1744
      %v1759 = vpack.c.b16 %v1747, %v1746
      %v1760 = vpack.c.b16 %v1749, %v1748
      %v1761 = vpack.c.b16 %v1751, %v1750
      %v1773 = vsel %vm349, %v1710, 0
      %1775 = vmatprep.subr.bf16.mxu0 0
      %1776 = vmatpush1.bf16.msra.mxu0 %v1752
      %1777 = vmatprep.subr.bf16.mxu0 0
      %1778 = vmatpush1.bf16.msra.mxu0 %v1753
      %1779 = vmatprep.subr.bf16.mxu0 0
      %1780 = vmatpush1.bf16.msra.mxu0 %v1754
      %1781 = vmatprep.subr.bf16.mxu0 0
      %1782 = vmatpush1.bf16.msra.mxu0 %v1755
      %1783 = vmatprep.subr.bf16.mxu0 0
      %1784 = vmatpush1.bf16.msra.mxu0 %v1756
      %1785 = vmatprep.subr.bf16.mxu0 0
      %1786 = vmatpush1.bf16.msra.mxu0 %v1757
      %1787 = vmatprep.subr.bf16.mxu0 0
      %1788 = vmatpush1.bf16.msra.mxu0 %v1758
      %1789 = vmatprep.subr.bf16.mxu0 0
      %1790 = vmatpush1.bf16.msra.mxu0 %v1759
      %1791 = vmatprep.subr.bf16.mxu0 0
      %1792 = vmatpush1.bf16.msra.mxu0 %v1760
      %1793 = vmatprep.subr.bf16.mxu0 0
      %1794 = vmatpush1.bf16.msra.mxu0 %v1761
      %1795 = vmatprep.subr.bf16.mxu0 0
      %1796 = vmatpush1.bf16.msra.mxu0 0
      %1797 = vmatprep.subr.bf16.mxu0 0
      %1798 = vmatpush1.bf16.msra.mxu0 0
      %1799 = vmatprep.subr.bf16.mxu0 0
      %1800 = vmatpush1.bf16.msra.mxu0 0
      %1801 = vmatprep.subr.bf16.mxu0 0
      %1802 = vmatpush1.bf16.msra.mxu0 0
      %1803 = vmatprep.subr.bf16.mxu0 0
      %1804 = vmatpush1.bf16.msra.mxu0 0
      %1805 = vmatprep.subr.bf16.mxu0 0
      %1806 = vmatpush1.bf16.msra.mxu0 0
      %1807 = vmatprep.mubr.bf16.mxu0 %v1773
      %1808 = vmatmul.mubr.bf16.gmra.mrb[0].mxu0 %v1703
      %v1809 = vpop.f32.mrb[0].mxu0
      %v1810 = vadd.f32 0.0, %v1809
      %v1811 = vpop.f32.mrb[0].mxu0
      %v1812 = vpop.f32.mrb[0].mxu0
      %v1813 = vpop.f32.mrb[0].mxu0
      %1814 = vdwg.mxu0
      %v1815 = vadd.f32 %v1665, %v1810
      %v1816 = vld [vmem:[%s2] sm:$0x1]
      %v1818 = vlaneseq
      %v1819 = vshrl.u32 %v1818, 7
      %v1820 = vsub.s32 0, %v1819
      %v1821 = vrot.slane %v1816, %v1820
      %v1823 = vadd.f32 %v1815, %v1821
      %v1824 = vmul.f32 %v1823, %v1823
      %v1825 = vld [vmem:[%s3] sm:$0xff]
      %v1826 = vld [vmem:[%s3 + $0x8] sm:$0xff]
      %v1827 = vld [vmem:[%s3 + $0x10] sm:$0xff]
      %v1828 = vld [vmem:[%s3 + $0x18] sm:$0xff]
      %v1829 = vld [vmem:[%s4] sm:$0x1]
      %v1831 = vlaneseq
      %v1832 = vshrl.u32 %v1831, 7
      %v1833 = vsub.s32 0, %v1832
      %v1834 = vrot.slane %v1829, %v1833
      %v1837 = vsel %vm349, %v1824, 0
      %1839 = vmatprep.subr.mxu0 0.0
      %1840 = vmatpush1.msra.mxu0 %v1825
      %1841 = vmatprep.subr.mxu0 0.0
      %1842 = vmatpush1.msra.mxu0 %v1826
      %1843 = vmatprep.subr.mxu0 0.0
      %1844 = vmatpush1.msra.mxu0 %v1827
      %1845 = vmatprep.subr.mxu0 0.0
      %1846 = vmatpush1.msra.mxu0 %v1828
      %1847 = vmatprep.subr.mxu0 0.0
      %1848 = vmatpush1.msra.mxu0 0.0
      %1849 = vmatprep.subr.mxu0 0.0
      %1850 = vmatpush1.msra.mxu0 0.0
      %1851 = vmatprep.subr.mxu0 0.0
      %1852 = vmatpush1.msra.mxu0 0.0
      %1853 = vmatprep.subr.mxu0 0.0
      %1854 = vmatpush1.msra.mxu0 0.0
      %1855 = vmatprep.subr.mxu0 0.0
      %1856 = vmatpush1.msra.mxu0 0.0
      %1857 = vmatprep.subr.mxu0 0.0
      %1858 = vmatpush1.msra.mxu0 0.0
      %1859 = vmatprep.subr.mxu0 0.0
      %1860 = vmatpush1.msra.mxu0 0.0
      %1861 = vmatprep.subr.mxu0 0.0
      %1862 = vmatpush1.msra.mxu0 0.0
      %1863 = vmatprep.subr.mxu0 0.0
      %1864 = vmatpush1.msra.mxu0 0.0
      %1865 = vmatprep.subr.mxu0 0.0
      %1866 = vmatpush1.msra.mxu0 0.0
      %1867 = vmatprep.subr.mxu0 0.0
      %1868 = vmatpush1.msra.mxu0 0.0
      %1869 = vmatprep.subr.mxu0 0.0
      %1870 = vmatpush1.msra.mxu0 0.0
      %1871 = vmatprep.subr.mxu0 0.0
      %1872 = vmatpush1.msra.mxu0 0.0
      %1873 = vmatprep.subr.mxu0 0.0
      %1874 = vmatpush1.msra.mxu0 0.0
      %1875 = vmatprep.subr.mxu0 0.0
      %1876 = vmatpush1.msra.mxu0 0.0
      %1877 = vmatprep.subr.mxu0 0.0
      %1878 = vmatpush1.msra.mxu0 0.0
      %1879 = vmatprep.subr.mxu0 0.0
      %1880 = vmatpush1.msra.mxu0 0.0
      %1881 = vmatprep.subr.mxu0 0.0
      %1882 = vmatpush1.msra.mxu0 0.0
      %1883 = vmatprep.subr.mxu0 0.0
      %1884 = vmatpush1.msra.mxu0 0.0
      %1885 = vmatprep.subr.mxu0 0.0
      %1886 = vmatpush1.msra.mxu0 0.0
      %1887 = vmatprep.subr.mxu0 0.0
      %1888 = vmatpush1.msra.mxu0 0.0
      %1889 = vmatprep.subr.mxu0 0.0
      %1890 = vmatpush1.msra.mxu0 0.0
      %1891 = vmatprep.subr.mxu0 0.0
      %1892 = vmatpush1.msra.mxu0 0.0
      %1893 = vmatprep.subr.mxu0 0.0
      %1894 = vmatpush1.msra.mxu0 0.0
      %1895 = vmatprep.subr.mxu0 0.0
      %1896 = vmatpush1.msra.mxu0 0.0
      %1897 = vmatprep.subr.mxu0 0.0
      %1898 = vmatpush1.msra.mxu0 0.0
      %1899 = vmatprep.subr.mxu0 0.0
      %1900 = vmatpush1.msra.mxu0 0.0
      %1901 = vmatprep.subr.mxu0 0.0
      %1902 = vmatpush1.msra.mxu0 0.0
      %1903 = vmatprep.mubr.f32.mxu0 0.0
      %1904 = vmatmul.mubr.f32.gmra.mrb[0].mxu0 %v1837
      %v1905 = vpop.f32.mrb[0].mxu0
      %v1906 = vadd.f32 %v1834, %v1905
      %v1907 = vpop.f32.mrb[0].mxu0
      %1908 = vdwg.mxu0
      %v1909 = vrsqrt.pop %v1906
      %v1910 = vmul.f32 %v1823, %v1909
      %v1911 = vpack.c.bf16 %v1910, %v1910
      %s1912 = scalar_lea.vmem %s219, 1
      %1913 = vst.msk [vmem:[%s1912] sm:$0x1] %vm1069, %v1911
      %p1914 = scmp.lt.s32.totalorder %s16, 1
      %s1915 = scalar_select %p1914, %s16, 1
      %s1916 = smul.addr %s1915, 2
      %s1917 = scalar_lea.vmem %s5, %s1916
      // Predicated region
      $region41: #{analysis_forward.6} parent=39 // pred_check
        %p1918 = pneg %p144
      $region42: #{analysis_forward.6} parent=39 // pred_check_branch
        %1920 = sbr.rel (%p1918) target = $region44
      $region43: #{analysis_forward.6} parent=39 // pred_region
        _
      $region44: #{analysis_forward.6} parent=39 // pred_fallthru
        _
    $region40: #{analysis_forward.6} parent=5 // pred_fallthru
      _
    %p1921 = scmp.le.s32.totalorder 2, %s11
    // Predicated region
    $region45: #{analysis_forward.6} parent=5 // pred_check
      %p1922 = pneg %p1921
    $region46: #{analysis_forward.6} parent=5 // pred_check_branch
      %1924 = sbr.rel (%p1922) target = $region48
    $region47: #{analysis_forward.6} parent=5 // pred_region
      %s1925 = ssub.s32 %s11, 2
      // Predicated region
      $region49: #{analysis_forward.6} parent=47 // pred_check
        %p1926 = pneg %p150
      $region50: #{analysis_forward.6} parent=47 // pred_check_branch
        %1928 = sbr.rel (%p1926) target = $region52
      $region51: #{analysis_forward.6} parent=47 // pred_region
        %p1929 = scmp.lt.s32.totalorder %s17, 1
        %s1930 = scalar_select %p1929, %s17, 1
        %s1931 = smul.addr %s1930, 2
        %s1932 = scalar_lea.vmem %s5, %s1931
      $region52: #{analysis_forward.6} parent=47 // pred_fallthru
        _
    $region48: #{analysis_forward.6} parent=5 // pred_fallthru
      _
  $region6: #{analysis_forward.6} parent=0 // loop_footer
    %s15 = sadd.s32 1, %s11
  $region7: #{analysis_forward.6} parent=0 // loop_footer_branch
    %10 = sbr.rel target = $region3
  $region8: #{analysis_forward.6} parent=0 // loop_exit
    _

// kernel: analysis_forward.7
$region0: #{analysis_forward.7}
  #allocation0 [shape = 'u32[]', space=smem, size = 0x4, offset = 0x4, fixed_abs, tag = 'smem constant byte address 0x4 - core index']
  #allocation1 [shape = 'u32[144,128]{1,0:T(1,128)}', space=vmem, size = 0x12000, scoped, tag = 'internal scratch']
  %s0 = inlined_call_operand.vmem [shape: bf16[2,6,1,160], index: 0, kind: input, shape index: {}]
  %s1 = inlined_call_operand.vmem [shape: bf16[5,160,48], index: 1, kind: input, shape index: {}]
  %s2 = inlined_call_operand.vmem [shape: f32[1,48], index: 2, kind: input, shape index: {}]
  %s3 = inlined_call_operand.hbm [shape: f32[2,1,1,48], index: 3, kind: output, shape index: {}]
  %s4 = sld [smem:[#allocation0]]
  $region45: #{analysis_forward.7} parent=0
    _
  %s6 = ssub.s32 1, %s4
  %s7 = scalar_select 0, %s6, %s4
  $region1: #{analysis_forward.7} parent=0
    #allocation2 [shape = 'u8[1024]{0}', space=vmem, size = 0x400, scoped, tag = 'output window, operand 0']
    #allocation3 [shape = 's32[2]{0}', space=sflag, size = 0x8, scoped, tag = 'scoped memory for analysis_forward.7']
    %8 = vsyncpa [#allocation3], 0
    %s9 = scalar_lea.sflag [#allocation3], 1
    %10 = vsyncpa %s9, 0
    loop: start=0, step=1, limit=4
    $region2: #{analysis_forward.7} parent=1 // loop_pre_header
      _
    $region3: #{analysis_forward.7} parent=1 // loop_header
      %s12 = sphi 0, %s16
      %p13 = scmp.ge.s32.totalorder %s12, 4
      %s22 = sphi 0, %s24
      %s25 = sphi 0, %s22
      %s26 = sphi 0, %s25
      %s42 = sphi 0, %s26
      %s46 = sphi 0, %s46
      %s48 = sphi 0, %s46
      %s49 = sphi 0, %s48
      %s63 = sphi 0, %s49
      %s67 = sphi 0, %s67
      %s69 = sphi 0, %s67
      %s70 = sphi 0, %s69
      %s84 = sphi 0, %s70
      %s90 = sphi 0, %s92
      %s93 = sphi 0, %s90
      %s94 = sphi 0, %s93
      %s110 = sphi 0, %s94
    $region4: #{analysis_forward.7} parent=1 // loop_header_branch
      %15 = sbr.rel (%p13) target = $region8
    $region5: #{analysis_forward.7} parent=1 // loop_body
      %s17 = ssub.s32 %s12, 1
      %s18 = ssub.s32 %s12, 2
      %s19 = sadd.s32 %s12, 1
      %s20 = ssub.s32 %s12, %s19
      %p21 = scmp.eq.s32.totalorder %s20, 0
      %s23 = sadd.s32 %s22, 1
      %s24 = scalar_select %p21, %s22, %s23
      %p27 = pneg %p21
      %p28 = scmp.eq.s32.totalorder %s12, 1
      %p29 = por %p27, %p28
      %p30 = scmp.ne.s32.totalorder %s22, %s25
      %p31 = scmp.eq.s32.totalorder %s12, 0
      %p32 = por %p30, %p31
      %p33 = scmp.ne.s32.totalorder %s22, %s25
      %p34 = scmp.eq.s32.totalorder %s17, 1
      %p35 = por %p33, %p34
      %p36 = scmp.ne.s32.totalorder %s25, %s26
      %p37 = scmp.eq.s32.totalorder %s17, 0
      %p38 = por %p36, %p37
      %p39 = scmp.ne.s32.totalorder %s25, %s26
      %p40 = scmp.eq.s32.totalorder %s18, 1
      %p41 = por %p39, %p40
      %p43 = scmp.ne.s32.totalorder %s26, %s42
      %p44 = scmp.eq.s32.totalorder %s18, 0
      %p45 = por %p43, %p44
      %s47 = sadd.s32 %s46, 1
      %p50 = scmp.eq.s32.totalorder %s12, 1
      %p51 = scmp.ne.s32.totalorder %s46, %s48
      %p52 = scmp.eq.s32.totalorder %s12, 0
      %p53 = por %p51, %p52
      %p54 = scmp.ne.s32.totalorder %s46, %s48
      %p55 = scmp.eq.s32.totalorder %s17, 1
      %p56 = por %p54, %p55
      %p57 = scmp.ne.s32.totalorder %s48, %s49
      %p58 = scmp.eq.s32.totalorder %s17, 0
      %p59 = por %p57, %p58
      %p60 = scmp.ne.s32.totalorder %s48, %s49
      %p61 = scmp.eq.s32.totalorder %s18, 1
      %p62 = por %p60, %p61
      %p64 = scmp.ne.s32.totalorder %s49, %s63
      %p65 = scmp.eq.s32.totalorder %s18, 0
      %p66 = por %p64, %p65
      %s68 = sadd.s32 %s67, 1
      %p71 = scmp.eq.s32.totalorder %s12, 1
      %p72 = scmp.ne.s32.totalorder %s67, %s69
      %p73 = scmp.eq.s32.totalorder %s12, 0
      %p74 = por %p72, %p73
      %p75 = scmp.ne.s32.totalorder %s67, %s69
      %p76 = scmp.eq.s32.totalorder %s17, 1
      %p77 = por %p75, %p76
      %p78 = scmp.ne.s32.totalorder %s69, %s70
      %p79 = scmp.eq.s32.totalorder %s17, 0
      %p80 = por %p78, %p79
      %p81 = scmp.ne.s32.totalorder %s69, %s70
      %p82 = scmp.eq.s32.totalorder %s18, 1
      %p83 = por %p81, %p82
      %p85 = scmp.ne.s32.totalorder %s70, %s84
      %p86 = scmp.eq.s32.totalorder %s18, 0
      %p87 = por %p85, %p86
      %s88 = ssub.s32 %s12, %s19
      %p89 = scmp.eq.s32.totalorder %s88, 0
      %s91 = sadd.s32 %s90, 1
      %s92 = scalar_select %p89, %s90, %s91
      %p95 = pneg %p89
      %p96 = scmp.eq.s32.totalorder %s12, 1
      %p97 = por %p95, %p96
      %p98 = scmp.ne.s32.totalorder %s90, %s93
      %p99 = scmp.eq.s32.totalorder %s12, 0
      %p100 = por %p98, %p99
      %p101 = scmp.ne.s32.totalorder %s90, %s93
      %p102 = scmp.eq.s32.totalorder %s17, 1
      %p103 = por %p101, %p102
      %p104 = scmp.ne.s32.totalorder %s93, %s94
      %p105 = scmp.eq.s32.totalorder %s17, 0
      %p106 = por %p104, %p105
      %p107 = scmp.ne.s32.totalorder %s93, %s94
      %p108 = scmp.eq.s32.totalorder %s18, 1
      %p109 = por %p107, %p108
      %p111 = scmp.ne.s32.totalorder %s94, %s110
      %p112 = scmp.eq.s32.totalorder %s18, 0
      %p113 = por %p111, %p112
      %p114 = scmp.le.s32.totalorder 1, %s12
      %p115 = scmp.lt.s32.totalorder %s12, 3
      %p116 = pnand %p114, %p115
      %p117 = pneg %p116
      // Predicated region
      $region9: #{analysis_forward.7} parent=5 // pred_check
        _
      $region10: #{analysis_forward.7} parent=5 // pred_check_branch
        %119 = sbr.rel (%p116) target = $region12
      $region11: #{analysis_forward.7} parent=5 // pred_region
        %s120 = ssub.s32 %s12, 1
        // Predicated region
        $region13: #{analysis_forward.7} parent=11 // pred_check
          %p121 = pneg %p59
        $region14: #{analysis_forward.7} parent=11 // pred_check_branch
          %123 = sbr.rel (%p121) target = $region16
        $region15: #{analysis_forward.7} parent=11 // pred_region
          _
        $region16: #{analysis_forward.7} parent=11 // pred_fallthru
          _
        // Predicated region
        $region17: #{analysis_forward.7} parent=11 // pred_check
          %p124 = pneg %p80
        $region18: #{analysis_forward.7} parent=11 // pred_check_branch
          %126 = sbr.rel (%p124) target = $region20
        $region19: #{analysis_forward.7} parent=11 // pred_region
          _
        $region20: #{analysis_forward.7} parent=11 // pred_fallthru
          _
      $region12: #{analysis_forward.7} parent=5 // pred_fallthru
        _
      %p127 = scmp.lt.s32.totalorder %s12, 2
      // Predicated region
      $region21: #{analysis_forward.7} parent=5 // pred_check
        %p128 = pneg %p127
      $region22: #{analysis_forward.7} parent=5 // pred_check_branch
        %130 = sbr.rel (%p128) target = $region24
      $region23: #{analysis_forward.7} parent=5 // pred_region
        // Predicated region
        $region25: #{analysis_forward.7} parent=23 // pred_check
          %p131 = pneg %p32
        $region26: #{analysis_forward.7} parent=23 // pred_check_branch
          %133 = sbr.rel (%p131) target = $region28
        $region27: #{analysis_forward.7} parent=23 // pred_region
          %p134 = scmp.lt.s32.totalorder %s12, 1
          %s135 = scalar_select %p134, %s12, 1
          %s136 = smul.addr %s135, 12
          %s137 = scalar_lea.vmem %s0, %s136
        $region28: #{analysis_forward.7} parent=23 // pred_fallthru
          _
      $region24: #{analysis_forward.7} parent=5 // pred_fallthru
        _
      %p138 = scmp.le.s32.totalorder 1, %s12
      %p139 = scmp.lt.s32.totalorder %s12, 3
      %p140 = pnand %p138, %p139
      %p141 = pneg %p140
      // Predicated region
      $region29: #{analysis_forward.7} parent=5 // pred_check
        _
      $region30: #{analysis_forward.7} parent=5 // pred_check_branch
        %143 = sbr.rel (%p140) target = $region32
      $region31: #{analysis_forward.7} parent=5 // pred_region
        %s144 = ssub.s32 %s12, 1
        %p145 = scmp.lt.s32.totalorder %s17, 1
        %s146 = scalar_select %p145, %s17, 1
        %s147 = smul.addr %s146, 12
        %s148 = scalar_lea.vmem %s0, %s147
        %p149 = pneg %p38
        %p150 = pneg %p35
        %p151 = pneg %p59
        %p152 = pneg %p56
        %p153 = pneg %p80
        %p154 = pneg %p77
        %p155 = pneg %p106
        %p156 = pneg %p103
        %s157 = sand.u32 %s93, 1
        %s158 = scalar_lea.sflag [#allocation3], %s157
        %s159 = sand.u32 %s93, 1
        %s160 = scalar_lea.vmem [#allocation2], %s159
        %p161 = scmp.lt.s32.totalorder %s17, 1
        %s162 = scalar_select %p161, %s17, 1
        %s163 = smul.addr %s162, 12
        %s164 = scalar_lea.vmem %s0, %s163
        %v166 = vld [vmem:[%s164] sm:$0x3]
        %v167 = vld [vmem:[%s1] sm:$0xf]
        %v168 = vld [vmem:[%s1 + $0x4] sm:$0xf]
        %v169 = vld [vmem:[%s1 + $0x8] sm:$0xf]
        %v170 = vld [vmem:[%s1 + $0xc] sm:$0xf]
        %v171 = vld [vmem:[%s1 + $0x10] sm:$0xf]
        %v172 = vld [vmem:[%s1 + $0x14] sm:$0xf]
        %v173 = vld [vmem:[%s1 + $0x18] sm:$0xf]
        %v174 = vld [vmem:[%s1 + $0x1c] sm:$0xf]
        %v175 = vld [vmem:[%s1 + $0x20] sm:$0xf]
        %v176 = vld [vmem:[%s1 + $0x24] sm:$0xf]
        %v177 = vld [vmem:[%s1 + $0x28] sm:$0xf]
        %v178 = vld [vmem:[%s1 + $0x2c] sm:$0xf]
        %v179 = vld [vmem:[%s1 + $0x30] sm:$0xf]
        %v180 = vld [vmem:[%s1 + $0x34] sm:$0xf]
        %v181 = vld [vmem:[%s1 + $0x38] sm:$0xf]
        %v182 = vld [vmem:[%s1 + $0x3c] sm:$0xf]
        %v183 = vld [vmem:[%s1 + $0x40] sm:$0xf]
        %v184 = vld [vmem:[%s1 + $0x44] sm:$0xf]
        %v185 = vld [vmem:[%s1 + $0x48] sm:$0xf]
        %v186 = vld [vmem:[%s1 + $0x4c] sm:$0xf]
        %s187 = scalar_lea.vmem %s164, 2
        %v188 = vld [vmem:[%s187] sm:$0x3]
        %s189 = scalar_lea.vmem %s1, 80
        %v190 = vld [vmem:[%s189] sm:$0xf]
        %v191 = vld [vmem:[%s189 + $0x4] sm:$0xf]
        %v192 = vld [vmem:[%s189 + $0x8] sm:$0xf]
        %v193 = vld [vmem:[%s189 + $0xc] sm:$0xf]
        %v194 = vld [vmem:[%s189 + $0x10] sm:$0xf]
        %v195 = vld [vmem:[%s189 + $0x14] sm:$0xf]
        %v196 = vld [vmem:[%s189 + $0x18] sm:$0xf]
        %v197 = vld [vmem:[%s189 + $0x1c] sm:$0xf]
        %v198 = vld [vmem:[%s189 + $0x20] sm:$0xf]
        %v199 = vld [vmem:[%s189 + $0x24] sm:$0xf]
        %v200 = vld [vmem:[%s189 + $0x28] sm:$0xf]
        %v201 = vld [vmem:[%s189 + $0x2c] sm:$0xf]
        %v202 = vld [vmem:[%s189 + $0x30] sm:$0xf]
        %v203 = vld [vmem:[%s189 + $0x34] sm:$0xf]
        %v204 = vld [vmem:[%s189 + $0x38] sm:$0xf]
        %v205 = vld [vmem:[%s189 + $0x3c] sm:$0xf]
        %v206 = vld [vmem:[%s189 + $0x40] sm:$0xf]
        %v207 = vld [vmem:[%s189 + $0x44] sm:$0xf]
        %v208 = vld [vmem:[%s189 + $0x48] sm:$0xf]
        %v209 = vld [vmem:[%s189 + $0x4c] sm:$0xf]
        %v212 = vunpack.c.l.s4 1966171168
        %v213 = vunpack.c.0.s8 %v212
        %v214 = vlaneseq
        %v215 = vshrl.u32 %v214, 7
        %v216 = vsub.s32 %v213, %v215
        %v217 = vrot.slane %v188, %v216
        %v218 = vcombine.high %v217, %v217
        %v220 = vunpack.c.l.s4 1966171168
        %v221 = vunpack.c.0.s8 %v220
        %v222 = vlaneseq
        %v223 = vshrl.u32 %v222, 7
        %v224 = vsub.s32 %v221, %v223
        %v225 = vrot.slane %v217, %v224
        %v227 = vunpack.c.l.s4 1966171168
        %v228 = vunpack.c.0.s8 %v227
        %v229 = vlaneseq
        %v230 = vshrl.u32 %v229, 7
        %v231 = vsub.s32 %v228, %v230
        %v232 = vrot.slane %v218, %v231
        %v254 = vunpack.c.l.b16 %v190
        %v255 = vunpack.c.l.b16 %v191
        %v256 = vunpack.c.l.b16 %v192
        %v257 = vunpack.c.l.b16 %v193
        %v258 = vunpack.c.l.b16 %v194
        %v259 = vunpack.c.l.b16 %v195
        %v260 = vunpack.c.l.b16 %v196
        %v261 = vunpack.c.l.b16 %v197
        %v262 = vunpack.c.l.b16 %v198
        %v263 = vunpack.c.l.b16 %v199
        %v264 = vunpack.c.l.b16 %v200
        %v265 = vunpack.c.l.b16 %v201
        %v266 = vunpack.c.l.b16 %v202
        %v267 = vunpack.c.l.b16 %v203
        %v268 = vunpack.c.l.b16 %v204
        %v269 = vunpack.c.l.b16 %v205
        %v270 = vunpack.c.l.b16 %v206
        %v271 = vunpack.c.l.b16 %v207
        %v272 = vunpack.c.l.b16 %v208
        %v273 = vunpack.c.l.b16 %v209
        %v274 = vpack.c.b16 %v255, %v254
        %v275 = vpack.c.b16 %v257, %v256
        %v276 = vpack.c.b16 %v259, %v258
        %v277 = vpack.c.b16 %v261, %v260
        %v278 = vpack.c.b16 %v263, %v262
        %v279 = vpack.c.b16 %v265, %v264
        %v280 = vpack.c.b16 %v267, %v266
        %v281 = vpack.c.b16 %v269, %v268
        %v282 = vpack.c.b16 %v271, %v270
        %v283 = vpack.c.b16 %v273, %v272
        %vm294 = vcmask 261120
        %v296 = vsel %vm294, %v232, 0
        %298 = vmatprep.subr.bf16.mxu0 0
        %299 = vmatpush1.bf16.msra.mxu0 %v274
        %300 = vmatprep.subr.bf16.mxu0 0
        %301 = vmatpush1.bf16.msra.mxu0 %v275
        %302 = vmatprep.subr.bf16.mxu0 0
        %303 = vmatpush1.bf16.msra.mxu0 %v276
        %304 = vmatprep.subr.bf16.mxu0 0
        %305 = vmatpush1.bf16.msra.mxu0 %v277
        %306 = vmatprep.subr.bf16.mxu0 0
        %307 = vmatpush1.bf16.msra.mxu0 %v278
        %308 = vmatprep.subr.bf16.mxu0 0
        %309 = vmatpush1.bf16.msra.mxu0 %v279
        %310 = vmatprep.subr.bf16.mxu0 0
        %311 = vmatpush1.bf16.msra.mxu0 %v280
        %312 = vmatprep.subr.bf16.mxu0 0
        %313 = vmatpush1.bf16.msra.mxu0 %v281
        %314 = vmatprep.subr.bf16.mxu0 0
        %315 = vmatpush1.bf16.msra.mxu0 %v282
        %316 = vmatprep.subr.bf16.mxu0 0
        %317 = vmatpush1.bf16.msra.mxu0 %v283
        %318 = vmatprep.subr.bf16.mxu0 0
        %319 = vmatpush1.bf16.msra.mxu0 0
        %320 = vmatprep.subr.bf16.mxu0 0
        %321 = vmatpush1.bf16.msra.mxu0 0
        %322 = vmatprep.subr.bf16.mxu0 0
        %323 = vmatpush1.bf16.msra.mxu0 0
        %324 = vmatprep.subr.bf16.mxu0 0
        %325 = vmatpush1.bf16.msra.mxu0 0
        %326 = vmatprep.subr.bf16.mxu0 0
        %327 = vmatpush1.bf16.msra.mxu0 0
        %328 = vmatprep.subr.bf16.mxu0 0
        %329 = vmatpush1.bf16.msra.mxu0 0
        %330 = vmatprep.mubr.bf16.mxu0 %v296
        %331 = vmatmul.mubr.bf16.gmra.mrb[0].mxu0 %v225
        %v332 = vpop.f32.mrb[0].mxu0
        %v333 = vadd.f32 0.0, %v332
        %v334 = vpop.f32.mrb[0].mxu0
        %v335 = vpop.f32.mrb[0].mxu0
        %v336 = vpop.f32.mrb[0].mxu0
        %337 = vdwg.mxu0
        %v340 = vunpack.c.l.s4 1966171168
        %v341 = vunpack.c.0.s8 %v340
        %v342 = vlaneseq
        %v343 = vshrl.u32 %v342, 7
        %v344 = vsub.s32 %v341, %v343
        %v345 = vrot.slane %v166, %v344
        %v346 = vcombine.high %v345, %v345
        %v348 = vunpack.c.l.s4 1966171168
        %v349 = vunpack.c.0.s8 %v348
        %v350 = vlaneseq
        %v351 = vshrl.u32 %v350, 7
        %v352 = vsub.s32 %v349, %v351
        %v353 = vrot.slane %v345, %v352
        %v355 = vunpack.c.l.s4 1966171168
        %v356 = vunpack.c.0.s8 %v355
        %v357 = vlaneseq
        %v358 = vshrl.u32 %v357, 7
        %v359 = vsub.s32 %v356, %v358
        %v360 = vrot.slane %v346, %v359
        %v382 = vunpack.c.l.b16 %v167
        %v383 = vunpack.c.l.b16 %v168
        %v384 = vunpack.c.l.b16 %v169
        %v385 = vunpack.c.l.b16 %v170
        %v386 = vunpack.c.l.b16 %v171
        %v387 = vunpack.c.l.b16 %v172
        %v388 = vunpack.c.l.b16 %v173
        %v389 = vunpack.c.l.b16 %v174
        %v390 = vunpack.c.l.b16 %v175
        %v391 = vunpack.c.l.b16 %v176
        %v392 = vunpack.c.l.b16 %v177
        %v393 = vunpack.c.l.b16 %v178
        %v394 = vunpack.c.l.b16 %v179
        %v395 = vunpack.c.l.b16 %v180
        %v396 = vunpack.c.l.b16 %v181
        %v397 = vunpack.c.l.b16 %v182
        %v398 = vunpack.c.l.b16 %v183
        %v399 = vunpack.c.l.b16 %v184
        %v400 = vunpack.c.l.b16 %v185
        %v401 = vunpack.c.l.b16 %v186
        %v402 = vpack.c.b16 %v383, %v382
        %v403 = vpack.c.b16 %v385, %v384
        %v404 = vpack.c.b16 %v387, %v386
        %v405 = vpack.c.b16 %v389, %v388
        %v406 = vpack.c.b16 %v391, %v390
        %v407 = vpack.c.b16 %v393, %v392
        %v408 = vpack.c.b16 %v395, %v394
        %v409 = vpack.c.b16 %v397, %v396
        %v410 = vpack.c.b16 %v399, %v398
        %v411 = vpack.c.b16 %v401, %v400
        %v423 = vsel %vm294, %v360, 0
        %425 = vmatprep.subr.bf16.mxu0 0
        %426 = vmatpush1.bf16.msra.mxu0 %v402
        %427 = vmatprep.subr.bf16.mxu0 0
        %428 = vmatpush1.bf16.msra.mxu0 %v403
        %429 = vmatprep.subr.bf16.mxu0 0
        %430 = vmatpush1.bf16.msra.mxu0 %v404
        %431 = vmatprep.subr.bf16.mxu0 0
        %432 = vmatpush1.bf16.msra.mxu0 %v405
        %433 = vmatprep.subr.bf16.mxu0 0
        %434 = vmatpush1.bf16.msra.mxu0 %v406
        %435 = vmatprep.subr.bf16.mxu0 0
        %436 = vmatpush1.bf16.msra.mxu0 %v407
        %437 = vmatprep.subr.bf16.mxu0 0
        %438 = vmatpush1.bf16.msra.mxu0 %v408
        %439 = vmatprep.subr.bf16.mxu0 0
        %440 = vmatpush1.bf16.msra.mxu0 %v409
        %441 = vmatprep.subr.bf16.mxu0 0
        %442 = vmatpush1.bf16.msra.mxu0 %v410
        %443 = vmatprep.subr.bf16.mxu0 0
        %444 = vmatpush1.bf16.msra.mxu0 %v411
        %445 = vmatprep.subr.bf16.mxu0 0
        %446 = vmatpush1.bf16.msra.mxu0 0
        %447 = vmatprep.subr.bf16.mxu0 0
        %448 = vmatpush1.bf16.msra.mxu0 0
        %449 = vmatprep.subr.bf16.mxu0 0
        %450 = vmatpush1.bf16.msra.mxu0 0
        %451 = vmatprep.subr.bf16.mxu0 0
        %452 = vmatpush1.bf16.msra.mxu0 0
        %453 = vmatprep.subr.bf16.mxu0 0
        %454 = vmatpush1.bf16.msra.mxu0 0
        %455 = vmatprep.subr.bf16.mxu0 0
        %456 = vmatpush1.bf16.msra.mxu0 0
        %457 = vmatprep.mubr.bf16.mxu0 %v423
        %458 = vmatmul.mubr.bf16.gmra.mrb[0].mxu0 %v353
        %v459 = vpop.f32.mrb[0].mxu0
        %v460 = vadd.f32 %v333, %v459
        %v461 = vpop.f32.mrb[0].mxu0
        %v462 = vpop.f32.mrb[0].mxu0
        %v463 = vpop.f32.mrb[0].mxu0
        %464 = vdwg.mxu0
        %s465 = scalar_lea.vmem %s164, 4
        %v466 = vld [vmem:[%s465] sm:$0x3]
        %s467 = scalar_lea.vmem %s1, 160
        %v468 = vld [vmem:[%s467] sm:$0xf]
        %v469 = vld [vmem:[%s467 + $0x4] sm:$0xf]
        %v470 = vld [vmem:[%s467 + $0x8] sm:$0xf]
        %v471 = vld [vmem:[%s467 + $0xc] sm:$0xf]
        %v472 = vld [vmem:[%s467 + $0x10] sm:$0xf]
        %v473 = vld [vmem:[%s467 + $0x14] sm:$0xf]
        %v474 = vld [vmem:[%s467 + $0x18] sm:$0xf]
        %v475 = vld [vmem:[%s467 + $0x1c] sm:$0xf]
        %v476 = vld [vmem:[%s467 + $0x20] sm:$0xf]
        %v477 = vld [vmem:[%s467 + $0x24] sm:$0xf]
        %v478 = vld [vmem:[%s467 + $0x28] sm:$0xf]
        %v479 = vld [vmem:[%s467 + $0x2c] sm:$0xf]
        %v480 = vld [vmem:[%s467 + $0x30] sm:$0xf]
        %v481 = vld [vmem:[%s467 + $0x34] sm:$0xf]
        %v482 = vld [vmem:[%s467 + $0x38] sm:$0xf]
        %v483 = vld [vmem:[%s467 + $0x3c] sm:$0xf]
        %v484 = vld [vmem:[%s467 + $0x40] sm:$0xf]
        %v485 = vld [vmem:[%s467 + $0x44] sm:$0xf]
        %v486 = vld [vmem:[%s467 + $0x48] sm:$0xf]
        %v487 = vld [vmem:[%s467 + $0x4c] sm:$0xf]
        %v490 = vunpack.c.l.s4 1966171168
        %v491 = vunpack.c.0.s8 %v490
        %v492 = vlaneseq
        %v493 = vshrl.u32 %v492, 7
        %v494 = vsub.s32 %v491, %v493
        %v495 = vrot.slane %v466, %v494
        %v496 = vcombine.high %v495, %v495
        %v498 = vunpack.c.l.s4 1966171168
        %v499 = vunpack.c.0.s8 %v498
        %v500 = vlaneseq
        %v501 = vshrl.u32 %v500, 7
        %v502 = vsub.s32 %v499, %v501
        %v503 = vrot.slane %v495, %v502
        %v505 = vunpack.c.l.s4 1966171168
        %v506 = vunpack.c.0.s8 %v505
        %v507 = vlaneseq
        %v508 = vshrl.u32 %v507, 7
        %v509 = vsub.s32 %v506, %v508
        %v510 = vrot.slane %v496, %v509
        %v532 = vunpack.c.l.b16 %v468
        %v533 = vunpack.c.l.b16 %v469
        %v534 = vunpack.c.l.b16 %v470
        %v535 = vunpack.c.l.b16 %v471
        %v536 = vunpack.c.l.b16 %v472
        %v537 = vunpack.c.l.b16 %v473
        %v538 = vunpack.c.l.b16 %v474
        %v539 = vunpack.c.l.b16 %v475
        %v540 = vunpack.c.l.b16 %v476
        %v541 = vunpack.c.l.b16 %v477
        %v542 = vunpack.c.l.b16 %v478
        %v543 = vunpack.c.l.b16 %v479
        %v544 = vunpack.c.l.b16 %v480
        %v545 = vunpack.c.l.b16 %v481
        %v546 = vunpack.c.l.b16 %v482
        %v547 = vunpack.c.l.b16 %v483
        %v548 = vunpack.c.l.b16 %v484
        %v549 = vunpack.c.l.b16 %v485
        %v550 = vunpack.c.l.b16 %v486
        %v551 = vunpack.c.l.b16 %v487
        %v552 = vpack.c.b16 %v533, %v532
        %v553 = vpack.c.b16 %v535, %v534
        %v554 = vpack.c.b16 %v537, %v536
        %v555 = vpack.c.b16 %v539, %v538
        %v556 = vpack.c.b16 %v541, %v540
        %v557 = vpack.c.b16 %v543, %v542
        %v558 = vpack.c.b16 %v545, %v544
        %v559 = vpack.c.b16 %v547, %v546
        %v560 = vpack.c.b16 %v549, %v548
        %v561 = vpack.c.b16 %v551, %v550
        %v573 = vsel %vm294, %v510, 0
        %575 = vmatprep.subr.bf16.mxu0 0
        %576 = vmatpush1.bf16.msra.mxu0 %v552
        %577 = vmatprep.subr.bf16.mxu0 0
        %578 = vmatpush1.bf16.msra.mxu0 %v553
        %579 = vmatprep.subr.bf16.mxu0 0
        %580 = vmatpush1.bf16.msra.mxu0 %v554
        %581 = vmatprep.subr.bf16.mxu0 0
        %582 = vmatpush1.bf16.msra.mxu0 %v555
        %583 = vmatprep.subr.bf16.mxu0 0
        %584 = vmatpush1.bf16.msra.mxu0 %v556
        %585 = vmatprep.subr.bf16.mxu0 0
        %586 = vmatpush1.bf16.msra.mxu0 %v557
        %587 = vmatprep.subr.bf16.mxu0 0
        %588 = vmatpush1.bf16.msra.mxu0 %v558
        %589 = vmatprep.subr.bf16.mxu0 0
        %590 = vmatpush1.bf16.msra.mxu0 %v559
        %591 = vmatprep.subr.bf16.mxu0 0
        %592 = vmatpush1.bf16.msra.mxu0 %v560
        %593 = vmatprep.subr.bf16.mxu0 0
        %594 = vmatpush1.bf16.msra.mxu0 %v561
        %595 = vmatprep.subr.bf16.mxu0 0
        %596 = vmatpush1.bf16.msra.mxu0 0
        %597 = vmatprep.subr.bf16.mxu0 0
        %598 = vmatpush1.bf16.msra.mxu0 0
        %599 = vmatprep.subr.bf16.mxu0 0
        %600 = vmatpush1.bf16.msra.mxu0 0
        %601 = vmatprep.subr.bf16.mxu0 0
        %602 = vmatpush1.bf16.msra.mxu0 0
        %603 = vmatprep.subr.bf16.mxu0 0
        %604 = vmatpush1.bf16.msra.mxu0 0
        %605 = vmatprep.subr.bf16.mxu0 0
        %606 = vmatpush1.bf16.msra.mxu0 0
        %607 = vmatprep.mubr.bf16.mxu0 %v573
        %608 = vmatmul.mubr.bf16.gmra.mrb[0].mxu0 %v503
        %v609 = vpop.f32.mrb[0].mxu0
        %v610 = vadd.f32 0.0, %v609
        %v611 = vpop.f32.mrb[0].mxu0
        %v612 = vpop.f32.mrb[0].mxu0
        %v613 = vpop.f32.mrb[0].mxu0
        %614 = vdwg.mxu0
        %v615 = vadd.f32 %v460, %v610
        %s616 = scalar_lea.vmem %s164, 6
        %v617 = vld [vmem:[%s616] sm:$0x3]
        %s618 = scalar_lea.vmem %s1, 240
        %v619 = vld [vmem:[%s618] sm:$0xf]
        %v620 = vld [vmem:[%s618 + $0x4] sm:$0xf]
        %v621 = vld [vmem:[%s618 + $0x8] sm:$0xf]
        %v622 = vld [vmem:[%s618 + $0xc] sm:$0xf]
        %v623 = vld [vmem:[%s618 + $0x10] sm:$0xf]
        %v624 = vld [vmem:[%s618 + $0x14] sm:$0xf]
        %v625 = vld [vmem:[%s618 + $0x18] sm:$0xf]
        %v626 = vld [vmem:[%s618 + $0x1c] sm:$0xf]
        %v627 = vld [vmem:[%s618 + $0x20] sm:$0xf]
        %v628 = vld [vmem:[%s618 + $0x24] sm:$0xf]
        %v629 = vld [vmem:[%s618 + $0x28] sm:$0xf]
        %v630 = vld [vmem:[%s618 + $0x2c] sm:$0xf]
        %v631 = vld [vmem:[%s618 + $0x30] sm:$0xf]
        %v632 = vld [vmem:[%s618 + $0x34] sm:$0xf]
        %v633 = vld [vmem:[%s618 + $0x38] sm:$0xf]
        %v634 = vld [vmem:[%s618 + $0x3c] sm:$0xf]
        %v635 = vld [vmem:[%s618 + $0x40] sm:$0xf]
        %v636 = vld [vmem:[%s618 + $0x44] sm:$0xf]
        %v637 = vld [vmem:[%s618 + $0x48] sm:$0xf]
        %v638 = vld [vmem:[%s618 + $0x4c] sm:$0xf]
        %v641 = vunpack.c.l.s4 1966171168
        %v642 = vunpack.c.0.s8 %v641
        %v643 = vlaneseq
        %v644 = vshrl.u32 %v643, 7
        %v645 = vsub.s32 %v642, %v644
        %v646 = vrot.slane %v617, %v645
        %v647 = vcombine.high %v646, %v646
        %v649 = vunpack.c.l.s4 1966171168
        %v650 = vunpack.c.0.s8 %v649
        %v651 = vlaneseq
        %v652 = vshrl.u32 %v651, 7
        %v653 = vsub.s32 %v650, %v652
        %v654 = vrot.slane %v646, %v653
        %v656 = vunpack.c.l.s4 1966171168
        %v657 = vunpack.c.0.s8 %v656
        %v658 = vlaneseq
        %v659 = vshrl.u32 %v658, 7
        %v660 = vsub.s32 %v657, %v659
        %v661 = vrot.slane %v647, %v660
        %v683 = vunpack.c.l.b16 %v619
        %v684 = vunpack.c.l.b16 %v620
        %v685 = vunpack.c.l.b16 %v621
        %v686 = vunpack.c.l.b16 %v622
        %v687 = vunpack.c.l.b16 %v623
        %v688 = vunpack.c.l.b16 %v624
        %v689 = vunpack.c.l.b16 %v625
        %v690 = vunpack.c.l.b16 %v626
        %v691 = vunpack.c.l.b16 %v627
        %v692 = vunpack.c.l.b16 %v628
        %v693 = vunpack.c.l.b16 %v629
        %v694 = vunpack.c.l.b16 %v630
        %v695 = vunpack.c.l.b16 %v631
        %v696 = vunpack.c.l.b16 %v632
        %v697 = vunpack.c.l.b16 %v633
        %v698 = vunpack.c.l.b16 %v634
        %v699 = vunpack.c.l.b16 %v635
        %v700 = vunpack.c.l.b16 %v636
        %v701 = vunpack.c.l.b16 %v637
        %v702 = vunpack.c.l.b16 %v638
        %v703 = vpack.c.b16 %v684, %v683
        %v704 = vpack.c.b16 %v686, %v685
        %v705 = vpack.c.b16 %v688, %v687
        %v706 = vpack.c.b16 %v690, %v689
        %v707 = vpack.c.b16 %v692, %v691
        %v708 = vpack.c.b16 %v694, %v693
        %v709 = vpack.c.b16 %v696, %v695
        %v710 = vpack.c.b16 %v698, %v697
        %v711 = vpack.c.b16 %v700, %v699
        %v712 = vpack.c.b16 %v702, %v701
        %v724 = vsel %vm294, %v661, 0
        %726 = vmatprep.subr.bf16.mxu0 0
        %727 = vmatpush1.bf16.msra.mxu0 %v703
        %728 = vmatprep.subr.bf16.mxu0 0
        %729 = vmatpush1.bf16.msra.mxu0 %v704
        %730 = vmatprep.subr.bf16.mxu0 0
        %731 = vmatpush1.bf16.msra.mxu0 %v705
        %732 = vmatprep.subr.bf16.mxu0 0
        %733 = vmatpush1.bf16.msra.mxu0 %v706
        %734 = vmatprep.subr.bf16.mxu0 0
        %735 = vmatpush1.bf16.msra.mxu0 %v707
        %736 = vmatprep.subr.bf16.mxu0 0
        %737 = vmatpush1.bf16.msra.mxu0 %v708
        %738 = vmatprep.subr.bf16.mxu0 0
        %739 = vmatpush1.bf16.msra.mxu0 %v709
        %740 = vmatprep.subr.bf16.mxu0 0
        %741 = vmatpush1.bf16.msra.mxu0 %v710
        %742 = vmatprep.subr.bf16.mxu0 0
        %743 = vmatpush1.bf16.msra.mxu0 %v711
        %744 = vmatprep.subr.bf16.mxu0 0
        %745 = vmatpush1.bf16.msra.mxu0 %v712
        %746 = vmatprep.subr.bf16.mxu0 0
        %747 = vmatpush1.bf16.msra.mxu0 0
        %748 = vmatprep.subr.bf16.mxu0 0
        %749 = vmatpush1.bf16.msra.mxu0 0
        %750 = vmatprep.subr.bf16.mxu0 0
        %751 = vmatpush1.bf16.msra.mxu0 0
        %752 = vmatprep.subr.bf16.mxu0 0
        %753 = vmatpush1.bf16.msra.mxu0 0
        %754 = vmatprep.subr.bf16.mxu0 0
        %755 = vmatpush1.bf16.msra.mxu0 0
        %756 = vmatprep.subr.bf16.mxu0 0
        %757 = vmatpush1.bf16.msra.mxu0 0
        %758 = vmatprep.mubr.bf16.mxu0 %v724
        %759 = vmatmul.mubr.bf16.gmra.mrb[0].mxu0 %v654
        %v760 = vpop.f32.mrb[0].mxu0
        %v761 = vadd.f32 0.0, %v760
        %v762 = vpop.f32.mrb[0].mxu0
        %v763 = vpop.f32.mrb[0].mxu0
        %v764 = vpop.f32.mrb[0].mxu0
        %765 = vdwg.mxu0
        %v766 = vadd.f32 %v615, %v761
        %s767 = scalar_lea.vmem %s164, 8
        %v768 = vld [vmem:[%s767] sm:$0x3]
        %s769 = scalar_lea.vmem %s1, 320
        %v770 = vld [vmem:[%s769] sm:$0xf]
        %v771 = vld [vmem:[%s769 + $0x4] sm:$0xf]
        %v772 = vld [vmem:[%s769 + $0x8] sm:$0xf]
        %v773 = vld [vmem:[%s769 + $0xc] sm:$0xf]
        %v774 = vld [vmem:[%s769 + $0x10] sm:$0xf]
        %v775 = vld [vmem:[%s769 + $0x14] sm:$0xf]
        %v776 = vld [vmem:[%s769 + $0x18] sm:$0xf]
        %v777 = vld [vmem:[%s769 + $0x1c] sm:$0xf]
        %v778 = vld [vmem:[%s769 + $0x20] sm:$0xf]
        %v779 = vld [vmem:[%s769 + $0x24] sm:$0xf]
        %v780 = vld [vmem:[%s769 + $0x28] sm:$0xf]
        %v781 = vld [vmem:[%s769 + $0x2c] sm:$0xf]
        %v782 = vld [vmem:[%s769 + $0x30] sm:$0xf]
        %v783 = vld [vmem:[%s769 + $0x34] sm:$0xf]
        %v784 = vld [vmem:[%s769 + $0x38] sm:$0xf]
        %v785 = vld [vmem:[%s769 + $0x3c] sm:$0xf]
        %v786 = vld [vmem:[%s769 + $0x40] sm:$0xf]
        %v787 = vld [vmem:[%s769 + $0x44] sm:$0xf]
        %v788 = vld [vmem:[%s769 + $0x48] sm:$0xf]
        %v789 = vld [vmem:[%s769 + $0x4c] sm:$0xf]
        %v792 = vunpack.c.l.s4 1966171168
        %v793 = vunpack.c.0.s8 %v792
        %v794 = vlaneseq
        %v795 = vshrl.u32 %v794, 7
        %v796 = vsub.s32 %v793, %v795
        %v797 = vrot.slane %v768, %v796
        %v798 = vcombine.high %v797, %v797
        %v800 = vunpack.c.l.s4 1966171168
        %v801 = vunpack.c.0.s8 %v800
        %v802 = vlaneseq
        %v803 = vshrl.u32 %v802, 7
        %v804 = vsub.s32 %v801, %v803
        %v805 = vrot.slane %v797, %v804
        %v807 = vunpack.c.l.s4 1966171168
        %v808 = vunpack.c.0.s8 %v807
        %v809 = vlaneseq
        %v810 = vshrl.u32 %v809, 7
        %v811 = vsub.s32 %v808, %v810
        %v812 = vrot.slane %v798, %v811
        %v834 = vunpack.c.l.b16 %v770
        %v835 = vunpack.c.l.b16 %v771
        %v836 = vunpack.c.l.b16 %v772
        %v837 = vunpack.c.l.b16 %v773
        %v838 = vunpack.c.l.b16 %v774
        %v839 = vunpack.c.l.b16 %v775
        %v840 = vunpack.c.l.b16 %v776
        %v841 = vunpack.c.l.b16 %v777
        %v842 = vunpack.c.l.b16 %v778
        %v843 = vunpack.c.l.b16 %v779
        %v844 = vunpack.c.l.b16 %v780
        %v845 = vunpack.c.l.b16 %v781
        %v846 = vunpack.c.l.b16 %v782
        %v847 = vunpack.c.l.b16 %v783
        %v848 = vunpack.c.l.b16 %v784
        %v849 = vunpack.c.l.b16 %v785
        %v850 = vunpack.c.l.b16 %v786
        %v851 = vunpack.c.l.b16 %v787
        %v852 = vunpack.c.l.b16 %v788
        %v853 = vunpack.c.l.b16 %v789
        %v854 = vpack.c.b16 %v835, %v834
        %v855 = vpack.c.b16 %v837, %v836
        %v856 = vpack.c.b16 %v839, %v838
        %v857 = vpack.c.b16 %v841, %v840
        %v858 = vpack.c.b16 %v843, %v842
        %v859 = vpack.c.b16 %v845, %v844
        %v860 = vpack.c.b16 %v847, %v846
        %v861 = vpack.c.b16 %v849, %v848
        %v862 = vpack.c.b16 %v851, %v850
        %v863 = vpack.c.b16 %v853, %v852
        %v875 = vsel %vm294, %v812, 0
        %877 = vmatprep.subr.bf16.mxu0 0
        %878 = vmatpush1.bf16.msra.mxu0 %v854
        %879 = vmatprep.subr.bf16.mxu0 0
        %880 = vmatpush1.bf16.msra.mxu0 %v855
        %881 = vmatprep.subr.bf16.mxu0 0
        %882 = vmatpush1.bf16.msra.mxu0 %v856
        %883 = vmatprep.subr.bf16.mxu0 0
        %884 = vmatpush1.bf16.msra.mxu0 %v857
        %885 = vmatprep.subr.bf16.mxu0 0
        %886 = vmatpush1.bf16.msra.mxu0 %v858
        %887 = vmatprep.subr.bf16.mxu0 0
        %888 = vmatpush1.bf16.msra.mxu0 %v859
        %889 = vmatprep.subr.bf16.mxu0 0
        %890 = vmatpush1.bf16.msra.mxu0 %v860
        %891 = vmatprep.subr.bf16.mxu0 0
        %892 = vmatpush1.bf16.msra.mxu0 %v861
        %893 = vmatprep.subr.bf16.mxu0 0
        %894 = vmatpush1.bf16.msra.mxu0 %v862
        %895 = vmatprep.subr.bf16.mxu0 0
        %896 = vmatpush1.bf16.msra.mxu0 %v863
        %897 = vmatprep.subr.bf16.mxu0 0
        %898 = vmatpush1.bf16.msra.mxu0 0
        %899 = vmatprep.subr.bf16.mxu0 0
        %900 = vmatpush1.bf16.msra.mxu0 0
        %901 = vmatprep.subr.bf16.mxu0 0
        %902 = vmatpush1.bf16.msra.mxu0 0
        %903 = vmatprep.subr.bf16.mxu0 0
        %904 = vmatpush1.bf16.msra.mxu0 0
        %905 = vmatprep.subr.bf16.mxu0 0
        %906 = vmatpush1.bf16.msra.mxu0 0
        %907 = vmatprep.subr.bf16.mxu0 0
        %908 = vmatpush1.bf16.msra.mxu0 0
        %909 = vmatprep.mubr.bf16.mxu0 %v875
        %910 = vmatmul.mubr.bf16.gmra.mrb[0].mxu0 %v805
        %v911 = vpop.f32.mrb[0].mxu0
        %v912 = vadd.f32 0.0, %v911
        %v913 = vpop.f32.mrb[0].mxu0
        %v914 = vpop.f32.mrb[0].mxu0
        %v915 = vpop.f32.mrb[0].mxu0
        %916 = vdwg.mxu0
        %v917 = vadd.f32 %v766, %v912
        %v918 = vld [vmem:[%s2] sm:$0x1]
        %v919 = vadd.f32 %v917, %v918
        %vm920 = vcmask 385024
        %921 = vst.msk [vmem:[%s160] sm:$0x1] %vm920, %v919
        %s922 = sand.u32 %s93, 1
        %s923 = scalar_lea.sflag [#allocation3], %s922
        %s924 = sand.u32 %s93, 1
        %s925 = scalar_lea.vmem [#allocation2], %s924
        // Predicated region
        $region33: #{analysis_forward.7} parent=31 // pred_check
          %p926 = pneg %p103
        $region34: #{analysis_forward.7} parent=31 // pred_check_branch
          %928 = sbr.rel (%p926) target = $region36
        $region35: #{analysis_forward.7} parent=31 // pred_region
          %s930 = ssub.s32 16, 16
          %931 = vsyncadd %s923, %s930
          %s932 = smul.addr %s17, 16
          %s933 = scalar_lea.hbm %s3, %s932
          %s935 = sshll.u32 %s925, 4
          %s936 = int_to_ptr.vmem [resolvable:$true] %s935
          %938 = dma.vmem_to_hbm [thread:$0]  %s936, 16, %s933, %s923
        $region36: #{analysis_forward.7} parent=31 // pred_fallthru
          _
      $region32: #{analysis_forward.7} parent=5 // pred_fallthru
        _
      %p939 = scmp.le.s32.totalorder 2, %s12
      // Predicated region
      $region37: #{analysis_forward.7} parent=5 // pred_check
        %p940 = pneg %p939
      $region38: #{analysis_forward.7} parent=5 // pred_check_branch
        %942 = sbr.rel (%p940) target = $region40
      $region39: #{analysis_forward.7} parent=5 // pred_region
        %s943 = ssub.s32 %s12, 2
        // Predicated region
        $region41: #{analysis_forward.7} parent=39 // pred_check
          %p944 = pneg %p109
        $region42: #{analysis_forward.7} parent=39 // pred_check_branch
          %946 = sbr.rel (%p944) target = $region44
        $region43: #{analysis_forward.7} parent=39 // pred_region
          %s947 = sand.u32 %s94, 1
          %s948 = scalar_lea.sflag [#allocation3], %s947
          %s949 = sand.u32 %s94, 1
          %s950 = scalar_lea.vmem [#allocation2], %s949
          %951 = dma.done %s948, 16
        $region44: #{analysis_forward.7} parent=39 // pred_fallthru
          _
      $region40: #{analysis_forward.7} parent=5 // pred_fallthru
        _
    $region6: #{analysis_forward.7} parent=1 // loop_footer
      %s16 = sadd.s32 1, %s12
    $region7: #{analysis_forward.7} parent=1 // loop_footer_branch
      %11 = sbr.rel target = $region3
    $region8: #{analysis_forward.7} parent=1 // loop_exit
      _
    %952 = vsyncpa [#allocation3], 1
    %s953 = scalar_lea.sflag [#allocation3], 1
    %954 = vsyncpa %s953, 1

</llo_original>
